<compile_context>
chip_gen: v7x
topology: tpu7x:2x2x1
jax: 0.10.0
libtpu: 0.0.40
codegen_flags: <defaults>
</compile_context>

<pallas_src>
import math

import numpy as np
import jax
import jax.numpy as jnp
from jax.experimental import pallas as pl
from jax.experimental.pallas import tpu as pltpu

# ----------------------------- model hyper-params -----------------------------
EMB = 32           # embedding_dim
HEAD = 4           # head_num
QKV = 8            # qkv_dim
HD = HEAD * QKV    # 32
FF = 64            # ff_hidden_dim
LAYERS = 2         # encoder_layer_num
HYPER_HIDDEN = 256
SQRT_EMB = math.sqrt(EMB)    # sqrt_embedding_dim
LOGIT_CLIP = 10.0            # logit_clipping
NEG_BIG = -1e9               # finite stand-in for -inf inside kernels (NaN guard)


# ------------------------------ in-kernel helpers ------------------------------
def _dot(a, b):
    return jnp.dot(a, b, preferred_element_type=jnp.float32)


def _dot_nt(a, b):
    """a @ b.T via dot_general contracting the last dims (operands stay lane-dense)."""
    return jax.lax.dot_general(a, b, (((1,), (1,)), ((), ())),
                               preferred_element_type=jnp.float32)


def _softmax_rows(s):
    s = s - jnp.max(s, axis=-1, keepdims=True)
    e = jnp.exp(s)
    return e / jnp.sum(e, axis=-1, keepdims=True)


def _instance_norm(a, gamma, beta):
    # nn.InstanceNorm1d(E, affine=True): per (batch, channel) stats over the token axis.
    mean = jnp.mean(a, axis=0, keepdims=True)
    var = jnp.mean((a - mean) ** 2, axis=0, keepdims=True)
    return (a - mean) * jax.lax.rsqrt(var + 1e-5) * gamma + beta


# ---------------------------------- kernels -------------------------------------
def _pre_forward_kernel(inst_ref, pref_ref, pe_ref, emb_ref,
                        wproj_ref, wmhc_ref, wff1_ref, wff2_ref, vec_ref,
                        fc2_ref, fc3_ref, wkv_ref,
                        big_ref, embpref_ref,
                        x_scr, mh_scr):
    # inst: (B*P, 4)   pref: (B, 2)   pe: (1, EMB)
    # emb_ref (8, EMB): rows 0:4 node-emb W, 4 node-emb b, 5:7 pref-emb W, 7 pref-emb b
    # wproj (L, EMB, 4*HD)=[Wq1|Wk1|Wv1|Wv2], wmhc (L,HD,EMB), wff1 (L,EMB,FF), wff2 (L,FF,EMB)
    # vec (L, 7, FF): rows = b_mhc, gamma1, beta1, b_ff1, b_ff2, gamma2, beta2
    # fc2 (EMB+1, HYPER_HIDDEN), fc3 (HYPER_HIDDEN+1, EMB), wkv (EMB, 2*HD)=[Wk|Wv]
    # big out (B, P, 4*EMB) = [enc_q | kvn | k | v],  embpref out (B, EMB)
    B, N, _ = x_scr.shape
    P = N - 1
    inv_sqrt_d = 1.0 / math.sqrt(QKV)

    # ---- embedding (MoE('Linear') deterministic expert + embedding_pref) ----
    nodes = _dot(inst_ref[...], emb_ref[0:4, :]) + emb_ref[4:5, :]          # (B*P, EMB)
    prefs = _dot(pref_ref[...], emb_ref[5:7, :]) + emb_ref[7:8, :]          # (B, EMB)
    embpref_ref[...] = prefs
    for b in range(B):
        x_scr[b, 0:P, :] = nodes[b * P:(b + 1) * P, :]
        x_scr[b, P:P + 1, :] = prefs[b:b + 1, :]

    # ---- encoder layers (activation stays in VMEM scratch across layers) ----
    is_node = jax.lax.broadcasted_iota(jnp.int32, (N, 1), 0) < P            # (N, 1)
    for l in range(LAYERS):
        w_proj = wproj_ref[l]                                               # (EMB, 4*HD)
        w_mhc = wmhc_ref[l]                                                 # (HD, EMB)
        w_ff1 = wff1_ref[l]                                                 # (EMB, FF)
        w_ff2 = wff2_ref[l]                                                 # (FF, EMB)
        vec_l = vec_ref[l]                                                  # (7, FF)
        b_mhc, g1, be1 = vec_l[0:1, 0:EMB], vec_l[1:2, 0:EMB], vec_l[2:3, 0:EMB]
        b_ff1 = vec_l[3:4, 0:FF]
        b_ff2, g2, be2 = vec_l[4:5, 0:EMB], vec_l[5:6, 0:EMB], vec_l[6:7, 0:EMB]
        for b in range(B):
            x = x_scr[b]                                                    # (N, EMB)
            proj = _dot(x, w_proj)                                          # (N, 4*HD)
            q1, k1 = proj[:, 0:HD], proj[:, HD:2 * HD]
            v1 = proj[:, 2 * HD:3 * HD]
            # pref-token attention: softmax over a single key == 1  =>  add == Wv2(pref)
            v2 = proj[N - 1:N, 3 * HD:4 * HD]                               # (1, HD)
            # per-head MHA 1, head outputs collected into a (N, HD) scratch
            for h in range(HEAD):
                s = slice(h * QKV, (h + 1) * QKV)
                sc = _dot_nt(q1[:, s], k1[:, s]) * inv_sqrt_d               # (N, N)
                mh_scr[:, s] = _dot(_softmax_rows(sc), v1[:, s])            # (N, D)
            oc = mh_scr[...] + jnp.where(is_node, v2, 0.0)                  # add_concat on node rows
            mh_out = _dot(oc, w_mhc) + b_mhc                                # multi_head_combine
            out1 = _instance_norm(x + mh_out, g1, be1)
            # MoE('MLP') deterministic expert:  EMB -> FF -> EMB
            hidden = jnp.maximum(_dot(out1, w_ff1) + b_ff1, 0.0)
            out2 = _dot(hidden, w_ff2) + b_ff2
            x_scr[b] = _instance_norm(out1 + out2, g2, be2)

    # ---- set_kv: hyper_fc2 -> hyper_fc3 positional shift, then decoder Wk|Wv ----
    ep = _dot(pe_ref[...], fc2_ref[0:EMB, :]) + fc2_ref[EMB:EMB + 1, :]                    # (1, 256)
    ep = _dot(ep, fc3_ref[0:HYPER_HIDDEN, :]) + fc3_ref[HYPER_HIDDEN:HYPER_HIDDEN + 1, :]  # (1, EMB)
    for b in range(B):
        encq = x_scr[b, 0:P, :]                       # encoded_nodes_q   (P, EMB)
        kvn = encq + ep                               # encoded_nodes_kv  (P, EMB)
        kv = _dot(kvn, wkv_ref[...])                  # (P, 2*HD) = [k | v]
        big_ref[b, :, 0:EMB] = encq
        big_ref[b, :, EMB:2 * EMB] = kvn
        big_ref[b, :, 2 * EMB:4 * EMB] = kv


def _decoder_step_kernel(encfl_ref, big_ref, mask_ref, wq_ref, ff1_ref, ff2_ref,
                         probs_ref, head_scr):
    # encfl: (B, pomo, 2*EMB) = [enc_first | enc_last]
    # big:   (B, P, 4*EMB)    = [enc_q | kvn | k | v]
    # mask:  (B, pomo, P)   wq: (2*EMB, HD)   ff1: (HD+1, FF)   ff2: (FF+1, EMB)
    B, pomo, P = mask_ref.shape
    inv_sqrt_d = 1.0 / math.sqrt(QKV)
    for b in range(B):
        q = _dot(encfl_ref[b], wq_ref[...])                                  # q_first + q_last
        bb = big_ref[b]                                                      # (P, 4*EMB)
        kvn = bb[:, EMB:2 * EMB]                                             # single_head_key
        k = bb[:, 2 * EMB:3 * EMB]
        v = bb[:, 3 * EMB:4 * EMB]
        mask = jnp.maximum(mask_ref[b], NEG_BIG)                             # clamp -inf -> finite
        for h in range(HEAD):
            s = slice(h * QKV, (h + 1) * QKV)
            sc = _dot_nt(q[:, s], k[:, s]) * inv_sqrt_d + mask               # (pomo, P)
            head_scr[:, s] = _dot(_softmax_rows(sc), v[:, s])                # (pomo, D)
        oc = head_scr[...]                                                   # (pomo, HD)
        # MoE('MLP') deterministic expert as multi_head_combine: HD -> FF -> EMB
        hidden = jnp.maximum(_dot(oc, ff1_ref[0:HD, :]) + ff1_ref[HD:HD + 1, :], 0.0)
        mh = _dot(hidden, ff2_ref[0:FF, :]) + ff2_ref[FF:FF + 1, :]          # (pomo, EMB)
        score = _dot_nt(mh, kvn) * (1.0 / SQRT_EMB)                          # (pomo, P)
        score = LOGIT_CLIP * jnp.tanh(score) + mask
        score = score - jnp.max(score, axis=-1, keepdims=True)
        e = jnp.exp(score)
        probs_ref[b] = e / jnp.sum(e, axis=-1, keepdims=True)


# ----------------------------- pallas_call wrappers -----------------------------
def position_encoding_init(n_position, emb_dim):
    table = np.array([[pos / np.power(10000, 2 * (j // 2) / emb_dim)
                       for j in range(emb_dim)]
                      if pos != 0 else np.zeros(emb_dim)
                      for pos in range(50)], dtype=np.float32)
    table[1:, 0::2] = np.sin(table[1:, 0::2])
    table[1:, 1::2] = np.cos(table[1:, 1::2])
    n_size = n_position // 10
    return jnp.asarray(table[n_size], jnp.float32).reshape(1, emb_dim)


def pre_forward(params, instances, pref):
    """Fused encoder + positional fc2/fc3 + decoder.set_kv.  One launch.

    Returns (big, embedded_pref) where big[..., 0:EMB] = encoded_nodes_q,
    big[..., EMB:2E] = encoded_nodes_kv, big[..., 2E:3E] = decoder k, big[..., 3E:4E] = v.
    """
    B, P, C = instances.shape
    pe = position_encoding_init(P, EMB)                      # (1, EMB)
    inst_flat = instances.reshape(B * P, C)
    big, emb_pref = pl.pallas_call(
        _pre_forward_kernel,
        out_shape=(jax.ShapeDtypeStruct((B, P, 4 * EMB), jnp.float32),
                   jax.ShapeDtypeStruct((B, EMB), jnp.float32)),
        scratch_shapes=[pltpu.VMEM((B, P + 1, EMB), jnp.float32),   # activations across layers
                        pltpu.VMEM((P + 1, HD), jnp.float32)],      # per-head output collector
    )(inst_flat, pref, pe, params['emb_slab'],
      params['w_proj'], params['w_mhc'], params['w_ff1'], params['w_ff2'], params['vec'],
      params['fc2'], params['fc3'], params['w_kv'])
    return big, emb_pref


def decoder_forward(params, encoded_first_node, encoded_last_node, big,
                    mid_embd_pref, ninf_mask):
    del mid_embd_pref  # TODO(synk): used only by the (unavailable) MoE gating network
    B, pomo, _ = encoded_last_node.shape
    P = big.shape[1]
    enc_fl = jnp.concatenate([encoded_first_node, encoded_last_node], axis=-1)  # (B, pomo, 2E)
    probs = pl.pallas_call(
        _decoder_step_kernel,
        out_shape=jax.ShapeDtypeStruct((B, pomo, P), jnp.float32),
        scratch_shapes=[pltpu.VMEM((pomo, HD), jnp.float32)],
    )(enc_fl, big, ninf_mask, params['dec_wq'], params['dec_ff1'], params['dec_ff2'])
    moe_loss = jnp.float32(0.0)
    return probs, moe_loss


# ---------------------------------- JAX glue -------------------------------------
def get_encoding(encoded_nodes, node_index_to_pick):
    # encoded_nodes: (B, P, E), idx: (B, pomo) -> (B, pomo, E)
    return jnp.take_along_axis(encoded_nodes, node_index_to_pick[:, :, None], axis=1)


# ----------------------------- parameter init ----------------------------------
def _lin(key, out_dim, in_dim, bias=True):
    kw, kb = jax.random.split(key)
    bound = 1.0 / math.sqrt(in_dim)
    w = jax.random.uniform(kw, (out_dim, in_dim), jnp.float32, -bound, bound)
    b = (jax.random.uniform(kb, (out_dim,), jnp.float32, -bound, bound)
         if bias else None)
    return w, b


def init_params(key):
    keys = iter(jax.random.split(key, 64))
    p = {}

    w_pref, b_pref = _lin(next(keys), EMB, 2)       # embedding_pref
    w_emb, b_emb = _lin(next(keys), EMB, 4)         # MoE('Linear') deterministic expert
    p['emb_slab'] = jnp.concatenate(
        [w_emb.T, b_emb[None, :], w_pref.T, b_pref[None, :]], axis=0)        # (8, EMB)

    def _pad_ff(v):
        return jnp.pad(v, (0, FF - v.shape[0]))

    wproj, wmhc, wff1, wff2, vec = [], [], [], [], []
    for _ in range(LAYERS):
        wq1, _ = _lin(next(keys), HD, EMB, bias=False)
        wk1, _ = _lin(next(keys), HD, EMB, bias=False)
        wv1, _ = _lin(next(keys), HD, EMB, bias=False)
        wv2, _ = _lin(next(keys), HD, EMB, bias=False)   # Wq2/Wk2 are mathematically inert
        wproj.append(jnp.concatenate([wq1.T, wk1.T, wv1.T, wv2.T], axis=1))  # (EMB, 128)
        w, b_mhc = _lin(next(keys), EMB, HD)                                 # multi_head_combine
        wmhc.append(w.T)
        w1, b1 = _lin(next(keys), FF, EMB)                                   # MoE('MLP') expert
        w2, b2 = _lin(next(keys), EMB, FF)
        wff1.append(w1.T)
        wff2.append(w2.T)
        vec.append(jnp.stack([
            _pad_ff(b_mhc),
            _pad_ff(jnp.ones(EMB, jnp.float32)), _pad_ff(jnp.zeros(EMB, jnp.float32)),
            b1,
            _pad_ff(b2),
            _pad_ff(jnp.ones(EMB, jnp.float32)), _pad_ff(jnp.zeros(EMB, jnp.float32)),
        ], axis=0))                                                          # (7, FF)
    p['w_proj'] = jnp.stack(wproj)     # (L, EMB, 128)
    p['w_mhc'] = jnp.stack(wmhc)       # (L, HD, EMB)
    p['w_ff1'] = jnp.stack(wff1)       # (L, EMB, FF)
    p['w_ff2'] = jnp.stack(wff2)       # (L, FF, EMB)
    p['vec'] = jnp.stack(vec)          # (L, 7, FF)

    # model-level hyper nets (fc2/fc3), bias appended as the last row
    w2f, b2f = _lin(next(keys), HYPER_HIDDEN, EMB)
    p['fc2'] = jnp.concatenate([w2f.T, b2f[None, :]], axis=0)                # (EMB+1, 256)
    w3f, b3f = _lin(next(keys), EMB, HYPER_HIDDEN)
    p['fc3'] = jnp.concatenate([w3f.T, b3f[None, :]], axis=0)                # (257, EMB)

    # decoder
    wk, _ = _lin(next(keys), HD, EMB, bias=False)
    wv, _ = _lin(next(keys), HD, EMB, bias=False)
    p['w_kv'] = jnp.concatenate([wk.T, wv.T], axis=1)                        # (EMB, 2*HD)
    wqf, _ = _lin(next(keys), HD, EMB, bias=False)
    wql, _ = _lin(next(keys), HD, EMB, bias=False)
    p['dec_wq'] = jnp.concatenate([wqf.T, wql.T], axis=0)                    # (2*EMB, HD)
    w1, b1 = _lin(next(keys), FF, HD)                                        # MoE('MLP') expert
    w2, b2 = _lin(next(keys), EMB, FF)
    p['dec_ff1'] = jnp.concatenate([w1.T, b1[None, :]], axis=0)              # (HD+1, FF)
    p['dec_ff2'] = jnp.concatenate([w2.T, b2[None, :]], axis=0)              # (FF+1, EMB)
    return p


# =================================== main =======================================
if __name__ == "__main__":
    B, P = 2, 8          # batch, problem_size (== pomo_size)
    pomo = P

    key = jax.random.PRNGKey(0)
    k_inst, k_pref = jax.random.split(key)
    instances = jax.random.uniform(k_inst, (B, P, 4), jnp.float32)     # MOTSP coords
    pref = jax.random.uniform(k_pref, (B, 2), jnp.float32)
    pref = pref / jnp.sum(pref, axis=-1, keepdims=True)

    params = init_params(jax.random.PRNGKey(42))

    pre_fwd = jax.jit(pre_forward)
    dec_fwd = jax.jit(decoder_forward)

    # --- pre_forward (encoder + set_kv fused in one launch) ---
    big, emb_pref = pre_fwd(params, instances, pref)
    enc_q = big[:, :, :EMB]                                            # encoded_nodes_q

    # --- forward step 1 (current_node is None): POMO start nodes, set_q1 input ---
    selected0 = jnp.broadcast_to(jnp.arange(pomo)[None, :], (B, pomo))
    prob0 = jnp.ones((B, pomo), jnp.float32)
    encoded_first_node = get_encoding(enc_q, selected0)   # Wq_first applied inside decoder kernel

    # --- forward step 2 (decoder step, eval_type='argmax') ---
    ninf_mask = jnp.where(jax.nn.one_hot(selected0, P) > 0,
                          -jnp.inf, 0.0).astype(jnp.float32)           # (B, pomo, P)
    encoded_last_node = get_encoding(enc_q, selected0)
    probs, moe_loss = dec_fwd(params, encoded_first_node, encoded_last_node,
                              big, emb_pref, ninf_mask)
    selected = jnp.argmax(probs, axis=2)                               # (B, pomo)

    jax.block_until_ready((selected, probs, prob0, moe_loss))
    assert probs.shape == (B, pomo, P)
    assert bool(jnp.all(jnp.isfinite(probs)))
    assert bool(jnp.allclose(jnp.sum(probs, axis=-1), 1.0, atol=1e-4))
    print("KERNEL_OK")
</pallas_src>

<mosaic_0001>
module attributes {stable_mosaic.version = 11 : i64} {
  func.func @_pre_forward_kernel(%arg0: memref<16x4xf32, #tpu.memory_space<vmem>>, %arg1: memref<2x2xf32, #tpu.memory_space<vmem>>, %arg2: memref<1x32xf32, #tpu.memory_space<vmem>>, %arg3: memref<8x32xf32, #tpu.memory_space<vmem>>, %arg4: memref<2x32x128xf32, #tpu.memory_space<vmem>>, %arg5: memref<2x32x32xf32, #tpu.memory_space<vmem>>, %arg6: memref<2x32x64xf32, #tpu.memory_space<vmem>>, %arg7: memref<2x64x32xf32, #tpu.memory_space<vmem>>, %arg8: memref<2x7x64xf32, #tpu.memory_space<vmem>>, %arg9: memref<33x256xf32, #tpu.memory_space<vmem>>, %arg10: memref<257x32xf32, #tpu.memory_space<vmem>>, %arg11: memref<32x64xf32, #tpu.memory_space<vmem>>, %arg12: memref<2x8x128xf32, #tpu.memory_space<vmem>>, %arg13: memref<2x32xf32, #tpu.memory_space<vmem>>, %arg14: memref<2x9x32xf32, #tpu.memory_space<vmem>>, %arg15: memref<9x32xf32, #tpu.memory_space<vmem>>) attributes {dimension_semantics = [], scalar_prefetch = 0 : i64, scratch_operands = 2 : i64, tpu.core_type = #tpu.core_type<tc>} {
    %c0 = arith.constant 0 : index
    %c0_0 = arith.constant 0 : index
    %0 = vector.load %arg0[%c0, %c0_0] : memref<16x4xf32, #tpu.memory_space<vmem>>, vector<16x4xf32>
    %c0_1 = arith.constant 0 : index
    %c0_2 = arith.constant 0 : index
    %1 = vector.load %arg3[%c0_1, %c0_2] : memref<8x32xf32, #tpu.memory_space<vmem>>, vector<4x32xf32>
    %cst = arith.constant dense<0.000000e+00> : vector<16x32xf32>
    %2 = tpu.matmul %0, %1, %cst {dimension_numbers = #tpu.dot_dimension_numbers<[1], [0], [0], [1], [0, 0, 1, 1], [], []>} : vector<16x4xf32>, vector<4x32xf32>, vector<16x32xf32> -> vector<16x32xf32>
    %c4 = arith.constant 4 : index
    %c0_3 = arith.constant 0 : index
    %3 = vector.load %arg3[%c4, %c0_3] : memref<8x32xf32, #tpu.memory_space<vmem>>, vector<1x32xf32>
    %4 = vector.broadcast %3 : vector<1x32xf32> to vector<16x32xf32>
    %5 = arith.addf %2, %4 : vector<16x32xf32>
    %c0_4 = arith.constant 0 : index
    %c0_5 = arith.constant 0 : index
    %6 = vector.load %arg1[%c0_4, %c0_5] : memref<2x2xf32, #tpu.memory_space<vmem>>, vector<2x2xf32>
    %c5 = arith.constant 5 : index
    %c0_6 = arith.constant 0 : index
    %7 = vector.load %arg3[%c5, %c0_6] : memref<8x32xf32, #tpu.memory_space<vmem>>, vector<2x32xf32>
    %cst_7 = arith.constant dense<0.000000e+00> : vector<2x32xf32>
    %8 = tpu.matmul %6, %7, %cst_7 {dimension_numbers = #tpu.dot_dimension_numbers<[1], [0], [0], [1], [0, 0, 1, 1], [], []>} : vector<2x2xf32>, vector<2x32xf32>, vector<2x32xf32> -> vector<2x32xf32>
    %c7 = arith.constant 7 : index
    %c0_8 = arith.constant 0 : index
    %9 = vector.load %arg3[%c7, %c0_8] : memref<8x32xf32, #tpu.memory_space<vmem>>, vector<1x32xf32>
    %10 = vector.broadcast %9 : vector<1x32xf32> to vector<2x32xf32>
    %11 = arith.addf %8, %10 : vector<2x32xf32>
    %c0_9 = arith.constant 0 : index
    %c0_10 = arith.constant 0 : index
    %12 = vector.load %arg13[%c0_9, %c0_10] : memref<2x32xf32, #tpu.memory_space<vmem>>, vector<2x32xf32>
    tpu.vector_store %arg13[%c0_9, %c0_10], %11 {strides = array<i32>} : memref<2x32xf32, #tpu.memory_space<vmem>>, vector<2x32xf32>,
    %13 = vector.extract_strided_slice %5 {offsets = [0, 0], sizes = [8, 32], strides = [1, 1]} : vector<16x32xf32> to vector<8x32xf32>
    %c0_11 = arith.constant 0 : index
    %c0_12 = arith.constant 0 : index
    %c0_13 = arith.constant 0 : index
    %14 = vector.load %arg14[%c0_11, %c0_12, %c0_13] : memref<2x9x32xf32, #tpu.memory_space<vmem>>, vector<1x8x32xf32>
    %15 = vector.shape_cast %14 : vector<1x8x32xf32> to vector<8x32xf32>
    %16 = vector.shape_cast %13 : vector<8x32xf32> to vector<1x8x32xf32>
    tpu.vector_store %arg14[%c0_11, %c0_12, %c0_13], %16 {strides = array<i32>} : memref<2x9x32xf32, #tpu.memory_space<vmem>>, vector<1x8x32xf32>,
    %17 = vector.extract_strided_slice %11 {offsets = [0, 0], sizes = [1, 32], strides = [1, 1]} : vector<2x32xf32> to vector<1x32xf32>
    %c0_14 = arith.constant 0 : index
    %c8 = arith.constant 8 : index
    %c0_15 = arith.constant 0 : index
    %18 = vector.load %arg14[%c0_14, %c8, %c0_15] : memref<2x9x32xf32, #tpu.memory_space<vmem>>, vector<1x1x32xf32>
    %19 = vector.shape_cast %18 : vector<1x1x32xf32> to vector<1x32xf32>
    %20 = vector.shape_cast %17 : vector<1x32xf32> to vector<1x1x32xf32>
    tpu.vector_store %arg14[%c0_14, %c8, %c0_15], %20 {strides = array<i32>} : memref<2x9x32xf32, #tpu.memory_space<vmem>>, vector<1x1x32xf32>,
    %21 = vector.extract_strided_slice %5 {offsets = [8, 0], sizes = [8, 32], strides = [1, 1]} : vector<16x32xf32> to vector<8x32xf32>
    %c1 = arith.constant 1 : index
    %c0_16 = arith.constant 0 : index
    %c0_17 = arith.constant 0 : index
    %22 = vector.load %arg14[%c1, %c0_16, %c0_17] : memref<2x9x32xf32, #tpu.memory_space<vmem>>, vector<1x8x32xf32>
    %23 = vector.shape_cast %22 : vector<1x8x32xf32> to vector<8x32xf32>
    %24 = vector.shape_cast %21 : vector<8x32xf32> to vector<1x8x32xf32>
    tpu.vector_store %arg14[%c1, %c0_16, %c0_17], %24 {strides = array<i32>} : memref<2x9x32xf32, #tpu.memory_space<vmem>>, vector<1x8x32xf32>,
    %25 = vector.extract_strided_slice %11 {offsets = [1, 0], sizes = [1, 32], strides = [1, 1]} : vector<2x32xf32> to vector<1x32xf32>
    %c1_18 = arith.constant 1 : index
    %c8_19 = arith.constant 8 : index
    %c0_20 = arith.constant 0 : index
    %26 = vector.load %arg14[%c1_18, %c8_19, %c0_20] : memref<2x9x32xf32, #tpu.memory_space<vmem>>, vector<1x1x32xf32>
    %27 = vector.shape_cast %26 : vector<1x1x32xf32> to vector<1x32xf32>
    %28 = vector.shape_cast %25 : vector<1x32xf32> to vector<1x1x32xf32>
    tpu.vector_store %arg14[%c1_18, %c8_19, %c0_20], %28 {strides = array<i32>} : memref<2x9x32xf32, #tpu.memory_space<vmem>>, vector<1x1x32xf32>,
    %29 = tpu.iota {dimensions = array<i32: 0>} : vector<9x1xi32>
    %c8_i32 = arith.constant 8 : i32
    %30 = vector.broadcast %c8_i32 : i32 to vector<9x1xi32>
    %31 = arith.cmpi slt, %29, %30 : vector<9x1xi32>
    %c0_21 = arith.constant 0 : index
    %c0_22 = arith.constant 0 : index
    %c0_23 = arith.constant 0 : index
    %32 = vector.load %arg4[%c0_21, %c0_22, %c0_23] : memref<2x32x128xf32, #tpu.memory_space<vmem>>, vector<1x32x128xf32>
    %33 = vector.shape_cast %32 : vector<1x32x128xf32> to vector<32x128xf32>
    %c0_24 = arith.constant 0 : index
    %c0_25 = arith.constant 0 : index
    %c0_26 = arith.constant 0 : index
    %34 = vector.load %arg5[%c0_24, %c0_25, %c0_26] : memref<2x32x32xf32, #tpu.memory_space<vmem>>, vector<1x32x32xf32>
    %35 = vector.shape_cast %34 : vector<1x32x32xf32> to vector<32x32xf32>
    %c0_27 = arith.constant 0 : index
    %c0_28 = arith.constant 0 : index
    %c0_29 = arith.constant 0 : index
    %36 = vector.load %arg6[%c0_27, %c0_28, %c0_29] : memref<2x32x64xf32, #tpu.memory_space<vmem>>, vector<1x32x64xf32>
    %37 = vector.shape_cast %36 : vector<1x32x64xf32> to vector<32x64xf32>
    %c0_30 = arith.constant 0 : index
    %c0_31 = arith.constant 0 : index
    %c0_32 = arith.constant 0 : index
    %38 = vector.load %arg7[%c0_30, %c0_31, %c0_32] : memref<2x64x32xf32, #tpu.memory_space<vmem>>, vector<1x64x32xf32>
    %39 = vector.shape_cast %38 : vector<1x64x32xf32> to vector<64x32xf32>
    %c0_33 = arith.constant 0 : index
    %c0_34 = arith.constant 0 : index
    %c0_35 = arith.constant 0 : index
    %40 = vector.load %arg8[%c0_33, %c0_34, %c0_35] : memref<2x7x64xf32, #tpu.memory_space<vmem>>, vector<1x7x64xf32>
    %41 = vector.shape_cast %40 : vector<1x7x64xf32> to vector<7x64xf32>
    %42 = vector.extract_strided_slice %41 {offsets = [0, 0], sizes = [1, 32], strides = [1, 1]} : vector<7x64xf32> to vector<1x32xf32>
    %43 = vector.extract_strided_slice %41 {offsets = [1, 0], sizes = [1, 32], strides = [1, 1]} : vector<7x64xf32> to vector<1x32xf32>
    %44 = vector.extract_strided_slice %41 {offsets = [2, 0], sizes = [1, 32], strides = [1, 1]} : vector<7x64xf32> to vector<1x32xf32>
    %45 = vector.extract_strided_slice %41 {offsets = [3, 0], sizes = [1, 64], strides = [1, 1]} : vector<7x64xf32> to vector<1x64xf32>
    %46 = vector.extract_strided_slice %41 {offsets = [4, 0], sizes = [1, 32], strides = [1, 1]} : vector<7x64xf32> to vector<1x32xf32>
    %47 = vector.extract_strided_slice %41 {offsets = [5, 0], sizes = [1, 32], strides = [1, 1]} : vector<7x64xf32> to vector<1x32xf32>
    %48 = vector.extract_strided_slice %41 {offsets = [6, 0], sizes = [1, 32], strides = [1, 1]} : vector<7x64xf32> to vector<1x32xf32>
    %c0_36 = arith.constant 0 : index
    %c0_37 = arith.constant 0 : index
    %c0_38 = arith.constant 0 : index
    %49 = vector.load %arg14[%c0_36, %c0_37, %c0_38] : memref<2x9x32xf32, #tpu.memory_space<vmem>>, vector<1x9x32xf32>
    %50 = vector.shape_cast %49 : vector<1x9x32xf32> to vector<9x32xf32>
    %cst_39 = arith.constant dense<0.000000e+00> : vector<9x128xf32>
    %51 = tpu.matmul %50, %33, %cst_39 {dimension_numbers = #tpu.dot_dimension_numbers<[1], [0], [0], [1], [0, 0, 1, 1], [], []>} : vector<9x32xf32>, vector<32x128xf32>, vector<9x128xf32> -> vector<9x128xf32>
    %52 = vector.extract_strided_slice %51 {offsets = [0, 0], sizes = [9, 32], strides = [1, 1]} : vector<9x128xf32> to vector<9x32xf32>
    %53 = vector.extract_strided_slice %51 {offsets = [0, 32], sizes = [9, 32], strides = [1, 1]} : vector<9x128xf32> to vector<9x32xf32>
    %54 = vector.extract_strided_slice %51 {offsets = [0, 64], sizes = [9, 32], strides = [1, 1]} : vector<9x128xf32> to vector<9x32xf32>
    %55 = vector.extract_strided_slice %51 {offsets = [8, 96], sizes = [1, 32], strides = [1, 1]} : vector<9x128xf32> to vector<1x32xf32>
    %56 = vector.extract_strided_slice %52 {offsets = [0, 0], sizes = [9, 8], strides = [1, 1]} : vector<9x32xf32> to vector<9x8xf32>
    %57 = vector.extract_strided_slice %53 {offsets = [0, 0], sizes = [9, 8], strides = [1, 1]} : vector<9x32xf32> to vector<9x8xf32>
    %cst_40 = arith.constant dense<0.000000e+00> : vector<9x9xf32>
    %58 = tpu.matmul %56, %57, %cst_40 {dimension_numbers = #tpu.dot_dimension_numbers<[1], [1], [0], [0], [0, 0, 1, 0], [], []>} : vector<9x8xf32>, vector<9x8xf32>, vector<9x9xf32> -> vector<9x9xf32>
    %cst_41 = arith.constant 0.353553385 : f32
    %59 = vector.broadcast %cst_41 : f32 to vector<9x9xf32>
    %60 = arith.mulf %58, %59 : vector<9x9xf32>
    %cst_42 = arith.constant dense<0xFF800000> : vector<9xf32>
    %61 = vector.multi_reduction <maximumf>, %60, %cst_42 [1] : vector<9x9xf32> to vector<9xf32>
    %62 = vector.shape_cast %61 : vector<9xf32> to vector<9x1xf32>
    %63 = vector.broadcast %62 : vector<9x1xf32> to vector<9x9xf32>
    %64 = arith.subf %60, %63 : vector<9x9xf32>
    %65 = math.exp %64 : vector<9x9xf32>
    %cst_43 = arith.constant dense<0.000000e+00> : vector<9xf32>
    %66 = vector.multi_reduction <add>, %65, %cst_43 [1] : vector<9x9xf32> to vector<9xf32>
    %67 = vector.shape_cast %66 : vector<9xf32> to vector<9x1xf32>
    %68 = vector.broadcast %67 : vector<9x1xf32> to vector<9x9xf32>
    %69 = arith.divf %65, %68 : vector<9x9xf32>
    %70 = vector.extract_strided_slice %54 {offsets = [0, 0], sizes = [9, 8], strides = [1, 1]} : vector<9x32xf32> to vector<9x8xf32>
    %cst_44 = arith.constant dense<0.000000e+00> : vector<9x8xf32>
    %71 = tpu.matmul %69, %70, %cst_44 {dimension_numbers = #tpu.dot_dimension_numbers<[1], [0], [0], [1], [0, 0, 1, 1], [], []>} : vector<9x9xf32>, vector<9x8xf32>, vector<9x8xf32> -> vector<9x8xf32>
    %c0_45 = arith.constant 0 : index
    %c0_46 = arith.constant 0 : index
    %72 = vector.load %arg15[%c0_45, %c0_46] : memref<9x32xf32, #tpu.memory_space<vmem>>, vector<9x8xf32>
    tpu.vector_store %arg15[%c0_45, %c0_46], %71 {strides = array<i32>} : memref<9x32xf32, #tpu.memory_space<vmem>>, vector<9x8xf32>,
    %73 = vector.extract_strided_slice %52 {offsets = [0, 8], sizes = [9, 8], strides = [1, 1]} : vector<9x32xf32> to vector<9x8xf32>
    %74 = vector.extract_strided_slice %53 {offsets = [0, 8], sizes = [9, 8], strides = [1, 1]} : vector<9x32xf32> to vector<9x8xf32>
    %cst_47 = arith.constant dense<0.000000e+00> : vector<9x9xf32>
    %75 = tpu.matmul %73, %74, %cst_47 {dimension_numbers = #tpu.dot_dimension_numbers<[1], [1], [0], [0], [0, 0, 1, 0], [], []>} : vector<9x8xf32>, vector<9x8xf32>, vector<9x9xf32> -> vector<9x9xf32>
    %cst_48 = arith.constant 0.353553385 : f32
    %76 = vector.broadcast %cst_48 : f32 to vector<9x9xf32>
    %77 = arith.mulf %75, %76 : vector<9x9xf32>
    %cst_49 = arith.constant dense<0xFF800000> : vector<9xf32>
    %78 = vector.multi_reduction <maximumf>, %77, %cst_49 [1] : vector<9x9xf32> to vector<9xf32>
    %79 = vector.shape_cast %78 : vector<9xf32> to vector<9x1xf32>
    %80 = vector.broadcast %79 : vector<9x1xf32> to vector<9x9xf32>
    %81 = arith.subf %77, %80 : vector<9x9xf32>
    %82 = math.exp %81 : vector<9x9xf32>
    %cst_50 = arith.constant dense<0.000000e+00> : vector<9xf32>
    %83 = vector.multi_reduction <add>, %82, %cst_50 [1] : vector<9x9xf32> to vector<9xf32>
    %84 = vector.shape_cast %83 : vector<9xf32> to vector<9x1xf32>
    %85 = vector.broadcast %84 : vector<9x1xf32> to vector<9x9xf32>
    %86 = arith.divf %82, %85 : vector<9x9xf32>
    %87 = vector.extract_strided_slice %54 {offsets = [0, 8], sizes = [9, 8], strides = [1, 1]} : vector<9x32xf32> to vector<9x8xf32>
    %cst_51 = arith.constant dense<0.000000e+00> : vector<9x8xf32>
    %88 = tpu.matmul %86, %87, %cst_51 {dimension_numbers = #tpu.dot_dimension_numbers<[1], [0], [0], [1], [0, 0, 1, 1], [], []>} : vector<9x9xf32>, vector<9x8xf32>, vector<9x8xf32> -> vector<9x8xf32>
    %c0_52 = arith.constant 0 : index
    %c8_53 = arith.constant 8 : index
    %89 = vector.load %arg15[%c0_52, %c8_53] : memref<9x32xf32, #tpu.memory_space<vmem>>, vector<9x8xf32>
    tpu.vector_store %arg15[%c0_52, %c8_53], %88 {strides = array<i32>} : memref<9x32xf32, #tpu.memory_space<vmem>>, vector<9x8xf32>,
    %90 = vector.extract_strided_slice %52 {offsets = [0, 16], sizes = [9, 8], strides = [1, 1]} : vector<9x32xf32> to vector<9x8xf32>
    %91 = vector.extract_strided_slice %53 {offsets = [0, 16], sizes = [9, 8], strides = [1, 1]} : vector<9x32xf32> to vector<9x8xf32>
    %cst_54 = arith.constant dense<0.000000e+00> : vector<9x9xf32>
    %92 = tpu.matmul %90, %91, %cst_54 {dimension_numbers = #tpu.dot_dimension_numbers<[1], [1], [0], [0], [0, 0, 1, 0], [], []>} : vector<9x8xf32>, vector<9x8xf32>, vector<9x9xf32> -> vector<9x9xf32>
    %cst_55 = arith.constant 0.353553385 : f32
    %93 = vector.broadcast %cst_55 : f32 to vector<9x9xf32>
    %94 = arith.mulf %92, %93 : vector<9x9xf32>
    %cst_56 = arith.constant dense<0xFF800000> : vector<9xf32>
    %95 = vector.multi_reduction <maximumf>, %94, %cst_56 [1] : vector<9x9xf32> to vector<9xf32>
    %96 = vector.shape_cast %95 : vector<9xf32> to vector<9x1xf32>
    %97 = vector.broadcast %96 : vector<9x1xf32> to vector<9x9xf32>
    %98 = arith.subf %94, %97 : vector<9x9xf32>
    %99 = math.exp %98 : vector<9x9xf32>
    %cst_57 = arith.constant dense<0.000000e+00> : vector<9xf32>
    %100 = vector.multi_reduction <add>, %99, %cst_57 [1] : vector<9x9xf32> to vector<9xf32>
    %101 = vector.shape_cast %100 : vector<9xf32> to vector<9x1xf32>
    %102 = vector.broadcast %101 : vector<9x1xf32> to vector<9x9xf32>
    %103 = arith.divf %99, %102 : vector<9x9xf32>
    %104 = vector.extract_strided_slice %54 {offsets = [0, 16], sizes = [9, 8], strides = [1, 1]} : vector<9x32xf32> to vector<9x8xf32>
    %cst_58 = arith.constant dense<0.000000e+00> : vector<9x8xf32>
    %105 = tpu.matmul %103, %104, %cst_58 {dimension_numbers = #tpu.dot_dimension_numbers<[1], [0], [0], [1], [0, 0, 1, 1], [], []>} : vector<9x9xf32>, vector<9x8xf32>, vector<9x8xf32> -> vector<9x8xf32>
    %c0_59 = arith.constant 0 : index
    %c16 = arith.constant 16 : index
    %106 = vector.load %arg15[%c0_59, %c16] : memref<9x32xf32, #tpu.memory_space<vmem>>, vector<9x8xf32>
    tpu.vector_store %arg15[%c0_59, %c16], %105 {strides = array<i32>} : memref<9x32xf32, #tpu.memory_space<vmem>>, vector<9x8xf32>,
    %107 = vector.extract_strided_slice %52 {offsets = [0, 24], sizes = [9, 8], strides = [1, 1]} : vector<9x32xf32> to vector<9x8xf32>
    %108 = vector.extract_strided_slice %53 {offsets = [0, 24], sizes = [9, 8], strides = [1, 1]} : vector<9x32xf32> to vector<9x8xf32>
    %cst_60 = arith.constant dense<0.000000e+00> : vector<9x9xf32>
    %109 = tpu.matmul %107, %108, %cst_60 {dimension_numbers = #tpu.dot_dimension_numbers<[1], [1], [0], [0], [0, 0, 1, 0], [], []>} : vector<9x8xf32>, vector<9x8xf32>, vector<9x9xf32> -> vector<9x9xf32>
    %cst_61 = arith.constant 0.353553385 : f32
    %110 = vector.broadcast %cst_61 : f32 to vector<9x9xf32>
    %111 = arith.mulf %109, %110 : vector<9x9xf32>
    %cst_62 = arith.constant dense<0xFF800000> : vector<9xf32>
    %112 = vector.multi_reduction <maximumf>, %111, %cst_62 [1] : vector<9x9xf32> to vector<9xf32>
    %113 = vector.shape_cast %112 : vector<9xf32> to vector<9x1xf32>
    %114 = vector.broadcast %113 : vector<9x1xf32> to vector<9x9xf32>
    %115 = arith.subf %111, %114 : vector<9x9xf32>
    %116 = math.exp %115 : vector<9x9xf32>
    %cst_63 = arith.constant dense<0.000000e+00> : vector<9xf32>
    %117 = vector.multi_reduction <add>, %116, %cst_63 [1] : vector<9x9xf32> to vector<9xf32>
    %118 = vector.shape_cast %117 : vector<9xf32> to vector<9x1xf32>
    %119 = vector.broadcast %118 : vector<9x1xf32> to vector<9x9xf32>
    %120 = arith.divf %116, %119 : vector<9x9xf32>
    %121 = vector.extract_strided_slice %54 {offsets = [0, 24], sizes = [9, 8], strides = [1, 1]} : vector<9x32xf32> to vector<9x8xf32>
    %cst_64 = arith.constant dense<0.000000e+00> : vector<9x8xf32>
    %122 = tpu.matmul %120, %121, %cst_64 {dimension_numbers = #tpu.dot_dimension_numbers<[1], [0], [0], [1], [0, 0, 1, 1], [], []>} : vector<9x9xf32>, vector<9x8xf32>, vector<9x8xf32> -> vector<9x8xf32>
    %c0_65 = arith.constant 0 : index
    %c24 = arith.constant 24 : index
    %123 = vector.load %arg15[%c0_65, %c24] : memref<9x32xf32, #tpu.memory_space<vmem>>, vector<9x8xf32>
    tpu.vector_store %arg15[%c0_65, %c24], %122 {strides = array<i32>} : memref<9x32xf32, #tpu.memory_space<vmem>>, vector<9x8xf32>,
    %c0_66 = arith.constant 0 : index
    %c0_67 = arith.constant 0 : index
    %124 = vector.load %arg15[%c0_66, %c0_67] : memref<9x32xf32, #tpu.memory_space<vmem>>, vector<9x32xf32>
    %cst_68 = arith.constant 0.000000e+00 : f32
    %125 = vector.shape_cast %31 : vector<9x1xi1> to vector<9x1xi1>
    %126 = vector.broadcast %125 : vector<9x1xi1> to vector<9x32xi1>
    %127 = vector.shape_cast %55 : vector<1x32xf32> to vector<1x32xf32>
    %128 = vector.broadcast %127 : vector<1x32xf32> to vector<9x32xf32>
    %129 = vector.broadcast %cst_68 : f32 to vector<9x32xf32>
    %130 = arith.select %126, %128, %129 : vector<9x32xi1>, vector<9x32xf32>
    %131 = arith.addf %124, %130 : vector<9x32xf32>
    %cst_69 = arith.constant dense<0.000000e+00> : vector<9x32xf32>
    %132 = tpu.matmul %131, %35, %cst_69 {dimension_numbers = #tpu.dot_dimension_numbers<[1], [0], [0], [1], [0, 0, 1, 1], [], []>} : vector<9x32xf32>, vector<32x32xf32>, vector<9x32xf32> -> vector<9x32xf32>
    %133 = vector.broadcast %42 : vector<1x32xf32> to vector<9x32xf32>
    %134 = arith.addf %132, %133 : vector<9x32xf32>
    %135 = arith.addf %50, %134 : vector<9x32xf32>
    %cst_70 = arith.constant dense<0.000000e+00> : vector<32xf32>
    %136 = vector.multi_reduction <add>, %135, %cst_70 [0] : vector<9x32xf32> to vector<32xf32>
    %137 = vector.shape_cast %136 : vector<32xf32> to vector<1x32xf32>
    %cst_71 = arith.constant 9.000000e+00 : f32
    %138 = vector.broadcast %cst_71 : f32 to vector<1x32xf32>
    %139 = arith.divf %137, %138 : vector<1x32xf32>
    %140 = vector.broadcast %139 : vector<1x32xf32> to vector<9x32xf32>
    %141 = arith.subf %135, %140 : vector<9x32xf32>
    %142 = arith.mulf %141, %141 : vector<9x32xf32>
    %cst_72 = arith.constant dense<0.000000e+00> : vector<32xf32>
    %143 = vector.multi_reduction <add>, %142, %cst_72 [0] : vector<9x32xf32> to vector<32xf32>
    %144 = vector.shape_cast %143 : vector<32xf32> to vector<1x32xf32>
    %cst_73 = arith.constant 9.000000e+00 : f32
    %145 = vector.broadcast %cst_73 : f32 to vector<1x32xf32>
    %146 = arith.divf %144, %145 : vector<1x32xf32>
    %147 = vector.broadcast %139 : vector<1x32xf32> to vector<9x32xf32>
    %148 = arith.subf %135, %147 : vector<9x32xf32>
    %cst_74 = arith.constant 9.99999974E-6 : f32
    %149 = vector.broadcast %cst_74 : f32 to vector<1x32xf32>
    %150 = arith.addf %146, %149 : vector<1x32xf32>
    %151 = math.rsqrt %150 : vector<1x32xf32>
    %152 = vector.broadcast %151 : vector<1x32xf32> to vector<9x32xf32>
    %153 = arith.mulf %148, %152 : vector<9x32xf32>
    %154 = vector.broadcast %43 : vector<1x32xf32> to vector<9x32xf32>
    %155 = arith.mulf %153, %154 : vector<9x32xf32>
    %156 = vector.broadcast %44 : vector<1x32xf32> to vector<9x32xf32>
    %157 = arith.addf %155, %156 : vector<9x32xf32>
    %cst_75 = arith.constant dense<0.000000e+00> : vector<9x64xf32>
    %158 = tpu.matmul %157, %37, %cst_75 {dimension_numbers = #tpu.dot_dimension_numbers<[1], [0], [0], [1], [0, 0, 1, 1], [], []>} : vector<9x32xf32>, vector<32x64xf32>, vector<9x64xf32> -> vector<9x64xf32>
    %159 = vector.broadcast %45 : vector<1x64xf32> to vector<9x64xf32>
    %160 = arith.addf %158, %159 : vector<9x64xf32>
    %cst_76 = arith.constant 0.000000e+00 : f32
    %161 = vector.broadcast %cst_76 : f32 to vector<9x64xf32>
    %162 = arith.maximumf %160, %161 : vector<9x64xf32>
    %cst_77 = arith.constant dense<0.000000e+00> : vector<9x32xf32>
    %163 = tpu.matmul %162, %39, %cst_77 {dimension_numbers = #tpu.dot_dimension_numbers<[1], [0], [0], [1], [0, 0, 1, 1], [], []>} : vector<9x64xf32>, vector<64x32xf32>, vector<9x32xf32> -> vector<9x32xf32>
    %164 = vector.broadcast %46 : vector<1x32xf32> to vector<9x32xf32>
    %165 = arith.addf %163, %164 : vector<9x32xf32>
    %166 = arith.addf %157, %165 : vector<9x32xf32>
    %cst_78 = arith.constant dense<0.000000e+00> : vector<32xf32>
    %167 = vector.multi_reduction <add>, %166, %cst_78 [0] : vector<9x32xf32> to vector<32xf32>
    %168 = vector.shape_cast %167 : vector<32xf32> to vector<1x32xf32>
    %cst_79 = arith.constant 9.000000e+00 : f32
    %169 = vector.broadcast %cst_79 : f32 to vector<1x32xf32>
    %170 = arith.divf %168, %169 : vector<1x32xf32>
    %171 = vector.broadcast %170 : vector<1x32xf32> to vector<9x32xf32>
    %172 = arith.subf %166, %171 : vector<9x32xf32>
    %173 = arith.mulf %172, %172 : vector<9x32xf32>
    %cst_80 = arith.constant dense<0.000000e+00> : vector<32xf32>
    %174 = vector.multi_reduction <add>, %173, %cst_80 [0] : vector<9x32xf32> to vector<32xf32>
    %175 = vector.shape_cast %174 : vector<32xf32> to vector<1x32xf32>
    %cst_81 = arith.constant 9.000000e+00 : f32
    %176 = vector.broadcast %cst_81 : f32 to vector<1x32xf32>
    %177 = arith.divf %175, %176 : vector<1x32xf32>
    %178 = vector.broadcast %170 : vector<1x32xf32> to vector<9x32xf32>
    %179 = arith.subf %166, %178 : vector<9x32xf32>
    %cst_82 = arith.constant 9.99999974E-6 : f32
    %180 = vector.broadcast %cst_82 : f32 to vector<1x32xf32>
    %181 = arith.addf %177, %180 : vector<1x32xf32>
    %182 = math.rsqrt %181 : vector<1x32xf32>
    %183 = vector.broadcast %182 : vector<1x32xf32> to vector<9x32xf32>
    %184 = arith.mulf %179, %183 : vector<9x32xf32>
    %185 = vector.broadcast %47 : vector<1x32xf32> to vector<9x32xf32>
    %186 = arith.mulf %184, %185 : vector<9x32xf32>
    %187 = vector.broadcast %48 : vector<1x32xf32> to vector<9x32xf32>
    %188 = arith.addf %186, %187 : vector<9x32xf32>
    %c0_83 = arith.constant 0 : index
    %c0_84 = arith.constant 0 : index
    %c0_85 = arith.constant 0 : index
    %189 = vector.load %arg14[%c0_83, %c0_84, %c0_85] : memref<2x9x32xf32, #tpu.memory_space<vmem>>, vector<1x9x32xf32>
    %190 = vector.shape_cast %189 : vector<1x9x32xf32> to vector<9x32xf32>
    %191 = vector.shape_cast %188 : vector<9x32xf32> to vector<1x9x32xf32>
    tpu.vector_store %arg14[%c0_83, %c0_84, %c0_85], %191 {strides = array<i32>} : memref<2x9x32xf32, #tpu.memory_space<vmem>>, vector<1x9x32xf32>,
    %c1_86 = arith.constant 1 : index
    %c0_87 = arith.constant 0 : index
    %c0_88 = arith.constant 0 : index
    %192 = vector.load %arg14[%c1_86, %c0_87, %c0_88] : memref<2x9x32xf32, #tpu.memory_space<vmem>>, vector<1x9x32xf32>
    %193 = vector.shape_cast %192 : vector<1x9x32xf32> to vector<9x32xf32>
    %cst_89 = arith.constant dense<0.000000e+00> : vector<9x128xf32>
    %194 = tpu.matmul %193, %33, %cst_89 {dimension_numbers = #tpu.dot_dimension_numbers<[1], [0], [0], [1], [0, 0, 1, 1], [], []>} : vector<9x32xf32>, vector<32x128xf32>, vector<9x128xf32> -> vector<9x128xf32>
    %195 = vector.extract_strided_slice %194 {offsets = [0, 0], sizes = [9, 32], strides = [1, 1]} : vector<9x128xf32> to vector<9x32xf32>
    %196 = vector.extract_strided_slice %194 {offsets = [0, 32], sizes = [9, 32], strides = [1, 1]} : vector<9x128xf32> to vector<9x32xf32>
    %197 = vector.extract_strided_slice %194 {offsets = [0, 64], sizes = [9, 32], strides = [1, 1]} : vector<9x128xf32> to vector<9x32xf32>
    %198 = vector.extract_strided_slice %194 {offsets = [8, 96], sizes = [1, 32], strides = [1, 1]} : vector<9x128xf32> to vector<1x32xf32>
    %199 = vector.extract_strided_slice %195 {offsets = [0, 0], sizes = [9, 8], strides = [1, 1]} : vector<9x32xf32> to vector<9x8xf32>
    %200 = vector.extract_strided_slice %196 {offsets = [0, 0], sizes = [9, 8], strides = [1, 1]} : vector<9x32xf32> to vector<9x8xf32>
    %cst_90 = arith.constant dense<0.000000e+00> : vector<9x9xf32>
    %201 = tpu.matmul %199, %200, %cst_90 {dimension_numbers = #tpu.dot_dimension_numbers<[1], [1], [0], [0], [0, 0, 1, 0], [], []>} : vector<9x8xf32>, vector<9x8xf32>, vector<9x9xf32> -> vector<9x9xf32>
    %cst_91 = arith.constant 0.353553385 : f32
    %202 = vector.broadcast %cst_91 : f32 to vector<9x9xf32>
    %203 = arith.mulf %201, %202 : vector<9x9xf32>
    %cst_92 = arith.constant dense<0xFF800000> : vector<9xf32>
    %204 = vector.multi_reduction <maximumf>, %203, %cst_92 [1] : vector<9x9xf32> to vector<9xf32>
    %205 = vector.shape_cast %204 : vector<9xf32> to vector<9x1xf32>
    %206 = vector.broadcast %205 : vector<9x1xf32> to vector<9x9xf32>
    %207 = arith.subf %203, %206 : vector<9x9xf32>
    %208 = math.exp %207 : vector<9x9xf32>
    %cst_93 = arith.constant dense<0.000000e+00> : vector<9xf32>
    %209 = vector.multi_reduction <add>, %208, %cst_93 [1] : vector<9x9xf32> to vector<9xf32>
    %210 = vector.shape_cast %209 : vector<9xf32> to vector<9x1xf32>
    %211 = vector.broadcast %210 : vector<9x1xf32> to vector<9x9xf32>
    %212 = arith.divf %208, %211 : vector<9x9xf32>
    %213 = vector.extract_strided_slice %197 {offsets = [0, 0], sizes = [9, 8], strides = [1, 1]} : vector<9x32xf32> to vector<9x8xf32>
    %cst_94 = arith.constant dense<0.000000e+00> : vector<9x8xf32>
    %214 = tpu.matmul %212, %213, %cst_94 {dimension_numbers = #tpu.dot_dimension_numbers<[1], [0], [0], [1], [0, 0, 1, 1], [], []>} : vector<9x9xf32>, vector<9x8xf32>, vector<9x8xf32> -> vector<9x8xf32>
    %c0_95 = arith.constant 0 : index
    %c0_96 = arith.constant 0 : index
    %215 = vector.load %arg15[%c0_95, %c0_96] : memref<9x32xf32, #tpu.memory_space<vmem>>, vector<9x8xf32>
    tpu.vector_store %arg15[%c0_95, %c0_96], %214 {strides = array<i32>} : memref<9x32xf32, #tpu.memory_space<vmem>>, vector<9x8xf32>,
    %216 = vector.extract_strided_slice %195 {offsets = [0, 8], sizes = [9, 8], strides = [1, 1]} : vector<9x32xf32> to vector<9x8xf32>
    %217 = vector.extract_strided_slice %196 {offsets = [0, 8], sizes = [9, 8], strides = [1, 1]} : vector<9x32xf32> to vector<9x8xf32>
    %cst_97 = arith.constant dense<0.000000e+00> : vector<9x9xf32>
    %218 = tpu.matmul %216, %217, %cst_97 {dimension_numbers = #tpu.dot_dimension_numbers<[1], [1], [0], [0], [0, 0, 1, 0], [], []>} : vector<9x8xf32>, vector<9x8xf32>, vector<9x9xf32> -> vector<9x9xf32>
    %cst_98 = arith.constant 0.353553385 : f32
    %219 = vector.broadcast %cst_98 : f32 to vector<9x9xf32>
    %220 = arith.mulf %218, %219 : vector<9x9xf32>
    %cst_99 = arith.constant dense<0xFF800000> : vector<9xf32>
    %221 = vector.multi_reduction <maximumf>, %220, %cst_99 [1] : vector<9x9xf32> to vector<9xf32>
    %222 = vector.shape_cast %221 : vector<9xf32> to vector<9x1xf32>
    %223 = vector.broadcast %222 : vector<9x1xf32> to vector<9x9xf32>
    %224 = arith.subf %220, %223 : vector<9x9xf32>
    %225 = math.exp %224 : vector<9x9xf32>
    %cst_100 = arith.constant dense<0.000000e+00> : vector<9xf32>
    %226 = vector.multi_reduction <add>, %225, %cst_100 [1] : vector<9x9xf32> to vector<9xf32>
    %227 = vector.shape_cast %226 : vector<9xf32> to vector<9x1xf32>
    %228 = vector.broadcast %227 : vector<9x1xf32> to vector<9x9xf32>
    %229 = arith.divf %225, %228 : vector<9x9xf32>
    %230 = vector.extract_strided_slice %197 {offsets = [0, 8], sizes = [9, 8], strides = [1, 1]} : vector<9x32xf32> to vector<9x8xf32>
    %cst_101 = arith.constant dense<0.000000e+00> : vector<9x8xf32>
    %231 = tpu.matmul %229, %230, %cst_101 {dimension_numbers = #tpu.dot_dimension_numbers<[1], [0], [0], [1], [0, 0, 1, 1], [], []>} : vector<9x9xf32>, vector<9x8xf32>, vector<9x8xf32> -> vector<9x8xf32>
    %c0_102 = arith.constant 0 : index
    %c8_103 = arith.constant 8 : index
    %232 = vector.load %arg15[%c0_102, %c8_103] : memref<9x32xf32, #tpu.memory_space<vmem>>, vector<9x8xf32>
    tpu.vector_store %arg15[%c0_102, %c8_103], %231 {strides = array<i32>} : memref<9x32xf32, #tpu.memory_space<vmem>>, vector<9x8xf32>,
    %233 = vector.extract_strided_slice %195 {offsets = [0, 16], sizes = [9, 8], strides = [1, 1]} : vector<9x32xf32> to vector<9x8xf32>
    %234 = vector.extract_strided_slice %196 {offsets = [0, 16], sizes = [9, 8], strides = [1, 1]} : vector<9x32xf32> to vector<9x8xf32>
    %cst_104 = arith.constant dense<0.000000e+00> : vector<9x9xf32>
    %235 = tpu.matmul %233, %234, %cst_104 {dimension_numbers = #tpu.dot_dimension_numbers<[1], [1], [0], [0], [0, 0, 1, 0], [], []>} : vector<9x8xf32>, vector<9x8xf32>, vector<9x9xf32> -> vector<9x9xf32>
    %cst_105 = arith.constant 0.353553385 : f32
    %236 = vector.broadcast %cst_105 : f32 to vector<9x9xf32>
    %237 = arith.mulf %235, %236 : vector<9x9xf32>
    %cst_106 = arith.constant dense<0xFF800000> : vector<9xf32>
    %238 = vector.multi_reduction <maximumf>, %237, %cst_106 [1] : vector<9x9xf32> to vector<9xf32>
    %239 = vector.shape_cast %238 : vector<9xf32> to vector<9x1xf32>
    %240 = vector.broadcast %239 : vector<9x1xf32> to vector<9x9xf32>
    %241 = arith.subf %237, %240 : vector<9x9xf32>
    %242 = math.exp %241 : vector<9x9xf32>
    %cst_107 = arith.constant dense<0.000000e+00> : vector<9xf32>
    %243 = vector.multi_reduction <add>, %242, %cst_107 [1] : vector<9x9xf32> to vector<9xf32>
    %244 = vector.shape_cast %243 : vector<9xf32> to vector<9x1xf32>
    %245 = vector.broadcast %244 : vector<9x1xf32> to vector<9x9xf32>
    %246 = arith.divf %242, %245 : vector<9x9xf32>
    %247 = vector.extract_strided_slice %197 {offsets = [0, 16], sizes = [9, 8], strides = [1, 1]} : vector<9x32xf32> to vector<9x8xf32>
    %cst_108 = arith.constant dense<0.000000e+00> : vector<9x8xf32>
    %248 = tpu.matmul %246, %247, %cst_108 {dimension_numbers = #tpu.dot_dimension_numbers<[1], [0], [0], [1], [0, 0, 1, 1], [], []>} : vector<9x9xf32>, vector<9x8xf32>, vector<9x8xf32> -> vector<9x8xf32>
    %c0_109 = arith.constant 0 : index
    %c16_110 = arith.constant 16 : index
    %249 = vector.load %arg15[%c0_109, %c16_110] : memref<9x32xf32, #tpu.memory_space<vmem>>, vector<9x8xf32>
    tpu.vector_store %arg15[%c0_109, %c16_110], %248 {strides = array<i32>} : memref<9x32xf32, #tpu.memory_space<vmem>>, vector<9x8xf32>,
    %250 = vector.extract_strided_slice %195 {offsets = [0, 24], sizes = [9, 8], strides = [1, 1]} : vector<9x32xf32> to vector<9x8xf32>
    %251 = vector.extract_strided_slice %196 {offsets = [0, 24], sizes = [9, 8], strides = [1, 1]} : vector<9x32xf32> to vector<9x8xf32>
    %cst_111 = arith.constant dense<0.000000e+00> : vector<9x9xf32>
    %252 = tpu.matmul %250, %251, %cst_111 {dimension_numbers = #tpu.dot_dimension_numbers<[1], [1], [0], [0], [0, 0, 1, 0], [], []>} : vector<9x8xf32>, vector<9x8xf32>, vector<9x9xf32> -> vector<9x9xf32>
    %cst_112 = arith.constant 0.353553385 : f32
    %253 = vector.broadcast %cst_112 : f32 to vector<9x9xf32>
    %254 = arith.mulf %252, %253 : vector<9x9xf32>
    %cst_113 = arith.constant dense<0xFF800000> : vector<9xf32>
    %255 = vector.multi_reduction <maximumf>, %254, %cst_113 [1] : vector<9x9xf32> to vector<9xf32>
    %256 = vector.shape_cast %255 : vector<9xf32> to vector<9x1xf32>
    %257 = vector.broadcast %256 : vector<9x1xf32> to vector<9x9xf32>
    %258 = arith.subf %254, %257 : vector<9x9xf32>
    %259 = math.exp %258 : vector<9x9xf32>
    %cst_114 = arith.constant dense<0.000000e+00> : vector<9xf32>
    %260 = vector.multi_reduction <add>, %259, %cst_114 [1] : vector<9x9xf32> to vector<9xf32>
    %261 = vector.shape_cast %260 : vector<9xf32> to vector<9x1xf32>
    %262 = vector.broadcast %261 : vector<9x1xf32> to vector<9x9xf32>
    %263 = arith.divf %259, %262 : vector<9x9xf32>
    %264 = vector.extract_strided_slice %197 {offsets = [0, 24], sizes = [9, 8], strides = [1, 1]} : vector<9x32xf32> to vector<9x8xf32>
    %cst_115 = arith.constant dense<0.000000e+00> : vector<9x8xf32>
    %265 = tpu.matmul %263, %264, %cst_115 {dimension_numbers = #tpu.dot_dimension_numbers<[1], [0], [0], [1], [0, 0, 1, 1], [], []>} : vector<9x9xf32>, vector<9x8xf32>, vector<9x8xf32> -> vector<9x8xf32>
    %c0_116 = arith.constant 0 : index
    %c24_117 = arith.constant 24 : index
    %266 = vector.load %arg15[%c0_116, %c24_117] : memref<9x32xf32, #tpu.memory_space<vmem>>, vector<9x8xf32>
    tpu.vector_store %arg15[%c0_116, %c24_117], %265 {strides = array<i32>} : memref<9x32xf32, #tpu.memory_space<vmem>>, vector<9x8xf32>,
    %c0_118 = arith.constant 0 : index
    %c0_119 = arith.constant 0 : index
    %267 = vector.load %arg15[%c0_118, %c0_119] : memref<9x32xf32, #tpu.memory_space<vmem>>, vector<9x32xf32>
    %cst_120 = arith.constant 0.000000e+00 : f32
    %268 = vector.shape_cast %31 : vector<9x1xi1> to vector<9x1xi1>
    %269 = vector.broadcast %268 : vector<9x1xi1> to vector<9x32xi1>
    %270 = vector.shape_cast %198 : vector<1x32xf32> to vector<1x32xf32>
    %271 = vector.broadcast %270 : vector<1x32xf32> to vector<9x32xf32>
    %272 = vector.broadcast %cst_120 : f32 to vector<9x32xf32>
    %273 = arith.select %269, %271, %272 : vector<9x32xi1>, vector<9x32xf32>
    %274 = arith.addf %267, %273 : vector<9x32xf32>
    %cst_121 = arith.constant dense<0.000000e+00> : vector<9x32xf32>
    %275 = tpu.matmul %274, %35, %cst_121 {dimension_numbers = #tpu.dot_dimension_numbers<[1], [0], [0], [1], [0, 0, 1, 1], [], []>} : vector<9x32xf32>, vector<32x32xf32>, vector<9x32xf32> -> vector<9x32xf32>
    %276 = vector.broadcast %42 : vector<1x32xf32> to vector<9x32xf32>
    %277 = arith.addf %275, %276 : vector<9x32xf32>
    %278 = arith.addf %193, %277 : vector<9x32xf32>
    %cst_122 = arith.constant dense<0.000000e+00> : vector<32xf32>
    %279 = vector.multi_reduction <add>, %278, %cst_122 [0] : vector<9x32xf32> to vector<32xf32>
    %280 = vector.shape_cast %279 : vector<32xf32> to vector<1x32xf32>
    %cst_123 = arith.constant 9.000000e+00 : f32
    %281 = vector.broadcast %cst_123 : f32 to vector<1x32xf32>
    %282 = arith.divf %280, %281 : vector<1x32xf32>
    %283 = vector.broadcast %282 : vector<1x32xf32> to vector<9x32xf32>
    %284 = arith.subf %278, %283 : vector<9x32xf32>
    %285 = arith.mulf %284, %284 : vector<9x32xf32>
    %cst_124 = arith.constant dense<0.000000e+00> : vector<32xf32>
    %286 = vector.multi_reduction <add>, %285, %cst_124 [0] : vector<9x32xf32> to vector<32xf32>
    %287 = vector.shape_cast %286 : vector<32xf32> to vector<1x32xf32>
    %cst_125 = arith.constant 9.000000e+00 : f32
    %288 = vector.broadcast %cst_125 : f32 to vector<1x32xf32>
    %289 = arith.divf %287, %288 : vector<1x32xf32>
    %290 = vector.broadcast %282 : vector<1x32xf32> to vector<9x32xf32>
    %291 = arith.subf %278, %290 : vector<9x32xf32>
    %cst_126 = arith.constant 9.99999974E-6 : f32
    %292 = vector.broadcast %cst_126 : f32 to vector<1x32xf32>
    %293 = arith.addf %289, %292 : vector<1x32xf32>
    %294 = math.rsqrt %293 : vector<1x32xf32>
    %295 = vector.broadcast %294 : vector<1x32xf32> to vector<9x32xf32>
    %296 = arith.mulf %291, %295 : vector<9x32xf32>
    %297 = vector.broadcast %43 : vector<1x32xf32> to vector<9x32xf32>
    %298 = arith.mulf %296, %297 : vector<9x32xf32>
    %299 = vector.broadcast %44 : vector<1x32xf32> to vector<9x32xf32>
    %300 = arith.addf %298, %299 : vector<9x32xf32>
    %cst_127 = arith.constant dense<0.000000e+00> : vector<9x64xf32>
    %301 = tpu.matmul %300, %37, %cst_127 {dimension_numbers = #tpu.dot_dimension_numbers<[1], [0], [0], [1], [0, 0, 1, 1], [], []>} : vector<9x32xf32>, vector<32x64xf32>, vector<9x64xf32> -> vector<9x64xf32>
    %302 = vector.broadcast %45 : vector<1x64xf32> to vector<9x64xf32>
    %303 = arith.addf %301, %302 : vector<9x64xf32>
    %cst_128 = arith.constant 0.000000e+00 : f32
    %304 = vector.broadcast %cst_128 : f32 to vector<9x64xf32>
    %305 = arith.maximumf %303, %304 : vector<9x64xf32>
    %cst_129 = arith.constant dense<0.000000e+00> : vector<9x32xf32>
    %306 = tpu.matmul %305, %39, %cst_129 {dimension_numbers = #tpu.dot_dimension_numbers<[1], [0], [0], [1], [0, 0, 1, 1], [], []>} : vector<9x64xf32>, vector<64x32xf32>, vector<9x32xf32> -> vector<9x32xf32>
    %307 = vector.broadcast %46 : vector<1x32xf32> to vector<9x32xf32>
    %308 = arith.addf %306, %307 : vector<9x32xf32>
    %309 = arith.addf %300, %308 : vector<9x32xf32>
    %cst_130 = arith.constant dense<0.000000e+00> : vector<32xf32>
    %310 = vector.multi_reduction <add>, %309, %cst_130 [0] : vector<9x32xf32> to vector<32xf32>
    %311 = vector.shape_cast %310 : vector<32xf32> to vector<1x32xf32>
    %cst_131 = arith.constant 9.000000e+00 : f32
    %312 = vector.broadcast %cst_131 : f32 to vector<1x32xf32>
    %313 = arith.divf %311, %312 : vector<1x32xf32>
    %314 = vector.broadcast %313 : vector<1x32xf32> to vector<9x32xf32>
    %315 = arith.subf %309, %314 : vector<9x32xf32>
    %316 = arith.mulf %315, %315 : vector<9x32xf32>
    %cst_132 = arith.constant dense<0.000000e+00> : vector<32xf32>
    %317 = vector.multi_reduction <add>, %316, %cst_132 [0] : vector<9x32xf32> to vector<32xf32>
    %318 = vector.shape_cast %317 : vector<32xf32> to vector<1x32xf32>
    %cst_133 = arith.constant 9.000000e+00 : f32
    %319 = vector.broadcast %cst_133 : f32 to vector<1x32xf32>
    %320 = arith.divf %318, %319 : vector<1x32xf32>
    %321 = vector.broadcast %313 : vector<1x32xf32> to vector<9x32xf32>
    %322 = arith.subf %309, %321 : vector<9x32xf32>
    %cst_134 = arith.constant 9.99999974E-6 : f32
    %323 = vector.broadcast %cst_134 : f32 to vector<1x32xf32>
    %324 = arith.addf %320, %323 : vector<1x32xf32>
    %325 = math.rsqrt %324 : vector<1x32xf32>
    %326 = vector.broadcast %325 : vector<1x32xf32> to vector<9x32xf32>
    %327 = arith.mulf %322, %326 : vector<9x32xf32>
    %328 = vector.broadcast %47 : vector<1x32xf32> to vector<9x32xf32>
    %329 = arith.mulf %327, %328 : vector<9x32xf32>
    %330 = vector.broadcast %48 : vector<1x32xf32> to vector<9x32xf32>
    %331 = arith.addf %329, %330 : vector<9x32xf32>
    %c1_135 = arith.constant 1 : index
    %c0_136 = arith.constant 0 : index
    %c0_137 = arith.constant 0 : index
    %332 = vector.load %arg14[%c1_135, %c0_136, %c0_137] : memref<2x9x32xf32, #tpu.memory_space<vmem>>, vector<1x9x32xf32>
    %333 = vector.shape_cast %332 : vector<1x9x32xf32> to vector<9x32xf32>
    %334 = vector.shape_cast %331 : vector<9x32xf32> to vector<1x9x32xf32>
    tpu.vector_store %arg14[%c1_135, %c0_136, %c0_137], %334 {strides = array<i32>} : memref<2x9x32xf32, #tpu.memory_space<vmem>>, vector<1x9x32xf32>,
    %c1_138 = arith.constant 1 : index
    %c0_139 = arith.constant 0 : index
    %c0_140 = arith.constant 0 : index
    %335 = vector.load %arg4[%c1_138, %c0_139, %c0_140] : memref<2x32x128xf32, #tpu.memory_space<vmem>>, vector<1x32x128xf32>
    %336 = vector.shape_cast %335 : vector<1x32x128xf32> to vector<32x128xf32>
    %c1_141 = arith.constant 1 : index
    %c0_142 = arith.constant 0 : index
    %c0_143 = arith.constant 0 : index
    %337 = vector.load %arg5[%c1_141, %c0_142, %c0_143] : memref<2x32x32xf32, #tpu.memory_space<vmem>>, vector<1x32x32xf32>
    %338 = vector.shape_cast %337 : vector<1x32x32xf32> to vector<32x32xf32>
    %c1_144 = arith.constant 1 : index
    %c0_145 = arith.constant 0 : index
    %c0_146 = arith.constant 0 : index
    %339 = vector.load %arg6[%c1_144, %c0_145, %c0_146] : memref<2x32x64xf32, #tpu.memory_space<vmem>>, vector<1x32x64xf32>
    %340 = vector.shape_cast %339 : vector<1x32x64xf32> to vector<32x64xf32>
    %c1_147 = arith.constant 1 : index
    %c0_148 = arith.constant 0 : index
    %c0_149 = arith.constant 0 : index
    %341 = vector.load %arg7[%c1_147, %c0_148, %c0_149] : memref<2x64x32xf32, #tpu.memory_space<vmem>>, vector<1x64x32xf32>
    %342 = vector.shape_cast %341 : vector<1x64x32xf32> to vector<64x32xf32>
    %c1_150 = arith.constant 1 : index
    %c0_151 = arith.constant 0 : index
    %c0_152 = arith.constant 0 : index
    %343 = vector.load %arg8[%c1_150, %c0_151, %c0_152] : memref<2x7x64xf32, #tpu.memory_space<vmem>>, vector<1x7x64xf32>
    %344 = vector.shape_cast %343 : vector<1x7x64xf32> to vector<7x64xf32>
    %345 = vector.extract_strided_slice %344 {offsets = [0, 0], sizes = [1, 32], strides = [1, 1]} : vector<7x64xf32> to vector<1x32xf32>
    %346 = vector.extract_strided_slice %344 {offsets = [1, 0], sizes = [1, 32], strides = [1, 1]} : vector<7x64xf32> to vector<1x32xf32>
    %347 = vector.extract_strided_slice %344 {offsets = [2, 0], sizes = [1, 32], strides = [1, 1]} : vector<7x64xf32> to vector<1x32xf32>
    %348 = vector.extract_strided_slice %344 {offsets = [3, 0], sizes = [1, 64], strides = [1, 1]} : vector<7x64xf32> to vector<1x64xf32>
    %349 = vector.extract_strided_slice %344 {offsets = [4, 0], sizes = [1, 32], strides = [1, 1]} : vector<7x64xf32> to vector<1x32xf32>
    %350 = vector.extract_strided_slice %344 {offsets = [5, 0], sizes = [1, 32], strides = [1, 1]} : vector<7x64xf32> to vector<1x32xf32>
    %351 = vector.extract_strided_slice %344 {offsets = [6, 0], sizes = [1, 32], strides = [1, 1]} : vector<7x64xf32> to vector<1x32xf32>
    %c0_153 = arith.constant 0 : index
    %c0_154 = arith.constant 0 : index
    %c0_155 = arith.constant 0 : index
    %352 = vector.load %arg14[%c0_153, %c0_154, %c0_155] : memref<2x9x32xf32, #tpu.memory_space<vmem>>, vector<1x9x32xf32>
    %353 = vector.shape_cast %352 : vector<1x9x32xf32> to vector<9x32xf32>
    %cst_156 = arith.constant dense<0.000000e+00> : vector<9x128xf32>
    %354 = tpu.matmul %353, %336, %cst_156 {dimension_numbers = #tpu.dot_dimension_numbers<[1], [0], [0], [1], [0, 0, 1, 1], [], []>} : vector<9x32xf32>, vector<32x128xf32>, vector<9x128xf32> -> vector<9x128xf32>
    %355 = vector.extract_strided_slice %354 {offsets = [0, 0], sizes = [9, 32], strides = [1, 1]} : vector<9x128xf32> to vector<9x32xf32>
    %356 = vector.extract_strided_slice %354 {offsets = [0, 32], sizes = [9, 32], strides = [1, 1]} : vector<9x128xf32> to vector<9x32xf32>
    %357 = vector.extract_strided_slice %354 {offsets = [0, 64], sizes = [9, 32], strides = [1, 1]} : vector<9x128xf32> to vector<9x32xf32>
    %358 = vector.extract_strided_slice %354 {offsets = [8, 96], sizes = [1, 32], strides = [1, 1]} : vector<9x128xf32> to vector<1x32xf32>
    %359 = vector.extract_strided_slice %355 {offsets = [0, 0], sizes = [9, 8], strides = [1, 1]} : vector<9x32xf32> to vector<9x8xf32>
    %360 = vector.extract_strided_slice %356 {offsets = [0, 0], sizes = [9, 8], strides = [1, 1]} : vector<9x32xf32> to vector<9x8xf32>
    %cst_157 = arith.constant dense<0.000000e+00> : vector<9x9xf32>
    %361 = tpu.matmul %359, %360, %cst_157 {dimension_numbers = #tpu.dot_dimension_numbers<[1], [1], [0], [0], [0, 0, 1, 0], [], []>} : vector<9x8xf32>, vector<9x8xf32>, vector<9x9xf32> -> vector<9x9xf32>
    %cst_158 = arith.constant 0.353553385 : f32
    %362 = vector.broadcast %cst_158 : f32 to vector<9x9xf32>
    %363 = arith.mulf %361, %362 : vector<9x9xf32>
    %cst_159 = arith.constant dense<0xFF800000> : vector<9xf32>
    %364 = vector.multi_reduction <maximumf>, %363, %cst_159 [1] : vector<9x9xf32> to vector<9xf32>
    %365 = vector.shape_cast %364 : vector<9xf32> to vector<9x1xf32>
    %366 = vector.broadcast %365 : vector<9x1xf32> to vector<9x9xf32>
    %367 = arith.subf %363, %366 : vector<9x9xf32>
    %368 = math.exp %367 : vector<9x9xf32>
    %cst_160 = arith.constant dense<0.000000e+00> : vector<9xf32>
    %369 = vector.multi_reduction <add>, %368, %cst_160 [1] : vector<9x9xf32> to vector<9xf32>
    %370 = vector.shape_cast %369 : vector<9xf32> to vector<9x1xf32>
    %371 = vector.broadcast %370 : vector<9x1xf32> to vector<9x9xf32>
    %372 = arith.divf %368, %371 : vector<9x9xf32>
    %373 = vector.extract_strided_slice %357 {offsets = [0, 0], sizes = [9, 8], strides = [1, 1]} : vector<9x32xf32> to vector<9x8xf32>
    %cst_161 = arith.constant dense<0.000000e+00> : vector<9x8xf32>
    %374 = tpu.matmul %372, %373, %cst_161 {dimension_numbers = #tpu.dot_dimension_numbers<[1], [0], [0], [1], [0, 0, 1, 1], [], []>} : vector<9x9xf32>, vector<9x8xf32>, vector<9x8xf32> -> vector<9x8xf32>
    %c0_162 = arith.constant 0 : index
    %c0_163 = arith.constant 0 : index
    %375 = vector.load %arg15[%c0_162, %c0_163] : memref<9x32xf32, #tpu.memory_space<vmem>>, vector<9x8xf32>
    tpu.vector_store %arg15[%c0_162, %c0_163], %374 {strides = array<i32>} : memref<9x32xf32, #tpu.memory_space<vmem>>, vector<9x8xf32>,
    %376 = vector.extract_strided_slice %355 {offsets = [0, 8], sizes = [9, 8], strides = [1, 1]} : vector<9x32xf32> to vector<9x8xf32>
    %377 = vector.extract_strided_slice %356 {offsets = [0, 8], sizes = [9, 8], strides = [1, 1]} : vector<9x32xf32> to vector<9x8xf32>
    %cst_164 = arith.constant dense<0.000000e+00> : vector<9x9xf32>
    %378 = tpu.matmul %376, %377, %cst_164 {dimension_numbers = #tpu.dot_dimension_numbers<[1], [1], [0], [0], [0, 0, 1, 0], [], []>} : vector<9x8xf32>, vector<9x8xf32>, vector<9x9xf32> -> vector<9x9xf32>
    %cst_165 = arith.constant 0.353553385 : f32
    %379 = vector.broadcast %cst_165 : f32 to vector<9x9xf32>
    %380 = arith.mulf %378, %379 : vector<9x9xf32>
    %cst_166 = arith.constant dense<0xFF800000> : vector<9xf32>
    %381 = vector.multi_reduction <maximumf>, %380, %cst_166 [1] : vector<9x9xf32> to vector<9xf32>
    %382 = vector.shape_cast %381 : vector<9xf32> to vector<9x1xf32>
    %383 = vector.broadcast %382 : vector<9x1xf32> to vector<9x9xf32>
    %384 = arith.subf %380, %383 : vector<9x9xf32>
    %385 = math.exp %384 : vector<9x9xf32>
    %cst_167 = arith.constant dense<0.000000e+00> : vector<9xf32>
    %386 = vector.multi_reduction <add>, %385, %cst_167 [1] : vector<9x9xf32> to vector<9xf32>
    %387 = vector.shape_cast %386 : vector<9xf32> to vector<9x1xf32>
    %388 = vector.broadcast %387 : vector<9x1xf32> to vector<9x9xf32>
    %389 = arith.divf %385, %388 : vector<9x9xf32>
    %390 = vector.extract_strided_slice %357 {offsets = [0, 8], sizes = [9, 8], strides = [1, 1]} : vector<9x32xf32> to vector<9x8xf32>
    %cst_168 = arith.constant dense<0.000000e+00> : vector<9x8xf32>
    %391 = tpu.matmul %389, %390, %cst_168 {dimension_numbers = #tpu.dot_dimension_numbers<[1], [0], [0], [1], [0, 0, 1, 1], [], []>} : vector<9x9xf32>, vector<9x8xf32>, vector<9x8xf32> -> vector<9x8xf32>
    %c0_169 = arith.constant 0 : index
    %c8_170 = arith.constant 8 : index
    %392 = vector.load %arg15[%c0_169, %c8_170] : memref<9x32xf32, #tpu.memory_space<vmem>>, vector<9x8xf32>
    tpu.vector_store %arg15[%c0_169, %c8_170], %391 {strides = array<i32>} : memref<9x32xf32, #tpu.memory_space<vmem>>, vector<9x8xf32>,
    %393 = vector.extract_strided_slice %355 {offsets = [0, 16], sizes = [9, 8], strides = [1, 1]} : vector<9x32xf32> to vector<9x8xf32>
    %394 = vector.extract_strided_slice %356 {offsets = [0, 16], sizes = [9, 8], strides = [1, 1]} : vector<9x32xf32> to vector<9x8xf32>
    %cst_171 = arith.constant dense<0.000000e+00> : vector<9x9xf32>
    %395 = tpu.matmul %393, %394, %cst_171 {dimension_numbers = #tpu.dot_dimension_numbers<[1], [1], [0], [0], [0, 0, 1, 0], [], []>} : vector<9x8xf32>, vector<9x8xf32>, vector<9x9xf32> -> vector<9x9xf32>
    %cst_172 = arith.constant 0.353553385 : f32
    %396 = vector.broadcast %cst_172 : f32 to vector<9x9xf32>
    %397 = arith.mulf %395, %396 : vector<9x9xf32>
    %cst_173 = arith.constant dense<0xFF800000> : vector<9xf32>
    %398 = vector.multi_reduction <maximumf>, %397, %cst_173 [1] : vector<9x9xf32> to vector<9xf32>
    %399 = vector.shape_cast %398 : vector<9xf32> to vector<9x1xf32>
    %400 = vector.broadcast %399 : vector<9x1xf32> to vector<9x9xf32>
    %401 = arith.subf %397, %400 : vector<9x9xf32>
    %402 = math.exp %401 : vector<9x9xf32>
    %cst_174 = arith.constant dense<0.000000e+00> : vector<9xf32>
    %403 = vector.multi_reduction <add>, %402, %cst_174 [1] : vector<9x9xf32> to vector<9xf32>
    %404 = vector.shape_cast %403 : vector<9xf32> to vector<9x1xf32>
    %405 = vector.broadcast %404 : vector<9x1xf32> to vector<9x9xf32>
    %406 = arith.divf %402, %405 : vector<9x9xf32>
    %407 = vector.extract_strided_slice %357 {offsets = [0, 16], sizes = [9, 8], strides = [1, 1]} : vector<9x32xf32> to vector<9x8xf32>
    %cst_175 = arith.constant dense<0.000000e+00> : vector<9x8xf32>
    %408 = tpu.matmul %406, %407, %cst_175 {dimension_numbers = #tpu.dot_dimension_numbers<[1], [0], [0], [1], [0, 0, 1, 1], [], []>} : vector<9x9xf32>, vector<9x8xf32>, vector<9x8xf32> -> vector<9x8xf32>
    %c0_176 = arith.constant 0 : index
    %c16_177 = arith.constant 16 : index
    %409 = vector.load %arg15[%c0_176, %c16_177] : memref<9x32xf32, #tpu.memory_space<vmem>>, vector<9x8xf32>
    tpu.vector_store %arg15[%c0_176, %c16_177], %408 {strides = array<i32>} : memref<9x32xf32, #tpu.memory_space<vmem>>, vector<9x8xf32>,
    %410 = vector.extract_strided_slice %355 {offsets = [0, 24], sizes = [9, 8], strides = [1, 1]} : vector<9x32xf32> to vector<9x8xf32>
    %411 = vector.extract_strided_slice %356 {offsets = [0, 24], sizes = [9, 8], strides = [1, 1]} : vector<9x32xf32> to vector<9x8xf32>
    %cst_178 = arith.constant dense<0.000000e+00> : vector<9x9xf32>
    %412 = tpu.matmul %410, %411, %cst_178 {dimension_numbers = #tpu.dot_dimension_numbers<[1], [1], [0], [0], [0, 0, 1, 0], [], []>} : vector<9x8xf32>, vector<9x8xf32>, vector<9x9xf32> -> vector<9x9xf32>
    %cst_179 = arith.constant 0.353553385 : f32
    %413 = vector.broadcast %cst_179 : f32 to vector<9x9xf32>
    %414 = arith.mulf %412, %413 : vector<9x9xf32>
    %cst_180 = arith.constant dense<0xFF800000> : vector<9xf32>
    %415 = vector.multi_reduction <maximumf>, %414, %cst_180 [1] : vector<9x9xf32> to vector<9xf32>
    %416 = vector.shape_cast %415 : vector<9xf32> to vector<9x1xf32>
    %417 = vector.broadcast %416 : vector<9x1xf32> to vector<9x9xf32>
    %418 = arith.subf %414, %417 : vector<9x9xf32>
    %419 = math.exp %418 : vector<9x9xf32>
    %cst_181 = arith.constant dense<0.000000e+00> : vector<9xf32>
    %420 = vector.multi_reduction <add>, %419, %cst_181 [1] : vector<9x9xf32> to vector<9xf32>
    %421 = vector.shape_cast %420 : vector<9xf32> to vector<9x1xf32>
    %422 = vector.broadcast %421 : vector<9x1xf32> to vector<9x9xf32>
    %423 = arith.divf %419, %422 : vector<9x9xf32>
    %424 = vector.extract_strided_slice %357 {offsets = [0, 24], sizes = [9, 8], strides = [1, 1]} : vector<9x32xf32> to vector<9x8xf32>
    %cst_182 = arith.constant dense<0.000000e+00> : vector<9x8xf32>
    %425 = tpu.matmul %423, %424, %cst_182 {dimension_numbers = #tpu.dot_dimension_numbers<[1], [0], [0], [1], [0, 0, 1, 1], [], []>} : vector<9x9xf32>, vector<9x8xf32>, vector<9x8xf32> -> vector<9x8xf32>
    %c0_183 = arith.constant 0 : index
    %c24_184 = arith.constant 24 : index
    %426 = vector.load %arg15[%c0_183, %c24_184] : memref<9x32xf32, #tpu.memory_space<vmem>>, vector<9x8xf32>
    tpu.vector_store %arg15[%c0_183, %c24_184], %425 {strides = array<i32>} : memref<9x32xf32, #tpu.memory_space<vmem>>, vector<9x8xf32>,
    %c0_185 = arith.constant 0 : index
    %c0_186 = arith.constant 0 : index
    %427 = vector.load %arg15[%c0_185, %c0_186] : memref<9x32xf32, #tpu.memory_space<vmem>>, vector<9x32xf32>
    %cst_187 = arith.constant 0.000000e+00 : f32
    %428 = vector.shape_cast %31 : vector<9x1xi1> to vector<9x1xi1>
    %429 = vector.broadcast %428 : vector<9x1xi1> to vector<9x32xi1>
    %430 = vector.shape_cast %358 : vector<1x32xf32> to vector<1x32xf32>
    %431 = vector.broadcast %430 : vector<1x32xf32> to vector<9x32xf32>
    %432 = vector.broadcast %cst_187 : f32 to vector<9x32xf32>
    %433 = arith.select %429, %431, %432 : vector<9x32xi1>, vector<9x32xf32>
    %434 = arith.addf %427, %433 : vector<9x32xf32>
    %cst_188 = arith.constant dense<0.000000e+00> : vector<9x32xf32>
    %435 = tpu.matmul %434, %338, %cst_188 {dimension_numbers = #tpu.dot_dimension_numbers<[1], [0], [0], [1], [0, 0, 1, 1], [], []>} : vector<9x32xf32>, vector<32x32xf32>, vector<9x32xf32> -> vector<9x32xf32>
    %436 = vector.broadcast %345 : vector<1x32xf32> to vector<9x32xf32>
    %437 = arith.addf %435, %436 : vector<9x32xf32>
    %438 = arith.addf %353, %437 : vector<9x32xf32>
    %cst_189 = arith.constant dense<0.000000e+00> : vector<32xf32>
    %439 = vector.multi_reduction <add>, %438, %cst_189 [0] : vector<9x32xf32> to vector<32xf32>
    %440 = vector.shape_cast %439 : vector<32xf32> to vector<1x32xf32>
    %cst_190 = arith.constant 9.000000e+00 : f32
    %441 = vector.broadcast %cst_190 : f32 to vector<1x32xf32>
    %442 = arith.divf %440, %441 : vector<1x32xf32>
    %443 = vector.broadcast %442 : vector<1x32xf32> to vector<9x32xf32>
    %444 = arith.subf %438, %443 : vector<9x32xf32>
    %445 = arith.mulf %444, %444 : vector<9x32xf32>
    %cst_191 = arith.constant dense<0.000000e+00> : vector<32xf32>
    %446 = vector.multi_reduction <add>, %445, %cst_191 [0] : vector<9x32xf32> to vector<32xf32>
    %447 = vector.shape_cast %446 : vector<32xf32> to vector<1x32xf32>
    %cst_192 = arith.constant 9.000000e+00 : f32
    %448 = vector.broadcast %cst_192 : f32 to vector<1x32xf32>
    %449 = arith.divf %447, %448 : vector<1x32xf32>
    %450 = vector.broadcast %442 : vector<1x32xf32> to vector<9x32xf32>
    %451 = arith.subf %438, %450 : vector<9x32xf32>
    %cst_193 = arith.constant 9.99999974E-6 : f32
    %452 = vector.broadcast %cst_193 : f32 to vector<1x32xf32>
    %453 = arith.addf %449, %452 : vector<1x32xf32>
    %454 = math.rsqrt %453 : vector<1x32xf32>
    %455 = vector.broadcast %454 : vector<1x32xf32> to vector<9x32xf32>
    %456 = arith.mulf %451, %455 : vector<9x32xf32>
    %457 = vector.broadcast %346 : vector<1x32xf32> to vector<9x32xf32>
    %458 = arith.mulf %456, %457 : vector<9x32xf32>
    %459 = vector.broadcast %347 : vector<1x32xf32> to vector<9x32xf32>
    %460 = arith.addf %458, %459 : vector<9x32xf32>
    %cst_194 = arith.constant dense<0.000000e+00> : vector<9x64xf32>
    %461 = tpu.matmul %460, %340, %cst_194 {dimension_numbers = #tpu.dot_dimension_numbers<[1], [0], [0], [1], [0, 0, 1, 1], [], []>} : vector<9x32xf32>, vector<32x64xf32>, vector<9x64xf32> -> vector<9x64xf32>
    %462 = vector.broadcast %348 : vector<1x64xf32> to vector<9x64xf32>
    %463 = arith.addf %461, %462 : vector<9x64xf32>
    %cst_195 = arith.constant 0.000000e+00 : f32
    %464 = vector.broadcast %cst_195 : f32 to vector<9x64xf32>
    %465 = arith.maximumf %463, %464 : vector<9x64xf32>
    %cst_196 = arith.constant dense<0.000000e+00> : vector<9x32xf32>
    %466 = tpu.matmul %465, %342, %cst_196 {dimension_numbers = #tpu.dot_dimension_numbers<[1], [0], [0], [1], [0, 0, 1, 1], [], []>} : vector<9x64xf32>, vector<64x32xf32>, vector<9x32xf32> -> vector<9x32xf32>
    %467 = vector.broadcast %349 : vector<1x32xf32> to vector<9x32xf32>
    %468 = arith.addf %466, %467 : vector<9x32xf32>
    %469 = arith.addf %460, %468 : vector<9x32xf32>
    %cst_197 = arith.constant dense<0.000000e+00> : vector<32xf32>
    %470 = vector.multi_reduction <add>, %469, %cst_197 [0] : vector<9x32xf32> to vector<32xf32>
    %471 = vector.shape_cast %470 : vector<32xf32> to vector<1x32xf32>
    %cst_198 = arith.constant 9.000000e+00 : f32
    %472 = vector.broadcast %cst_198 : f32 to vector<1x32xf32>
    %473 = arith.divf %471, %472 : vector<1x32xf32>
    %474 = vector.broadcast %473 : vector<1x32xf32> to vector<9x32xf32>
    %475 = arith.subf %469, %474 : vector<9x32xf32>
    %476 = arith.mulf %475, %475 : vector<9x32xf32>
    %cst_199 = arith.constant dense<0.000000e+00> : vector<32xf32>
    %477 = vector.multi_reduction <add>, %476, %cst_199 [0] : vector<9x32xf32> to vector<32xf32>
    %478 = vector.shape_cast %477 : vector<32xf32> to vector<1x32xf32>
    %cst_200 = arith.constant 9.000000e+00 : f32
    %479 = vector.broadcast %cst_200 : f32 to vector<1x32xf32>
    %480 = arith.divf %478, %479 : vector<1x32xf32>
    %481 = vector.broadcast %473 : vector<1x32xf32> to vector<9x32xf32>
    %482 = arith.subf %469, %481 : vector<9x32xf32>
    %cst_201 = arith.constant 9.99999974E-6 : f32
    %483 = vector.broadcast %cst_201 : f32 to vector<1x32xf32>
    %484 = arith.addf %480, %483 : vector<1x32xf32>
    %485 = math.rsqrt %484 : vector<1x32xf32>
    %486 = vector.broadcast %485 : vector<1x32xf32> to vector<9x32xf32>
    %487 = arith.mulf %482, %486 : vector<9x32xf32>
    %488 = vector.broadcast %350 : vector<1x32xf32> to vector<9x32xf32>
    %489 = arith.mulf %487, %488 : vector<9x32xf32>
    %490 = vector.broadcast %351 : vector<1x32xf32> to vector<9x32xf32>
    %491 = arith.addf %489, %490 : vector<9x32xf32>
    %c0_202 = arith.constant 0 : index
    %c0_203 = arith.constant 0 : index
    %c0_204 = arith.constant 0 : index
    %492 = vector.load %arg14[%c0_202, %c0_203, %c0_204] : memref<2x9x32xf32, #tpu.memory_space<vmem>>, vector<1x9x32xf32>
    %493 = vector.shape_cast %492 : vector<1x9x32xf32> to vector<9x32xf32>
    %494 = vector.shape_cast %491 : vector<9x32xf32> to vector<1x9x32xf32>
    tpu.vector_store %arg14[%c0_202, %c0_203, %c0_204], %494 {strides = array<i32>} : memref<2x9x32xf32, #tpu.memory_space<vmem>>, vector<1x9x32xf32>,
    %c1_205 = arith.constant 1 : index
    %c0_206 = arith.constant 0 : index
    %c0_207 = arith.constant 0 : index
    %495 = vector.load %arg14[%c1_205, %c0_206, %c0_207] : memref<2x9x32xf32, #tpu.memory_space<vmem>>, vector<1x9x32xf32>
    %496 = vector.shape_cast %495 : vector<1x9x32xf32> to vector<9x32xf32>
    %cst_208 = arith.constant dense<0.000000e+00> : vector<9x128xf32>
    %497 = tpu.matmul %496, %336, %cst_208 {dimension_numbers = #tpu.dot_dimension_numbers<[1], [0], [0], [1], [0, 0, 1, 1], [], []>} : vector<9x32xf32>, vector<32x128xf32>, vector<9x128xf32> -> vector<9x128xf32>
    %498 = vector.extract_strided_slice %497 {offsets = [0, 0], sizes = [9, 32], strides = [1, 1]} : vector<9x128xf32> to vector<9x32xf32>
    %499 = vector.extract_strided_slice %497 {offsets = [0, 32], sizes = [9, 32], strides = [1, 1]} : vector<9x128xf32> to vector<9x32xf32>
    %500 = vector.extract_strided_slice %497 {offsets = [0, 64], sizes = [9, 32], strides = [1, 1]} : vector<9x128xf32> to vector<9x32xf32>
    %501 = vector.extract_strided_slice %497 {offsets = [8, 96], sizes = [1, 32], strides = [1, 1]} : vector<9x128xf32> to vector<1x32xf32>
    %502 = vector.extract_strided_slice %498 {offsets = [0, 0], sizes = [9, 8], strides = [1, 1]} : vector<9x32xf32> to vector<9x8xf32>
    %503 = vector.extract_strided_slice %499 {offsets = [0, 0], sizes = [9, 8], strides = [1, 1]} : vector<9x32xf32> to vector<9x8xf32>
    %cst_209 = arith.constant dense<0.000000e+00> : vector<9x9xf32>
    %504 = tpu.matmul %502, %503, %cst_209 {dimension_numbers = #tpu.dot_dimension_numbers<[1], [1], [0], [0], [0, 0, 1, 0], [], []>} : vector<9x8xf32>, vector<9x8xf32>, vector<9x9xf32> -> vector<9x9xf32>
    %cst_210 = arith.constant 0.353553385 : f32
    %505 = vector.broadcast %cst_210 : f32 to vector<9x9xf32>
    %506 = arith.mulf %504, %505 : vector<9x9xf32>
    %cst_211 = arith.constant dense<0xFF800000> : vector<9xf32>
    %507 = vector.multi_reduction <maximumf>, %506, %cst_211 [1] : vector<9x9xf32> to vector<9xf32>
    %508 = vector.shape_cast %507 : vector<9xf32> to vector<9x1xf32>
    %509 = vector.broadcast %508 : vector<9x1xf32> to vector<9x9xf32>
    %510 = arith.subf %506, %509 : vector<9x9xf32>
    %511 = math.exp %510 : vector<9x9xf32>
    %cst_212 = arith.constant dense<0.000000e+00> : vector<9xf32>
    %512 = vector.multi_reduction <add>, %511, %cst_212 [1] : vector<9x9xf32> to vector<9xf32>
    %513 = vector.shape_cast %512 : vector<9xf32> to vector<9x1xf32>
    %514 = vector.broadcast %513 : vector<9x1xf32> to vector<9x9xf32>
    %515 = arith.divf %511, %514 : vector<9x9xf32>
    %516 = vector.extract_strided_slice %500 {offsets = [0, 0], sizes = [9, 8], strides = [1, 1]} : vector<9x32xf32> to vector<9x8xf32>
    %cst_213 = arith.constant dense<0.000000e+00> : vector<9x8xf32>
    %517 = tpu.matmul %515, %516, %cst_213 {dimension_numbers = #tpu.dot_dimension_numbers<[1], [0], [0], [1], [0, 0, 1, 1], [], []>} : vector<9x9xf32>, vector<9x8xf32>, vector<9x8xf32> -> vector<9x8xf32>
    %c0_214 = arith.constant 0 : index
    %c0_215 = arith.constant 0 : index
    %518 = vector.load %arg15[%c0_214, %c0_215] : memref<9x32xf32, #tpu.memory_space<vmem>>, vector<9x8xf32>
    tpu.vector_store %arg15[%c0_214, %c0_215], %517 {strides = array<i32>} : memref<9x32xf32, #tpu.memory_space<vmem>>, vector<9x8xf32>,
    %519 = vector.extract_strided_slice %498 {offsets = [0, 8], sizes = [9, 8], strides = [1, 1]} : vector<9x32xf32> to vector<9x8xf32>
    %520 = vector.extract_strided_slice %499 {offsets = [0, 8], sizes = [9, 8], strides = [1, 1]} : vector<9x32xf32> to vector<9x8xf32>
    %cst_216 = arith.constant dense<0.000000e+00> : vector<9x9xf32>
    %521 = tpu.matmul %519, %520, %cst_216 {dimension_numbers = #tpu.dot_dimension_numbers<[1], [1], [0], [0], [0, 0, 1, 0], [], []>} : vector<9x8xf32>, vector<9x8xf32>, vector<9x9xf32> -> vector<9x9xf32>
    %cst_217 = arith.constant 0.353553385 : f32
    %522 = vector.broadcast %cst_217 : f32 to vector<9x9xf32>
    %523 = arith.mulf %521, %522 : vector<9x9xf32>
    %cst_218 = arith.constant dense<0xFF800000> : vector<9xf32>
    %524 = vector.multi_reduction <maximumf>, %523, %cst_218 [1] : vector<9x9xf32> to vector<9xf32>
    %525 = vector.shape_cast %524 : vector<9xf32> to vector<9x1xf32>
    %526 = vector.broadcast %525 : vector<9x1xf32> to vector<9x9xf32>
    %527 = arith.subf %523, %526 : vector<9x9xf32>
    %528 = math.exp %527 : vector<9x9xf32>
    %cst_219 = arith.constant dense<0.000000e+00> : vector<9xf32>
    %529 = vector.multi_reduction <add>, %528, %cst_219 [1] : vector<9x9xf32> to vector<9xf32>
    %530 = vector.shape_cast %529 : vector<9xf32> to vector<9x1xf32>
    %531 = vector.broadcast %530 : vector<9x1xf32> to vector<9x9xf32>
    %532 = arith.divf %528, %531 : vector<9x9xf32>
    %533 = vector.extract_strided_slice %500 {offsets = [0, 8], sizes = [9, 8], strides = [1, 1]} : vector<9x32xf32> to vector<9x8xf32>
    %cst_220 = arith.constant dense<0.000000e+00> : vector<9x8xf32>
    %534 = tpu.matmul %532, %533, %cst_220 {dimension_numbers = #tpu.dot_dimension_numbers<[1], [0], [0], [1], [0, 0, 1, 1], [], []>} : vector<9x9xf32>, vector<9x8xf32>, vector<9x8xf32> -> vector<9x8xf32>
    %c0_221 = arith.constant 0 : index
    %c8_222 = arith.constant 8 : index
    %535 = vector.load %arg15[%c0_221, %c8_222] : memref<9x32xf32, #tpu.memory_space<vmem>>, vector<9x8xf32>
    tpu.vector_store %arg15[%c0_221, %c8_222], %534 {strides = array<i32>} : memref<9x32xf32, #tpu.memory_space<vmem>>, vector<9x8xf32>,
    %536 = vector.extract_strided_slice %498 {offsets = [0, 16], sizes = [9, 8], strides = [1, 1]} : vector<9x32xf32> to vector<9x8xf32>
    %537 = vector.extract_strided_slice %499 {offsets = [0, 16], sizes = [9, 8], strides = [1, 1]} : vector<9x32xf32> to vector<9x8xf32>
    %cst_223 = arith.constant dense<0.000000e+00> : vector<9x9xf32>
    %538 = tpu.matmul %536, %537, %cst_223 {dimension_numbers = #tpu.dot_dimension_numbers<[1], [1], [0], [0], [0, 0, 1, 0], [], []>} : vector<9x8xf32>, vector<9x8xf32>, vector<9x9xf32> -> vector<9x9xf32>
    %cst_224 = arith.constant 0.353553385 : f32
    %539 = vector.broadcast %cst_224 : f32 to vector<9x9xf32>
    %540 = arith.mulf %538, %539 : vector<9x9xf32>
    %cst_225 = arith.constant dense<0xFF800000> : vector<9xf32>
    %541 = vector.multi_reduction <maximumf>, %540, %cst_225 [1] : vector<9x9xf32> to vector<9xf32>
    %542 = vector.shape_cast %541 : vector<9xf32> to vector<9x1xf32>
    %543 = vector.broadcast %542 : vector<9x1xf32> to vector<9x9xf32>
    %544 = arith.subf %540, %543 : vector<9x9xf32>
    %545 = math.exp %544 : vector<9x9xf32>
    %cst_226 = arith.constant dense<0.000000e+00> : vector<9xf32>
    %546 = vector.multi_reduction <add>, %545, %cst_226 [1] : vector<9x9xf32> to vector<9xf32>
    %547 = vector.shape_cast %546 : vector<9xf32> to vector<9x1xf32>
    %548 = vector.broadcast %547 : vector<9x1xf32> to vector<9x9xf32>
    %549 = arith.divf %545, %548 : vector<9x9xf32>
    %550 = vector.extract_strided_slice %500 {offsets = [0, 16], sizes = [9, 8], strides = [1, 1]} : vector<9x32xf32> to vector<9x8xf32>
    %cst_227 = arith.constant dense<0.000000e+00> : vector<9x8xf32>
    %551 = tpu.matmul %549, %550, %cst_227 {dimension_numbers = #tpu.dot_dimension_numbers<[1], [0], [0], [1], [0, 0, 1, 1], [], []>} : vector<9x9xf32>, vector<9x8xf32>, vector<9x8xf32> -> vector<9x8xf32>
    %c0_228 = arith.constant 0 : index
    %c16_229 = arith.constant 16 : index
    %552 = vector.load %arg15[%c0_228, %c16_229] : memref<9x32xf32, #tpu.memory_space<vmem>>, vector<9x8xf32>
    tpu.vector_store %arg15[%c0_228, %c16_229], %551 {strides = array<i32>} : memref<9x32xf32, #tpu.memory_space<vmem>>, vector<9x8xf32>,
    %553 = vector.extract_strided_slice %498 {offsets = [0, 24], sizes = [9, 8], strides = [1, 1]} : vector<9x32xf32> to vector<9x8xf32>
    %554 = vector.extract_strided_slice %499 {offsets = [0, 24], sizes = [9, 8], strides = [1, 1]} : vector<9x32xf32> to vector<9x8xf32>
    %cst_230 = arith.constant dense<0.000000e+00> : vector<9x9xf32>
    %555 = tpu.matmul %553, %554, %cst_230 {dimension_numbers = #tpu.dot_dimension_numbers<[1], [1], [0], [0], [0, 0, 1, 0], [], []>} : vector<9x8xf32>, vector<9x8xf32>, vector<9x9xf32> -> vector<9x9xf32>
    %cst_231 = arith.constant 0.353553385 : f32
    %556 = vector.broadcast %cst_231 : f32 to vector<9x9xf32>
    %557 = arith.mulf %555, %556 : vector<9x9xf32>
    %cst_232 = arith.constant dense<0xFF800000> : vector<9xf32>
    %558 = vector.multi_reduction <maximumf>, %557, %cst_232 [1] : vector<9x9xf32> to vector<9xf32>
    %559 = vector.shape_cast %558 : vector<9xf32> to vector<9x1xf32>
    %560 = vector.broadcast %559 : vector<9x1xf32> to vector<9x9xf32>
    %561 = arith.subf %557, %560 : vector<9x9xf32>
    %562 = math.exp %561 : vector<9x9xf32>
    %cst_233 = arith.constant dense<0.000000e+00> : vector<9xf32>
    %563 = vector.multi_reduction <add>, %562, %cst_233 [1] : vector<9x9xf32> to vector<9xf32>
    %564 = vector.shape_cast %563 : vector<9xf32> to vector<9x1xf32>
    %565 = vector.broadcast %564 : vector<9x1xf32> to vector<9x9xf32>
    %566 = arith.divf %562, %565 : vector<9x9xf32>
    %567 = vector.extract_strided_slice %500 {offsets = [0, 24], sizes = [9, 8], strides = [1, 1]} : vector<9x32xf32> to vector<9x8xf32>
    %cst_234 = arith.constant dense<0.000000e+00> : vector<9x8xf32>
    %568 = tpu.matmul %566, %567, %cst_234 {dimension_numbers = #tpu.dot_dimension_numbers<[1], [0], [0], [1], [0, 0, 1, 1], [], []>} : vector<9x9xf32>, vector<9x8xf32>, vector<9x8xf32> -> vector<9x8xf32>
    %c0_235 = arith.constant 0 : index
    %c24_236 = arith.constant 24 : index
    %569 = vector.load %arg15[%c0_235, %c24_236] : memref<9x32xf32, #tpu.memory_space<vmem>>, vector<9x8xf32>
    tpu.vector_store %arg15[%c0_235, %c24_236], %568 {strides = array<i32>} : memref<9x32xf32, #tpu.memory_space<vmem>>, vector<9x8xf32>,
    %c0_237 = arith.constant 0 : index
    %c0_238 = arith.constant 0 : index
    %570 = vector.load %arg15[%c0_237, %c0_238] : memref<9x32xf32, #tpu.memory_space<vmem>>, vector<9x32xf32>
    %cst_239 = arith.constant 0.000000e+00 : f32
    %571 = vector.shape_cast %31 : vector<9x1xi1> to vector<9x1xi1>
    %572 = vector.broadcast %571 : vector<9x1xi1> to vector<9x32xi1>
    %573 = vector.shape_cast %501 : vector<1x32xf32> to vector<1x32xf32>
    %574 = vector.broadcast %573 : vector<1x32xf32> to vector<9x32xf32>
    %575 = vector.broadcast %cst_239 : f32 to vector<9x32xf32>
    %576 = arith.select %572, %574, %575 : vector<9x32xi1>, vector<9x32xf32>
    %577 = arith.addf %570, %576 : vector<9x32xf32>
    %cst_240 = arith.constant dense<0.000000e+00> : vector<9x32xf32>
    %578 = tpu.matmul %577, %338, %cst_240 {dimension_numbers = #tpu.dot_dimension_numbers<[1], [0], [0], [1], [0, 0, 1, 1], [], []>} : vector<9x32xf32>, vector<32x32xf32>, vector<9x32xf32> -> vector<9x32xf32>
    %579 = vector.broadcast %345 : vector<1x32xf32> to vector<9x32xf32>
    %580 = arith.addf %578, %579 : vector<9x32xf32>
    %581 = arith.addf %496, %580 : vector<9x32xf32>
    %cst_241 = arith.constant dense<0.000000e+00> : vector<32xf32>
    %582 = vector.multi_reduction <add>, %581, %cst_241 [0] : vector<9x32xf32> to vector<32xf32>
    %583 = vector.shape_cast %582 : vector<32xf32> to vector<1x32xf32>
    %cst_242 = arith.constant 9.000000e+00 : f32
    %584 = vector.broadcast %cst_242 : f32 to vector<1x32xf32>
    %585 = arith.divf %583, %584 : vector<1x32xf32>
    %586 = vector.broadcast %585 : vector<1x32xf32> to vector<9x32xf32>
    %587 = arith.subf %581, %586 : vector<9x32xf32>
    %588 = arith.mulf %587, %587 : vector<9x32xf32>
    %cst_243 = arith.constant dense<0.000000e+00> : vector<32xf32>
    %589 = vector.multi_reduction <add>, %588, %cst_243 [0] : vector<9x32xf32> to vector<32xf32>
    %590 = vector.shape_cast %589 : vector<32xf32> to vector<1x32xf32>
    %cst_244 = arith.constant 9.000000e+00 : f32
    %591 = vector.broadcast %cst_244 : f32 to vector<1x32xf32>
    %592 = arith.divf %590, %591 : vector<1x32xf32>
    %593 = vector.broadcast %585 : vector<1x32xf32> to vector<9x32xf32>
    %594 = arith.subf %581, %593 : vector<9x32xf32>
    %cst_245 = arith.constant 9.99999974E-6 : f32
    %595 = vector.broadcast %cst_245 : f32 to vector<1x32xf32>
    %596 = arith.addf %592, %595 : vector<1x32xf32>
    %597 = math.rsqrt %596 : vector<1x32xf32>
    %598 = vector.broadcast %597 : vector<1x32xf32> to vector<9x32xf32>
    %599 = arith.mulf %594, %598 : vector<9x32xf32>
    %600 = vector.broadcast %346 : vector<1x32xf32> to vector<9x32xf32>
    %601 = arith.mulf %599, %600 : vector<9x32xf32>
    %602 = vector.broadcast %347 : vector<1x32xf32> to vector<9x32xf32>
    %603 = arith.addf %601, %602 : vector<9x32xf32>
    %cst_246 = arith.constant dense<0.000000e+00> : vector<9x64xf32>
    %604 = tpu.matmul %603, %340, %cst_246 {dimension_numbers = #tpu.dot_dimension_numbers<[1], [0], [0], [1], [0, 0, 1, 1], [], []>} : vector<9x32xf32>, vector<32x64xf32>, vector<9x64xf32> -> vector<9x64xf32>
    %605 = vector.broadcast %348 : vector<1x64xf32> to vector<9x64xf32>
    %606 = arith.addf %604, %605 : vector<9x64xf32>
    %cst_247 = arith.constant 0.000000e+00 : f32
    %607 = vector.broadcast %cst_247 : f32 to vector<9x64xf32>
    %608 = arith.maximumf %606, %607 : vector<9x64xf32>
    %cst_248 = arith.constant dense<0.000000e+00> : vector<9x32xf32>
    %609 = tpu.matmul %608, %342, %cst_248 {dimension_numbers = #tpu.dot_dimension_numbers<[1], [0], [0], [1], [0, 0, 1, 1], [], []>} : vector<9x64xf32>, vector<64x32xf32>, vector<9x32xf32> -> vector<9x32xf32>
    %610 = vector.broadcast %349 : vector<1x32xf32> to vector<9x32xf32>
    %611 = arith.addf %609, %610 : vector<9x32xf32>
    %612 = arith.addf %603, %611 : vector<9x32xf32>
    %cst_249 = arith.constant dense<0.000000e+00> : vector<32xf32>
    %613 = vector.multi_reduction <add>, %612, %cst_249 [0] : vector<9x32xf32> to vector<32xf32>
    %614 = vector.shape_cast %613 : vector<32xf32> to vector<1x32xf32>
    %cst_250 = arith.constant 9.000000e+00 : f32
    %615 = vector.broadcast %cst_250 : f32 to vector<1x32xf32>
    %616 = arith.divf %614, %615 : vector<1x32xf32>
    %617 = vector.broadcast %616 : vector<1x32xf32> to vector<9x32xf32>
    %618 = arith.subf %612, %617 : vector<9x32xf32>
    %619 = arith.mulf %618, %618 : vector<9x32xf32>
    %cst_251 = arith.constant dense<0.000000e+00> : vector<32xf32>
    %620 = vector.multi_reduction <add>, %619, %cst_251 [0] : vector<9x32xf32> to vector<32xf32>
    %621 = vector.shape_cast %620 : vector<32xf32> to vector<1x32xf32>
    %cst_252 = arith.constant 9.000000e+00 : f32
    %622 = vector.broadcast %cst_252 : f32 to vector<1x32xf32>
    %623 = arith.divf %621, %622 : vector<1x32xf32>
    %624 = vector.broadcast %616 : vector<1x32xf32> to vector<9x32xf32>
    %625 = arith.subf %612, %624 : vector<9x32xf32>
    %cst_253 = arith.constant 9.99999974E-6 : f32
    %626 = vector.broadcast %cst_253 : f32 to vector<1x32xf32>
    %627 = arith.addf %623, %626 : vector<1x32xf32>
    %628 = math.rsqrt %627 : vector<1x32xf32>
    %629 = vector.broadcast %628 : vector<1x32xf32> to vector<9x32xf32>
    %630 = arith.mulf %625, %629 : vector<9x32xf32>
    %631 = vector.broadcast %350 : vector<1x32xf32> to vector<9x32xf32>
    %632 = arith.mulf %630, %631 : vector<9x32xf32>
    %633 = vector.broadcast %351 : vector<1x32xf32> to vector<9x32xf32>
    %634 = arith.addf %632, %633 : vector<9x32xf32>
    %c1_254 = arith.constant 1 : index
    %c0_255 = arith.constant 0 : index
    %c0_256 = arith.constant 0 : index
    %635 = vector.load %arg14[%c1_254, %c0_255, %c0_256] : memref<2x9x32xf32, #tpu.memory_space<vmem>>, vector<1x9x32xf32>
    %636 = vector.shape_cast %635 : vector<1x9x32xf32> to vector<9x32xf32>
    %637 = vector.shape_cast %634 : vector<9x32xf32> to vector<1x9x32xf32>
    tpu.vector_store %arg14[%c1_254, %c0_255, %c0_256], %637 {strides = array<i32>} : memref<2x9x32xf32, #tpu.memory_space<vmem>>, vector<1x9x32xf32>,
    %c0_257 = arith.constant 0 : index
    %c0_258 = arith.constant 0 : index
    %638 = vector.load %arg2[%c0_257, %c0_258] : memref<1x32xf32, #tpu.memory_space<vmem>>, vector<1x32xf32>
    %c0_259 = arith.constant 0 : index
    %c0_260 = arith.constant 0 : index
    %639 = vector.load %arg9[%c0_259, %c0_260] : memref<33x256xf32, #tpu.memory_space<vmem>>, vector<32x256xf32>
    %cst_261 = arith.constant dense<0.000000e+00> : vector<1x256xf32>
    %640 = tpu.matmul %638, %639, %cst_261 {dimension_numbers = #tpu.dot_dimension_numbers<[1], [0], [0], [1], [0, 0, 1, 1], [], []>} : vector<1x32xf32>, vector<32x256xf32>, vector<1x256xf32> -> vector<1x256xf32>
    %c32 = arith.constant 32 : index
    %c0_262 = arith.constant 0 : index
    %641 = vector.load %arg9[%c32, %c0_262] : memref<33x256xf32, #tpu.memory_space<vmem>>, vector<1x256xf32>
    %642 = arith.addf %640, %641 : vector<1x256xf32>
    %c0_263 = arith.constant 0 : index
    %c0_264 = arith.constant 0 : index
    %643 = vector.load %arg10[%c0_263, %c0_264] : memref<257x32xf32, #tpu.memory_space<vmem>>, vector<256x32xf32>
    %cst_265 = arith.constant dense<0.000000e+00> : vector<1x32xf32>
    %644 = tpu.matmul %642, %643, %cst_265 {dimension_numbers = #tpu.dot_dimension_numbers<[1], [0], [0], [1], [0, 0, 1, 1], [], []>} : vector<1x256xf32>, vector<256x32xf32>, vector<1x32xf32> -> vector<1x32xf32>
    %c256 = arith.constant 256 : index
    %c0_266 = arith.constant 0 : index
    %645 = vector.load %arg10[%c256, %c0_266] : memref<257x32xf32, #tpu.memory_space<vmem>>, vector<1x32xf32>
    %646 = arith.addf %644, %645 : vector<1x32xf32>
    %c0_267 = arith.constant 0 : index
    %c0_268 = arith.constant 0 : index
    %c0_269 = arith.constant 0 : index
    %647 = vector.load %arg14[%c0_267, %c0_268, %c0_269] : memref<2x9x32xf32, #tpu.memory_space<vmem>>, vector<1x8x32xf32>
    %648 = vector.shape_cast %647 : vector<1x8x32xf32> to vector<8x32xf32>
    %649 = vector.broadcast %646 : vector<1x32xf32> to vector<8x32xf32>
    %650 = arith.addf %648, %649 : vector<8x32xf32>
    %c0_270 = arith.constant 0 : index
    %c0_271 = arith.constant 0 : index
    %651 = vector.load %arg11[%c0_270, %c0_271] : memref<32x64xf32, #tpu.memory_space<vmem>>, vector<32x64xf32>
    %cst_272 = arith.constant dense<0.000000e+00> : vector<8x64xf32>
    %652 = tpu.matmul %650, %651, %cst_272 {dimension_numbers = #tpu.dot_dimension_numbers<[1], [0], [0], [1], [0, 0, 1, 1], [], []>} : vector<8x32xf32>, vector<32x64xf32>, vector<8x64xf32> -> vector<8x64xf32>
    %c0_273 = arith.constant 0 : index
    %c0_274 = arith.constant 0 : index
    %c0_275 = arith.constant 0 : index
    %653 = vector.load %arg12[%c0_273, %c0_274, %c0_275] : memref<2x8x128xf32, #tpu.memory_space<vmem>>, vector<1x8x32xf32>
    %654 = vector.shape_cast %653 : vector<1x8x32xf32> to vector<8x32xf32>
    %655 = vector.shape_cast %648 : vector<8x32xf32> to vector<1x8x32xf32>
    tpu.vector_store %arg12[%c0_273, %c0_274, %c0_275], %655 {strides = array<i32>} : memref<2x8x128xf32, #tpu.memory_space<vmem>>, vector<1x8x32xf32>,
    %c0_276 = arith.constant 0 : index
    %c0_277 = arith.constant 0 : index
    %c32_278 = arith.constant 32 : index
    %656 = vector.load %arg12[%c0_276, %c0_277, %c32_278] : memref<2x8x128xf32, #tpu.memory_space<vmem>>, vector<1x8x32xf32>
    %657 = vector.shape_cast %656 : vector<1x8x32xf32> to vector<8x32xf32>
    %658 = vector.shape_cast %650 : vector<8x32xf32> to vector<1x8x32xf32>
    tpu.vector_store %arg12[%c0_276, %c0_277, %c32_278], %658 {strides = array<i32>} : memref<2x8x128xf32, #tpu.memory_space<vmem>>, vector<1x8x32xf32>,
    %c0_279 = arith.constant 0 : index
    %c0_280 = arith.constant 0 : index
    %c64 = arith.constant 64 : index
    %659 = vector.load %arg12[%c0_279, %c0_280, %c64] : memref<2x8x128xf32, #tpu.memory_space<vmem>>, vector<1x8x64xf32>
    %660 = vector.shape_cast %659 : vector<1x8x64xf32> to vector<8x64xf32>
    %661 = vector.shape_cast %652 : vector<8x64xf32> to vector<1x8x64xf32>
    tpu.vector_store %arg12[%c0_279, %c0_280, %c64], %661 {strides = array<i32>} : memref<2x8x128xf32, #tpu.memory_space<vmem>>, vector<1x8x64xf32>,
    %c1_281 = arith.constant 1 : index
    %c0_282 = arith.constant 0 : index
    %c0_283 = arith.constant 0 : index
    %662 = vector.load %arg14[%c1_281, %c0_282, %c0_283] : memref<2x9x32xf32, #tpu.memory_space<vmem>>, vector<1x8x32xf32>
    %663 = vector.shape_cast %662 : vector<1x8x32xf32> to vector<8x32xf32>
    %664 = vector.broadcast %646 : vector<1x32xf32> to vector<8x32xf32>
    %665 = arith.addf %663, %664 : vector<8x32xf32>
    %c0_284 = arith.constant 0 : index
    %c0_285 = arith.constant 0 : index
    %666 = vector.load %arg11[%c0_284, %c0_285] : memref<32x64xf32, #tpu.memory_space<vmem>>, vector<32x64xf32>
    %cst_286 = arith.constant dense<0.000000e+00> : vector<8x64xf32>
    %667 = tpu.matmul %665, %666, %cst_286 {dimension_numbers = #tpu.dot_dimension_numbers<[1], [0], [0], [1], [0, 0, 1, 1], [], []>} : vector<8x32xf32>, vector<32x64xf32>, vector<8x64xf32> -> vector<8x64xf32>
    %c1_287 = arith.constant 1 : index
    %c0_288 = arith.constant 0 : index
    %c0_289 = arith.constant 0 : index
    %668 = vector.load %arg12[%c1_287, %c0_288, %c0_289] : memref<2x8x128xf32, #tpu.memory_space<vmem>>, vector<1x8x32xf32>
    %669 = vector.shape_cast %668 : vector<1x8x32xf32> to vector<8x32xf32>
    %670 = vector.shape_cast %663 : vector<8x32xf32> to vector<1x8x32xf32>
    tpu.vector_store %arg12[%c1_287, %c0_288, %c0_289], %670 {strides = array<i32>} : memref<2x8x128xf32, #tpu.memory_space<vmem>>, vector<1x8x32xf32>,
    %c1_290 = arith.constant 1 : index
    %c0_291 = arith.constant 0 : index
    %c32_292 = arith.constant 32 : index
    %671 = vector.load %arg12[%c1_290, %c0_291, %c32_292] : memref<2x8x128xf32, #tpu.memory_space<vmem>>, vector<1x8x32xf32>
    %672 = vector.shape_cast %671 : vector<1x8x32xf32> to vector<8x32xf32>
    %673 = vector.shape_cast %665 : vector<8x32xf32> to vector<1x8x32xf32>
    tpu.vector_store %arg12[%c1_290, %c0_291, %c32_292], %673 {strides = array<i32>} : memref<2x8x128xf32, #tpu.memory_space<vmem>>, vector<1x8x32xf32>,
    %c1_293 = arith.constant 1 : index
    %c0_294 = arith.constant 0 : index
    %c64_295 = arith.constant 64 : index
    %674 = vector.load %arg12[%c1_293, %c0_294, %c64_295] : memref<2x8x128xf32, #tpu.memory_space<vmem>>, vector<1x8x64xf32>
    %675 = vector.shape_cast %674 : vector<1x8x64xf32> to vector<8x64xf32>
    %676 = vector.shape_cast %667 : vector<8x64xf32> to vector<1x8x64xf32>
    tpu.vector_store %arg12[%c1_293, %c0_294, %c64_295], %676 {strides = array<i32>} : memref<2x8x128xf32, #tpu.memory_space<vmem>>, vector<1x8x64xf32>,
    return
  }
}

</mosaic_0001>

<llo_original>
// kernel: pre_forward.1
$region0: #{pre_forward.1}
  #allocation0 [shape = 'u32[]', space=smem, size = 0x4, offset = 0x4, fixed_abs, tag = 'smem constant byte address 0x4 - core index']
  #allocation1 [shape = 'u32[144,128]{1,0:T(1,128)}', space=vmem, size = 0x12000, scoped, tag = 'internal scratch']
  #allocation2 [shape = 'f32[2,9,32]{2,1,0:T(8,128)}', space=vmem, size = 0x4000, scoped, tag = 'scratch operand']
  #allocation3 [shape = 'f32[9,32]{1,0:T(8,128)}', space=vmem, size = 0x2000, scoped, tag = 'scratch operand']
  %s0 = inlined_call_operand.vmem [shape: f32[16,4], index: 0, kind: input, shape index: {}]
  %s1 = inlined_call_operand.vmem [shape: f32[2,2], index: 1, kind: input, shape index: {}]
  %s2 = inlined_call_operand.vmem [shape: f32[1,32], index: 2, kind: input, shape index: {}]
  %s3 = inlined_call_operand.vmem [shape: f32[8,32], index: 3, kind: input, shape index: {}]
  %s4 = inlined_call_operand.vmem [shape: f32[2,32,128], index: 4, kind: input, shape index: {}]
  %s5 = inlined_call_operand.vmem [shape: f32[2,32,32], index: 5, kind: input, shape index: {}]
  %s6 = inlined_call_operand.vmem [shape: f32[2,32,64], index: 6, kind: input, shape index: {}]
  %s7 = inlined_call_operand.vmem [shape: f32[2,64,32], index: 7, kind: input, shape index: {}]
  %s8 = inlined_call_operand.vmem [shape: f32[2,7,64], index: 8, kind: input, shape index: {}]
  %s9 = inlined_call_operand.vmem [shape: f32[33,256], index: 9, kind: input, shape index: {}]
  %s10 = inlined_call_operand.vmem [shape: f32[257,32], index: 10, kind: input, shape index: {}]
  %s11 = inlined_call_operand.vmem [shape: f32[32,64], index: 11, kind: input, shape index: {}]
  %s12 = inlined_call_operand.hbm [shape: f32[2,8,128], index: 12, kind: output, shape index: {0}]
  %s13 = inlined_call_operand.hbm [shape: f32[2,32], index: 13, kind: output, shape index: {1}]
  %14 = xla_tuple %s12, %s13
  %s15 = sld [smem:[#allocation0]]
  $region66: #{pre_forward.1} parent=0
    _
  %s17 = ssub.s32 1, %s15
  %s18 = scalar_select 0, %s17, %s15
  $region1: #{pre_forward.1} parent=0
    #allocation4 [shape = 'u8[8192]{0}', space=vmem, size = 0x2000, scoped, tag = 'output window, operand 0, single buffered']
    #allocation5 [shape = 's32[1]{0}', space=sflag, size = 0x4, scoped, tag = 'scoped memory for pre_forward.1']
    #allocation6 [shape = 'u8[1024]{0}', space=vmem, size = 0x400, scoped, tag = 'output window, operand 1, single buffered']
    #allocation7 [shape = 's32[1]{0}', space=sflag, size = 0x4, scoped, tag = 'scoped memory for pre_forward.1']
    %19 = vsyncpa [#allocation5], 0
    %20 = vsyncpa [#allocation7], 0
    // Predicated region
    $region2: #{pre_forward.1} parent=1 // pred_check
      _
    $region3: #{pre_forward.1} parent=1 // pred_check_branch
      %22 = sbr.rel (0) target = $region5
    $region4: #{pre_forward.1} parent=1 // pred_region
      _
    $region5: #{pre_forward.1} parent=1 // pred_fallthru
      _
    // Predicated region
    $region6: #{pre_forward.1} parent=1 // pred_check
      _
    $region7: #{pre_forward.1} parent=1 // pred_check_branch
      %24 = sbr.rel (0) target = $region9
    $region8: #{pre_forward.1} parent=1 // pred_region
      _
    $region9: #{pre_forward.1} parent=1 // pred_fallthru
      _
    // Predicated region
    $region10: #{pre_forward.1} parent=1 // pred_check
      _
    $region11: #{pre_forward.1} parent=1 // pred_check_branch
      %26 = sbr.rel (0) target = $region13
    $region12: #{pre_forward.1} parent=1 // pred_region
      _
    $region13: #{pre_forward.1} parent=1 // pred_fallthru
      _
    // Predicated region
    $region14: #{pre_forward.1} parent=1 // pred_check
      _
    $region15: #{pre_forward.1} parent=1 // pred_check_branch
      %28 = sbr.rel (0) target = $region17
    $region16: #{pre_forward.1} parent=1 // pred_region
      _
    $region17: #{pre_forward.1} parent=1 // pred_fallthru
      _
    // Predicated region
    $region18: #{pre_forward.1} parent=1 // pred_check
      _
    $region19: #{pre_forward.1} parent=1 // pred_check_branch
      %30 = sbr.rel (0) target = $region21
    $region20: #{pre_forward.1} parent=1 // pred_region
      _
    $region21: #{pre_forward.1} parent=1 // pred_fallthru
      _
    // Predicated region
    $region22: #{pre_forward.1} parent=1 // pred_check
      _
    $region23: #{pre_forward.1} parent=1 // pred_check_branch
      %32 = sbr.rel (0) target = $region25
    $region24: #{pre_forward.1} parent=1 // pred_region
      _
    $region25: #{pre_forward.1} parent=1 // pred_fallthru
      _
    // Predicated region
    $region26: #{pre_forward.1} parent=1 // pred_check
      _
    $region27: #{pre_forward.1} parent=1 // pred_check_branch
      %34 = sbr.rel (0) target = $region29
    $region28: #{pre_forward.1} parent=1 // pred_region
      _
    $region29: #{pre_forward.1} parent=1 // pred_fallthru
      _
    // Predicated region
    $region30: #{pre_forward.1} parent=1 // pred_check
      _
    $region31: #{pre_forward.1} parent=1 // pred_check_branch
      %36 = sbr.rel (0) target = $region33
    $region32: #{pre_forward.1} parent=1 // pred_region
      _
    $region33: #{pre_forward.1} parent=1 // pred_fallthru
      _
    // Predicated region
    $region34: #{pre_forward.1} parent=1 // pred_check
      _
    $region35: #{pre_forward.1} parent=1 // pred_check_branch
      %38 = sbr.rel (0) target = $region37
    $region36: #{pre_forward.1} parent=1 // pred_region
      _
    $region37: #{pre_forward.1} parent=1 // pred_fallthru
      _
    // Predicated region
    $region38: #{pre_forward.1} parent=1 // pred_check
      _
    $region39: #{pre_forward.1} parent=1 // pred_check_branch
      %40 = sbr.rel (0) target = $region41
    $region40: #{pre_forward.1} parent=1 // pred_region
      _
    $region41: #{pre_forward.1} parent=1 // pred_fallthru
      _
    // Predicated region
    $region42: #{pre_forward.1} parent=1 // pred_check
      _
    $region43: #{pre_forward.1} parent=1 // pred_check_branch
      %42 = sbr.rel (0) target = $region45
    $region44: #{pre_forward.1} parent=1 // pred_region
      _
    $region45: #{pre_forward.1} parent=1 // pred_fallthru
      _
    // Predicated region
    $region46: #{pre_forward.1} parent=1 // pred_check
      _
    $region47: #{pre_forward.1} parent=1 // pred_check_branch
      %44 = sbr.rel (0) target = $region49
    $region48: #{pre_forward.1} parent=1 // pred_region
      _
    $region49: #{pre_forward.1} parent=1 // pred_fallthru
      _
    %v45 = vld [vmem:[%s0] sm:$0xff]
    %v46 = vld [vmem:[%s0 + $0x8] sm:$0xff]
    %v47 = vld [vmem:[%s3] sm:$0xf]
    %v48 = vld [vmem:[%s3 + $0x4] sm:$0x1]
    %v49 = vlaneseq
    %v50 = vshrl.u32 %v49, 7
    %v51 = vsub.s32 0, %v50
    %v52 = vrot.slane %v48, %v51
    %vm53 = vcmask 31744
    %v55 = vsel %vm53, %v45, 0
    %v58 = vsel %vm53, %v46, 0
    %vm60 = vcmask 1043456
    %v62 = vsel %vm60, %v47, 0
    %64 = vmatprep.subr.mxu0 0.0
    %65 = vmatpush1.msra.mxu0 %v62
    %66 = vmatprep.subr.mxu0 0.0
    %67 = vmatpush1.msra.mxu0 0.0
    %68 = vmatprep.subr.mxu0 0.0
    %69 = vmatpush1.msra.mxu0 0.0
    %70 = vmatprep.subr.mxu0 0.0
    %71 = vmatpush1.msra.mxu0 0.0
    %72 = vmatprep.subr.mxu0 0.0
    %73 = vmatpush1.msra.mxu0 0.0
    %74 = vmatprep.subr.mxu0 0.0
    %75 = vmatpush1.msra.mxu0 0.0
    %76 = vmatprep.subr.mxu0 0.0
    %77 = vmatpush1.msra.mxu0 0.0
    %78 = vmatprep.subr.mxu0 0.0
    %79 = vmatpush1.msra.mxu0 0.0
    %80 = vmatprep.subr.mxu0 0.0
    %81 = vmatpush1.msra.mxu0 0.0
    %82 = vmatprep.subr.mxu0 0.0
    %83 = vmatpush1.msra.mxu0 0.0
    %84 = vmatprep.subr.mxu0 0.0
    %85 = vmatpush1.msra.mxu0 0.0
    %86 = vmatprep.subr.mxu0 0.0
    %87 = vmatpush1.msra.mxu0 0.0
    %88 = vmatprep.subr.mxu0 0.0
    %89 = vmatpush1.msra.mxu0 0.0
    %90 = vmatprep.subr.mxu0 0.0
    %91 = vmatpush1.msra.mxu0 0.0
    %92 = vmatprep.subr.mxu0 0.0
    %93 = vmatpush1.msra.mxu0 0.0
    %94 = vmatprep.subr.mxu0 0.0
    %95 = vmatpush1.msra.mxu0 0.0
    %96 = vmatprep.subr.mxu0 0.0
    %97 = vmatpush1.msra.mxu0 0.0
    %98 = vmatprep.subr.mxu0 0.0
    %99 = vmatpush1.msra.mxu0 0.0
    %100 = vmatprep.subr.mxu0 0.0
    %101 = vmatpush1.msra.mxu0 0.0
    %102 = vmatprep.subr.mxu0 0.0
    %103 = vmatpush1.msra.mxu0 0.0
    %104 = vmatprep.subr.mxu0 0.0
    %105 = vmatpush1.msra.mxu0 0.0
    %106 = vmatprep.subr.mxu0 0.0
    %107 = vmatpush1.msra.mxu0 0.0
    %108 = vmatprep.subr.mxu0 0.0
    %109 = vmatpush1.msra.mxu0 0.0
    %110 = vmatprep.subr.mxu0 0.0
    %111 = vmatpush1.msra.mxu0 0.0
    %112 = vmatprep.subr.mxu0 0.0
    %113 = vmatpush1.msra.mxu0 0.0
    %114 = vmatprep.subr.mxu0 0.0
    %115 = vmatpush1.msra.mxu0 0.0
    %116 = vmatprep.subr.mxu0 0.0
    %117 = vmatpush1.msra.mxu0 0.0
    %118 = vmatprep.subr.mxu0 0.0
    %119 = vmatpush1.msra.mxu0 0.0
    %120 = vmatprep.subr.mxu0 0.0
    %121 = vmatpush1.msra.mxu0 0.0
    %122 = vmatprep.subr.mxu0 0.0
    %123 = vmatpush1.msra.mxu0 0.0
    %124 = vmatprep.subr.mxu0 0.0
    %125 = vmatpush1.msra.mxu0 0.0
    %126 = vmatprep.subr.mxu0 0.0
    %127 = vmatpush1.msra.mxu0 0.0
    %128 = vmatprep.mubr.f32.mxu0 0.0
    %129 = vmatmul.mubr.f32.gmra.mrb[0].mxu0 %v55
    %v130 = vpop.f32.mrb[0].mxu0
    %v131 = vadd.f32 %v52, %v130
    %v132 = vpop.f32.mrb[0].mxu0
    %133 = vmatprep.mubr.f32.mxu0 0.0
    %134 = vmatmul.mubr.f32.gmra.mrb[0].mxu0 %v58
    %v135 = vpop.f32.mrb[0].mxu0
    %v136 = vadd.f32 %v52, %v135
    %v137 = vpop.f32.mrb[0].mxu0
    %138 = vdwg.mxu0
    %v139 = vld [vmem:[%s1] sm:$0x3]
    %v140 = vld [vmem:[%s3 + $0x5] sm:$0x3]
    %v141 = vld [vmem:[%s3 + $0x7] sm:$0x1]
    %v142 = vlaneseq
    %v143 = vshrl.u32 %v142, 7
    %v144 = vsub.s32 0, %v143
    %v145 = vrot.slane %v141, %v144
    %vm146 = vcmask 15360
    %v148 = vsel %vm146, %v139, 0
    %vm150 = vcmask 1041408
    %v152 = vsel %vm150, %v140, 0
    %154 = vmatprep.subr.mxu0 0.0
    %155 = vmatpush1.msra.mxu0 %v152
    %156 = vmatprep.subr.mxu0 0.0
    %157 = vmatpush1.msra.mxu0 0.0
    %158 = vmatprep.subr.mxu0 0.0
    %159 = vmatpush1.msra.mxu0 0.0
    %160 = vmatprep.subr.mxu0 0.0
    %161 = vmatpush1.msra.mxu0 0.0
    %162 = vmatprep.subr.mxu0 0.0
    %163 = vmatpush1.msra.mxu0 0.0
    %164 = vmatprep.subr.mxu0 0.0
    %165 = vmatpush1.msra.mxu0 0.0
    %166 = vmatprep.subr.mxu0 0.0
    %167 = vmatpush1.msra.mxu0 0.0
    %168 = vmatprep.subr.mxu0 0.0
    %169 = vmatpush1.msra.mxu0 0.0
    %170 = vmatprep.subr.mxu0 0.0
    %171 = vmatpush1.msra.mxu0 0.0
    %172 = vmatprep.subr.mxu0 0.0
    %173 = vmatpush1.msra.mxu0 0.0
    %174 = vmatprep.subr.mxu0 0.0
    %175 = vmatpush1.msra.mxu0 0.0
    %176 = vmatprep.subr.mxu0 0.0
    %177 = vmatpush1.msra.mxu0 0.0
    %178 = vmatprep.subr.mxu0 0.0
    %179 = vmatpush1.msra.mxu0 0.0
    %180 = vmatprep.subr.mxu0 0.0
    %181 = vmatpush1.msra.mxu0 0.0
    %182 = vmatprep.subr.mxu0 0.0
    %183 = vmatpush1.msra.mxu0 0.0
    %184 = vmatprep.subr.mxu0 0.0
    %185 = vmatpush1.msra.mxu0 0.0
    %186 = vmatprep.subr.mxu0 0.0
    %187 = vmatpush1.msra.mxu0 0.0
    %188 = vmatprep.subr.mxu0 0.0
    %189 = vmatpush1.msra.mxu0 0.0
    %190 = vmatprep.subr.mxu0 0.0
    %191 = vmatpush1.msra.mxu0 0.0
    %192 = vmatprep.subr.mxu0 0.0
    %193 = vmatpush1.msra.mxu0 0.0
    %194 = vmatprep.subr.mxu0 0.0
    %195 = vmatpush1.msra.mxu0 0.0
    %196 = vmatprep.subr.mxu0 0.0
    %197 = vmatpush1.msra.mxu0 0.0
    %198 = vmatprep.subr.mxu0 0.0
    %199 = vmatpush1.msra.mxu0 0.0
    %200 = vmatprep.subr.mxu0 0.0
    %201 = vmatpush1.msra.mxu0 0.0
    %202 = vmatprep.subr.mxu0 0.0
    %203 = vmatpush1.msra.mxu0 0.0
    %204 = vmatprep.subr.mxu0 0.0
    %205 = vmatpush1.msra.mxu0 0.0
    %206 = vmatprep.subr.mxu0 0.0
    %207 = vmatpush1.msra.mxu0 0.0
    %208 = vmatprep.subr.mxu0 0.0
    %209 = vmatpush1.msra.mxu0 0.0
    %210 = vmatprep.subr.mxu0 0.0
    %211 = vmatpush1.msra.mxu0 0.0
    %212 = vmatprep.subr.mxu0 0.0
    %213 = vmatpush1.msra.mxu0 0.0
    %214 = vmatprep.subr.mxu0 0.0
    %215 = vmatpush1.msra.mxu0 0.0
    %216 = vmatprep.subr.mxu0 0.0
    %217 = vmatpush1.msra.mxu0 0.0
    %218 = vmatprep.mubr.f32.mxu0 0.0
    %219 = vmatmul.mubr.f32.gmra.mrb[0].mxu0 %v148
    %v220 = vpop.f32.mrb[0].mxu0
    %v221 = vadd.f32 %v145, %v220
    %v222 = vpop.f32.mrb[0].mxu0
    %223 = vdwg.mxu0
    %vm224 = vcmask 254976
    %225 = vst.msk [vmem:[#allocation6] sm:$0x3] %vm224, %v221
    %vm226 = vcmask 261120
    %227 = vst.msk [vmem:[#allocation2] sm:$0xff] %vm226, %v131
    %vm228 = vcmask 253952
    %229 = vst.msk [vmem:[#allocation2 + $0x8] sm:$0x1] %vm228, %v221
    %s230 = scalar_lea.vmem [#allocation2], 16
    %231 = vst.msk [vmem:[%s230] sm:$0xff] %vm226, %v136
    %vm232 = vcmask 254977
    %233 = vst.msk [vmem:[%s230 + $0x7] sm:$0x2] %vm232, %v221
    %v234 = vlaneseq
    %v235 = vshrl.u32 %v234, 7
    %v236 = vadd.s32 %v235, 8
    %vm237 = vcmp.lt.s32.totalorder %v235, 8
    %vm238 = vcmp.lt.s32.totalorder %v236, 8
    %v239 = vld [vmem:[%s4] sm:$0xff]
    %v240 = vld [vmem:[%s4 + $0x8] sm:$0xff]
    %v241 = vld [vmem:[%s4 + $0x10] sm:$0xff]
    %v242 = vld [vmem:[%s4 + $0x18] sm:$0xff]
    %v243 = vld [vmem:[%s5] sm:$0xff]
    %v244 = vld [vmem:[%s5 + $0x8] sm:$0xff]
    %v245 = vld [vmem:[%s5 + $0x10] sm:$0xff]
    %v246 = vld [vmem:[%s5 + $0x18] sm:$0xff]
    %v247 = vld [vmem:[%s6] sm:$0xff]
    %v248 = vld [vmem:[%s6 + $0x8] sm:$0xff]
    %v249 = vld [vmem:[%s6 + $0x10] sm:$0xff]
    %v250 = vld [vmem:[%s6 + $0x18] sm:$0xff]
    %v251 = vld [vmem:[%s7] sm:$0xff]
    %v252 = vld [vmem:[%s7 + $0x8] sm:$0xff]
    %v253 = vld [vmem:[%s7 + $0x10] sm:$0xff]
    %v254 = vld [vmem:[%s7 + $0x18] sm:$0xff]
    %v255 = vld [vmem:[%s7 + $0x20] sm:$0xff]
    %v256 = vld [vmem:[%s7 + $0x28] sm:$0xff]
    %v257 = vld [vmem:[%s7 + $0x30] sm:$0xff]
    %v258 = vld [vmem:[%s7 + $0x38] sm:$0xff]
    %v259 = vld [vmem:[%s8] sm:$0x7f]
    %v260 = vld [vmem:[#allocation2] sm:$0xff]
    %v261 = vld [vmem:[#allocation2 + $0x8] sm:$0x1]
    %v263 = vsel %vm226, %v260, 0
    %v266 = vsel %vm226, %v261, 0
    %268 = vmatprep.subr.mxu0 0.0
    %269 = vmatpush1.msra.mxu0 %v239
    %270 = vmatprep.subr.mxu0 0.0
    %271 = vmatpush1.msra.mxu0 %v240
    %272 = vmatprep.subr.mxu0 0.0
    %273 = vmatpush1.msra.mxu0 %v241
    %274 = vmatprep.subr.mxu0 0.0
    %275 = vmatpush1.msra.mxu0 %v242
    %276 = vmatprep.subr.mxu0 0.0
    %277 = vmatpush1.msra.mxu0 0.0
    %278 = vmatprep.subr.mxu0 0.0
    %279 = vmatpush1.msra.mxu0 0.0
    %280 = vmatprep.subr.mxu0 0.0
    %281 = vmatpush1.msra.mxu0 0.0
    %282 = vmatprep.subr.mxu0 0.0
    %283 = vmatpush1.msra.mxu0 0.0
    %284 = vmatprep.subr.mxu0 0.0
    %285 = vmatpush1.msra.mxu0 0.0
    %286 = vmatprep.subr.mxu0 0.0
    %287 = vmatpush1.msra.mxu0 0.0
    %288 = vmatprep.subr.mxu0 0.0
    %289 = vmatpush1.msra.mxu0 0.0
    %290 = vmatprep.subr.mxu0 0.0
    %291 = vmatpush1.msra.mxu0 0.0
    %292 = vmatprep.subr.mxu0 0.0
    %293 = vmatpush1.msra.mxu0 0.0
    %294 = vmatprep.subr.mxu0 0.0
    %295 = vmatpush1.msra.mxu0 0.0
    %296 = vmatprep.subr.mxu0 0.0
    %297 = vmatpush1.msra.mxu0 0.0
    %298 = vmatprep.subr.mxu0 0.0
    %299 = vmatpush1.msra.mxu0 0.0
    %300 = vmatprep.subr.mxu0 0.0
    %301 = vmatpush1.msra.mxu0 0.0
    %302 = vmatprep.subr.mxu0 0.0
    %303 = vmatpush1.msra.mxu0 0.0
    %304 = vmatprep.subr.mxu0 0.0
    %305 = vmatpush1.msra.mxu0 0.0
    %306 = vmatprep.subr.mxu0 0.0
    %307 = vmatpush1.msra.mxu0 0.0
    %308 = vmatprep.subr.mxu0 0.0
    %309 = vmatpush1.msra.mxu0 0.0
    %310 = vmatprep.subr.mxu0 0.0
    %311 = vmatpush1.msra.mxu0 0.0
    %312 = vmatprep.subr.mxu0 0.0
    %313 = vmatpush1.msra.mxu0 0.0
    %314 = vmatprep.subr.mxu0 0.0
    %315 = vmatpush1.msra.mxu0 0.0
    %316 = vmatprep.subr.mxu0 0.0
    %317 = vmatpush1.msra.mxu0 0.0
    %318 = vmatprep.subr.mxu0 0.0
    %319 = vmatpush1.msra.mxu0 0.0
    %320 = vmatprep.subr.mxu0 0.0
    %321 = vmatpush1.msra.mxu0 0.0
    %322 = vmatprep.subr.mxu0 0.0
    %323 = vmatpush1.msra.mxu0 0.0
    %324 = vmatprep.subr.mxu0 0.0
    %325 = vmatpush1.msra.mxu0 0.0
    %326 = vmatprep.subr.mxu0 0.0
    %327 = vmatpush1.msra.mxu0 0.0
    %328 = vmatprep.subr.mxu0 0.0
    %329 = vmatpush1.msra.mxu0 0.0
    %330 = vmatprep.subr.mxu0 0.0
    %331 = vmatpush1.msra.mxu0 0.0
    %332 = vmatprep.mubr.f32.mxu0 0.0
    %333 = vmatmul.mubr.f32.gmra.mrb[0].mxu0 %v263
    %v334 = vpop.f32.mrb[0].mxu0
    %v335 = vadd.f32 0.0, %v334
    %v336 = vpop.f32.mrb[0].mxu0
    %337 = vmatprep.mubr.f32.mxu0 0.0
    %338 = vmatmul.mubr.f32.gmra.mrb[0].mxu0 %v266
    %v339 = vpop.f32.mrb[0].mxu0
    %v340 = vadd.f32 0.0, %v339
    %v341 = vpop.f32.mrb[0].mxu0
    %342 = vdwg.mxu0
    %345 = vrot.lane.b32.xlu0 %v335, 96
    %v346 = vpop.permute.xlu0 %345
    %347 = vrot.lane.b32.xlu0 %v340, 96
    %v348 = vpop.permute.xlu0 %347
    %vm349 = vcmask 64512
    %v350 = vsel %vm349, %v335, 0
    %v352 = vsel %vm349, %v340, 0
    %v354 = vsel %vm349, %v346, 0
    %v356 = vsel %vm349, %v348, 0
    %358 = vmatprep.subr.mxu0 0.0
    %359 = vmatpush1.xpose.msra.mxu0 %v354
    %360 = vmatprep.subr.mxu0 0.0
    %361 = vmatpush1.xpose.msra.mxu0 %v356
    %362 = vmatprep.subr.mxu0 0.0
    %363 = vmatpush1.xpose.msra.mxu0 0.0
    %364 = vmatprep.subr.mxu0 0.0
    %365 = vmatpush1.xpose.msra.mxu0 0.0
    %366 = vmatprep.subr.mxu0 0.0
    %367 = vmatpush1.xpose.msra.mxu0 0.0
    %368 = vmatprep.subr.mxu0 0.0
    %369 = vmatpush1.xpose.msra.mxu0 0.0
    %370 = vmatprep.subr.mxu0 0.0
    %371 = vmatpush1.xpose.msra.mxu0 0.0
    %372 = vmatprep.subr.mxu0 0.0
    %373 = vmatpush1.xpose.msra.mxu0 0.0
    %374 = vmatprep.subr.mxu0 0.0
    %375 = vmatpush1.xpose.msra.mxu0 0.0
    %376 = vmatprep.subr.mxu0 0.0
    %377 = vmatpush1.xpose.msra.mxu0 0.0
    %378 = vmatprep.subr.mxu0 0.0
    %379 = vmatpush1.xpose.msra.mxu0 0.0
    %380 = vmatprep.subr.mxu0 0.0
    %381 = vmatpush1.xpose.msra.mxu0 0.0
    %382 = vmatprep.subr.mxu0 0.0
    %383 = vmatpush1.xpose.msra.mxu0 0.0
    %384 = vmatprep.subr.mxu0 0.0
    %385 = vmatpush1.xpose.msra.mxu0 0.0
    %386 = vmatprep.subr.mxu0 0.0
    %387 = vmatpush1.xpose.msra.mxu0 0.0
    %388 = vmatprep.subr.mxu0 0.0
    %389 = vmatpush1.xpose.msra.mxu0 0.0
    %390 = vmatprep.subr.mxu0 0.0
    %391 = vmatpush1.xpose.msra.mxu0 0.0
    %392 = vmatprep.subr.mxu0 0.0
    %393 = vmatpush1.xpose.msra.mxu0 0.0
    %394 = vmatprep.subr.mxu0 0.0
    %395 = vmatpush1.xpose.msra.mxu0 0.0
    %396 = vmatprep.subr.mxu0 0.0
    %397 = vmatpush1.xpose.msra.mxu0 0.0
    %398 = vmatprep.subr.mxu0 0.0
    %399 = vmatpush1.xpose.msra.mxu0 0.0
    %400 = vmatprep.subr.mxu0 0.0
    %401 = vmatpush1.xpose.msra.mxu0 0.0
    %402 = vmatprep.subr.mxu0 0.0
    %403 = vmatpush1.xpose.msra.mxu0 0.0
    %404 = vmatprep.subr.mxu0 0.0
    %405 = vmatpush1.xpose.msra.mxu0 0.0
    %406 = vmatprep.subr.mxu0 0.0
    %407 = vmatpush1.xpose.msra.mxu0 0.0
    %408 = vmatprep.subr.mxu0 0.0
    %409 = vmatpush1.xpose.msra.mxu0 0.0
    %410 = vmatprep.subr.mxu0 0.0
    %411 = vmatpush1.xpose.msra.mxu0 0.0
    %412 = vmatprep.subr.mxu0 0.0
    %413 = vmatpush1.xpose.msra.mxu0 0.0
    %414 = vmatprep.subr.mxu0 0.0
    %415 = vmatpush1.xpose.msra.mxu0 0.0
    %416 = vmatprep.subr.mxu0 0.0
    %417 = vmatpush1.xpose.msra.mxu0 0.0
    %418 = vmatprep.subr.mxu0 0.0
    %419 = vmatpush1.xpose.msra.mxu0 0.0
    %420 = vmatprep.subr.mxu0 0.0
    %421 = vmatpush1.xpose.msra.mxu0 0.0
    %422 = vmatprep.mubr.f32.mxu0 0.0
    %423 = vmatmul.mubr.f32.gmra.mrb[0].mxu0 %v350
    %v424 = vpop.f32.mrb[0].mxu0
    %v425 = vadd.f32 0.0, %v424
    %v426 = vpop.f32.mrb[0].mxu0
    %427 = vmatprep.mubr.f32.mxu0 0.0
    %428 = vmatmul.mubr.f32.gmra.mrb[0].mxu0 %v352
    %v429 = vpop.f32.mrb[0].mxu0
    %v430 = vadd.f32 0.0, %v429
    %v431 = vpop.f32.mrb[0].mxu0
    %432 = vdwg.mxu0
    %v433 = vmul.f32 %v425, 0.35355338
    %v434 = vmul.f32 %v430, 0.35355338
    %vm435 = vcmask 72704
    %v436 = vsel %vm435, %v433, -inf
    %437 = vmax.xlane.f32.xlu0 %v436
    %v438 = vpop.xlane.xlu0 %437
    %vm439 = vcmask 65536
    %v440 = vsel %vm439, %v434, -inf
    %441 = vmax.xlane.f32.xlu0 %v440
    %v442 = vpop.xlane.xlu0 %441
    %v443 = vsub.f32 %v433, %v438
    %v444 = vsub.f32 %v434, %v442
    %v445 = vmul.f32 %v443, 1.442695
    %v446 = vpow.pop %v445
    %v447 = vmul.f32 %v444, 1.442695
    %v448 = vpow.pop %v447
    %v449 = vsel %vm435, %v446, 0.0
    %450 = vadd.xlane.f32.xlu0 %v449
    %v451 = vpop.xlane.xlu0 %450
    %v452 = vsel %vm439, %v448, 0.0
    %453 = vadd.xlane.f32.xlu0 %v452
    %v454 = vpop.xlane.xlu0 %453
    %v455 = vrcp.pop %v451
    %v456 = vmul.f32 %v446, %v455
    %v457 = vrcp.pop %v454
    %v458 = vmul.f32 %v448, %v457
    %459 = vrot.lane.b32.xlu0 %v335, 64
    %v460 = vpop.permute.xlu0 %459
    %461 = vrot.lane.b32.xlu0 %v340, 64
    %v462 = vpop.permute.xlu0 %461
    %v465 = vsel %vm435, %v456, 0
    %v468 = vsel %vm435, %v458, 0
    %vm470 = vcmask 1040384
    %v471 = vsel %vm470, %v462, 0
    %473 = vmatprep.subr.mxu0 0.0
    %474 = vmatpush1.msra.mxu0 %v460
    %475 = vmatprep.subr.mxu0 0.0
    %476 = vmatpush1.msra.mxu0 %v471
    %477 = vmatprep.subr.mxu0 0.0
    %478 = vmatpush1.msra.mxu0 0.0
    %479 = vmatprep.subr.mxu0 0.0
    %480 = vmatpush1.msra.mxu0 0.0
    %481 = vmatprep.subr.mxu0 0.0
    %482 = vmatpush1.msra.mxu0 0.0
    %483 = vmatprep.subr.mxu0 0.0
    %484 = vmatpush1.msra.mxu0 0.0
    %485 = vmatprep.subr.mxu0 0.0
    %486 = vmatpush1.msra.mxu0 0.0
    %487 = vmatprep.subr.mxu0 0.0
    %488 = vmatpush1.msra.mxu0 0.0
    %489 = vmatprep.subr.mxu0 0.0
    %490 = vmatpush1.msra.mxu0 0.0
    %491 = vmatprep.subr.mxu0 0.0
    %492 = vmatpush1.msra.mxu0 0.0
    %493 = vmatprep.subr.mxu0 0.0
    %494 = vmatpush1.msra.mxu0 0.0
    %495 = vmatprep.subr.mxu0 0.0
    %496 = vmatpush1.msra.mxu0 0.0
    %497 = vmatprep.subr.mxu0 0.0
    %498 = vmatpush1.msra.mxu0 0.0
    %499 = vmatprep.subr.mxu0 0.0
    %500 = vmatpush1.msra.mxu0 0.0
    %501 = vmatprep.subr.mxu0 0.0
    %502 = vmatpush1.msra.mxu0 0.0
    %503 = vmatprep.subr.mxu0 0.0
    %504 = vmatpush1.msra.mxu0 0.0
    %505 = vmatprep.subr.mxu0 0.0
    %506 = vmatpush1.msra.mxu0 0.0
    %507 = vmatprep.subr.mxu0 0.0
    %508 = vmatpush1.msra.mxu0 0.0
    %509 = vmatprep.subr.mxu0 0.0
    %510 = vmatpush1.msra.mxu0 0.0
    %511 = vmatprep.subr.mxu0 0.0
    %512 = vmatpush1.msra.mxu0 0.0
    %513 = vmatprep.subr.mxu0 0.0
    %514 = vmatpush1.msra.mxu0 0.0
    %515 = vmatprep.subr.mxu0 0.0
    %516 = vmatpush1.msra.mxu0 0.0
    %517 = vmatprep.subr.mxu0 0.0
    %518 = vmatpush1.msra.mxu0 0.0
    %519 = vmatprep.subr.mxu0 0.0
    %520 = vmatpush1.msra.mxu0 0.0
    %521 = vmatprep.subr.mxu0 0.0
    %522 = vmatpush1.msra.mxu0 0.0
    %523 = vmatprep.subr.mxu0 0.0
    %524 = vmatpush1.msra.mxu0 0.0
    %525 = vmatprep.subr.mxu0 0.0
    %526 = vmatpush1.msra.mxu0 0.0
    %527 = vmatprep.subr.mxu0 0.0
    %528 = vmatpush1.msra.mxu0 0.0
    %529 = vmatprep.subr.mxu0 0.0
    %530 = vmatpush1.msra.mxu0 0.0
    %531 = vmatprep.subr.mxu0 0.0
    %532 = vmatpush1.msra.mxu0 0.0
    %533 = vmatprep.subr.mxu0 0.0
    %534 = vmatpush1.msra.mxu0 0.0
    %535 = vmatprep.subr.mxu0 0.0
    %536 = vmatpush1.msra.mxu0 0.0
    %537 = vmatprep.mubr.f32.mxu0 0.0
    %538 = vmatmul.mubr.f32.gmra.mrb[0].mxu0 %v465
    %v539 = vpop.f32.mrb[0].mxu0
    %v540 = vadd.f32 0.0, %v539
    %v541 = vpop.f32.mrb[0].mxu0
    %542 = vmatprep.mubr.f32.mxu0 0.0
    %543 = vmatmul.mubr.f32.gmra.mrb[0].mxu0 %v468
    %v544 = vpop.f32.mrb[0].mxu0
    %v545 = vadd.f32 0.0, %v544
    %v546 = vpop.f32.mrb[0].mxu0
    %547 = vdwg.mxu0
    %548 = vst.msk [vmem:[#allocation3] sm:$0xff] %vm349, %v540
    %vm549 = vcmask 57344
    %550 = vst.msk [vmem:[#allocation3 + $0x8] sm:$0x1] %vm549, %v545
    %551 = vrot.lane.b32.xlu0 %v335, 120
    %v552 = vpop.permute.xlu0 %551
    %553 = vrot.lane.b32.xlu0 %v340, 120
    %v554 = vpop.permute.xlu0 %553
    %555 = vrot.lane.b32.xlu0 %v335, 88
    %v556 = vpop.permute.xlu0 %555
    %557 = vrot.lane.b32.xlu0 %v340, 88
    %v558 = vpop.permute.xlu0 %557
    %v559 = vsel %vm349, %v552, 0
    %v561 = vsel %vm349, %v554, 0
    %v563 = vsel %vm349, %v556, 0
    %v565 = vsel %vm349, %v558, 0
    %567 = vmatprep.subr.mxu0 0.0
    %568 = vmatpush1.xpose.msra.mxu0 %v563
    %569 = vmatprep.subr.mxu0 0.0
    %570 = vmatpush1.xpose.msra.mxu0 %v565
    %571 = vmatprep.subr.mxu0 0.0
    %572 = vmatpush1.xpose.msra.mxu0 0.0
    %573 = vmatprep.subr.mxu0 0.0
    %574 = vmatpush1.xpose.msra.mxu0 0.0
    %575 = vmatprep.subr.mxu0 0.0
    %576 = vmatpush1.xpose.msra.mxu0 0.0
    %577 = vmatprep.subr.mxu0 0.0
    %578 = vmatpush1.xpose.msra.mxu0 0.0
    %579 = vmatprep.subr.mxu0 0.0
    %580 = vmatpush1.xpose.msra.mxu0 0.0
    %581 = vmatprep.subr.mxu0 0.0
    %582 = vmatpush1.xpose.msra.mxu0 0.0
    %583 = vmatprep.subr.mxu0 0.0
    %584 = vmatpush1.xpose.msra.mxu0 0.0
    %585 = vmatprep.subr.mxu0 0.0
    %586 = vmatpush1.xpose.msra.mxu0 0.0
    %587 = vmatprep.subr.mxu0 0.0
    %588 = vmatpush1.xpose.msra.mxu0 0.0
    %589 = vmatprep.subr.mxu0 0.0
    %590 = vmatpush1.xpose.msra.mxu0 0.0
    %591 = vmatprep.subr.mxu0 0.0
    %592 = vmatpush1.xpose.msra.mxu0 0.0
    %593 = vmatprep.subr.mxu0 0.0
    %594 = vmatpush1.xpose.msra.mxu0 0.0
    %595 = vmatprep.subr.mxu0 0.0
    %596 = vmatpush1.xpose.msra.mxu0 0.0
    %597 = vmatprep.subr.mxu0 0.0
    %598 = vmatpush1.xpose.msra.mxu0 0.0
    %599 = vmatprep.subr.mxu0 0.0
    %600 = vmatpush1.xpose.msra.mxu0 0.0
    %601 = vmatprep.subr.mxu0 0.0
    %602 = vmatpush1.xpose.msra.mxu0 0.0
    %603 = vmatprep.subr.mxu0 0.0
    %604 = vmatpush1.xpose.msra.mxu0 0.0
    %605 = vmatprep.subr.mxu0 0.0
    %606 = vmatpush1.xpose.msra.mxu0 0.0
    %607 = vmatprep.subr.mxu0 0.0
    %608 = vmatpush1.xpose.msra.mxu0 0.0
    %609 = vmatprep.subr.mxu0 0.0
    %610 = vmatpush1.xpose.msra.mxu0 0.0
    %611 = vmatprep.subr.mxu0 0.0
    %612 = vmatpush1.xpose.msra.mxu0 0.0
    %613 = vmatprep.subr.mxu0 0.0
    %614 = vmatpush1.xpose.msra.mxu0 0.0
    %615 = vmatprep.subr.mxu0 0.0
    %616 = vmatpush1.xpose.msra.mxu0 0.0
    %617 = vmatprep.subr.mxu0 0.0
    %618 = vmatpush1.xpose.msra.mxu0 0.0
    %619 = vmatprep.subr.mxu0 0.0
    %620 = vmatpush1.xpose.msra.mxu0 0.0
    %621 = vmatprep.subr.mxu0 0.0
    %622 = vmatpush1.xpose.msra.mxu0 0.0
    %623 = vmatprep.subr.mxu0 0.0
    %624 = vmatpush1.xpose.msra.mxu0 0.0
    %625 = vmatprep.subr.mxu0 0.0
    %626 = vmatpush1.xpose.msra.mxu0 0.0
    %627 = vmatprep.subr.mxu0 0.0
    %628 = vmatpush1.xpose.msra.mxu0 0.0
    %629 = vmatprep.subr.mxu0 0.0
    %630 = vmatpush1.xpose.msra.mxu0 0.0
    %631 = vmatprep.mubr.f32.mxu0 0.0
    %632 = vmatmul.mubr.f32.gmra.mrb[0].mxu0 %v559
    %v633 = vpop.f32.mrb[0].mxu0
    %v634 = vadd.f32 0.0, %v633
    %v635 = vpop.f32.mrb[0].mxu0
    %636 = vmatprep.mubr.f32.mxu0 0.0
    %637 = vmatmul.mubr.f32.gmra.mrb[0].mxu0 %v561
    %v638 = vpop.f32.mrb[0].mxu0
    %v639 = vadd.f32 0.0, %v638
    %v640 = vpop.f32.mrb[0].mxu0
    %641 = vdwg.mxu0
    %v642 = vmul.f32 %v634, 0.35355338
    %v643 = vmul.f32 %v639, 0.35355338
    %v644 = vsel %vm435, %v642, -inf
    %645 = vmax.xlane.f32.xlu0 %v644
    %v646 = vpop.xlane.xlu0 %645
    %v647 = vsel %vm439, %v643, -inf
    %648 = vmax.xlane.f32.xlu0 %v647
    %v649 = vpop.xlane.xlu0 %648
    %v650 = vsub.f32 %v642, %v646
    %v651 = vsub.f32 %v643, %v649
    %v652 = vmul.f32 %v650, 1.442695
    %v653 = vpow.pop %v652
    %v654 = vmul.f32 %v651, 1.442695
    %v655 = vpow.pop %v654
    %v656 = vsel %vm435, %v653, 0.0
    %657 = vadd.xlane.f32.xlu0 %v656
    %v658 = vpop.xlane.xlu0 %657
    %v659 = vsel %vm439, %v655, 0.0
    %660 = vadd.xlane.f32.xlu0 %v659
    %v661 = vpop.xlane.xlu0 %660
    %v662 = vrcp.pop %v658
    %v663 = vmul.f32 %v653, %v662
    %v664 = vrcp.pop %v661
    %v665 = vmul.f32 %v655, %v664
    %666 = vrot.lane.b32.xlu0 %v335, 56
    %v667 = vpop.permute.xlu0 %666
    %668 = vrot.lane.b32.xlu0 %v340, 56
    %v669 = vpop.permute.xlu0 %668
    %v672 = vsel %vm435, %v663, 0
    %v675 = vsel %vm435, %v665, 0
    %v677 = vsel %vm470, %v669, 0
    %679 = vmatprep.subr.mxu0 0.0
    %680 = vmatpush1.msra.mxu0 %v667
    %681 = vmatprep.subr.mxu0 0.0
    %682 = vmatpush1.msra.mxu0 %v677
    %683 = vmatprep.subr.mxu0 0.0
    %684 = vmatpush1.msra.mxu0 0.0
    %685 = vmatprep.subr.mxu0 0.0
    %686 = vmatpush1.msra.mxu0 0.0
    %687 = vmatprep.subr.mxu0 0.0
    %688 = vmatpush1.msra.mxu0 0.0
    %689 = vmatprep.subr.mxu0 0.0
    %690 = vmatpush1.msra.mxu0 0.0
    %691 = vmatprep.subr.mxu0 0.0
    %692 = vmatpush1.msra.mxu0 0.0
    %693 = vmatprep.subr.mxu0 0.0
    %694 = vmatpush1.msra.mxu0 0.0
    %695 = vmatprep.subr.mxu0 0.0
    %696 = vmatpush1.msra.mxu0 0.0
    %697 = vmatprep.subr.mxu0 0.0
    %698 = vmatpush1.msra.mxu0 0.0
    %699 = vmatprep.subr.mxu0 0.0
    %700 = vmatpush1.msra.mxu0 0.0
    %701 = vmatprep.subr.mxu0 0.0
    %702 = vmatpush1.msra.mxu0 0.0
    %703 = vmatprep.subr.mxu0 0.0
    %704 = vmatpush1.msra.mxu0 0.0
    %705 = vmatprep.subr.mxu0 0.0
    %706 = vmatpush1.msra.mxu0 0.0
    %707 = vmatprep.subr.mxu0 0.0
    %708 = vmatpush1.msra.mxu0 0.0
    %709 = vmatprep.subr.mxu0 0.0
    %710 = vmatpush1.msra.mxu0 0.0
    %711 = vmatprep.subr.mxu0 0.0
    %712 = vmatpush1.msra.mxu0 0.0
    %713 = vmatprep.subr.mxu0 0.0
    %714 = vmatpush1.msra.mxu0 0.0
    %715 = vmatprep.subr.mxu0 0.0
    %716 = vmatpush1.msra.mxu0 0.0
    %717 = vmatprep.subr.mxu0 0.0
    %718 = vmatpush1.msra.mxu0 0.0
    %719 = vmatprep.subr.mxu0 0.0
    %720 = vmatpush1.msra.mxu0 0.0
    %721 = vmatprep.subr.mxu0 0.0
    %722 = vmatpush1.msra.mxu0 0.0
    %723 = vmatprep.subr.mxu0 0.0
    %724 = vmatpush1.msra.mxu0 0.0
    %725 = vmatprep.subr.mxu0 0.0
    %726 = vmatpush1.msra.mxu0 0.0
    %727 = vmatprep.subr.mxu0 0.0
    %728 = vmatpush1.msra.mxu0 0.0
    %729 = vmatprep.subr.mxu0 0.0
    %730 = vmatpush1.msra.mxu0 0.0
    %731 = vmatprep.subr.mxu0 0.0
    %732 = vmatpush1.msra.mxu0 0.0
    %733 = vmatprep.subr.mxu0 0.0
    %734 = vmatpush1.msra.mxu0 0.0
    %735 = vmatprep.subr.mxu0 0.0
    %736 = vmatpush1.msra.mxu0 0.0
    %737 = vmatprep.subr.mxu0 0.0
    %738 = vmatpush1.msra.mxu0 0.0
    %739 = vmatprep.subr.mxu0 0.0
    %740 = vmatpush1.msra.mxu0 0.0
    %741 = vmatprep.subr.mxu0 0.0
    %742 = vmatpush1.msra.mxu0 0.0
    %743 = vmatprep.mubr.f32.mxu0 0.0
    %744 = vmatmul.mubr.f32.gmra.mrb[0].mxu0 %v672
    %v745 = vpop.f32.mrb[0].mxu0
    %v746 = vadd.f32 0.0, %v745
    %v747 = vpop.f32.mrb[0].mxu0
    %748 = vmatprep.mubr.f32.mxu0 0.0
    %749 = vmatmul.mubr.f32.gmra.mrb[0].mxu0 %v675
    %v750 = vpop.f32.mrb[0].mxu0
    %v751 = vadd.f32 0.0, %v750
    %v752 = vpop.f32.mrb[0].mxu0
    %753 = vdwg.mxu0
    %756 = vrot.lane.b32.xlu0 %v746, 8
    %v757 = vpop.permute.xlu0 %756
    %758 = vrot.lane.b32.xlu0 %v751, 8
    %v759 = vpop.permute.xlu0 %758
    %vm762 = vcmask 130112
    %763 = vst.msk [vmem:[#allocation3] sm:$0xff] %vm762, %v757
    %vm764 = vcmask 122944
    %765 = vst.msk [vmem:[#allocation3 + $0x8] sm:$0x1] %vm764, %v759
    %766 = vrot.lane.b32.xlu0 %v335, 112
    %v767 = vpop.permute.xlu0 %766
    %768 = vrot.lane.b32.xlu0 %v340, 112
    %v769 = vpop.permute.xlu0 %768
    %770 = vrot.lane.b32.xlu0 %v335, 80
    %v771 = vpop.permute.xlu0 %770
    %772 = vrot.lane.b32.xlu0 %v340, 80
    %v773 = vpop.permute.xlu0 %772
    %v774 = vsel %vm349, %v767, 0
    %v776 = vsel %vm349, %v769, 0
    %v778 = vsel %vm349, %v771, 0
    %v780 = vsel %vm349, %v773, 0
    %782 = vmatprep.subr.mxu0 0.0
    %783 = vmatpush1.xpose.msra.mxu0 %v778
    %784 = vmatprep.subr.mxu0 0.0
    %785 = vmatpush1.xpose.msra.mxu0 %v780
    %786 = vmatprep.subr.mxu0 0.0
    %787 = vmatpush1.xpose.msra.mxu0 0.0
    %788 = vmatprep.subr.mxu0 0.0
    %789 = vmatpush1.xpose.msra.mxu0 0.0
    %790 = vmatprep.subr.mxu0 0.0
    %791 = vmatpush1.xpose.msra.mxu0 0.0
    %792 = vmatprep.subr.mxu0 0.0
    %793 = vmatpush1.xpose.msra.mxu0 0.0
    %794 = vmatprep.subr.mxu0 0.0
    %795 = vmatpush1.xpose.msra.mxu0 0.0
    %796 = vmatprep.subr.mxu0 0.0
    %797 = vmatpush1.xpose.msra.mxu0 0.0
    %798 = vmatprep.subr.mxu0 0.0
    %799 = vmatpush1.xpose.msra.mxu0 0.0
    %800 = vmatprep.subr.mxu0 0.0
    %801 = vmatpush1.xpose.msra.mxu0 0.0
    %802 = vmatprep.subr.mxu0 0.0
    %803 = vmatpush1.xpose.msra.mxu0 0.0
    %804 = vmatprep.subr.mxu0 0.0
    %805 = vmatpush1.xpose.msra.mxu0 0.0
    %806 = vmatprep.subr.mxu0 0.0
    %807 = vmatpush1.xpose.msra.mxu0 0.0
    %808 = vmatprep.subr.mxu0 0.0
    %809 = vmatpush1.xpose.msra.mxu0 0.0
    %810 = vmatprep.subr.mxu0 0.0
    %811 = vmatpush1.xpose.msra.mxu0 0.0
    %812 = vmatprep.subr.mxu0 0.0
    %813 = vmatpush1.xpose.msra.mxu0 0.0
    %814 = vmatprep.subr.mxu0 0.0
    %815 = vmatpush1.xpose.msra.mxu0 0.0
    %816 = vmatprep.subr.mxu0 0.0
    %817 = vmatpush1.xpose.msra.mxu0 0.0
    %818 = vmatprep.subr.mxu0 0.0
    %819 = vmatpush1.xpose.msra.mxu0 0.0
    %820 = vmatprep.subr.mxu0 0.0
    %821 = vmatpush1.xpose.msra.mxu0 0.0
    %822 = vmatprep.subr.mxu0 0.0
    %823 = vmatpush1.xpose.msra.mxu0 0.0
    %824 = vmatprep.subr.mxu0 0.0
    %825 = vmatpush1.xpose.msra.mxu0 0.0
    %826 = vmatprep.subr.mxu0 0.0
    %827 = vmatpush1.xpose.msra.mxu0 0.0
    %828 = vmatprep.subr.mxu0 0.0
    %829 = vmatpush1.xpose.msra.mxu0 0.0
    %830 = vmatprep.subr.mxu0 0.0
    %831 = vmatpush1.xpose.msra.mxu0 0.0
    %832 = vmatprep.subr.mxu0 0.0
    %833 = vmatpush1.xpose.msra.mxu0 0.0
    %834 = vmatprep.subr.mxu0 0.0
    %835 = vmatpush1.xpose.msra.mxu0 0.0
    %836 = vmatprep.subr.mxu0 0.0
    %837 = vmatpush1.xpose.msra.mxu0 0.0
    %838 = vmatprep.subr.mxu0 0.0
    %839 = vmatpush1.xpose.msra.mxu0 0.0
    %840 = vmatprep.subr.mxu0 0.0
    %841 = vmatpush1.xpose.msra.mxu0 0.0
    %842 = vmatprep.subr.mxu0 0.0
    %843 = vmatpush1.xpose.msra.mxu0 0.0
    %844 = vmatprep.subr.mxu0 0.0
    %845 = vmatpush1.xpose.msra.mxu0 0.0
    %846 = vmatprep.mubr.f32.mxu0 0.0
    %847 = vmatmul.mubr.f32.gmra.mrb[0].mxu0 %v774
    %v848 = vpop.f32.mrb[0].mxu0
    %v849 = vadd.f32 0.0, %v848
    %v850 = vpop.f32.mrb[0].mxu0
    %851 = vmatprep.mubr.f32.mxu0 0.0
    %852 = vmatmul.mubr.f32.gmra.mrb[0].mxu0 %v776
    %v853 = vpop.f32.mrb[0].mxu0
    %v854 = vadd.f32 0.0, %v853
    %v855 = vpop.f32.mrb[0].mxu0
    %856 = vdwg.mxu0
    %v857 = vmul.f32 %v849, 0.35355338
    %v858 = vmul.f32 %v854, 0.35355338
    %v859 = vsel %vm435, %v857, -inf
    %860 = vmax.xlane.f32.xlu0 %v859
    %v861 = vpop.xlane.xlu0 %860
    %v862 = vsel %vm439, %v858, -inf
    %863 = vmax.xlane.f32.xlu0 %v862
    %v864 = vpop.xlane.xlu0 %863
    %v865 = vsub.f32 %v857, %v861
    %v866 = vsub.f32 %v858, %v864
    %v867 = vmul.f32 %v865, 1.442695
    %v868 = vpow.pop %v867
    %v869 = vmul.f32 %v866, 1.442695
    %v870 = vpow.pop %v869
    %v871 = vsel %vm435, %v868, 0.0
    %872 = vadd.xlane.f32.xlu0 %v871
    %v873 = vpop.xlane.xlu0 %872
    %v874 = vsel %vm439, %v870, 0.0
    %875 = vadd.xlane.f32.xlu0 %v874
    %v876 = vpop.xlane.xlu0 %875
    %v877 = vrcp.pop %v873
    %v878 = vmul.f32 %v868, %v877
    %v879 = vrcp.pop %v876
    %v880 = vmul.f32 %v870, %v879
    %881 = vrot.lane.b32.xlu0 %v335, 48
    %v882 = vpop.permute.xlu0 %881
    %883 = vrot.lane.b32.xlu0 %v340, 48
    %v884 = vpop.permute.xlu0 %883
    %v887 = vsel %vm435, %v878, 0
    %v890 = vsel %vm435, %v880, 0
    %v892 = vsel %vm470, %v884, 0
    %894 = vmatprep.subr.mxu0 0.0
    %895 = vmatpush1.msra.mxu0 %v882
    %896 = vmatprep.subr.mxu0 0.0
    %897 = vmatpush1.msra.mxu0 %v892
    %898 = vmatprep.subr.mxu0 0.0
    %899 = vmatpush1.msra.mxu0 0.0
    %900 = vmatprep.subr.mxu0 0.0
    %901 = vmatpush1.msra.mxu0 0.0
    %902 = vmatprep.subr.mxu0 0.0
    %903 = vmatpush1.msra.mxu0 0.0
    %904 = vmatprep.subr.mxu0 0.0
    %905 = vmatpush1.msra.mxu0 0.0
    %906 = vmatprep.subr.mxu0 0.0
    %907 = vmatpush1.msra.mxu0 0.0
    %908 = vmatprep.subr.mxu0 0.0
    %909 = vmatpush1.msra.mxu0 0.0
    %910 = vmatprep.subr.mxu0 0.0
    %911 = vmatpush1.msra.mxu0 0.0
    %912 = vmatprep.subr.mxu0 0.0
    %913 = vmatpush1.msra.mxu0 0.0
    %914 = vmatprep.subr.mxu0 0.0
    %915 = vmatpush1.msra.mxu0 0.0
    %916 = vmatprep.subr.mxu0 0.0
    %917 = vmatpush1.msra.mxu0 0.0
    %918 = vmatprep.subr.mxu0 0.0
    %919 = vmatpush1.msra.mxu0 0.0
    %920 = vmatprep.subr.mxu0 0.0
    %921 = vmatpush1.msra.mxu0 0.0
    %922 = vmatprep.subr.mxu0 0.0
    %923 = vmatpush1.msra.mxu0 0.0
    %924 = vmatprep.subr.mxu0 0.0
    %925 = vmatpush1.msra.mxu0 0.0
    %926 = vmatprep.subr.mxu0 0.0
    %927 = vmatpush1.msra.mxu0 0.0
    %928 = vmatprep.subr.mxu0 0.0
    %929 = vmatpush1.msra.mxu0 0.0
    %930 = vmatprep.subr.mxu0 0.0
    %931 = vmatpush1.msra.mxu0 0.0
    %932 = vmatprep.subr.mxu0 0.0
    %933 = vmatpush1.msra.mxu0 0.0
    %934 = vmatprep.subr.mxu0 0.0
    %935 = vmatpush1.msra.mxu0 0.0
    %936 = vmatprep.subr.mxu0 0.0
    %937 = vmatpush1.msra.mxu0 0.0
    %938 = vmatprep.subr.mxu0 0.0
    %939 = vmatpush1.msra.mxu0 0.0
    %940 = vmatprep.subr.mxu0 0.0
    %941 = vmatpush1.msra.mxu0 0.0
    %942 = vmatprep.subr.mxu0 0.0
    %943 = vmatpush1.msra.mxu0 0.0
    %944 = vmatprep.subr.mxu0 0.0
    %945 = vmatpush1.msra.mxu0 0.0
    %946 = vmatprep.subr.mxu0 0.0
    %947 = vmatpush1.msra.mxu0 0.0
    %948 = vmatprep.subr.mxu0 0.0
    %949 = vmatpush1.msra.mxu0 0.0
    %950 = vmatprep.subr.mxu0 0.0
    %951 = vmatpush1.msra.mxu0 0.0
    %952 = vmatprep.subr.mxu0 0.0
    %953 = vmatpush1.msra.mxu0 0.0
    %954 = vmatprep.subr.mxu0 0.0
    %955 = vmatpush1.msra.mxu0 0.0
    %956 = vmatprep.subr.mxu0 0.0
    %957 = vmatpush1.msra.mxu0 0.0
    %958 = vmatprep.mubr.f32.mxu0 0.0
    %959 = vmatmul.mubr.f32.gmra.mrb[0].mxu0 %v887
    %v960 = vpop.f32.mrb[0].mxu0
    %v961 = vadd.f32 0.0, %v960
    %v962 = vpop.f32.mrb[0].mxu0
    %963 = vmatprep.mubr.f32.mxu0 0.0
    %964 = vmatmul.mubr.f32.gmra.mrb[0].mxu0 %v890
    %v965 = vpop.f32.mrb[0].mxu0
    %v966 = vadd.f32 0.0, %v965
    %v967 = vpop.f32.mrb[0].mxu0
    %968 = vdwg.mxu0
    %971 = vrot.lane.b32.xlu0 %v961, 16
    %v972 = vpop.permute.xlu0 %971
    %973 = vrot.lane.b32.xlu0 %v966, 16
    %v974 = vpop.permute.xlu0 %973
    %vm977 = vcmask 195712
    %978 = vst.msk [vmem:[#allocation3] sm:$0xff] %vm977, %v972
    %vm979 = vcmask 188544
    %980 = vst.msk [vmem:[#allocation3 + $0x8] sm:$0x1] %vm979, %v974
    %981 = vrot.lane.b32.xlu0 %v335, 104
    %v982 = vpop.permute.xlu0 %981
    %983 = vrot.lane.b32.xlu0 %v340, 104
    %v984 = vpop.permute.xlu0 %983
    %985 = vrot.lane.b32.xlu0 %v335, 72
    %v986 = vpop.permute.xlu0 %985
    %987 = vrot.lane.b32.xlu0 %v340, 72
    %v988 = vpop.permute.xlu0 %987
    %v989 = vsel %vm349, %v982, 0
    %v991 = vsel %vm349, %v984, 0
    %v993 = vsel %vm349, %v986, 0
    %v995 = vsel %vm349, %v988, 0
    %997 = vmatprep.subr.mxu0 0.0
    %998 = vmatpush1.xpose.msra.mxu0 %v993
    %999 = vmatprep.subr.mxu0 0.0
    %1000 = vmatpush1.xpose.msra.mxu0 %v995
    %1001 = vmatprep.subr.mxu0 0.0
    %1002 = vmatpush1.xpose.msra.mxu0 0.0
    %1003 = vmatprep.subr.mxu0 0.0
    %1004 = vmatpush1.xpose.msra.mxu0 0.0
    %1005 = vmatprep.subr.mxu0 0.0
    %1006 = vmatpush1.xpose.msra.mxu0 0.0
    %1007 = vmatprep.subr.mxu0 0.0
    %1008 = vmatpush1.xpose.msra.mxu0 0.0
    %1009 = vmatprep.subr.mxu0 0.0
    %1010 = vmatpush1.xpose.msra.mxu0 0.0
    %1011 = vmatprep.subr.mxu0 0.0
    %1012 = vmatpush1.xpose.msra.mxu0 0.0
    %1013 = vmatprep.subr.mxu0 0.0
    %1014 = vmatpush1.xpose.msra.mxu0 0.0
    %1015 = vmatprep.subr.mxu0 0.0
    %1016 = vmatpush1.xpose.msra.mxu0 0.0
    %1017 = vmatprep.subr.mxu0 0.0
    %1018 = vmatpush1.xpose.msra.mxu0 0.0
    %1019 = vmatprep.subr.mxu0 0.0
    %1020 = vmatpush1.xpose.msra.mxu0 0.0
    %1021 = vmatprep.subr.mxu0 0.0
    %1022 = vmatpush1.xpose.msra.mxu0 0.0
    %1023 = vmatprep.subr.mxu0 0.0
    %1024 = vmatpush1.xpose.msra.mxu0 0.0
    %1025 = vmatprep.subr.mxu0 0.0
    %1026 = vmatpush1.xpose.msra.mxu0 0.0
    %1027 = vmatprep.subr.mxu0 0.0
    %1028 = vmatpush1.xpose.msra.mxu0 0.0
    %1029 = vmatprep.subr.mxu0 0.0
    %1030 = vmatpush1.xpose.msra.mxu0 0.0
    %1031 = vmatprep.subr.mxu0 0.0
    %1032 = vmatpush1.xpose.msra.mxu0 0.0
    %1033 = vmatprep.subr.mxu0 0.0
    %1034 = vmatpush1.xpose.msra.mxu0 0.0
    %1035 = vmatprep.subr.mxu0 0.0
    %1036 = vmatpush1.xpose.msra.mxu0 0.0
    %1037 = vmatprep.subr.mxu0 0.0
    %1038 = vmatpush1.xpose.msra.mxu0 0.0
    %1039 = vmatprep.subr.mxu0 0.0
    %1040 = vmatpush1.xpose.msra.mxu0 0.0
    %1041 = vmatprep.subr.mxu0 0.0
    %1042 = vmatpush1.xpose.msra.mxu0 0.0
    %1043 = vmatprep.subr.mxu0 0.0
    %1044 = vmatpush1.xpose.msra.mxu0 0.0
    %1045 = vmatprep.subr.mxu0 0.0
    %1046 = vmatpush1.xpose.msra.mxu0 0.0
    %1047 = vmatprep.subr.mxu0 0.0
    %1048 = vmatpush1.xpose.msra.mxu0 0.0
    %1049 = vmatprep.subr.mxu0 0.0
    %1050 = vmatpush1.xpose.msra.mxu0 0.0
    %1051 = vmatprep.subr.mxu0 0.0
    %1052 = vmatpush1.xpose.msra.mxu0 0.0
    %1053 = vmatprep.subr.mxu0 0.0
    %1054 = vmatpush1.xpose.msra.mxu0 0.0
    %1055 = vmatprep.subr.mxu0 0.0
    %1056 = vmatpush1.xpose.msra.mxu0 0.0
    %1057 = vmatprep.subr.mxu0 0.0
    %1058 = vmatpush1.xpose.msra.mxu0 0.0
    %1059 = vmatprep.subr.mxu0 0.0
    %1060 = vmatpush1.xpose.msra.mxu0 0.0
    %1061 = vmatprep.mubr.f32.mxu0 0.0
    %1062 = vmatmul.mubr.f32.gmra.mrb[0].mxu0 %v989
    %v1063 = vpop.f32.mrb[0].mxu0
    %v1064 = vadd.f32 0.0, %v1063
    %v1065 = vpop.f32.mrb[0].mxu0
    %1066 = vmatprep.mubr.f32.mxu0 0.0
    %1067 = vmatmul.mubr.f32.gmra.mrb[0].mxu0 %v991
    %v1068 = vpop.f32.mrb[0].mxu0
    %v1069 = vadd.f32 0.0, %v1068
    %v1070 = vpop.f32.mrb[0].mxu0
    %1071 = vdwg.mxu0
    %v1072 = vmul.f32 %v1064, 0.35355338
    %v1073 = vmul.f32 %v1069, 0.35355338
    %v1074 = vsel %vm435, %v1072, -inf
    %1075 = vmax.xlane.f32.xlu0 %v1074
    %v1076 = vpop.xlane.xlu0 %1075
    %v1077 = vsel %vm439, %v1073, -inf
    %1078 = vmax.xlane.f32.xlu0 %v1077
    %v1079 = vpop.xlane.xlu0 %1078
    %v1080 = vsub.f32 %v1072, %v1076
    %v1081 = vsub.f32 %v1073, %v1079
    %v1082 = vmul.f32 %v1080, 1.442695
    %v1083 = vpow.pop %v1082
    %v1084 = vmul.f32 %v1081, 1.442695
    %v1085 = vpow.pop %v1084
    %v1086 = vsel %vm435, %v1083, 0.0
    %1087 = vadd.xlane.f32.xlu0 %v1086
    %v1088 = vpop.xlane.xlu0 %1087
    %v1089 = vsel %vm439, %v1085, 0.0
    %1090 = vadd.xlane.f32.xlu0 %v1089
    %v1091 = vpop.xlane.xlu0 %1090
    %v1092 = vrcp.pop %v1088
    %v1093 = vmul.f32 %v1083, %v1092
    %v1094 = vrcp.pop %v1091
    %v1095 = vmul.f32 %v1085, %v1094
    %1096 = vrot.lane.b32.xlu0 %v335, 40
    %v1097 = vpop.permute.xlu0 %1096
    %1098 = vrot.lane.b32.xlu0 %v340, 40
    %v1099 = vpop.permute.xlu0 %1098
    %v1102 = vsel %vm435, %v1093, 0
    %v1105 = vsel %vm435, %v1095, 0
    %v1107 = vsel %vm470, %v1099, 0
    %1109 = vmatprep.subr.mxu0 0.0
    %1110 = vmatpush1.msra.mxu0 %v1097
    %1111 = vmatprep.subr.mxu0 0.0
    %1112 = vmatpush1.msra.mxu0 %v1107
    %1113 = vmatprep.subr.mxu0 0.0
    %1114 = vmatpush1.msra.mxu0 0.0
    %1115 = vmatprep.subr.mxu0 0.0
    %1116 = vmatpush1.msra.mxu0 0.0
    %1117 = vmatprep.subr.mxu0 0.0
    %1118 = vmatpush1.msra.mxu0 0.0
    %1119 = vmatprep.subr.mxu0 0.0
    %1120 = vmatpush1.msra.mxu0 0.0
    %1121 = vmatprep.subr.mxu0 0.0
    %1122 = vmatpush1.msra.mxu0 0.0
    %1123 = vmatprep.subr.mxu0 0.0
    %1124 = vmatpush1.msra.mxu0 0.0
    %1125 = vmatprep.subr.mxu0 0.0
    %1126 = vmatpush1.msra.mxu0 0.0
    %1127 = vmatprep.subr.mxu0 0.0
    %1128 = vmatpush1.msra.mxu0 0.0
    %1129 = vmatprep.subr.mxu0 0.0
    %1130 = vmatpush1.msra.mxu0 0.0
    %1131 = vmatprep.subr.mxu0 0.0
    %1132 = vmatpush1.msra.mxu0 0.0
    %1133 = vmatprep.subr.mxu0 0.0
    %1134 = vmatpush1.msra.mxu0 0.0
    %1135 = vmatprep.subr.mxu0 0.0
    %1136 = vmatpush1.msra.mxu0 0.0
    %1137 = vmatprep.subr.mxu0 0.0
    %1138 = vmatpush1.msra.mxu0 0.0
    %1139 = vmatprep.subr.mxu0 0.0
    %1140 = vmatpush1.msra.mxu0 0.0
    %1141 = vmatprep.subr.mxu0 0.0
    %1142 = vmatpush1.msra.mxu0 0.0
    %1143 = vmatprep.subr.mxu0 0.0
    %1144 = vmatpush1.msra.mxu0 0.0
    %1145 = vmatprep.subr.mxu0 0.0
    %1146 = vmatpush1.msra.mxu0 0.0
    %1147 = vmatprep.subr.mxu0 0.0
    %1148 = vmatpush1.msra.mxu0 0.0
    %1149 = vmatprep.subr.mxu0 0.0
    %1150 = vmatpush1.msra.mxu0 0.0
    %1151 = vmatprep.subr.mxu0 0.0
    %1152 = vmatpush1.msra.mxu0 0.0
    %1153 = vmatprep.subr.mxu0 0.0
    %1154 = vmatpush1.msra.mxu0 0.0
    %1155 = vmatprep.subr.mxu0 0.0
    %1156 = vmatpush1.msra.mxu0 0.0
    %1157 = vmatprep.subr.mxu0 0.0
    %1158 = vmatpush1.msra.mxu0 0.0
    %1159 = vmatprep.subr.mxu0 0.0
    %1160 = vmatpush1.msra.mxu0 0.0
    %1161 = vmatprep.subr.mxu0 0.0
    %1162 = vmatpush1.msra.mxu0 0.0
    %1163 = vmatprep.subr.mxu0 0.0
    %1164 = vmatpush1.msra.mxu0 0.0
    %1165 = vmatprep.subr.mxu0 0.0
    %1166 = vmatpush1.msra.mxu0 0.0
    %1167 = vmatprep.subr.mxu0 0.0
    %1168 = vmatpush1.msra.mxu0 0.0
    %1169 = vmatprep.subr.mxu0 0.0
    %1170 = vmatpush1.msra.mxu0 0.0
    %1171 = vmatprep.subr.mxu0 0.0
    %1172 = vmatpush1.msra.mxu0 0.0
    %1173 = vmatprep.mubr.f32.mxu0 0.0
    %1174 = vmatmul.mubr.f32.gmra.mrb[0].mxu0 %v1102
    %v1175 = vpop.f32.mrb[0].mxu0
    %v1176 = vadd.f32 0.0, %v1175
    %v1177 = vpop.f32.mrb[0].mxu0
    %1178 = vmatprep.mubr.f32.mxu0 0.0
    %1179 = vmatmul.mubr.f32.gmra.mrb[0].mxu0 %v1105
    %v1180 = vpop.f32.mrb[0].mxu0
    %v1181 = vadd.f32 0.0, %v1180
    %v1182 = vpop.f32.mrb[0].mxu0
    %1183 = vdwg.mxu0
    %1186 = vrot.lane.b32.xlu0 %v1176, 24
    %v1187 = vpop.permute.xlu0 %1186
    %1188 = vrot.lane.b32.xlu0 %v1181, 24
    %v1189 = vpop.permute.xlu0 %1188
    %vm1192 = vcmask 261312
    %1193 = vst.msk [vmem:[#allocation3] sm:$0xff] %vm1192, %v1187
    %vm1194 = vcmask 254144
    %1195 = vst.msk [vmem:[#allocation3 + $0x8] sm:$0x1] %vm1194, %v1189
    %v1196 = vld [vmem:[#allocation3] sm:$0xff]
    %v1197 = vld [vmem:[#allocation3 + $0x8] sm:$0x1]
    %v1198 = vsel %vm237, 1, 0
    %v1199 = vsel %vm238, 1, 0
    %vm1200 = vcmp.eq.s32.totalorder %v1198, 1
    %vm1201 = vcmp.eq.s32.totalorder %v1199, 1
    %v1202 = vlaneseq
    %v1203 = vshrl.u32 %v1202, 7
    %v1204 = vsub.s32 0, %v1203
    %v1205 = vrot.slane %v340, %v1204
    %v1206 = vsel %vm1200, %v1205, 0.0
    %v1207 = vsel %vm1201, %v1205, 0.0
    %1210 = vrot.lane.b32.xlu0 %v1206, 32
    %v1211 = vpop.permute.xlu0 %1210
    %1212 = vrot.lane.b32.xlu0 %v1207, 32
    %v1213 = vpop.permute.xlu0 %1212
    %v1216 = vadd.f32 %v1196, %v1211
    %v1217 = vadd.f32 %v1197, %v1213
    %v1218 = vlaneseq
    %v1219 = vshrl.u32 %v1218, 7
    %v1220 = vsub.s32 0, %v1219
    %v1221 = vrot.slane %v259, %v1220
    %v1223 = vsel %vm226, %v1216, 0
    %v1226 = vsel %vm226, %v1217, 0
    %1228 = vmatprep.subr.mxu0 0.0
    %1229 = vmatpush1.msra.mxu0 %v243
    %1230 = vmatprep.subr.mxu0 0.0
    %1231 = vmatpush1.msra.mxu0 %v244
    %1232 = vmatprep.subr.mxu0 0.0
    %1233 = vmatpush1.msra.mxu0 %v245
    %1234 = vmatprep.subr.mxu0 0.0
    %1235 = vmatpush1.msra.mxu0 %v246
    %1236 = vmatprep.subr.mxu0 0.0
    %1237 = vmatpush1.msra.mxu0 0.0
    %1238 = vmatprep.subr.mxu0 0.0
    %1239 = vmatpush1.msra.mxu0 0.0
    %1240 = vmatprep.subr.mxu0 0.0
    %1241 = vmatpush1.msra.mxu0 0.0
    %1242 = vmatprep.subr.mxu0 0.0
    %1243 = vmatpush1.msra.mxu0 0.0
    %1244 = vmatprep.subr.mxu0 0.0
    %1245 = vmatpush1.msra.mxu0 0.0
    %1246 = vmatprep.subr.mxu0 0.0
    %1247 = vmatpush1.msra.mxu0 0.0
    %1248 = vmatprep.subr.mxu0 0.0
    %1249 = vmatpush1.msra.mxu0 0.0
    %1250 = vmatprep.subr.mxu0 0.0
    %1251 = vmatpush1.msra.mxu0 0.0
    %1252 = vmatprep.subr.mxu0 0.0
    %1253 = vmatpush1.msra.mxu0 0.0
    %1254 = vmatprep.subr.mxu0 0.0
    %1255 = vmatpush1.msra.mxu0 0.0
    %1256 = vmatprep.subr.mxu0 0.0
    %1257 = vmatpush1.msra.mxu0 0.0
    %1258 = vmatprep.subr.mxu0 0.0
    %1259 = vmatpush1.msra.mxu0 0.0
    %1260 = vmatprep.subr.mxu0 0.0
    %1261 = vmatpush1.msra.mxu0 0.0
    %1262 = vmatprep.subr.mxu0 0.0
    %1263 = vmatpush1.msra.mxu0 0.0
    %1264 = vmatprep.subr.mxu0 0.0
    %1265 = vmatpush1.msra.mxu0 0.0
    %1266 = vmatprep.subr.mxu0 0.0
    %1267 = vmatpush1.msra.mxu0 0.0
    %1268 = vmatprep.subr.mxu0 0.0
    %1269 = vmatpush1.msra.mxu0 0.0
    %1270 = vmatprep.subr.mxu0 0.0
    %1271 = vmatpush1.msra.mxu0 0.0
    %1272 = vmatprep.subr.mxu0 0.0
    %1273 = vmatpush1.msra.mxu0 0.0
    %1274 = vmatprep.subr.mxu0 0.0
    %1275 = vmatpush1.msra.mxu0 0.0
    %1276 = vmatprep.subr.mxu0 0.0
    %1277 = vmatpush1.msra.mxu0 0.0
    %1278 = vmatprep.subr.mxu0 0.0
    %1279 = vmatpush1.msra.mxu0 0.0
    %1280 = vmatprep.subr.mxu0 0.0
    %1281 = vmatpush1.msra.mxu0 0.0
    %1282 = vmatprep.subr.mxu0 0.0
    %1283 = vmatpush1.msra.mxu0 0.0
    %1284 = vmatprep.subr.mxu0 0.0
    %1285 = vmatpush1.msra.mxu0 0.0
    %1286 = vmatprep.subr.mxu0 0.0
    %1287 = vmatpush1.msra.mxu0 0.0
    %1288 = vmatprep.subr.mxu0 0.0
    %1289 = vmatpush1.msra.mxu0 0.0
    %1290 = vmatprep.subr.mxu0 0.0
    %1291 = vmatpush1.msra.mxu0 0.0
    %1292 = vmatprep.mubr.f32.mxu0 0.0
    %1293 = vmatmul.mubr.f32.gmra.mrb[0].mxu0 %v1223
    %v1294 = vpop.f32.mrb[0].mxu0
    %v1295 = vadd.f32 %v1221, %v1294
    %v1296 = vpop.f32.mrb[0].mxu0
    %1297 = vmatprep.mubr.f32.mxu0 0.0
    %1298 = vmatmul.mubr.f32.gmra.mrb[0].mxu0 %v1226
    %v1299 = vpop.f32.mrb[0].mxu0
    %v1300 = vadd.f32 %v1221, %v1299
    %v1301 = vpop.f32.mrb[0].mxu0
    %1302 = vdwg.mxu0
    %v1303 = vadd.f32 %v260, %v1295
    %v1304 = vadd.f32 %v261, %v1300
    %v1305 = vsel %vm226, %v1303, 0.0
    %v1306 = vsel %vm228, %v1304, 0.0
    %v1307 = vadd.f32 %v1305, %v1306
    %v1308 = vrot.slane %v1307, 4
    %v1309 = vadd.f32 %v1307, %v1308
    %v1310 = vrot.slane %v1309, 2
    %v1311 = vadd.f32 %v1309, %v1310
    %v1312 = vrot.slane %v1311, 1
    %v1313 = vadd.f32 %v1311, %v1312
    %v1314 = vrcp.pop 9.0
    %v1315 = vmul.f32 %v1313, %v1314
    %v1316 = vsub.f32 %v1303, %v1315
    %v1317 = vsub.f32 %v1304, %v1315
    %v1318 = vmul.f32 %v1316, %v1316
    %v1319 = vmul.f32 %v1317, %v1317
    %v1320 = vsel %vm226, %v1318, 0.0
    %v1321 = vsel %vm228, %v1319, 0.0
    %v1322 = vadd.f32 %v1320, %v1321
    %v1323 = vrot.slane %v1322, 4
    %v1324 = vadd.f32 %v1322, %v1323
    %v1325 = vrot.slane %v1324, 2
    %v1326 = vadd.f32 %v1324, %v1325
    %v1327 = vrot.slane %v1326, 1
    %v1328 = vadd.f32 %v1326, %v1327
    %v1329 = vmul.f32 %v1328, %v1314
    %v1330 = vadd.f32 %v1329, 1e-05
    %v1331 = vrsqrt.pop %v1330
    %v1332 = vmul.f32 %v1316, %v1331
    %v1333 = vmul.f32 %v1317, %v1331
    %v1334 = vlaneseq
    %v1335 = vshrl.u32 %v1334, 7
    %v1336 = vsub.s32 1, %v1335
    %v1337 = vrot.slane %v259, %v1336
    %v1338 = vmul.f32 %v1332, %v1337
    %v1339 = vmul.f32 %v1333, %v1337
    %v1340 = vlaneseq
    %v1341 = vshrl.u32 %v1340, 7
    %v1342 = vsub.s32 2, %v1341
    %v1343 = vrot.slane %v259, %v1342
    %v1344 = vadd.f32 %v1338, %v1343
    %v1345 = vadd.f32 %v1339, %v1343
    %v1346 = vlaneseq
    %v1347 = vshrl.u32 %v1346, 7
    %v1348 = vsub.s32 3, %v1347
    %v1349 = vrot.slane %v259, %v1348
    %v1351 = vsel %vm226, %v1344, 0
    %v1354 = vsel %vm226, %v1345, 0
    %1356 = vmatprep.subr.mxu0 0.0
    %1357 = vmatpush1.msra.mxu0 %v247
    %1358 = vmatprep.subr.mxu0 0.0
    %1359 = vmatpush1.msra.mxu0 %v248
    %1360 = vmatprep.subr.mxu0 0.0
    %1361 = vmatpush1.msra.mxu0 %v249
    %1362 = vmatprep.subr.mxu0 0.0
    %1363 = vmatpush1.msra.mxu0 %v250
    %1364 = vmatprep.subr.mxu0 0.0
    %1365 = vmatpush1.msra.mxu0 0.0
    %1366 = vmatprep.subr.mxu0 0.0
    %1367 = vmatpush1.msra.mxu0 0.0
    %1368 = vmatprep.subr.mxu0 0.0
    %1369 = vmatpush1.msra.mxu0 0.0
    %1370 = vmatprep.subr.mxu0 0.0
    %1371 = vmatpush1.msra.mxu0 0.0
    %1372 = vmatprep.subr.mxu0 0.0
    %1373 = vmatpush1.msra.mxu0 0.0
    %1374 = vmatprep.subr.mxu0 0.0
    %1375 = vmatpush1.msra.mxu0 0.0
    %1376 = vmatprep.subr.mxu0 0.0
    %1377 = vmatpush1.msra.mxu0 0.0
    %1378 = vmatprep.subr.mxu0 0.0
    %1379 = vmatpush1.msra.mxu0 0.0
    %1380 = vmatprep.subr.mxu0 0.0
    %1381 = vmatpush1.msra.mxu0 0.0
    %1382 = vmatprep.subr.mxu0 0.0
    %1383 = vmatpush1.msra.mxu0 0.0
    %1384 = vmatprep.subr.mxu0 0.0
    %1385 = vmatpush1.msra.mxu0 0.0
    %1386 = vmatprep.subr.mxu0 0.0
    %1387 = vmatpush1.msra.mxu0 0.0
    %1388 = vmatprep.subr.mxu0 0.0
    %1389 = vmatpush1.msra.mxu0 0.0
    %1390 = vmatprep.subr.mxu0 0.0
    %1391 = vmatpush1.msra.mxu0 0.0
    %1392 = vmatprep.subr.mxu0 0.0
    %1393 = vmatpush1.msra.mxu0 0.0
    %1394 = vmatprep.subr.mxu0 0.0
    %1395 = vmatpush1.msra.mxu0 0.0
    %1396 = vmatprep.subr.mxu0 0.0
    %1397 = vmatpush1.msra.mxu0 0.0
    %1398 = vmatprep.subr.mxu0 0.0
    %1399 = vmatpush1.msra.mxu0 0.0
    %1400 = vmatprep.subr.mxu0 0.0
    %1401 = vmatpush1.msra.mxu0 0.0
    %1402 = vmatprep.subr.mxu0 0.0
    %1403 = vmatpush1.msra.mxu0 0.0
    %1404 = vmatprep.subr.mxu0 0.0
    %1405 = vmatpush1.msra.mxu0 0.0
    %1406 = vmatprep.subr.mxu0 0.0
    %1407 = vmatpush1.msra.mxu0 0.0
    %1408 = vmatprep.subr.mxu0 0.0
    %1409 = vmatpush1.msra.mxu0 0.0
    %1410 = vmatprep.subr.mxu0 0.0
    %1411 = vmatpush1.msra.mxu0 0.0
    %1412 = vmatprep.subr.mxu0 0.0
    %1413 = vmatpush1.msra.mxu0 0.0
    %1414 = vmatprep.subr.mxu0 0.0
    %1415 = vmatpush1.msra.mxu0 0.0
    %1416 = vmatprep.subr.mxu0 0.0
    %1417 = vmatpush1.msra.mxu0 0.0
    %1418 = vmatprep.subr.mxu0 0.0
    %1419 = vmatpush1.msra.mxu0 0.0
    %1420 = vmatprep.mubr.f32.mxu0 0.0
    %1421 = vmatmul.mubr.f32.gmra.mrb[0].mxu0 %v1351
    %v1422 = vpop.f32.mrb[0].mxu0
    %v1423 = vadd.f32 %v1349, %v1422
    %v1424 = vpop.f32.mrb[0].mxu0
    %1425 = vmatprep.mubr.f32.mxu0 0.0
    %1426 = vmatmul.mubr.f32.gmra.mrb[0].mxu0 %v1354
    %v1427 = vpop.f32.mrb[0].mxu0
    %v1428 = vadd.f32 %v1349, %v1427
    %v1429 = vpop.f32.mrb[0].mxu0
    %1430 = vdwg.mxu0
    %v1431 = vmax.f32 %v1423, 0.0
    %v1432 = vmax.f32 %v1428, 0.0
    %v1433 = vlaneseq
    %v1434 = vshrl.u32 %v1433, 7
    %v1435 = vsub.s32 4, %v1434
    %v1436 = vrot.slane %v259, %v1435
    %vm1437 = vcmask 523264
    %v1439 = vsel %vm1437, %v1431, 0
    %v1442 = vsel %vm1437, %v1432, 0
    %1444 = vmatprep.subr.mxu0 0.0
    %1445 = vmatpush1.msra.mxu0 %v251
    %1446 = vmatprep.subr.mxu0 0.0
    %1447 = vmatpush1.msra.mxu0 %v252
    %1448 = vmatprep.subr.mxu0 0.0
    %1449 = vmatpush1.msra.mxu0 %v253
    %1450 = vmatprep.subr.mxu0 0.0
    %1451 = vmatpush1.msra.mxu0 %v254
    %1452 = vmatprep.subr.mxu0 0.0
    %1453 = vmatpush1.msra.mxu0 %v255
    %1454 = vmatprep.subr.mxu0 0.0
    %1455 = vmatpush1.msra.mxu0 %v256
    %1456 = vmatprep.subr.mxu0 0.0
    %1457 = vmatpush1.msra.mxu0 %v257
    %1458 = vmatprep.subr.mxu0 0.0
    %1459 = vmatpush1.msra.mxu0 %v258
    %1460 = vmatprep.subr.mxu0 0.0
    %1461 = vmatpush1.msra.mxu0 0.0
    %1462 = vmatprep.subr.mxu0 0.0
    %1463 = vmatpush1.msra.mxu0 0.0
    %1464 = vmatprep.subr.mxu0 0.0
    %1465 = vmatpush1.msra.mxu0 0.0
    %1466 = vmatprep.subr.mxu0 0.0
    %1467 = vmatpush1.msra.mxu0 0.0
    %1468 = vmatprep.subr.mxu0 0.0
    %1469 = vmatpush1.msra.mxu0 0.0
    %1470 = vmatprep.subr.mxu0 0.0
    %1471 = vmatpush1.msra.mxu0 0.0
    %1472 = vmatprep.subr.mxu0 0.0
    %1473 = vmatpush1.msra.mxu0 0.0
    %1474 = vmatprep.subr.mxu0 0.0
    %1475 = vmatpush1.msra.mxu0 0.0
    %1476 = vmatprep.subr.mxu0 0.0
    %1477 = vmatpush1.msra.mxu0 0.0
    %1478 = vmatprep.subr.mxu0 0.0
    %1479 = vmatpush1.msra.mxu0 0.0
    %1480 = vmatprep.subr.mxu0 0.0
    %1481 = vmatpush1.msra.mxu0 0.0
    %1482 = vmatprep.subr.mxu0 0.0
    %1483 = vmatpush1.msra.mxu0 0.0
    %1484 = vmatprep.subr.mxu0 0.0
    %1485 = vmatpush1.msra.mxu0 0.0
    %1486 = vmatprep.subr.mxu0 0.0
    %1487 = vmatpush1.msra.mxu0 0.0
    %1488 = vmatprep.subr.mxu0 0.0
    %1489 = vmatpush1.msra.mxu0 0.0
    %1490 = vmatprep.subr.mxu0 0.0
    %1491 = vmatpush1.msra.mxu0 0.0
    %1492 = vmatprep.subr.mxu0 0.0
    %1493 = vmatpush1.msra.mxu0 0.0
    %1494 = vmatprep.subr.mxu0 0.0
    %1495 = vmatpush1.msra.mxu0 0.0
    %1496 = vmatprep.subr.mxu0 0.0
    %1497 = vmatpush1.msra.mxu0 0.0
    %1498 = vmatprep.subr.mxu0 0.0
    %1499 = vmatpush1.msra.mxu0 0.0
    %1500 = vmatprep.subr.mxu0 0.0
    %1501 = vmatpush1.msra.mxu0 0.0
    %1502 = vmatprep.subr.mxu0 0.0
    %1503 = vmatpush1.msra.mxu0 0.0
    %1504 = vmatprep.subr.mxu0 0.0
    %1505 = vmatpush1.msra.mxu0 0.0
    %1506 = vmatprep.subr.mxu0 0.0
    %1507 = vmatpush1.msra.mxu0 0.0
    %1508 = vmatprep.mubr.f32.mxu0 0.0
    %1509 = vmatmul.mubr.f32.gmra.mrb[0].mxu0 %v1439
    %v1510 = vpop.f32.mrb[0].mxu0
    %v1511 = vadd.f32 %v1436, %v1510
    %v1512 = vpop.f32.mrb[0].mxu0
    %1513 = vmatprep.mubr.f32.mxu0 0.0
    %1514 = vmatmul.mubr.f32.gmra.mrb[0].mxu0 %v1442
    %v1515 = vpop.f32.mrb[0].mxu0
    %v1516 = vadd.f32 %v1436, %v1515
    %v1517 = vpop.f32.mrb[0].mxu0
    %1518 = vdwg.mxu0
    %v1519 = vadd.f32 %v1344, %v1511
    %v1520 = vadd.f32 %v1345, %v1516
    %v1521 = vsel %vm226, %v1519, 0.0
    %v1522 = vsel %vm228, %v1520, 0.0
    %v1523 = vadd.f32 %v1521, %v1522
    %v1524 = vrot.slane %v1523, 4
    %v1525 = vadd.f32 %v1523, %v1524
    %v1526 = vrot.slane %v1525, 2
    %v1527 = vadd.f32 %v1525, %v1526
    %v1528 = vrot.slane %v1527, 1
    %v1529 = vadd.f32 %v1527, %v1528
    %v1530 = vmul.f32 %v1529, %v1314
    %v1531 = vsub.f32 %v1519, %v1530
    %v1532 = vsub.f32 %v1520, %v1530
    %v1533 = vmul.f32 %v1531, %v1531
    %v1534 = vmul.f32 %v1532, %v1532
    %v1535 = vsel %vm226, %v1533, 0.0
    %v1536 = vsel %vm228, %v1534, 0.0
    %v1537 = vadd.f32 %v1535, %v1536
    %v1538 = vrot.slane %v1537, 4
    %v1539 = vadd.f32 %v1537, %v1538
    %v1540 = vrot.slane %v1539, 2
    %v1541 = vadd.f32 %v1539, %v1540
    %v1542 = vrot.slane %v1541, 1
    %v1543 = vadd.f32 %v1541, %v1542
    %v1544 = vmul.f32 %v1543, %v1314
    %v1545 = vadd.f32 %v1544, 1e-05
    %v1546 = vrsqrt.pop %v1545
    %v1547 = vmul.f32 %v1531, %v1546
    %v1548 = vmul.f32 %v1532, %v1546
    %v1549 = vlaneseq
    %v1550 = vshrl.u32 %v1549, 7
    %v1551 = vsub.s32 5, %v1550
    %v1552 = vrot.slane %v259, %v1551
    %v1553 = vmul.f32 %v1547, %v1552
    %v1554 = vmul.f32 %v1548, %v1552
    %v1555 = vlaneseq
    %v1556 = vshrl.u32 %v1555, 7
    %v1557 = vsub.s32 6, %v1556
    %v1558 = vrot.slane %v259, %v1557
    %v1559 = vadd.f32 %v1553, %v1558
    %v1560 = vadd.f32 %v1554, %v1558
    %1561 = vst.msk [vmem:[#allocation2] sm:$0xff] %vm226, %v1559
    %1562 = vst.msk [vmem:[#allocation2 + $0x8] sm:$0x1] %vm228, %v1560
    %v1563 = vld [vmem:[%s230] sm:$0xff]
    %v1564 = vld [vmem:[%s230 + $0x8] sm:$0x1]
    %v1566 = vsel %vm226, %v1563, 0
    %v1569 = vsel %vm226, %v1564, 0
    %1571 = vmatprep.subr.mxu0 0.0
    %1572 = vmatpush1.msra.mxu0 %v239
    %1573 = vmatprep.subr.mxu0 0.0
    %1574 = vmatpush1.msra.mxu0 %v240
    %1575 = vmatprep.subr.mxu0 0.0
    %1576 = vmatpush1.msra.mxu0 %v241
    %1577 = vmatprep.subr.mxu0 0.0
    %1578 = vmatpush1.msra.mxu0 %v242
    %1579 = vmatprep.subr.mxu0 0.0
    %1580 = vmatpush1.msra.mxu0 0.0
    %1581 = vmatprep.subr.mxu0 0.0
    %1582 = vmatpush1.msra.mxu0 0.0
    %1583 = vmatprep.subr.mxu0 0.0
    %1584 = vmatpush1.msra.mxu0 0.0
    %1585 = vmatprep.subr.mxu0 0.0
    %1586 = vmatpush1.msra.mxu0 0.0
    %1587 = vmatprep.subr.mxu0 0.0
    %1588 = vmatpush1.msra.mxu0 0.0
    %1589 = vmatprep.subr.mxu0 0.0
    %1590 = vmatpush1.msra.mxu0 0.0
    %1591 = vmatprep.subr.mxu0 0.0
    %1592 = vmatpush1.msra.mxu0 0.0
    %1593 = vmatprep.subr.mxu0 0.0
    %1594 = vmatpush1.msra.mxu0 0.0
    %1595 = vmatprep.subr.mxu0 0.0
    %1596 = vmatpush1.msra.mxu0 0.0
    %1597 = vmatprep.subr.mxu0 0.0
    %1598 = vmatpush1.msra.mxu0 0.0
    %1599 = vmatprep.subr.mxu0 0.0
    %1600 = vmatpush1.msra.mxu0 0.0
    %1601 = vmatprep.subr.mxu0 0.0
    %1602 = vmatpush1.msra.mxu0 0.0
    %1603 = vmatprep.subr.mxu0 0.0
    %1604 = vmatpush1.msra.mxu0 0.0
    %1605 = vmatprep.subr.mxu0 0.0
    %1606 = vmatpush1.msra.mxu0 0.0
    %1607 = vmatprep.subr.mxu0 0.0
    %1608 = vmatpush1.msra.mxu0 0.0
    %1609 = vmatprep.subr.mxu0 0.0
    %1610 = vmatpush1.msra.mxu0 0.0
    %1611 = vmatprep.subr.mxu0 0.0
    %1612 = vmatpush1.msra.mxu0 0.0
    %1613 = vmatprep.subr.mxu0 0.0
    %1614 = vmatpush1.msra.mxu0 0.0
    %1615 = vmatprep.subr.mxu0 0.0
    %1616 = vmatpush1.msra.mxu0 0.0
    %1617 = vmatprep.subr.mxu0 0.0
    %1618 = vmatpush1.msra.mxu0 0.0
    %1619 = vmatprep.subr.mxu0 0.0
    %1620 = vmatpush1.msra.mxu0 0.0
    %1621 = vmatprep.subr.mxu0 0.0
    %1622 = vmatpush1.msra.mxu0 0.0
    %1623 = vmatprep.subr.mxu0 0.0
    %1624 = vmatpush1.msra.mxu0 0.0
    %1625 = vmatprep.subr.mxu0 0.0
    %1626 = vmatpush1.msra.mxu0 0.0
    %1627 = vmatprep.subr.mxu0 0.0
    %1628 = vmatpush1.msra.mxu0 0.0
    %1629 = vmatprep.subr.mxu0 0.0
    %1630 = vmatpush1.msra.mxu0 0.0
    %1631 = vmatprep.subr.mxu0 0.0
    %1632 = vmatpush1.msra.mxu0 0.0
    %1633 = vmatprep.subr.mxu0 0.0
    %1634 = vmatpush1.msra.mxu0 0.0
    %1635 = vmatprep.mubr.f32.mxu0 0.0
    %1636 = vmatmul.mubr.f32.gmra.mrb[0].mxu0 %v1566
    %v1637 = vpop.f32.mrb[0].mxu0
    %v1638 = vadd.f32 0.0, %v1637
    %v1639 = vpop.f32.mrb[0].mxu0
    %1640 = vmatprep.mubr.f32.mxu0 0.0
    %1641 = vmatmul.mubr.f32.gmra.mrb[0].mxu0 %v1569
    %v1642 = vpop.f32.mrb[0].mxu0
    %v1643 = vadd.f32 0.0, %v1642
    %v1644 = vpop.f32.mrb[0].mxu0
    %1645 = vdwg.mxu0
    %1648 = vrot.lane.b32.xlu0 %v1638, 96
    %v1649 = vpop.permute.xlu0 %1648
    %1650 = vrot.lane.b32.xlu0 %v1643, 96
    %v1651 = vpop.permute.xlu0 %1650
    %v1652 = vsel %vm349, %v1638, 0
    %v1654 = vsel %vm349, %v1643, 0
    %v1656 = vsel %vm349, %v1649, 0
    %v1658 = vsel %vm349, %v1651, 0
    %1660 = vmatprep.subr.mxu0 0.0
    %1661 = vmatpush1.xpose.msra.mxu0 %v1656
    %1662 = vmatprep.subr.mxu0 0.0
    %1663 = vmatpush1.xpose.msra.mxu0 %v1658
    %1664 = vmatprep.subr.mxu0 0.0
    %1665 = vmatpush1.xpose.msra.mxu0 0.0
    %1666 = vmatprep.subr.mxu0 0.0
    %1667 = vmatpush1.xpose.msra.mxu0 0.0
    %1668 = vmatprep.subr.mxu0 0.0
    %1669 = vmatpush1.xpose.msra.mxu0 0.0
    %1670 = vmatprep.subr.mxu0 0.0
    %1671 = vmatpush1.xpose.msra.mxu0 0.0
    %1672 = vmatprep.subr.mxu0 0.0
    %1673 = vmatpush1.xpose.msra.mxu0 0.0
    %1674 = vmatprep.subr.mxu0 0.0
    %1675 = vmatpush1.xpose.msra.mxu0 0.0
    %1676 = vmatprep.subr.mxu0 0.0
    %1677 = vmatpush1.xpose.msra.mxu0 0.0
    %1678 = vmatprep.subr.mxu0 0.0
    %1679 = vmatpush1.xpose.msra.mxu0 0.0
    %1680 = vmatprep.subr.mxu0 0.0
    %1681 = vmatpush1.xpose.msra.mxu0 0.0
    %1682 = vmatprep.subr.mxu0 0.0
    %1683 = vmatpush1.xpose.msra.mxu0 0.0
    %1684 = vmatprep.subr.mxu0 0.0
    %1685 = vmatpush1.xpose.msra.mxu0 0.0
    %1686 = vmatprep.subr.mxu0 0.0
    %1687 = vmatpush1.xpose.msra.mxu0 0.0
    %1688 = vmatprep.subr.mxu0 0.0
    %1689 = vmatpush1.xpose.msra.mxu0 0.0
    %1690 = vmatprep.subr.mxu0 0.0
    %1691 = vmatpush1.xpose.msra.mxu0 0.0
    %1692 = vmatprep.subr.mxu0 0.0
    %1693 = vmatpush1.xpose.msra.mxu0 0.0
    %1694 = vmatprep.subr.mxu0 0.0
    %1695 = vmatpush1.xpose.msra.mxu0 0.0
    %1696 = vmatprep.subr.mxu0 0.0
    %1697 = vmatpush1.xpose.msra.mxu0 0.0
    %1698 = vmatprep.subr.mxu0 0.0
    %1699 = vmatpush1.xpose.msra.mxu0 0.0
    %1700 = vmatprep.subr.mxu0 0.0
    %1701 = vmatpush1.xpose.msra.mxu0 0.0
    %1702 = vmatprep.subr.mxu0 0.0
    %1703 = vmatpush1.xpose.msra.mxu0 0.0
    %1704 = vmatprep.subr.mxu0 0.0
    %1705 = vmatpush1.xpose.msra.mxu0 0.0
    %1706 = vmatprep.subr.mxu0 0.0
    %1707 = vmatpush1.xpose.msra.mxu0 0.0
    %1708 = vmatprep.subr.mxu0 0.0
    %1709 = vmatpush1.xpose.msra.mxu0 0.0
    %1710 = vmatprep.subr.mxu0 0.0
    %1711 = vmatpush1.xpose.msra.mxu0 0.0
    %1712 = vmatprep.subr.mxu0 0.0
    %1713 = vmatpush1.xpose.msra.mxu0 0.0
    %1714 = vmatprep.subr.mxu0 0.0
    %1715 = vmatpush1.xpose.msra.mxu0 0.0
    %1716 = vmatprep.subr.mxu0 0.0
    %1717 = vmatpush1.xpose.msra.mxu0 0.0
    %1718 = vmatprep.subr.mxu0 0.0
    %1719 = vmatpush1.xpose.msra.mxu0 0.0
    %1720 = vmatprep.subr.mxu0 0.0
    %1721 = vmatpush1.xpose.msra.mxu0 0.0
    %1722 = vmatprep.subr.mxu0 0.0
    %1723 = vmatpush1.xpose.msra.mxu0 0.0
    %1724 = vmatprep.mubr.f32.mxu0 0.0
    %1725 = vmatmul.mubr.f32.gmra.mrb[0].mxu0 %v1652
    %v1726 = vpop.f32.mrb[0].mxu0
    %v1727 = vadd.f32 0.0, %v1726
    %v1728 = vpop.f32.mrb[0].mxu0
    %1729 = vmatprep.mubr.f32.mxu0 0.0
    %1730 = vmatmul.mubr.f32.gmra.mrb[0].mxu0 %v1654
    %v1731 = vpop.f32.mrb[0].mxu0
    %v1732 = vadd.f32 0.0, %v1731
    %v1733 = vpop.f32.mrb[0].mxu0
    %1734 = vdwg.mxu0
    %v1735 = vmul.f32 %v1727, 0.35355338
    %v1736 = vmul.f32 %v1732, 0.35355338
    %v1737 = vsel %vm435, %v1735, -inf
    %1738 = vmax.xlane.f32.xlu0 %v1737
    %v1739 = vpop.xlane.xlu0 %1738
    %v1740 = vsel %vm439, %v1736, -inf
    %1741 = vmax.xlane.f32.xlu0 %v1740
    %v1742 = vpop.xlane.xlu0 %1741
    %v1743 = vsub.f32 %v1735, %v1739
    %v1744 = vsub.f32 %v1736, %v1742
    %v1745 = vmul.f32 %v1743, 1.442695
    %v1746 = vpow.pop %v1745
    %v1747 = vmul.f32 %v1744, 1.442695
    %v1748 = vpow.pop %v1747
    %v1749 = vsel %vm435, %v1746, 0.0
    %1750 = vadd.xlane.f32.xlu0 %v1749
    %v1751 = vpop.xlane.xlu0 %1750
    %v1752 = vsel %vm439, %v1748, 0.0
    %1753 = vadd.xlane.f32.xlu0 %v1752
    %v1754 = vpop.xlane.xlu0 %1753
    %v1755 = vrcp.pop %v1751
    %v1756 = vmul.f32 %v1746, %v1755
    %v1757 = vrcp.pop %v1754
    %v1758 = vmul.f32 %v1748, %v1757
    %1759 = vrot.lane.b32.xlu0 %v1638, 64
    %v1760 = vpop.permute.xlu0 %1759
    %1761 = vrot.lane.b32.xlu0 %v1643, 64
    %v1762 = vpop.permute.xlu0 %1761
    %v1765 = vsel %vm435, %v1756, 0
    %v1768 = vsel %vm435, %v1758, 0
    %v1770 = vsel %vm470, %v1762, 0
    %1772 = vmatprep.subr.mxu0 0.0
    %1773 = vmatpush1.msra.mxu0 %v1760
    %1774 = vmatprep.subr.mxu0 0.0
    %1775 = vmatpush1.msra.mxu0 %v1770
    %1776 = vmatprep.subr.mxu0 0.0
    %1777 = vmatpush1.msra.mxu0 0.0
    %1778 = vmatprep.subr.mxu0 0.0
    %1779 = vmatpush1.msra.mxu0 0.0
    %1780 = vmatprep.subr.mxu0 0.0
    %1781 = vmatpush1.msra.mxu0 0.0
    %1782 = vmatprep.subr.mxu0 0.0
    %1783 = vmatpush1.msra.mxu0 0.0
    %1784 = vmatprep.subr.mxu0 0.0
    %1785 = vmatpush1.msra.mxu0 0.0
    %1786 = vmatprep.subr.mxu0 0.0
    %1787 = vmatpush1.msra.mxu0 0.0
    %1788 = vmatprep.subr.mxu0 0.0
    %1789 = vmatpush1.msra.mxu0 0.0
    %1790 = vmatprep.subr.mxu0 0.0
    %1791 = vmatpush1.msra.mxu0 0.0
    %1792 = vmatprep.subr.mxu0 0.0
    %1793 = vmatpush1.msra.mxu0 0.0
    %1794 = vmatprep.subr.mxu0 0.0
    %1795 = vmatpush1.msra.mxu0 0.0
    %1796 = vmatprep.subr.mxu0 0.0
    %1797 = vmatpush1.msra.mxu0 0.0
    %1798 = vmatprep.subr.mxu0 0.0
    %1799 = vmatpush1.msra.mxu0 0.0
    %1800 = vmatprep.subr.mxu0 0.0
    %1801 = vmatpush1.msra.mxu0 0.0
    %1802 = vmatprep.subr.mxu0 0.0
    %1803 = vmatpush1.msra.mxu0 0.0
    %1804 = vmatprep.subr.mxu0 0.0
    %1805 = vmatpush1.msra.mxu0 0.0
    %1806 = vmatprep.subr.mxu0 0.0
    %1807 = vmatpush1.msra.mxu0 0.0
    %1808 = vmatprep.subr.mxu0 0.0
    %1809 = vmatpush1.msra.mxu0 0.0
    %1810 = vmatprep.subr.mxu0 0.0
    %1811 = vmatpush1.msra.mxu0 0.0
    %1812 = vmatprep.subr.mxu0 0.0
    %1813 = vmatpush1.msra.mxu0 0.0
    %1814 = vmatprep.subr.mxu0 0.0
    %1815 = vmatpush1.msra.mxu0 0.0
    %1816 = vmatprep.subr.mxu0 0.0
    %1817 = vmatpush1.msra.mxu0 0.0
    %1818 = vmatprep.subr.mxu0 0.0
    %1819 = vmatpush1.msra.mxu0 0.0
    %1820 = vmatprep.subr.mxu0 0.0
    %1821 = vmatpush1.msra.mxu0 0.0
    %1822 = vmatprep.subr.mxu0 0.0
    %1823 = vmatpush1.msra.mxu0 0.0
    %1824 = vmatprep.subr.mxu0 0.0
    %1825 = vmatpush1.msra.mxu0 0.0
    %1826 = vmatprep.subr.mxu0 0.0
    %1827 = vmatpush1.msra.mxu0 0.0
    %1828 = vmatprep.subr.mxu0 0.0
    %1829 = vmatpush1.msra.mxu0 0.0
    %1830 = vmatprep.subr.mxu0 0.0
    %1831 = vmatpush1.msra.mxu0 0.0
    %1832 = vmatprep.subr.mxu0 0.0
    %1833 = vmatpush1.msra.mxu0 0.0
    %1834 = vmatprep.subr.mxu0 0.0
    %1835 = vmatpush1.msra.mxu0 0.0
    %1836 = vmatprep.mubr.f32.mxu0 0.0
    %1837 = vmatmul.mubr.f32.gmra.mrb[0].mxu0 %v1765
    %v1838 = vpop.f32.mrb[0].mxu0
    %v1839 = vadd.f32 0.0, %v1838
    %v1840 = vpop.f32.mrb[0].mxu0
    %1841 = vmatprep.mubr.f32.mxu0 0.0
    %1842 = vmatmul.mubr.f32.gmra.mrb[0].mxu0 %v1768
    %v1843 = vpop.f32.mrb[0].mxu0
    %v1844 = vadd.f32 0.0, %v1843
    %v1845 = vpop.f32.mrb[0].mxu0
    %1846 = vdwg.mxu0
    %1847 = vst.msk [vmem:[#allocation3] sm:$0xff] %vm349, %v1839
    %1848 = vst.msk [vmem:[#allocation3 + $0x8] sm:$0x1] %vm549, %v1844
    %1849 = vrot.lane.b32.xlu0 %v1638, 120
    %v1850 = vpop.permute.xlu0 %1849
    %1851 = vrot.lane.b32.xlu0 %v1643, 120
    %v1852 = vpop.permute.xlu0 %1851
    %1853 = vrot.lane.b32.xlu0 %v1638, 88
    %v1854 = vpop.permute.xlu0 %1853
    %1855 = vrot.lane.b32.xlu0 %v1643, 88
    %v1856 = vpop.permute.xlu0 %1855
    %v1857 = vsel %vm349, %v1850, 0
    %v1859 = vsel %vm349, %v1852, 0
    %v1861 = vsel %vm349, %v1854, 0
    %v1863 = vsel %vm349, %v1856, 0
    %1865 = vmatprep.subr.mxu0 0.0
    %1866 = vmatpush1.xpose.msra.mxu0 %v1861
    %1867 = vmatprep.subr.mxu0 0.0
    %1868 = vmatpush1.xpose.msra.mxu0 %v1863
    %1869 = vmatprep.subr.mxu0 0.0
    %1870 = vmatpush1.xpose.msra.mxu0 0.0
    %1871 = vmatprep.subr.mxu0 0.0
    %1872 = vmatpush1.xpose.msra.mxu0 0.0
    %1873 = vmatprep.subr.mxu0 0.0
    %1874 = vmatpush1.xpose.msra.mxu0 0.0
    %1875 = vmatprep.subr.mxu0 0.0
    %1876 = vmatpush1.xpose.msra.mxu0 0.0
    %1877 = vmatprep.subr.mxu0 0.0
    %1878 = vmatpush1.xpose.msra.mxu0 0.0
    %1879 = vmatprep.subr.mxu0 0.0
    %1880 = vmatpush1.xpose.msra.mxu0 0.0
    %1881 = vmatprep.subr.mxu0 0.0
    %1882 = vmatpush1.xpose.msra.mxu0 0.0
    %1883 = vmatprep.subr.mxu0 0.0
    %1884 = vmatpush1.xpose.msra.mxu0 0.0
    %1885 = vmatprep.subr.mxu0 0.0
    %1886 = vmatpush1.xpose.msra.mxu0 0.0
    %1887 = vmatprep.subr.mxu0 0.0
    %1888 = vmatpush1.xpose.msra.mxu0 0.0
    %1889 = vmatprep.subr.mxu0 0.0
    %1890 = vmatpush1.xpose.msra.mxu0 0.0
    %1891 = vmatprep.subr.mxu0 0.0
    %1892 = vmatpush1.xpose.msra.mxu0 0.0
    %1893 = vmatprep.subr.mxu0 0.0
    %1894 = vmatpush1.xpose.msra.mxu0 0.0
    %1895 = vmatprep.subr.mxu0 0.0
    %1896 = vmatpush1.xpose.msra.mxu0 0.0
    %1897 = vmatprep.subr.mxu0 0.0
    %1898 = vmatpush1.xpose.msra.mxu0 0.0
    %1899 = vmatprep.subr.mxu0 0.0
    %1900 = vmatpush1.xpose.msra.mxu0 0.0
    %1901 = vmatprep.subr.mxu0 0.0
    %1902 = vmatpush1.xpose.msra.mxu0 0.0
    %1903 = vmatprep.subr.mxu0 0.0
    %1904 = vmatpush1.xpose.msra.mxu0 0.0
    %1905 = vmatprep.subr.mxu0 0.0
    %1906 = vmatpush1.xpose.msra.mxu0 0.0
    %1907 = vmatprep.subr.mxu0 0.0
    %1908 = vmatpush1.xpose.msra.mxu0 0.0
    %1909 = vmatprep.subr.mxu0 0.0
    %1910 = vmatpush1.xpose.msra.mxu0 0.0
    %1911 = vmatprep.subr.mxu0 0.0
    %1912 = vmatpush1.xpose.msra.mxu0 0.0
    %1913 = vmatprep.subr.mxu0 0.0
    %1914 = vmatpush1.xpose.msra.mxu0 0.0
    %1915 = vmatprep.subr.mxu0 0.0
    %1916 = vmatpush1.xpose.msra.mxu0 0.0
    %1917 = vmatprep.subr.mxu0 0.0
    %1918 = vmatpush1.xpose.msra.mxu0 0.0
    %1919 = vmatprep.subr.mxu0 0.0
    %1920 = vmatpush1.xpose.msra.mxu0 0.0
    %1921 = vmatprep.subr.mxu0 0.0
    %1922 = vmatpush1.xpose.msra.mxu0 0.0
    %1923 = vmatprep.subr.mxu0 0.0
    %1924 = vmatpush1.xpose.msra.mxu0 0.0
    %1925 = vmatprep.subr.mxu0 0.0
    %1926 = vmatpush1.xpose.msra.mxu0 0.0
    %1927 = vmatprep.subr.mxu0 0.0
    %1928 = vmatpush1.xpose.msra.mxu0 0.0
    %1929 = vmatprep.mubr.f32.mxu0 0.0
    %1930 = vmatmul.mubr.f32.gmra.mrb[0].mxu0 %v1857
    %v1931 = vpop.f32.mrb[0].mxu0
    %v1932 = vadd.f32 0.0, %v1931
    %v1933 = vpop.f32.mrb[0].mxu0
    %1934 = vmatprep.mubr.f32.mxu0 0.0
    %1935 = vmatmul.mubr.f32.gmra.mrb[0].mxu0 %v1859
    %v1936 = vpop.f32.mrb[0].mxu0
    %v1937 = vadd.f32 0.0, %v1936
    %v1938 = vpop.f32.mrb[0].mxu0
    %1939 = vdwg.mxu0
    %v1940 = vmul.f32 %v1932, 0.35355338
    %v1941 = vmul.f32 %v1937, 0.35355338
    %v1942 = vsel %vm435, %v1940, -inf
    %1943 = vmax.xlane.f32.xlu0 %v1942
    %v1944 = vpop.xlane.xlu0 %1943
    %v1945 = vsel %vm439, %v1941, -inf
    %1946 = vmax.xlane.f32.xlu0 %v1945
    %v1947 = vpop.xlane.xlu0 %1946
    %v1948 = vsub.f32 %v1940, %v1944
    %v1949 = vsub.f32 %v1941, %v1947
    %v1950 = vmul.f32 %v1948, 1.442695
    %v1951 = vpow.pop %v1950
    %v1952 = vmul.f32 %v1949, 1.442695
    %v1953 = vpow.pop %v1952
    %v1954 = vsel %vm435, %v1951, 0.0
    %1955 = vadd.xlane.f32.xlu0 %v1954
    %v1956 = vpop.xlane.xlu0 %1955
    %v1957 = vsel %vm439, %v1953, 0.0
    %1958 = vadd.xlane.f32.xlu0 %v1957
    %v1959 = vpop.xlane.xlu0 %1958
    %v1960 = vrcp.pop %v1956
    %v1961 = vmul.f32 %v1951, %v1960
    %v1962 = vrcp.pop %v1959
    %v1963 = vmul.f32 %v1953, %v1962
    %1964 = vrot.lane.b32.xlu0 %v1638, 56
    %v1965 = vpop.permute.xlu0 %1964
    %1966 = vrot.lane.b32.xlu0 %v1643, 56
    %v1967 = vpop.permute.xlu0 %1966
    %v1970 = vsel %vm435, %v1961, 0
    %v1973 = vsel %vm435, %v1963, 0
    %v1975 = vsel %vm470, %v1967, 0
    %1977 = vmatprep.subr.mxu0 0.0
    %1978 = vmatpush1.msra.mxu0 %v1965
    %1979 = vmatprep.subr.mxu0 0.0
    %1980 = vmatpush1.msra.mxu0 %v1975
    %1981 = vmatprep.subr.mxu0 0.0
    %1982 = vmatpush1.msra.mxu0 0.0
    %1983 = vmatprep.subr.mxu0 0.0
    %1984 = vmatpush1.msra.mxu0 0.0
    %1985 = vmatprep.subr.mxu0 0.0
    %1986 = vmatpush1.msra.mxu0 0.0
    %1987 = vmatprep.subr.mxu0 0.0
    %1988 = vmatpush1.msra.mxu0 0.0
    %1989 = vmatprep.subr.mxu0 0.0
    %1990 = vmatpush1.msra.mxu0 0.0
    %1991 = vmatprep.subr.mxu0 0.0
    %1992 = vmatpush1.msra.mxu0 0.0
    %1993 = vmatprep.subr.mxu0 0.0
    %1994 = vmatpush1.msra.mxu0 0.0
    %1995 = vmatprep.subr.mxu0 0.0
    %1996 = vmatpush1.msra.mxu0 0.0
    %1997 = vmatprep.subr.mxu0 0.0
    %1998 = vmatpush1.msra.mxu0 0.0
    %1999 = vmatprep.subr.mxu0 0.0
    %2000 = vmatpush1.msra.mxu0 0.0
    %2001 = vmatprep.subr.mxu0 0.0
    %2002 = vmatpush1.msra.mxu0 0.0
    %2003 = vmatprep.subr.mxu0 0.0
    %2004 = vmatpush1.msra.mxu0 0.0
    %2005 = vmatprep.subr.mxu0 0.0
    %2006 = vmatpush1.msra.mxu0 0.0
    %2007 = vmatprep.subr.mxu0 0.0
    %2008 = vmatpush1.msra.mxu0 0.0
    %2009 = vmatprep.subr.mxu0 0.0
    %2010 = vmatpush1.msra.mxu0 0.0
    %2011 = vmatprep.subr.mxu0 0.0
    %2012 = vmatpush1.msra.mxu0 0.0
    %2013 = vmatprep.subr.mxu0 0.0
    %2014 = vmatpush1.msra.mxu0 0.0
    %2015 = vmatprep.subr.mxu0 0.0
    %2016 = vmatpush1.msra.mxu0 0.0
    %2017 = vmatprep.subr.mxu0 0.0
    %2018 = vmatpush1.msra.mxu0 0.0
    %2019 = vmatprep.subr.mxu0 0.0
    %2020 = vmatpush1.msra.mxu0 0.0
    %2021 = vmatprep.subr.mxu0 0.0
    %2022 = vmatpush1.msra.mxu0 0.0
    %2023 = vmatprep.subr.mxu0 0.0
    %2024 = vmatpush1.msra.mxu0 0.0
    %2025 = vmatprep.subr.mxu0 0.0
    %2026 = vmatpush1.msra.mxu0 0.0
    %2027 = vmatprep.subr.mxu0 0.0
    %2028 = vmatpush1.msra.mxu0 0.0
    %2029 = vmatprep.subr.mxu0 0.0
    %2030 = vmatpush1.msra.mxu0 0.0
    %2031 = vmatprep.subr.mxu0 0.0
    %2032 = vmatpush1.msra.mxu0 0.0
    %2033 = vmatprep.subr.mxu0 0.0
    %2034 = vmatpush1.msra.mxu0 0.0
    %2035 = vmatprep.subr.mxu0 0.0
    %2036 = vmatpush1.msra.mxu0 0.0
    %2037 = vmatprep.subr.mxu0 0.0
    %2038 = vmatpush1.msra.mxu0 0.0
    %2039 = vmatprep.subr.mxu0 0.0
    %2040 = vmatpush1.msra.mxu0 0.0
    %2041 = vmatprep.mubr.f32.mxu0 0.0
    %2042 = vmatmul.mubr.f32.gmra.mrb[0].mxu0 %v1970
    %v2043 = vpop.f32.mrb[0].mxu0
    %v2044 = vadd.f32 0.0, %v2043
    %v2045 = vpop.f32.mrb[0].mxu0
    %2046 = vmatprep.mubr.f32.mxu0 0.0
    %2047 = vmatmul.mubr.f32.gmra.mrb[0].mxu0 %v1973
    %v2048 = vpop.f32.mrb[0].mxu0
    %v2049 = vadd.f32 0.0, %v2048
    %v2050 = vpop.f32.mrb[0].mxu0
    %2051 = vdwg.mxu0
    %2054 = vrot.lane.b32.xlu0 %v2044, 8
    %v2055 = vpop.permute.xlu0 %2054
    %2056 = vrot.lane.b32.xlu0 %v2049, 8
    %v2057 = vpop.permute.xlu0 %2056
    %2060 = vst.msk [vmem:[#allocation3] sm:$0xff] %vm762, %v2055
    %2061 = vst.msk [vmem:[#allocation3 + $0x8] sm:$0x1] %vm764, %v2057
    %2062 = vrot.lane.b32.xlu0 %v1638, 112
    %v2063 = vpop.permute.xlu0 %2062
    %2064 = vrot.lane.b32.xlu0 %v1643, 112
    %v2065 = vpop.permute.xlu0 %2064
    %2066 = vrot.lane.b32.xlu0 %v1638, 80
    %v2067 = vpop.permute.xlu0 %2066
    %2068 = vrot.lane.b32.xlu0 %v1643, 80
    %v2069 = vpop.permute.xlu0 %2068
    %v2070 = vsel %vm349, %v2063, 0
    %v2072 = vsel %vm349, %v2065, 0
    %v2074 = vsel %vm349, %v2067, 0
    %v2076 = vsel %vm349, %v2069, 0
    %2078 = vmatprep.subr.mxu0 0.0
    %2079 = vmatpush1.xpose.msra.mxu0 %v2074
    %2080 = vmatprep.subr.mxu0 0.0
    %2081 = vmatpush1.xpose.msra.mxu0 %v2076
    %2082 = vmatprep.subr.mxu0 0.0
    %2083 = vmatpush1.xpose.msra.mxu0 0.0
    %2084 = vmatprep.subr.mxu0 0.0
    %2085 = vmatpush1.xpose.msra.mxu0 0.0
    %2086 = vmatprep.subr.mxu0 0.0
    %2087 = vmatpush1.xpose.msra.mxu0 0.0
    %2088 = vmatprep.subr.mxu0 0.0
    %2089 = vmatpush1.xpose.msra.mxu0 0.0
    %2090 = vmatprep.subr.mxu0 0.0
    %2091 = vmatpush1.xpose.msra.mxu0 0.0
    %2092 = vmatprep.subr.mxu0 0.0
    %2093 = vmatpush1.xpose.msra.mxu0 0.0
    %2094 = vmatprep.subr.mxu0 0.0
    %2095 = vmatpush1.xpose.msra.mxu0 0.0
    %2096 = vmatprep.subr.mxu0 0.0
    %2097 = vmatpush1.xpose.msra.mxu0 0.0
    %2098 = vmatprep.subr.mxu0 0.0
    %2099 = vmatpush1.xpose.msra.mxu0 0.0
    %2100 = vmatprep.subr.mxu0 0.0
    %2101 = vmatpush1.xpose.msra.mxu0 0.0
    %2102 = vmatprep.subr.mxu0 0.0
    %2103 = vmatpush1.xpose.msra.mxu0 0.0
    %2104 = vmatprep.subr.mxu0 0.0
    %2105 = vmatpush1.xpose.msra.mxu0 0.0
    %2106 = vmatprep.subr.mxu0 0.0
    %2107 = vmatpush1.xpose.msra.mxu0 0.0
    %2108 = vmatprep.subr.mxu0 0.0
    %2109 = vmatpush1.xpose.msra.mxu0 0.0
    %2110 = vmatprep.subr.mxu0 0.0
    %2111 = vmatpush1.xpose.msra.mxu0 0.0
    %2112 = vmatprep.subr.mxu0 0.0
    %2113 = vmatpush1.xpose.msra.mxu0 0.0
    %2114 = vmatprep.subr.mxu0 0.0
    %2115 = vmatpush1.xpose.msra.mxu0 0.0
    %2116 = vmatprep.subr.mxu0 0.0
    %2117 = vmatpush1.xpose.msra.mxu0 0.0
    %2118 = vmatprep.subr.mxu0 0.0
    %2119 = vmatpush1.xpose.msra.mxu0 0.0
    %2120 = vmatprep.subr.mxu0 0.0
    %2121 = vmatpush1.xpose.msra.mxu0 0.0
    %2122 = vmatprep.subr.mxu0 0.0
    %2123 = vmatpush1.xpose.msra.mxu0 0.0
    %2124 = vmatprep.subr.mxu0 0.0
    %2125 = vmatpush1.xpose.msra.mxu0 0.0
    %2126 = vmatprep.subr.mxu0 0.0
    %2127 = vmatpush1.xpose.msra.mxu0 0.0
    %2128 = vmatprep.subr.mxu0 0.0
    %2129 = vmatpush1.xpose.msra.mxu0 0.0
    %2130 = vmatprep.subr.mxu0 0.0
    %2131 = vmatpush1.xpose.msra.mxu0 0.0
    %2132 = vmatprep.subr.mxu0 0.0
    %2133 = vmatpush1.xpose.msra.mxu0 0.0
    %2134 = vmatprep.subr.mxu0 0.0
    %2135 = vmatpush1.xpose.msra.mxu0 0.0
    %2136 = vmatprep.subr.mxu0 0.0
    %2137 = vmatpush1.xpose.msra.mxu0 0.0
    %2138 = vmatprep.subr.mxu0 0.0
    %2139 = vmatpush1.xpose.msra.mxu0 0.0
    %2140 = vmatprep.subr.mxu0 0.0
    %2141 = vmatpush1.xpose.msra.mxu0 0.0
    %2142 = vmatprep.mubr.f32.mxu0 0.0
    %2143 = vmatmul.mubr.f32.gmra.mrb[0].mxu0 %v2070
    %v2144 = vpop.f32.mrb[0].mxu0
    %v2145 = vadd.f32 0.0, %v2144
    %v2146 = vpop.f32.mrb[0].mxu0
    %2147 = vmatprep.mubr.f32.mxu0 0.0
    %2148 = vmatmul.mubr.f32.gmra.mrb[0].mxu0 %v2072
    %v2149 = vpop.f32.mrb[0].mxu0
    %v2150 = vadd.f32 0.0, %v2149
    %v2151 = vpop.f32.mrb[0].mxu0
    %2152 = vdwg.mxu0
    %v2153 = vmul.f32 %v2145, 0.35355338
    %v2154 = vmul.f32 %v2150, 0.35355338
    %v2155 = vsel %vm435, %v2153, -inf
    %2156 = vmax.xlane.f32.xlu0 %v2155
    %v2157 = vpop.xlane.xlu0 %2156
    %v2158 = vsel %vm439, %v2154, -inf
    %2159 = vmax.xlane.f32.xlu0 %v2158
    %v2160 = vpop.xlane.xlu0 %2159
    %v2161 = vsub.f32 %v2153, %v2157
    %v2162 = vsub.f32 %v2154, %v2160
    %v2163 = vmul.f32 %v2161, 1.442695
    %v2164 = vpow.pop %v2163
    %v2165 = vmul.f32 %v2162, 1.442695
    %v2166 = vpow.pop %v2165
    %v2167 = vsel %vm435, %v2164, 0.0
    %2168 = vadd.xlane.f32.xlu0 %v2167
    %v2169 = vpop.xlane.xlu0 %2168
    %v2170 = vsel %vm439, %v2166, 0.0
    %2171 = vadd.xlane.f32.xlu0 %v2170
    %v2172 = vpop.xlane.xlu0 %2171
    %v2173 = vrcp.pop %v2169
    %v2174 = vmul.f32 %v2164, %v2173
    %v2175 = vrcp.pop %v2172
    %v2176 = vmul.f32 %v2166, %v2175
    %2177 = vrot.lane.b32.xlu0 %v1638, 48
    %v2178 = vpop.permute.xlu0 %2177
    %2179 = vrot.lane.b32.xlu0 %v1643, 48
    %v2180 = vpop.permute.xlu0 %2179
    %v2183 = vsel %vm435, %v2174, 0
    %v2186 = vsel %vm435, %v2176, 0
    %v2188 = vsel %vm470, %v2180, 0
    %2190 = vmatprep.subr.mxu0 0.0
    %2191 = vmatpush1.msra.mxu0 %v2178
    %2192 = vmatprep.subr.mxu0 0.0
    %2193 = vmatpush1.msra.mxu0 %v2188
    %2194 = vmatprep.subr.mxu0 0.0
    %2195 = vmatpush1.msra.mxu0 0.0
    %2196 = vmatprep.subr.mxu0 0.0
    %2197 = vmatpush1.msra.mxu0 0.0
    %2198 = vmatprep.subr.mxu0 0.0
    %2199 = vmatpush1.msra.mxu0 0.0
    %2200 = vmatprep.subr.mxu0 0.0
    %2201 = vmatpush1.msra.mxu0 0.0
    %2202 = vmatprep.subr.mxu0 0.0
    %2203 = vmatpush1.msra.mxu0 0.0
    %2204 = vmatprep.subr.mxu0 0.0
    %2205 = vmatpush1.msra.mxu0 0.0
    %2206 = vmatprep.subr.mxu0 0.0
    %2207 = vmatpush1.msra.mxu0 0.0
    %2208 = vmatprep.subr.mxu0 0.0
    %2209 = vmatpush1.msra.mxu0 0.0
    %2210 = vmatprep.subr.mxu0 0.0
    %2211 = vmatpush1.msra.mxu0 0.0
    %2212 = vmatprep.subr.mxu0 0.0
    %2213 = vmatpush1.msra.mxu0 0.0
    %2214 = vmatprep.subr.mxu0 0.0
    %2215 = vmatpush1.msra.mxu0 0.0
    %2216 = vmatprep.subr.mxu0 0.0
    %2217 = vmatpush1.msra.mxu0 0.0
    %2218 = vmatprep.subr.mxu0 0.0
    %2219 = vmatpush1.msra.mxu0 0.0
    %2220 = vmatprep.subr.mxu0 0.0
    %2221 = vmatpush1.msra.mxu0 0.0
    %2222 = vmatprep.subr.mxu0 0.0
    %2223 = vmatpush1.msra.mxu0 0.0
    %2224 = vmatprep.subr.mxu0 0.0
    %2225 = vmatpush1.msra.mxu0 0.0
    %2226 = vmatprep.subr.mxu0 0.0
    %2227 = vmatpush1.msra.mxu0 0.0
    %2228 = vmatprep.subr.mxu0 0.0
    %2229 = vmatpush1.msra.mxu0 0.0
    %2230 = vmatprep.subr.mxu0 0.0
    %2231 = vmatpush1.msra.mxu0 0.0
    %2232 = vmatprep.subr.mxu0 0.0
    %2233 = vmatpush1.msra.mxu0 0.0
    %2234 = vmatprep.subr.mxu0 0.0
    %2235 = vmatpush1.msra.mxu0 0.0
    %2236 = vmatprep.subr.mxu0 0.0
    %2237 = vmatpush1.msra.mxu0 0.0
    %2238 = vmatprep.subr.mxu0 0.0
    %2239 = vmatpush1.msra.mxu0 0.0
    %2240 = vmatprep.subr.mxu0 0.0
    %2241 = vmatpush1.msra.mxu0 0.0
    %2242 = vmatprep.subr.mxu0 0.0
    %2243 = vmatpush1.msra.mxu0 0.0
    %2244 = vmatprep.subr.mxu0 0.0
    %2245 = vmatpush1.msra.mxu0 0.0
    %2246 = vmatprep.subr.mxu0 0.0
    %2247 = vmatpush1.msra.mxu0 0.0
    %2248 = vmatprep.subr.mxu0 0.0
    %2249 = vmatpush1.msra.mxu0 0.0
    %2250 = vmatprep.subr.mxu0 0.0
    %2251 = vmatpush1.msra.mxu0 0.0
    %2252 = vmatprep.subr.mxu0 0.0
    %2253 = vmatpush1.msra.mxu0 0.0
    %2254 = vmatprep.mubr.f32.mxu0 0.0
    %2255 = vmatmul.mubr.f32.gmra.mrb[0].mxu0 %v2183
    %v2256 = vpop.f32.mrb[0].mxu0
    %v2257 = vadd.f32 0.0, %v2256
    %v2258 = vpop.f32.mrb[0].mxu0
    %2259 = vmatprep.mubr.f32.mxu0 0.0
    %2260 = vmatmul.mubr.f32.gmra.mrb[0].mxu0 %v2186
    %v2261 = vpop.f32.mrb[0].mxu0
    %v2262 = vadd.f32 0.0, %v2261
    %v2263 = vpop.f32.mrb[0].mxu0
    %2264 = vdwg.mxu0
    %2267 = vrot.lane.b32.xlu0 %v2257, 16
    %v2268 = vpop.permute.xlu0 %2267
    %2269 = vrot.lane.b32.xlu0 %v2262, 16
    %v2270 = vpop.permute.xlu0 %2269
    %2273 = vst.msk [vmem:[#allocation3] sm:$0xff] %vm977, %v2268
    %2274 = vst.msk [vmem:[#allocation3 + $0x8] sm:$0x1] %vm979, %v2270
    %2275 = vrot.lane.b32.xlu0 %v1638, 104
    %v2276 = vpop.permute.xlu0 %2275
    %2277 = vrot.lane.b32.xlu0 %v1643, 104
    %v2278 = vpop.permute.xlu0 %2277
    %2279 = vrot.lane.b32.xlu0 %v1638, 72
    %v2280 = vpop.permute.xlu0 %2279
    %2281 = vrot.lane.b32.xlu0 %v1643, 72
    %v2282 = vpop.permute.xlu0 %2281
    %v2283 = vsel %vm349, %v2276, 0
    %v2285 = vsel %vm349, %v2278, 0
    %v2287 = vsel %vm349, %v2280, 0
    %v2289 = vsel %vm349, %v2282, 0
    %2291 = vmatprep.subr.mxu0 0.0
    %2292 = vmatpush1.xpose.msra.mxu0 %v2287
    %2293 = vmatprep.subr.mxu0 0.0
    %2294 = vmatpush1.xpose.msra.mxu0 %v2289
    %2295 = vmatprep.subr.mxu0 0.0
    %2296 = vmatpush1.xpose.msra.mxu0 0.0
    %2297 = vmatprep.subr.mxu0 0.0
    %2298 = vmatpush1.xpose.msra.mxu0 0.0
    %2299 = vmatprep.subr.mxu0 0.0
    %2300 = vmatpush1.xpose.msra.mxu0 0.0
    %2301 = vmatprep.subr.mxu0 0.0
    %2302 = vmatpush1.xpose.msra.mxu0 0.0
    %2303 = vmatprep.subr.mxu0 0.0
    %2304 = vmatpush1.xpose.msra.mxu0 0.0
    %2305 = vmatprep.subr.mxu0 0.0
    %2306 = vmatpush1.xpose.msra.mxu0 0.0
    %2307 = vmatprep.subr.mxu0 0.0
    %2308 = vmatpush1.xpose.msra.mxu0 0.0
    %2309 = vmatprep.subr.mxu0 0.0
    %2310 = vmatpush1.xpose.msra.mxu0 0.0
    %2311 = vmatprep.subr.mxu0 0.0
    %2312 = vmatpush1.xpose.msra.mxu0 0.0
    %2313 = vmatprep.subr.mxu0 0.0
    %2314 = vmatpush1.xpose.msra.mxu0 0.0
    %2315 = vmatprep.subr.mxu0 0.0
    %2316 = vmatpush1.xpose.msra.mxu0 0.0
    %2317 = vmatprep.subr.mxu0 0.0
    %2318 = vmatpush1.xpose.msra.mxu0 0.0
    %2319 = vmatprep.subr.mxu0 0.0
    %2320 = vmatpush1.xpose.msra.mxu0 0.0
    %2321 = vmatprep.subr.mxu0 0.0
    %2322 = vmatpush1.xpose.msra.mxu0 0.0
    %2323 = vmatprep.subr.mxu0 0.0
    %2324 = vmatpush1.xpose.msra.mxu0 0.0
    %2325 = vmatprep.subr.mxu0 0.0
    %2326 = vmatpush1.xpose.msra.mxu0 0.0
    %2327 = vmatprep.subr.mxu0 0.0
    %2328 = vmatpush1.xpose.msra.mxu0 0.0
    %2329 = vmatprep.subr.mxu0 0.0
    %2330 = vmatpush1.xpose.msra.mxu0 0.0
    %2331 = vmatprep.subr.mxu0 0.0
    %2332 = vmatpush1.xpose.msra.mxu0 0.0
    %2333 = vmatprep.subr.mxu0 0.0
    %2334 = vmatpush1.xpose.msra.mxu0 0.0
    %2335 = vmatprep.subr.mxu0 0.0
    %2336 = vmatpush1.xpose.msra.mxu0 0.0
    %2337 = vmatprep.subr.mxu0 0.0
    %2338 = vmatpush1.xpose.msra.mxu0 0.0
    %2339 = vmatprep.subr.mxu0 0.0
    %2340 = vmatpush1.xpose.msra.mxu0 0.0
    %2341 = vmatprep.subr.mxu0 0.0
    %2342 = vmatpush1.xpose.msra.mxu0 0.0
    %2343 = vmatprep.subr.mxu0 0.0
    %2344 = vmatpush1.xpose.msra.mxu0 0.0
    %2345 = vmatprep.subr.mxu0 0.0
    %2346 = vmatpush1.xpose.msra.mxu0 0.0
    %2347 = vmatprep.subr.mxu0 0.0
    %2348 = vmatpush1.xpose.msra.mxu0 0.0
    %2349 = vmatprep.subr.mxu0 0.0
    %2350 = vmatpush1.xpose.msra.mxu0 0.0
    %2351 = vmatprep.subr.mxu0 0.0
    %2352 = vmatpush1.xpose.msra.mxu0 0.0
    %2353 = vmatprep.subr.mxu0 0.0
    %2354 = vmatpush1.xpose.msra.mxu0 0.0
    %2355 = vmatprep.mubr.f32.mxu0 0.0
    %2356 = vmatmul.mubr.f32.gmra.mrb[0].mxu0 %v2283
    %v2357 = vpop.f32.mrb[0].mxu0
    %v2358 = vadd.f32 0.0, %v2357
    %v2359 = vpop.f32.mrb[0].mxu0
    %2360 = vmatprep.mubr.f32.mxu0 0.0
    %2361 = vmatmul.mubr.f32.gmra.mrb[0].mxu0 %v2285
    %v2362 = vpop.f32.mrb[0].mxu0
    %v2363 = vadd.f32 0.0, %v2362
    %v2364 = vpop.f32.mrb[0].mxu0
    %2365 = vdwg.mxu0
    %v2366 = vmul.f32 %v2358, 0.35355338
    %v2367 = vmul.f32 %v2363, 0.35355338
    %v2368 = vsel %vm435, %v2366, -inf
    %2369 = vmax.xlane.f32.xlu0 %v2368
    %v2370 = vpop.xlane.xlu0 %2369
    %v2371 = vsel %vm439, %v2367, -inf
    %2372 = vmax.xlane.f32.xlu0 %v2371
    %v2373 = vpop.xlane.xlu0 %2372
    %v2374 = vsub.f32 %v2366, %v2370
    %v2375 = vsub.f32 %v2367, %v2373
    %v2376 = vmul.f32 %v2374, 1.442695
    %v2377 = vpow.pop %v2376
    %v2378 = vmul.f32 %v2375, 1.442695
    %v2379 = vpow.pop %v2378
    %v2380 = vsel %vm435, %v2377, 0.0
    %2381 = vadd.xlane.f32.xlu0 %v2380
    %v2382 = vpop.xlane.xlu0 %2381
    %v2383 = vsel %vm439, %v2379, 0.0
    %2384 = vadd.xlane.f32.xlu0 %v2383
    %v2385 = vpop.xlane.xlu0 %2384
    %v2386 = vrcp.pop %v2382
    %v2387 = vmul.f32 %v2377, %v2386
    %v2388 = vrcp.pop %v2385
    %v2389 = vmul.f32 %v2379, %v2388
    %2390 = vrot.lane.b32.xlu0 %v1638, 40
    %v2391 = vpop.permute.xlu0 %2390
    %2392 = vrot.lane.b32.xlu0 %v1643, 40
    %v2393 = vpop.permute.xlu0 %2392
    %v2396 = vsel %vm435, %v2387, 0
    %v2399 = vsel %vm435, %v2389, 0
    %v2401 = vsel %vm470, %v2393, 0
    %2403 = vmatprep.subr.mxu0 0.0
    %2404 = vmatpush1.msra.mxu0 %v2391
    %2405 = vmatprep.subr.mxu0 0.0
    %2406 = vmatpush1.msra.mxu0 %v2401
    %2407 = vmatprep.subr.mxu0 0.0
    %2408 = vmatpush1.msra.mxu0 0.0
    %2409 = vmatprep.subr.mxu0 0.0
    %2410 = vmatpush1.msra.mxu0 0.0
    %2411 = vmatprep.subr.mxu0 0.0
    %2412 = vmatpush1.msra.mxu0 0.0
    %2413 = vmatprep.subr.mxu0 0.0
    %2414 = vmatpush1.msra.mxu0 0.0
    %2415 = vmatprep.subr.mxu0 0.0
    %2416 = vmatpush1.msra.mxu0 0.0
    %2417 = vmatprep.subr.mxu0 0.0
    %2418 = vmatpush1.msra.mxu0 0.0
    %2419 = vmatprep.subr.mxu0 0.0
    %2420 = vmatpush1.msra.mxu0 0.0
    %2421 = vmatprep.subr.mxu0 0.0
    %2422 = vmatpush1.msra.mxu0 0.0
    %2423 = vmatprep.subr.mxu0 0.0
    %2424 = vmatpush1.msra.mxu0 0.0
    %2425 = vmatprep.subr.mxu0 0.0
    %2426 = vmatpush1.msra.mxu0 0.0
    %2427 = vmatprep.subr.mxu0 0.0
    %2428 = vmatpush1.msra.mxu0 0.0
    %2429 = vmatprep.subr.mxu0 0.0
    %2430 = vmatpush1.msra.mxu0 0.0
    %2431 = vmatprep.subr.mxu0 0.0
    %2432 = vmatpush1.msra.mxu0 0.0
    %2433 = vmatprep.subr.mxu0 0.0
    %2434 = vmatpush1.msra.mxu0 0.0
    %2435 = vmatprep.subr.mxu0 0.0
    %2436 = vmatpush1.msra.mxu0 0.0
    %2437 = vmatprep.subr.mxu0 0.0
    %2438 = vmatpush1.msra.mxu0 0.0
    %2439 = vmatprep.subr.mxu0 0.0
    %2440 = vmatpush1.msra.mxu0 0.0
    %2441 = vmatprep.subr.mxu0 0.0
    %2442 = vmatpush1.msra.mxu0 0.0
    %2443 = vmatprep.subr.mxu0 0.0
    %2444 = vmatpush1.msra.mxu0 0.0
    %2445 = vmatprep.subr.mxu0 0.0
    %2446 = vmatpush1.msra.mxu0 0.0
    %2447 = vmatprep.subr.mxu0 0.0
    %2448 = vmatpush1.msra.mxu0 0.0
    %2449 = vmatprep.subr.mxu0 0.0
    %2450 = vmatpush1.msra.mxu0 0.0
    %2451 = vmatprep.subr.mxu0 0.0
    %2452 = vmatpush1.msra.mxu0 0.0
    %2453 = vmatprep.subr.mxu0 0.0
    %2454 = vmatpush1.msra.mxu0 0.0
    %2455 = vmatprep.subr.mxu0 0.0
    %2456 = vmatpush1.msra.mxu0 0.0
    %2457 = vmatprep.subr.mxu0 0.0
    %2458 = vmatpush1.msra.mxu0 0.0
    %2459 = vmatprep.subr.mxu0 0.0
    %2460 = vmatpush1.msra.mxu0 0.0
    %2461 = vmatprep.subr.mxu0 0.0
    %2462 = vmatpush1.msra.mxu0 0.0
    %2463 = vmatprep.subr.mxu0 0.0
    %2464 = vmatpush1.msra.mxu0 0.0
    %2465 = vmatprep.subr.mxu0 0.0
    %2466 = vmatpush1.msra.mxu0 0.0
    %2467 = vmatprep.mubr.f32.mxu0 0.0
    %2468 = vmatmul.mubr.f32.gmra.mrb[0].mxu0 %v2396
    %v2469 = vpop.f32.mrb[0].mxu0
    %v2470 = vadd.f32 0.0, %v2469
    %v2471 = vpop.f32.mrb[0].mxu0
    %2472 = vmatprep.mubr.f32.mxu0 0.0
    %2473 = vmatmul.mubr.f32.gmra.mrb[0].mxu0 %v2399
    %v2474 = vpop.f32.mrb[0].mxu0
    %v2475 = vadd.f32 0.0, %v2474
    %v2476 = vpop.f32.mrb[0].mxu0
    %2477 = vdwg.mxu0
    %2480 = vrot.lane.b32.xlu0 %v2470, 24
    %v2481 = vpop.permute.xlu0 %2480
    %2482 = vrot.lane.b32.xlu0 %v2475, 24
    %v2483 = vpop.permute.xlu0 %2482
    %2486 = vst.msk [vmem:[#allocation3] sm:$0xff] %vm1192, %v2481
    %2487 = vst.msk [vmem:[#allocation3 + $0x8] sm:$0x1] %vm1194, %v2483
    %v2488 = vld [vmem:[#allocation3] sm:$0xff]
    %v2489 = vld [vmem:[#allocation3 + $0x8] sm:$0x1]
    %v2490 = vlaneseq
    %v2491 = vshrl.u32 %v2490, 7
    %v2492 = vsub.s32 0, %v2491
    %v2493 = vrot.slane %v1643, %v2492
    %v2494 = vsel %vm1200, %v2493, 0.0
    %v2495 = vsel %vm1201, %v2493, 0.0
    %2498 = vrot.lane.b32.xlu0 %v2494, 32
    %v2499 = vpop.permute.xlu0 %2498
    %2500 = vrot.lane.b32.xlu0 %v2495, 32
    %v2501 = vpop.permute.xlu0 %2500
    %v2504 = vadd.f32 %v2488, %v2499
    %v2505 = vadd.f32 %v2489, %v2501
    %v2507 = vsel %vm226, %v2504, 0
    %v2510 = vsel %vm226, %v2505, 0
    %2512 = vmatprep.subr.mxu0 0.0
    %2513 = vmatpush1.msra.mxu0 %v243
    %2514 = vmatprep.subr.mxu0 0.0
    %2515 = vmatpush1.msra.mxu0 %v244
    %2516 = vmatprep.subr.mxu0 0.0
    %2517 = vmatpush1.msra.mxu0 %v245
    %2518 = vmatprep.subr.mxu0 0.0
    %2519 = vmatpush1.msra.mxu0 %v246
    %2520 = vmatprep.subr.mxu0 0.0
    %2521 = vmatpush1.msra.mxu0 0.0
    %2522 = vmatprep.subr.mxu0 0.0
    %2523 = vmatpush1.msra.mxu0 0.0
    %2524 = vmatprep.subr.mxu0 0.0
    %2525 = vmatpush1.msra.mxu0 0.0
    %2526 = vmatprep.subr.mxu0 0.0
    %2527 = vmatpush1.msra.mxu0 0.0
    %2528 = vmatprep.subr.mxu0 0.0
    %2529 = vmatpush1.msra.mxu0 0.0
    %2530 = vmatprep.subr.mxu0 0.0
    %2531 = vmatpush1.msra.mxu0 0.0
    %2532 = vmatprep.subr.mxu0 0.0
    %2533 = vmatpush1.msra.mxu0 0.0
    %2534 = vmatprep.subr.mxu0 0.0
    %2535 = vmatpush1.msra.mxu0 0.0
    %2536 = vmatprep.subr.mxu0 0.0
    %2537 = vmatpush1.msra.mxu0 0.0
    %2538 = vmatprep.subr.mxu0 0.0
    %2539 = vmatpush1.msra.mxu0 0.0
    %2540 = vmatprep.subr.mxu0 0.0
    %2541 = vmatpush1.msra.mxu0 0.0
    %2542 = vmatprep.subr.mxu0 0.0
    %2543 = vmatpush1.msra.mxu0 0.0
    %2544 = vmatprep.subr.mxu0 0.0
    %2545 = vmatpush1.msra.mxu0 0.0
    %2546 = vmatprep.subr.mxu0 0.0
    %2547 = vmatpush1.msra.mxu0 0.0
    %2548 = vmatprep.subr.mxu0 0.0
    %2549 = vmatpush1.msra.mxu0 0.0
    %2550 = vmatprep.subr.mxu0 0.0
    %2551 = vmatpush1.msra.mxu0 0.0
    %2552 = vmatprep.subr.mxu0 0.0
    %2553 = vmatpush1.msra.mxu0 0.0
    %2554 = vmatprep.subr.mxu0 0.0
    %2555 = vmatpush1.msra.mxu0 0.0
    %2556 = vmatprep.subr.mxu0 0.0
    %2557 = vmatpush1.msra.mxu0 0.0
    %2558 = vmatprep.subr.mxu0 0.0
    %2559 = vmatpush1.msra.mxu0 0.0
    %2560 = vmatprep.subr.mxu0 0.0
    %2561 = vmatpush1.msra.mxu0 0.0
    %2562 = vmatprep.subr.mxu0 0.0
    %2563 = vmatpush1.msra.mxu0 0.0
    %2564 = vmatprep.subr.mxu0 0.0
    %2565 = vmatpush1.msra.mxu0 0.0
    %2566 = vmatprep.subr.mxu0 0.0
    %2567 = vmatpush1.msra.mxu0 0.0
    %2568 = vmatprep.subr.mxu0 0.0
    %2569 = vmatpush1.msra.mxu0 0.0
    %2570 = vmatprep.subr.mxu0 0.0
    %2571 = vmatpush1.msra.mxu0 0.0
    %2572 = vmatprep.subr.mxu0 0.0
    %2573 = vmatpush1.msra.mxu0 0.0
    %2574 = vmatprep.subr.mxu0 0.0
    %2575 = vmatpush1.msra.mxu0 0.0
    %2576 = vmatprep.mubr.f32.mxu0 0.0
    %2577 = vmatmul.mubr.f32.gmra.mrb[0].mxu0 %v2507
    %v2578 = vpop.f32.mrb[0].mxu0
    %v2579 = vadd.f32 %v1221, %v2578
    %v2580 = vpop.f32.mrb[0].mxu0
    %2581 = vmatprep.mubr.f32.mxu0 0.0
    %2582 = vmatmul.mubr.f32.gmra.mrb[0].mxu0 %v2510
    %v2583 = vpop.f32.mrb[0].mxu0
    %v2584 = vadd.f32 %v1221, %v2583
    %v2585 = vpop.f32.mrb[0].mxu0
    %2586 = vdwg.mxu0
    %v2587 = vadd.f32 %v1563, %v2579
    %v2588 = vadd.f32 %v1564, %v2584
    %v2589 = vsel %vm226, %v2587, 0.0
    %v2590 = vsel %vm228, %v2588, 0.0
    %v2591 = vadd.f32 %v2589, %v2590
    %v2592 = vrot.slane %v2591, 4
    %v2593 = vadd.f32 %v2591, %v2592
    %v2594 = vrot.slane %v2593, 2
    %v2595 = vadd.f32 %v2593, %v2594
    %v2596 = vrot.slane %v2595, 1
    %v2597 = vadd.f32 %v2595, %v2596
    %v2598 = vmul.f32 %v2597, %v1314
    %v2599 = vsub.f32 %v2587, %v2598
    %v2600 = vsub.f32 %v2588, %v2598
    %v2601 = vmul.f32 %v2599, %v2599
    %v2602 = vmul.f32 %v2600, %v2600
    %v2603 = vsel %vm226, %v2601, 0.0
    %v2604 = vsel %vm228, %v2602, 0.0
    %v2605 = vadd.f32 %v2603, %v2604
    %v2606 = vrot.slane %v2605, 4
    %v2607 = vadd.f32 %v2605, %v2606
    %v2608 = vrot.slane %v2607, 2
    %v2609 = vadd.f32 %v2607, %v2608
    %v2610 = vrot.slane %v2609, 1
    %v2611 = vadd.f32 %v2609, %v2610
    %v2612 = vmul.f32 %v2611, %v1314
    %v2613 = vadd.f32 %v2612, 1e-05
    %v2614 = vrsqrt.pop %v2613
    %v2615 = vmul.f32 %v2599, %v2614
    %v2616 = vmul.f32 %v2600, %v2614
    %v2617 = vmul.f32 %v2615, %v1337
    %v2618 = vmul.f32 %v2616, %v1337
    %v2619 = vadd.f32 %v2617, %v1343
    %v2620 = vadd.f32 %v2618, %v1343
    %v2622 = vsel %vm226, %v2619, 0
    %v2625 = vsel %vm226, %v2620, 0
    %2627 = vmatprep.subr.mxu0 0.0
    %2628 = vmatpush1.msra.mxu0 %v247
    %2629 = vmatprep.subr.mxu0 0.0
    %2630 = vmatpush1.msra.mxu0 %v248
    %2631 = vmatprep.subr.mxu0 0.0
    %2632 = vmatpush1.msra.mxu0 %v249
    %2633 = vmatprep.subr.mxu0 0.0
    %2634 = vmatpush1.msra.mxu0 %v250
    %2635 = vmatprep.subr.mxu0 0.0
    %2636 = vmatpush1.msra.mxu0 0.0
    %2637 = vmatprep.subr.mxu0 0.0
    %2638 = vmatpush1.msra.mxu0 0.0
    %2639 = vmatprep.subr.mxu0 0.0
    %2640 = vmatpush1.msra.mxu0 0.0
    %2641 = vmatprep.subr.mxu0 0.0
    %2642 = vmatpush1.msra.mxu0 0.0
    %2643 = vmatprep.subr.mxu0 0.0
    %2644 = vmatpush1.msra.mxu0 0.0
    %2645 = vmatprep.subr.mxu0 0.0
    %2646 = vmatpush1.msra.mxu0 0.0
    %2647 = vmatprep.subr.mxu0 0.0
    %2648 = vmatpush1.msra.mxu0 0.0
    %2649 = vmatprep.subr.mxu0 0.0
    %2650 = vmatpush1.msra.mxu0 0.0
    %2651 = vmatprep.subr.mxu0 0.0
    %2652 = vmatpush1.msra.mxu0 0.0
    %2653 = vmatprep.subr.mxu0 0.0
    %2654 = vmatpush1.msra.mxu0 0.0
    %2655 = vmatprep.subr.mxu0 0.0
    %2656 = vmatpush1.msra.mxu0 0.0
    %2657 = vmatprep.subr.mxu0 0.0
    %2658 = vmatpush1.msra.mxu0 0.0
    %2659 = vmatprep.subr.mxu0 0.0
    %2660 = vmatpush1.msra.mxu0 0.0
    %2661 = vmatprep.subr.mxu0 0.0
    %2662 = vmatpush1.msra.mxu0 0.0
    %2663 = vmatprep.subr.mxu0 0.0
    %2664 = vmatpush1.msra.mxu0 0.0
    %2665 = vmatprep.subr.mxu0 0.0
    %2666 = vmatpush1.msra.mxu0 0.0
    %2667 = vmatprep.subr.mxu0 0.0
    %2668 = vmatpush1.msra.mxu0 0.0
    %2669 = vmatprep.subr.mxu0 0.0
    %2670 = vmatpush1.msra.mxu0 0.0
    %2671 = vmatprep.subr.mxu0 0.0
    %2672 = vmatpush1.msra.mxu0 0.0
    %2673 = vmatprep.subr.mxu0 0.0
    %2674 = vmatpush1.msra.mxu0 0.0
    %2675 = vmatprep.subr.mxu0 0.0
    %2676 = vmatpush1.msra.mxu0 0.0
    %2677 = vmatprep.subr.mxu0 0.0
    %2678 = vmatpush1.msra.mxu0 0.0
    %2679 = vmatprep.subr.mxu0 0.0
    %2680 = vmatpush1.msra.mxu0 0.0
    %2681 = vmatprep.subr.mxu0 0.0
    %2682 = vmatpush1.msra.mxu0 0.0
    %2683 = vmatprep.subr.mxu0 0.0
    %2684 = vmatpush1.msra.mxu0 0.0
    %2685 = vmatprep.subr.mxu0 0.0
    %2686 = vmatpush1.msra.mxu0 0.0
    %2687 = vmatprep.subr.mxu0 0.0
    %2688 = vmatpush1.msra.mxu0 0.0
    %2689 = vmatprep.subr.mxu0 0.0
    %2690 = vmatpush1.msra.mxu0 0.0
    %2691 = vmatprep.mubr.f32.mxu0 0.0
    %2692 = vmatmul.mubr.f32.gmra.mrb[0].mxu0 %v2622
    %v2693 = vpop.f32.mrb[0].mxu0
    %v2694 = vadd.f32 %v1349, %v2693
    %v2695 = vpop.f32.mrb[0].mxu0
    %2696 = vmatprep.mubr.f32.mxu0 0.0
    %2697 = vmatmul.mubr.f32.gmra.mrb[0].mxu0 %v2625
    %v2698 = vpop.f32.mrb[0].mxu0
    %v2699 = vadd.f32 %v1349, %v2698
    %v2700 = vpop.f32.mrb[0].mxu0
    %2701 = vdwg.mxu0
    %v2702 = vmax.f32 %v2694, 0.0
    %v2703 = vmax.f32 %v2699, 0.0
    %v2705 = vsel %vm1437, %v2702, 0
    %v2708 = vsel %vm1437, %v2703, 0
    %2710 = vmatprep.subr.mxu0 0.0
    %2711 = vmatpush1.msra.mxu0 %v251
    %2712 = vmatprep.subr.mxu0 0.0
    %2713 = vmatpush1.msra.mxu0 %v252
    %2714 = vmatprep.subr.mxu0 0.0
    %2715 = vmatpush1.msra.mxu0 %v253
    %2716 = vmatprep.subr.mxu0 0.0
    %2717 = vmatpush1.msra.mxu0 %v254
    %2718 = vmatprep.subr.mxu0 0.0
    %2719 = vmatpush1.msra.mxu0 %v255
    %2720 = vmatprep.subr.mxu0 0.0
    %2721 = vmatpush1.msra.mxu0 %v256
    %2722 = vmatprep.subr.mxu0 0.0
    %2723 = vmatpush1.msra.mxu0 %v257
    %2724 = vmatprep.subr.mxu0 0.0
    %2725 = vmatpush1.msra.mxu0 %v258
    %2726 = vmatprep.subr.mxu0 0.0
    %2727 = vmatpush1.msra.mxu0 0.0
    %2728 = vmatprep.subr.mxu0 0.0
    %2729 = vmatpush1.msra.mxu0 0.0
    %2730 = vmatprep.subr.mxu0 0.0
    %2731 = vmatpush1.msra.mxu0 0.0
    %2732 = vmatprep.subr.mxu0 0.0
    %2733 = vmatpush1.msra.mxu0 0.0
    %2734 = vmatprep.subr.mxu0 0.0
    %2735 = vmatpush1.msra.mxu0 0.0
    %2736 = vmatprep.subr.mxu0 0.0
    %2737 = vmatpush1.msra.mxu0 0.0
    %2738 = vmatprep.subr.mxu0 0.0
    %2739 = vmatpush1.msra.mxu0 0.0
    %2740 = vmatprep.subr.mxu0 0.0
    %2741 = vmatpush1.msra.mxu0 0.0
    %2742 = vmatprep.subr.mxu0 0.0
    %2743 = vmatpush1.msra.mxu0 0.0
    %2744 = vmatprep.subr.mxu0 0.0
    %2745 = vmatpush1.msra.mxu0 0.0
    %2746 = vmatprep.subr.mxu0 0.0
    %2747 = vmatpush1.msra.mxu0 0.0
    %2748 = vmatprep.subr.mxu0 0.0
    %2749 = vmatpush1.msra.mxu0 0.0
    %2750 = vmatprep.subr.mxu0 0.0
    %2751 = vmatpush1.msra.mxu0 0.0
    %2752 = vmatprep.subr.mxu0 0.0
    %2753 = vmatpush1.msra.mxu0 0.0
    %2754 = vmatprep.subr.mxu0 0.0
    %2755 = vmatpush1.msra.mxu0 0.0
    %2756 = vmatprep.subr.mxu0 0.0
    %2757 = vmatpush1.msra.mxu0 0.0
    %2758 = vmatprep.subr.mxu0 0.0
    %2759 = vmatpush1.msra.mxu0 0.0
    %2760 = vmatprep.subr.mxu0 0.0
    %2761 = vmatpush1.msra.mxu0 0.0
    %2762 = vmatprep.subr.mxu0 0.0
    %2763 = vmatpush1.msra.mxu0 0.0
    %2764 = vmatprep.subr.mxu0 0.0
    %2765 = vmatpush1.msra.mxu0 0.0
    %2766 = vmatprep.subr.mxu0 0.0
    %2767 = vmatpush1.msra.mxu0 0.0
    %2768 = vmatprep.subr.mxu0 0.0
    %2769 = vmatpush1.msra.mxu0 0.0
    %2770 = vmatprep.subr.mxu0 0.0
    %2771 = vmatpush1.msra.mxu0 0.0
    %2772 = vmatprep.subr.mxu0 0.0
    %2773 = vmatpush1.msra.mxu0 0.0
    %2774 = vmatprep.mubr.f32.mxu0 0.0
    %2775 = vmatmul.mubr.f32.gmra.mrb[0].mxu0 %v2705
    %v2776 = vpop.f32.mrb[0].mxu0
    %v2777 = vadd.f32 %v1436, %v2776
    %v2778 = vpop.f32.mrb[0].mxu0
    %2779 = vmatprep.mubr.f32.mxu0 0.0
    %2780 = vmatmul.mubr.f32.gmra.mrb[0].mxu0 %v2708
    %v2781 = vpop.f32.mrb[0].mxu0
    %v2782 = vadd.f32 %v1436, %v2781
    %v2783 = vpop.f32.mrb[0].mxu0
    %2784 = vdwg.mxu0
    %v2785 = vadd.f32 %v2619, %v2777
    %v2786 = vadd.f32 %v2620, %v2782
    %v2787 = vsel %vm226, %v2785, 0.0
    %v2788 = vsel %vm228, %v2786, 0.0
    %v2789 = vadd.f32 %v2787, %v2788
    %v2790 = vrot.slane %v2789, 4
    %v2791 = vadd.f32 %v2789, %v2790
    %v2792 = vrot.slane %v2791, 2
    %v2793 = vadd.f32 %v2791, %v2792
    %v2794 = vrot.slane %v2793, 1
    %v2795 = vadd.f32 %v2793, %v2794
    %v2796 = vmul.f32 %v2795, %v1314
    %v2797 = vsub.f32 %v2785, %v2796
    %v2798 = vsub.f32 %v2786, %v2796
    %v2799 = vmul.f32 %v2797, %v2797
    %v2800 = vmul.f32 %v2798, %v2798
    %v2801 = vsel %vm226, %v2799, 0.0
    %v2802 = vsel %vm228, %v2800, 0.0
    %v2803 = vadd.f32 %v2801, %v2802
    %v2804 = vrot.slane %v2803, 4
    %v2805 = vadd.f32 %v2803, %v2804
    %v2806 = vrot.slane %v2805, 2
    %v2807 = vadd.f32 %v2805, %v2806
    %v2808 = vrot.slane %v2807, 1
    %v2809 = vadd.f32 %v2807, %v2808
    %v2810 = vmul.f32 %v2809, %v1314
    %v2811 = vadd.f32 %v2810, 1e-05
    %v2812 = vrsqrt.pop %v2811
    %v2813 = vmul.f32 %v2797, %v2812
    %v2814 = vmul.f32 %v2798, %v2812
    %v2815 = vmul.f32 %v2813, %v1552
    %v2816 = vmul.f32 %v2814, %v1552
    %v2817 = vadd.f32 %v2815, %v1558
    %v2818 = vadd.f32 %v2816, %v1558
    %2819 = vst.msk [vmem:[%s230] sm:$0xff] %vm226, %v2817
    %2820 = vst.msk [vmem:[%s230 + $0x8] sm:$0x1] %vm228, %v2818
    %s2821 = scalar_lea.vmem %s4, 32
    %v2822 = vld [vmem:[%s2821] sm:$0xff]
    %v2823 = vld [vmem:[%s2821 + $0x8] sm:$0xff]
    %v2824 = vld [vmem:[%s2821 + $0x10] sm:$0xff]
    %v2825 = vld [vmem:[%s2821 + $0x18] sm:$0xff]
    %s2826 = scalar_lea.vmem %s5, 32
    %v2827 = vld [vmem:[%s2826] sm:$0xff]
    %v2828 = vld [vmem:[%s2826 + $0x8] sm:$0xff]
    %v2829 = vld [vmem:[%s2826 + $0x10] sm:$0xff]
    %v2830 = vld [vmem:[%s2826 + $0x18] sm:$0xff]
    %s2831 = scalar_lea.vmem %s6, 32
    %v2832 = vld [vmem:[%s2831] sm:$0xff]
    %v2833 = vld [vmem:[%s2831 + $0x8] sm:$0xff]
    %v2834 = vld [vmem:[%s2831 + $0x10] sm:$0xff]
    %v2835 = vld [vmem:[%s2831 + $0x18] sm:$0xff]
    %s2836 = scalar_lea.vmem %s7, 64
    %v2837 = vld [vmem:[%s2836] sm:$0xff]
    %v2838 = vld [vmem:[%s2836 + $0x8] sm:$0xff]
    %v2839 = vld [vmem:[%s2836 + $0x10] sm:$0xff]
    %v2840 = vld [vmem:[%s2836 + $0x18] sm:$0xff]
    %v2841 = vld [vmem:[%s2836 + $0x20] sm:$0xff]
    %v2842 = vld [vmem:[%s2836 + $0x28] sm:$0xff]
    %v2843 = vld [vmem:[%s2836 + $0x30] sm:$0xff]
    %v2844 = vld [vmem:[%s2836 + $0x38] sm:$0xff]
    %s2845 = scalar_lea.vmem %s8, 8
    %v2846 = vld [vmem:[%s2845] sm:$0x7f]
    %v2847 = vld [vmem:[#allocation2] sm:$0xff]
    %v2848 = vld [vmem:[#allocation2 + $0x8] sm:$0x1]
    %v2850 = vsel %vm226, %v2847, 0
    %v2853 = vsel %vm226, %v2848, 0
    %2855 = vmatprep.subr.mxu0 0.0
    %2856 = vmatpush1.msra.mxu0 %v2822
    %2857 = vmatprep.subr.mxu0 0.0
    %2858 = vmatpush1.msra.mxu0 %v2823
    %2859 = vmatprep.subr.mxu0 0.0
    %2860 = vmatpush1.msra.mxu0 %v2824
    %2861 = vmatprep.subr.mxu0 0.0
    %2862 = vmatpush1.msra.mxu0 %v2825
    %2863 = vmatprep.subr.mxu0 0.0
    %2864 = vmatpush1.msra.mxu0 0.0
    %2865 = vmatprep.subr.mxu0 0.0
    %2866 = vmatpush1.msra.mxu0 0.0
    %2867 = vmatprep.subr.mxu0 0.0
    %2868 = vmatpush1.msra.mxu0 0.0
    %2869 = vmatprep.subr.mxu0 0.0
    %2870 = vmatpush1.msra.mxu0 0.0
    %2871 = vmatprep.subr.mxu0 0.0
    %2872 = vmatpush1.msra.mxu0 0.0
    %2873 = vmatprep.subr.mxu0 0.0
    %2874 = vmatpush1.msra.mxu0 0.0
    %2875 = vmatprep.subr.mxu0 0.0
    %2876 = vmatpush1.msra.mxu0 0.0
    %2877 = vmatprep.subr.mxu0 0.0
    %2878 = vmatpush1.msra.mxu0 0.0
    %2879 = vmatprep.subr.mxu0 0.0
    %2880 = vmatpush1.msra.mxu0 0.0
    %2881 = vmatprep.subr.mxu0 0.0
    %2882 = vmatpush1.msra.mxu0 0.0
    %2883 = vmatprep.subr.mxu0 0.0
    %2884 = vmatpush1.msra.mxu0 0.0
    %2885 = vmatprep.subr.mxu0 0.0
    %2886 = vmatpush1.msra.mxu0 0.0
    %2887 = vmatprep.subr.mxu0 0.0
    %2888 = vmatpush1.msra.mxu0 0.0
    %2889 = vmatprep.subr.mxu0 0.0
    %2890 = vmatpush1.msra.mxu0 0.0
    %2891 = vmatprep.subr.mxu0 0.0
    %2892 = vmatpush1.msra.mxu0 0.0
    %2893 = vmatprep.subr.mxu0 0.0
    %2894 = vmatpush1.msra.mxu0 0.0
    %2895 = vmatprep.subr.mxu0 0.0
    %2896 = vmatpush1.msra.mxu0 0.0
    %2897 = vmatprep.subr.mxu0 0.0
    %2898 = vmatpush1.msra.mxu0 0.0
    %2899 = vmatprep.subr.mxu0 0.0
    %2900 = vmatpush1.msra.mxu0 0.0
    %2901 = vmatprep.subr.mxu0 0.0
    %2902 = vmatpush1.msra.mxu0 0.0
    %2903 = vmatprep.subr.mxu0 0.0
    %2904 = vmatpush1.msra.mxu0 0.0
    %2905 = vmatprep.subr.mxu0 0.0
    %2906 = vmatpush1.msra.mxu0 0.0
    %2907 = vmatprep.subr.mxu0 0.0
    %2908 = vmatpush1.msra.mxu0 0.0
    %2909 = vmatprep.subr.mxu0 0.0
    %2910 = vmatpush1.msra.mxu0 0.0
    %2911 = vmatprep.subr.mxu0 0.0
    %2912 = vmatpush1.msra.mxu0 0.0
    %2913 = vmatprep.subr.mxu0 0.0
    %2914 = vmatpush1.msra.mxu0 0.0
    %2915 = vmatprep.subr.mxu0 0.0
    %2916 = vmatpush1.msra.mxu0 0.0
    %2917 = vmatprep.subr.mxu0 0.0
    %2918 = vmatpush1.msra.mxu0 0.0
    %2919 = vmatprep.mubr.f32.mxu0 0.0
    %2920 = vmatmul.mubr.f32.gmra.mrb[0].mxu0 %v2850
    %v2921 = vpop.f32.mrb[0].mxu0
    %v2922 = vadd.f32 0.0, %v2921
    %v2923 = vpop.f32.mrb[0].mxu0
    %2924 = vmatprep.mubr.f32.mxu0 0.0
    %2925 = vmatmul.mubr.f32.gmra.mrb[0].mxu0 %v2853
    %v2926 = vpop.f32.mrb[0].mxu0
    %v2927 = vadd.f32 0.0, %v2926
    %v2928 = vpop.f32.mrb[0].mxu0
    %2929 = vdwg.mxu0
    %2932 = vrot.lane.b32.xlu0 %v2922, 96
    %v2933 = vpop.permute.xlu0 %2932
    %2934 = vrot.lane.b32.xlu0 %v2927, 96
    %v2935 = vpop.permute.xlu0 %2934
    %v2936 = vsel %vm349, %v2922, 0
    %v2938 = vsel %vm349, %v2927, 0
    %v2940 = vsel %vm349, %v2933, 0
    %v2942 = vsel %vm349, %v2935, 0
    %2944 = vmatprep.subr.mxu0 0.0
    %2945 = vmatpush1.xpose.msra.mxu0 %v2940
    %2946 = vmatprep.subr.mxu0 0.0
    %2947 = vmatpush1.xpose.msra.mxu0 %v2942
    %2948 = vmatprep.subr.mxu0 0.0
    %2949 = vmatpush1.xpose.msra.mxu0 0.0
    %2950 = vmatprep.subr.mxu0 0.0
    %2951 = vmatpush1.xpose.msra.mxu0 0.0
    %2952 = vmatprep.subr.mxu0 0.0
    %2953 = vmatpush1.xpose.msra.mxu0 0.0
    %2954 = vmatprep.subr.mxu0 0.0
    %2955 = vmatpush1.xpose.msra.mxu0 0.0
    %2956 = vmatprep.subr.mxu0 0.0
    %2957 = vmatpush1.xpose.msra.mxu0 0.0
    %2958 = vmatprep.subr.mxu0 0.0
    %2959 = vmatpush1.xpose.msra.mxu0 0.0
    %2960 = vmatprep.subr.mxu0 0.0
    %2961 = vmatpush1.xpose.msra.mxu0 0.0
    %2962 = vmatprep.subr.mxu0 0.0
    %2963 = vmatpush1.xpose.msra.mxu0 0.0
    %2964 = vmatprep.subr.mxu0 0.0
    %2965 = vmatpush1.xpose.msra.mxu0 0.0
    %2966 = vmatprep.subr.mxu0 0.0
    %2967 = vmatpush1.xpose.msra.mxu0 0.0
    %2968 = vmatprep.subr.mxu0 0.0
    %2969 = vmatpush1.xpose.msra.mxu0 0.0
    %2970 = vmatprep.subr.mxu0 0.0
    %2971 = vmatpush1.xpose.msra.mxu0 0.0
    %2972 = vmatprep.subr.mxu0 0.0
    %2973 = vmatpush1.xpose.msra.mxu0 0.0
    %2974 = vmatprep.subr.mxu0 0.0
    %2975 = vmatpush1.xpose.msra.mxu0 0.0
    %2976 = vmatprep.subr.mxu0 0.0
    %2977 = vmatpush1.xpose.msra.mxu0 0.0
    %2978 = vmatprep.subr.mxu0 0.0
    %2979 = vmatpush1.xpose.msra.mxu0 0.0
    %2980 = vmatprep.subr.mxu0 0.0
    %2981 = vmatpush1.xpose.msra.mxu0 0.0
    %2982 = vmatprep.subr.mxu0 0.0
    %2983 = vmatpush1.xpose.msra.mxu0 0.0
    %2984 = vmatprep.subr.mxu0 0.0
    %2985 = vmatpush1.xpose.msra.mxu0 0.0
    %2986 = vmatprep.subr.mxu0 0.0
    %2987 = vmatpush1.xpose.msra.mxu0 0.0
    %2988 = vmatprep.subr.mxu0 0.0
    %2989 = vmatpush1.xpose.msra.mxu0 0.0
    %2990 = vmatprep.subr.mxu0 0.0
    %2991 = vmatpush1.xpose.msra.mxu0 0.0
    %2992 = vmatprep.subr.mxu0 0.0
    %2993 = vmatpush1.xpose.msra.mxu0 0.0
    %2994 = vmatprep.subr.mxu0 0.0
    %2995 = vmatpush1.xpose.msra.mxu0 0.0
    %2996 = vmatprep.subr.mxu0 0.0
    %2997 = vmatpush1.xpose.msra.mxu0 0.0
    %2998 = vmatprep.subr.mxu0 0.0
    %2999 = vmatpush1.xpose.msra.mxu0 0.0
    %3000 = vmatprep.subr.mxu0 0.0
    %3001 = vmatpush1.xpose.msra.mxu0 0.0
    %3002 = vmatprep.subr.mxu0 0.0
    %3003 = vmatpush1.xpose.msra.mxu0 0.0
    %3004 = vmatprep.subr.mxu0 0.0
    %3005 = vmatpush1.xpose.msra.mxu0 0.0
    %3006 = vmatprep.subr.mxu0 0.0
    %3007 = vmatpush1.xpose.msra.mxu0 0.0
    %3008 = vmatprep.mubr.f32.mxu0 0.0
    %3009 = vmatmul.mubr.f32.gmra.mrb[0].mxu0 %v2936
    %v3010 = vpop.f32.mrb[0].mxu0
    %v3011 = vadd.f32 0.0, %v3010
    %v3012 = vpop.f32.mrb[0].mxu0
    %3013 = vmatprep.mubr.f32.mxu0 0.0
    %3014 = vmatmul.mubr.f32.gmra.mrb[0].mxu0 %v2938
    %v3015 = vpop.f32.mrb[0].mxu0
    %v3016 = vadd.f32 0.0, %v3015
    %v3017 = vpop.f32.mrb[0].mxu0
    %3018 = vdwg.mxu0
    %v3019 = vmul.f32 %v3011, 0.35355338
    %v3020 = vmul.f32 %v3016, 0.35355338
    %v3021 = vsel %vm435, %v3019, -inf
    %3022 = vmax.xlane.f32.xlu0 %v3021
    %v3023 = vpop.xlane.xlu0 %3022
    %v3024 = vsel %vm439, %v3020, -inf
    %3025 = vmax.xlane.f32.xlu0 %v3024
    %v3026 = vpop.xlane.xlu0 %3025
    %v3027 = vsub.f32 %v3019, %v3023
    %v3028 = vsub.f32 %v3020, %v3026
    %v3029 = vmul.f32 %v3027, 1.442695
    %v3030 = vpow.pop %v3029
    %v3031 = vmul.f32 %v3028, 1.442695
    %v3032 = vpow.pop %v3031
    %v3033 = vsel %vm435, %v3030, 0.0
    %3034 = vadd.xlane.f32.xlu0 %v3033
    %v3035 = vpop.xlane.xlu0 %3034
    %v3036 = vsel %vm439, %v3032, 0.0
    %3037 = vadd.xlane.f32.xlu0 %v3036
    %v3038 = vpop.xlane.xlu0 %3037
    %v3039 = vrcp.pop %v3035
    %v3040 = vmul.f32 %v3030, %v3039
    %v3041 = vrcp.pop %v3038
    %v3042 = vmul.f32 %v3032, %v3041
    %3043 = vrot.lane.b32.xlu0 %v2922, 64
    %v3044 = vpop.permute.xlu0 %3043
    %3045 = vrot.lane.b32.xlu0 %v2927, 64
    %v3046 = vpop.permute.xlu0 %3045
    %v3049 = vsel %vm435, %v3040, 0
    %v3052 = vsel %vm435, %v3042, 0
    %v3054 = vsel %vm470, %v3046, 0
    %3056 = vmatprep.subr.mxu0 0.0
    %3057 = vmatpush1.msra.mxu0 %v3044
    %3058 = vmatprep.subr.mxu0 0.0
    %3059 = vmatpush1.msra.mxu0 %v3054
    %3060 = vmatprep.subr.mxu0 0.0
    %3061 = vmatpush1.msra.mxu0 0.0
    %3062 = vmatprep.subr.mxu0 0.0
    %3063 = vmatpush1.msra.mxu0 0.0
    %3064 = vmatprep.subr.mxu0 0.0
    %3065 = vmatpush1.msra.mxu0 0.0
    %3066 = vmatprep.subr.mxu0 0.0
    %3067 = vmatpush1.msra.mxu0 0.0
    %3068 = vmatprep.subr.mxu0 0.0
    %3069 = vmatpush1.msra.mxu0 0.0
    %3070 = vmatprep.subr.mxu0 0.0
    %3071 = vmatpush1.msra.mxu0 0.0
    %3072 = vmatprep.subr.mxu0 0.0
    %3073 = vmatpush1.msra.mxu0 0.0
    %3074 = vmatprep.subr.mxu0 0.0
    %3075 = vmatpush1.msra.mxu0 0.0
    %3076 = vmatprep.subr.mxu0 0.0
    %3077 = vmatpush1.msra.mxu0 0.0
    %3078 = vmatprep.subr.mxu0 0.0
    %3079 = vmatpush1.msra.mxu0 0.0
    %3080 = vmatprep.subr.mxu0 0.0
    %3081 = vmatpush1.msra.mxu0 0.0
    %3082 = vmatprep.subr.mxu0 0.0
    %3083 = vmatpush1.msra.mxu0 0.0
    %3084 = vmatprep.subr.mxu0 0.0
    %3085 = vmatpush1.msra.mxu0 0.0
    %3086 = vmatprep.subr.mxu0 0.0
    %3087 = vmatpush1.msra.mxu0 0.0
    %3088 = vmatprep.subr.mxu0 0.0
    %3089 = vmatpush1.msra.mxu0 0.0
    %3090 = vmatprep.subr.mxu0 0.0
    %3091 = vmatpush1.msra.mxu0 0.0
    %3092 = vmatprep.subr.mxu0 0.0
    %3093 = vmatpush1.msra.mxu0 0.0
    %3094 = vmatprep.subr.mxu0 0.0
    %3095 = vmatpush1.msra.mxu0 0.0
    %3096 = vmatprep.subr.mxu0 0.0
    %3097 = vmatpush1.msra.mxu0 0.0
    %3098 = vmatprep.subr.mxu0 0.0
    %3099 = vmatpush1.msra.mxu0 0.0
    %3100 = vmatprep.subr.mxu0 0.0
    %3101 = vmatpush1.msra.mxu0 0.0
    %3102 = vmatprep.subr.mxu0 0.0
    %3103 = vmatpush1.msra.mxu0 0.0
    %3104 = vmatprep.subr.mxu0 0.0
    %3105 = vmatpush1.msra.mxu0 0.0
    %3106 = vmatprep.subr.mxu0 0.0
    %3107 = vmatpush1.msra.mxu0 0.0
    %3108 = vmatprep.subr.mxu0 0.0
    %3109 = vmatpush1.msra.mxu0 0.0
    %3110 = vmatprep.subr.mxu0 0.0
    %3111 = vmatpush1.msra.mxu0 0.0
    %3112 = vmatprep.subr.mxu0 0.0
    %3113 = vmatpush1.msra.mxu0 0.0
    %3114 = vmatprep.subr.mxu0 0.0
    %3115 = vmatpush1.msra.mxu0 0.0
    %3116 = vmatprep.subr.mxu0 0.0
    %3117 = vmatpush1.msra.mxu0 0.0
    %3118 = vmatprep.subr.mxu0 0.0
    %3119 = vmatpush1.msra.mxu0 0.0
    %3120 = vmatprep.mubr.f32.mxu0 0.0
    %3121 = vmatmul.mubr.f32.gmra.mrb[0].mxu0 %v3049
    %v3122 = vpop.f32.mrb[0].mxu0
    %v3123 = vadd.f32 0.0, %v3122
    %v3124 = vpop.f32.mrb[0].mxu0
    %3125 = vmatprep.mubr.f32.mxu0 0.0
    %3126 = vmatmul.mubr.f32.gmra.mrb[0].mxu0 %v3052
    %v3127 = vpop.f32.mrb[0].mxu0
    %v3128 = vadd.f32 0.0, %v3127
    %v3129 = vpop.f32.mrb[0].mxu0
    %3130 = vdwg.mxu0
    %3131 = vst.msk [vmem:[#allocation3] sm:$0xff] %vm349, %v3123
    %3132 = vst.msk [vmem:[#allocation3 + $0x8] sm:$0x1] %vm549, %v3128
    %3133 = vrot.lane.b32.xlu0 %v2922, 120
    %v3134 = vpop.permute.xlu0 %3133
    %3135 = vrot.lane.b32.xlu0 %v2927, 120
    %v3136 = vpop.permute.xlu0 %3135
    %3137 = vrot.lane.b32.xlu0 %v2922, 88
    %v3138 = vpop.permute.xlu0 %3137
    %3139 = vrot.lane.b32.xlu0 %v2927, 88
    %v3140 = vpop.permute.xlu0 %3139
    %v3141 = vsel %vm349, %v3134, 0
    %v3143 = vsel %vm349, %v3136, 0
    %v3145 = vsel %vm349, %v3138, 0
    %v3147 = vsel %vm349, %v3140, 0
    %3149 = vmatprep.subr.mxu0 0.0
    %3150 = vmatpush1.xpose.msra.mxu0 %v3145
    %3151 = vmatprep.subr.mxu0 0.0
    %3152 = vmatpush1.xpose.msra.mxu0 %v3147
    %3153 = vmatprep.subr.mxu0 0.0
    %3154 = vmatpush1.xpose.msra.mxu0 0.0
    %3155 = vmatprep.subr.mxu0 0.0
    %3156 = vmatpush1.xpose.msra.mxu0 0.0
    %3157 = vmatprep.subr.mxu0 0.0
    %3158 = vmatpush1.xpose.msra.mxu0 0.0
    %3159 = vmatprep.subr.mxu0 0.0
    %3160 = vmatpush1.xpose.msra.mxu0 0.0
    %3161 = vmatprep.subr.mxu0 0.0
    %3162 = vmatpush1.xpose.msra.mxu0 0.0
    %3163 = vmatprep.subr.mxu0 0.0
    %3164 = vmatpush1.xpose.msra.mxu0 0.0
    %3165 = vmatprep.subr.mxu0 0.0
    %3166 = vmatpush1.xpose.msra.mxu0 0.0
    %3167 = vmatprep.subr.mxu0 0.0
    %3168 = vmatpush1.xpose.msra.mxu0 0.0
    %3169 = vmatprep.subr.mxu0 0.0
    %3170 = vmatpush1.xpose.msra.mxu0 0.0
    %3171 = vmatprep.subr.mxu0 0.0
    %3172 = vmatpush1.xpose.msra.mxu0 0.0
    %3173 = vmatprep.subr.mxu0 0.0
    %3174 = vmatpush1.xpose.msra.mxu0 0.0
    %3175 = vmatprep.subr.mxu0 0.0
    %3176 = vmatpush1.xpose.msra.mxu0 0.0
    %3177 = vmatprep.subr.mxu0 0.0
    %3178 = vmatpush1.xpose.msra.mxu0 0.0
    %3179 = vmatprep.subr.mxu0 0.0
    %3180 = vmatpush1.xpose.msra.mxu0 0.0
    %3181 = vmatprep.subr.mxu0 0.0
    %3182 = vmatpush1.xpose.msra.mxu0 0.0
    %3183 = vmatprep.subr.mxu0 0.0
    %3184 = vmatpush1.xpose.msra.mxu0 0.0
    %3185 = vmatprep.subr.mxu0 0.0
    %3186 = vmatpush1.xpose.msra.mxu0 0.0
    %3187 = vmatprep.subr.mxu0 0.0
    %3188 = vmatpush1.xpose.msra.mxu0 0.0
    %3189 = vmatprep.subr.mxu0 0.0
    %3190 = vmatpush1.xpose.msra.mxu0 0.0
    %3191 = vmatprep.subr.mxu0 0.0
    %3192 = vmatpush1.xpose.msra.mxu0 0.0
    %3193 = vmatprep.subr.mxu0 0.0
    %3194 = vmatpush1.xpose.msra.mxu0 0.0
    %3195 = vmatprep.subr.mxu0 0.0
    %3196 = vmatpush1.xpose.msra.mxu0 0.0
    %3197 = vmatprep.subr.mxu0 0.0
    %3198 = vmatpush1.xpose.msra.mxu0 0.0
    %3199 = vmatprep.subr.mxu0 0.0
    %3200 = vmatpush1.xpose.msra.mxu0 0.0
    %3201 = vmatprep.subr.mxu0 0.0
    %3202 = vmatpush1.xpose.msra.mxu0 0.0
    %3203 = vmatprep.subr.mxu0 0.0
    %3204 = vmatpush1.xpose.msra.mxu0 0.0
    %3205 = vmatprep.subr.mxu0 0.0
    %3206 = vmatpush1.xpose.msra.mxu0 0.0
    %3207 = vmatprep.subr.mxu0 0.0
    %3208 = vmatpush1.xpose.msra.mxu0 0.0
    %3209 = vmatprep.subr.mxu0 0.0
    %3210 = vmatpush1.xpose.msra.mxu0 0.0
    %3211 = vmatprep.subr.mxu0 0.0
    %3212 = vmatpush1.xpose.msra.mxu0 0.0
    %3213 = vmatprep.mubr.f32.mxu0 0.0
    %3214 = vmatmul.mubr.f32.gmra.mrb[0].mxu0 %v3141
    %v3215 = vpop.f32.mrb[0].mxu0
    %v3216 = vadd.f32 0.0, %v3215
    %v3217 = vpop.f32.mrb[0].mxu0
    %3218 = vmatprep.mubr.f32.mxu0 0.0
    %3219 = vmatmul.mubr.f32.gmra.mrb[0].mxu0 %v3143
    %v3220 = vpop.f32.mrb[0].mxu0
    %v3221 = vadd.f32 0.0, %v3220
    %v3222 = vpop.f32.mrb[0].mxu0
    %3223 = vdwg.mxu0
    %v3224 = vmul.f32 %v3216, 0.35355338
    %v3225 = vmul.f32 %v3221, 0.35355338
    %v3226 = vsel %vm435, %v3224, -inf
    %3227 = vmax.xlane.f32.xlu0 %v3226
    %v3228 = vpop.xlane.xlu0 %3227
    %v3229 = vsel %vm439, %v3225, -inf
    %3230 = vmax.xlane.f32.xlu0 %v3229
    %v3231 = vpop.xlane.xlu0 %3230
    %v3232 = vsub.f32 %v3224, %v3228
    %v3233 = vsub.f32 %v3225, %v3231
    %v3234 = vmul.f32 %v3232, 1.442695
    %v3235 = vpow.pop %v3234
    %v3236 = vmul.f32 %v3233, 1.442695
    %v3237 = vpow.pop %v3236
    %v3238 = vsel %vm435, %v3235, 0.0
    %3239 = vadd.xlane.f32.xlu0 %v3238
    %v3240 = vpop.xlane.xlu0 %3239
    %v3241 = vsel %vm439, %v3237, 0.0
    %3242 = vadd.xlane.f32.xlu0 %v3241
    %v3243 = vpop.xlane.xlu0 %3242
    %v3244 = vrcp.pop %v3240
    %v3245 = vmul.f32 %v3235, %v3244
    %v3246 = vrcp.pop %v3243
    %v3247 = vmul.f32 %v3237, %v3246
    %3248 = vrot.lane.b32.xlu0 %v2922, 56
    %v3249 = vpop.permute.xlu0 %3248
    %3250 = vrot.lane.b32.xlu0 %v2927, 56
    %v3251 = vpop.permute.xlu0 %3250
    %v3254 = vsel %vm435, %v3245, 0
    %v3257 = vsel %vm435, %v3247, 0
    %v3259 = vsel %vm470, %v3251, 0
    %3261 = vmatprep.subr.mxu0 0.0
    %3262 = vmatpush1.msra.mxu0 %v3249
    %3263 = vmatprep.subr.mxu0 0.0
    %3264 = vmatpush1.msra.mxu0 %v3259
    %3265 = vmatprep.subr.mxu0 0.0
    %3266 = vmatpush1.msra.mxu0 0.0
    %3267 = vmatprep.subr.mxu0 0.0
    %3268 = vmatpush1.msra.mxu0 0.0
    %3269 = vmatprep.subr.mxu0 0.0
    %3270 = vmatpush1.msra.mxu0 0.0
    %3271 = vmatprep.subr.mxu0 0.0
    %3272 = vmatpush1.msra.mxu0 0.0
    %3273 = vmatprep.subr.mxu0 0.0
    %3274 = vmatpush1.msra.mxu0 0.0
    %3275 = vmatprep.subr.mxu0 0.0
    %3276 = vmatpush1.msra.mxu0 0.0
    %3277 = vmatprep.subr.mxu0 0.0
    %3278 = vmatpush1.msra.mxu0 0.0
    %3279 = vmatprep.subr.mxu0 0.0
    %3280 = vmatpush1.msra.mxu0 0.0
    %3281 = vmatprep.subr.mxu0 0.0
    %3282 = vmatpush1.msra.mxu0 0.0
    %3283 = vmatprep.subr.mxu0 0.0
    %3284 = vmatpush1.msra.mxu0 0.0
    %3285 = vmatprep.subr.mxu0 0.0
    %3286 = vmatpush1.msra.mxu0 0.0
    %3287 = vmatprep.subr.mxu0 0.0
    %3288 = vmatpush1.msra.mxu0 0.0
    %3289 = vmatprep.subr.mxu0 0.0
    %3290 = vmatpush1.msra.mxu0 0.0
    %3291 = vmatprep.subr.mxu0 0.0
    %3292 = vmatpush1.msra.mxu0 0.0
    %3293 = vmatprep.subr.mxu0 0.0
    %3294 = vmatpush1.msra.mxu0 0.0
    %3295 = vmatprep.subr.mxu0 0.0
    %3296 = vmatpush1.msra.mxu0 0.0
    %3297 = vmatprep.subr.mxu0 0.0
    %3298 = vmatpush1.msra.mxu0 0.0
    %3299 = vmatprep.subr.mxu0 0.0
    %3300 = vmatpush1.msra.mxu0 0.0
    %3301 = vmatprep.subr.mxu0 0.0
    %3302 = vmatpush1.msra.mxu0 0.0
    %3303 = vmatprep.subr.mxu0 0.0
    %3304 = vmatpush1.msra.mxu0 0.0
    %3305 = vmatprep.subr.mxu0 0.0
    %3306 = vmatpush1.msra.mxu0 0.0
    %3307 = vmatprep.subr.mxu0 0.0
    %3308 = vmatpush1.msra.mxu0 0.0
    %3309 = vmatprep.subr.mxu0 0.0
    %3310 = vmatpush1.msra.mxu0 0.0
    %3311 = vmatprep.subr.mxu0 0.0
    %3312 = vmatpush1.msra.mxu0 0.0
    %3313 = vmatprep.subr.mxu0 0.0
    %3314 = vmatpush1.msra.mxu0 0.0
    %3315 = vmatprep.subr.mxu0 0.0
    %3316 = vmatpush1.msra.mxu0 0.0
    %3317 = vmatprep.subr.mxu0 0.0
    %3318 = vmatpush1.msra.mxu0 0.0
    %3319 = vmatprep.subr.mxu0 0.0
    %3320 = vmatpush1.msra.mxu0 0.0
    %3321 = vmatprep.subr.mxu0 0.0
    %3322 = vmatpush1.msra.mxu0 0.0
    %3323 = vmatprep.subr.mxu0 0.0
    %3324 = vmatpush1.msra.mxu0 0.0
    %3325 = vmatprep.mubr.f32.mxu0 0.0
    %3326 = vmatmul.mubr.f32.gmra.mrb[0].mxu0 %v3254
    %v3327 = vpop.f32.mrb[0].mxu0
    %v3328 = vadd.f32 0.0, %v3327
    %v3329 = vpop.f32.mrb[0].mxu0
    %3330 = vmatprep.mubr.f32.mxu0 0.0
    %3331 = vmatmul.mubr.f32.gmra.mrb[0].mxu0 %v3257
    %v3332 = vpop.f32.mrb[0].mxu0
    %v3333 = vadd.f32 0.0, %v3332
    %v3334 = vpop.f32.mrb[0].mxu0
    %3335 = vdwg.mxu0
    %3338 = vrot.lane.b32.xlu0 %v3328, 8
    %v3339 = vpop.permute.xlu0 %3338
    %3340 = vrot.lane.b32.xlu0 %v3333, 8
    %v3341 = vpop.permute.xlu0 %3340
    %3344 = vst.msk [vmem:[#allocation3] sm:$0xff] %vm762, %v3339
    %3345 = vst.msk [vmem:[#allocation3 + $0x8] sm:$0x1] %vm764, %v3341
    %3346 = vrot.lane.b32.xlu0 %v2922, 112
    %v3347 = vpop.permute.xlu0 %3346
    %3348 = vrot.lane.b32.xlu0 %v2927, 112
    %v3349 = vpop.permute.xlu0 %3348
    %3350 = vrot.lane.b32.xlu0 %v2922, 80
    %v3351 = vpop.permute.xlu0 %3350
    %3352 = vrot.lane.b32.xlu0 %v2927, 80
    %v3353 = vpop.permute.xlu0 %3352
    %v3354 = vsel %vm349, %v3347, 0
    %v3356 = vsel %vm349, %v3349, 0
    %v3358 = vsel %vm349, %v3351, 0
    %v3360 = vsel %vm349, %v3353, 0
    %3362 = vmatprep.subr.mxu0 0.0
    %3363 = vmatpush1.xpose.msra.mxu0 %v3358
    %3364 = vmatprep.subr.mxu0 0.0
    %3365 = vmatpush1.xpose.msra.mxu0 %v3360
    %3366 = vmatprep.subr.mxu0 0.0
    %3367 = vmatpush1.xpose.msra.mxu0 0.0
    %3368 = vmatprep.subr.mxu0 0.0
    %3369 = vmatpush1.xpose.msra.mxu0 0.0
    %3370 = vmatprep.subr.mxu0 0.0
    %3371 = vmatpush1.xpose.msra.mxu0 0.0
    %3372 = vmatprep.subr.mxu0 0.0
    %3373 = vmatpush1.xpose.msra.mxu0 0.0
    %3374 = vmatprep.subr.mxu0 0.0
    %3375 = vmatpush1.xpose.msra.mxu0 0.0
    %3376 = vmatprep.subr.mxu0 0.0
    %3377 = vmatpush1.xpose.msra.mxu0 0.0
    %3378 = vmatprep.subr.mxu0 0.0
    %3379 = vmatpush1.xpose.msra.mxu0 0.0
    %3380 = vmatprep.subr.mxu0 0.0
    %3381 = vmatpush1.xpose.msra.mxu0 0.0
    %3382 = vmatprep.subr.mxu0 0.0
    %3383 = vmatpush1.xpose.msra.mxu0 0.0
    %3384 = vmatprep.subr.mxu0 0.0
    %3385 = vmatpush1.xpose.msra.mxu0 0.0
    %3386 = vmatprep.subr.mxu0 0.0
    %3387 = vmatpush1.xpose.msra.mxu0 0.0
    %3388 = vmatprep.subr.mxu0 0.0
    %3389 = vmatpush1.xpose.msra.mxu0 0.0
    %3390 = vmatprep.subr.mxu0 0.0
    %3391 = vmatpush1.xpose.msra.mxu0 0.0
    %3392 = vmatprep.subr.mxu0 0.0
    %3393 = vmatpush1.xpose.msra.mxu0 0.0
    %3394 = vmatprep.subr.mxu0 0.0
    %3395 = vmatpush1.xpose.msra.mxu0 0.0
    %3396 = vmatprep.subr.mxu0 0.0
    %3397 = vmatpush1.xpose.msra.mxu0 0.0
    %3398 = vmatprep.subr.mxu0 0.0
    %3399 = vmatpush1.xpose.msra.mxu0 0.0
    %3400 = vmatprep.subr.mxu0 0.0
    %3401 = vmatpush1.xpose.msra.mxu0 0.0
    %3402 = vmatprep.subr.mxu0 0.0
    %3403 = vmatpush1.xpose.msra.mxu0 0.0
    %3404 = vmatprep.subr.mxu0 0.0
    %3405 = vmatpush1.xpose.msra.mxu0 0.0
    %3406 = vmatprep.subr.mxu0 0.0
    %3407 = vmatpush1.xpose.msra.mxu0 0.0
    %3408 = vmatprep.subr.mxu0 0.0
    %3409 = vmatpush1.xpose.msra.mxu0 0.0
    %3410 = vmatprep.subr.mxu0 0.0
    %3411 = vmatpush1.xpose.msra.mxu0 0.0
    %3412 = vmatprep.subr.mxu0 0.0
    %3413 = vmatpush1.xpose.msra.mxu0 0.0
    %3414 = vmatprep.subr.mxu0 0.0
    %3415 = vmatpush1.xpose.msra.mxu0 0.0
    %3416 = vmatprep.subr.mxu0 0.0
    %3417 = vmatpush1.xpose.msra.mxu0 0.0
    %3418 = vmatprep.subr.mxu0 0.0
    %3419 = vmatpush1.xpose.msra.mxu0 0.0
    %3420 = vmatprep.subr.mxu0 0.0
    %3421 = vmatpush1.xpose.msra.mxu0 0.0
    %3422 = vmatprep.subr.mxu0 0.0
    %3423 = vmatpush1.xpose.msra.mxu0 0.0
    %3424 = vmatprep.subr.mxu0 0.0
    %3425 = vmatpush1.xpose.msra.mxu0 0.0
    %3426 = vmatprep.mubr.f32.mxu0 0.0
    %3427 = vmatmul.mubr.f32.gmra.mrb[0].mxu0 %v3354
    %v3428 = vpop.f32.mrb[0].mxu0
    %v3429 = vadd.f32 0.0, %v3428
    %v3430 = vpop.f32.mrb[0].mxu0
    %3431 = vmatprep.mubr.f32.mxu0 0.0
    %3432 = vmatmul.mubr.f32.gmra.mrb[0].mxu0 %v3356
    %v3433 = vpop.f32.mrb[0].mxu0
    %v3434 = vadd.f32 0.0, %v3433
    %v3435 = vpop.f32.mrb[0].mxu0
    %3436 = vdwg.mxu0
    %v3437 = vmul.f32 %v3429, 0.35355338
    %v3438 = vmul.f32 %v3434, 0.35355338
    %v3439 = vsel %vm435, %v3437, -inf
    %3440 = vmax.xlane.f32.xlu0 %v3439
    %v3441 = vpop.xlane.xlu0 %3440
    %v3442 = vsel %vm439, %v3438, -inf
    %3443 = vmax.xlane.f32.xlu0 %v3442
    %v3444 = vpop.xlane.xlu0 %3443
    %v3445 = vsub.f32 %v3437, %v3441
    %v3446 = vsub.f32 %v3438, %v3444
    %v3447 = vmul.f32 %v3445, 1.442695
    %v3448 = vpow.pop %v3447
    %v3449 = vmul.f32 %v3446, 1.442695
    %v3450 = vpow.pop %v3449
    %v3451 = vsel %vm435, %v3448, 0.0
    %3452 = vadd.xlane.f32.xlu0 %v3451
    %v3453 = vpop.xlane.xlu0 %3452
    %v3454 = vsel %vm439, %v3450, 0.0
    %3455 = vadd.xlane.f32.xlu0 %v3454
    %v3456 = vpop.xlane.xlu0 %3455
    %v3457 = vrcp.pop %v3453
    %v3458 = vmul.f32 %v3448, %v3457
    %v3459 = vrcp.pop %v3456
    %v3460 = vmul.f32 %v3450, %v3459
    %3461 = vrot.lane.b32.xlu0 %v2922, 48
    %v3462 = vpop.permute.xlu0 %3461
    %3463 = vrot.lane.b32.xlu0 %v2927, 48
    %v3464 = vpop.permute.xlu0 %3463
    %v3467 = vsel %vm435, %v3458, 0
    %v3470 = vsel %vm435, %v3460, 0
    %v3472 = vsel %vm470, %v3464, 0
    %3474 = vmatprep.subr.mxu0 0.0
    %3475 = vmatpush1.msra.mxu0 %v3462
    %3476 = vmatprep.subr.mxu0 0.0
    %3477 = vmatpush1.msra.mxu0 %v3472
    %3478 = vmatprep.subr.mxu0 0.0
    %3479 = vmatpush1.msra.mxu0 0.0
    %3480 = vmatprep.subr.mxu0 0.0
    %3481 = vmatpush1.msra.mxu0 0.0
    %3482 = vmatprep.subr.mxu0 0.0
    %3483 = vmatpush1.msra.mxu0 0.0
    %3484 = vmatprep.subr.mxu0 0.0
    %3485 = vmatpush1.msra.mxu0 0.0
    %3486 = vmatprep.subr.mxu0 0.0
    %3487 = vmatpush1.msra.mxu0 0.0
    %3488 = vmatprep.subr.mxu0 0.0
    %3489 = vmatpush1.msra.mxu0 0.0
    %3490 = vmatprep.subr.mxu0 0.0
    %3491 = vmatpush1.msra.mxu0 0.0
    %3492 = vmatprep.subr.mxu0 0.0
    %3493 = vmatpush1.msra.mxu0 0.0
    %3494 = vmatprep.subr.mxu0 0.0
    %3495 = vmatpush1.msra.mxu0 0.0
    %3496 = vmatprep.subr.mxu0 0.0
    %3497 = vmatpush1.msra.mxu0 0.0
    %3498 = vmatprep.subr.mxu0 0.0
    %3499 = vmatpush1.msra.mxu0 0.0
    %3500 = vmatprep.subr.mxu0 0.0
    %3501 = vmatpush1.msra.mxu0 0.0
    %3502 = vmatprep.subr.mxu0 0.0
    %3503 = vmatpush1.msra.mxu0 0.0
    %3504 = vmatprep.subr.mxu0 0.0
    %3505 = vmatpush1.msra.mxu0 0.0
    %3506 = vmatprep.subr.mxu0 0.0
    %3507 = vmatpush1.msra.mxu0 0.0
    %3508 = vmatprep.subr.mxu0 0.0
    %3509 = vmatpush1.msra.mxu0 0.0
    %3510 = vmatprep.subr.mxu0 0.0
    %3511 = vmatpush1.msra.mxu0 0.0
    %3512 = vmatprep.subr.mxu0 0.0
    %3513 = vmatpush1.msra.mxu0 0.0
    %3514 = vmatprep.subr.mxu0 0.0
    %3515 = vmatpush1.msra.mxu0 0.0
    %3516 = vmatprep.subr.mxu0 0.0
    %3517 = vmatpush1.msra.mxu0 0.0
    %3518 = vmatprep.subr.mxu0 0.0
    %3519 = vmatpush1.msra.mxu0 0.0
    %3520 = vmatprep.subr.mxu0 0.0
    %3521 = vmatpush1.msra.mxu0 0.0
    %3522 = vmatprep.subr.mxu0 0.0
    %3523 = vmatpush1.msra.mxu0 0.0
    %3524 = vmatprep.subr.mxu0 0.0
    %3525 = vmatpush1.msra.mxu0 0.0
    %3526 = vmatprep.subr.mxu0 0.0
    %3527 = vmatpush1.msra.mxu0 0.0
    %3528 = vmatprep.subr.mxu0 0.0
    %3529 = vmatpush1.msra.mxu0 0.0
    %3530 = vmatprep.subr.mxu0 0.0
    %3531 = vmatpush1.msra.mxu0 0.0
    %3532 = vmatprep.subr.mxu0 0.0
    %3533 = vmatpush1.msra.mxu0 0.0
    %3534 = vmatprep.subr.mxu0 0.0
    %3535 = vmatpush1.msra.mxu0 0.0
    %3536 = vmatprep.subr.mxu0 0.0
    %3537 = vmatpush1.msra.mxu0 0.0
    %3538 = vmatprep.mubr.f32.mxu0 0.0
    %3539 = vmatmul.mubr.f32.gmra.mrb[0].mxu0 %v3467
    %v3540 = vpop.f32.mrb[0].mxu0
    %v3541 = vadd.f32 0.0, %v3540
    %v3542 = vpop.f32.mrb[0].mxu0
    %3543 = vmatprep.mubr.f32.mxu0 0.0
    %3544 = vmatmul.mubr.f32.gmra.mrb[0].mxu0 %v3470
    %v3545 = vpop.f32.mrb[0].mxu0
    %v3546 = vadd.f32 0.0, %v3545
    %v3547 = vpop.f32.mrb[0].mxu0
    %3548 = vdwg.mxu0
    %3551 = vrot.lane.b32.xlu0 %v3541, 16
    %v3552 = vpop.permute.xlu0 %3551
    %3553 = vrot.lane.b32.xlu0 %v3546, 16
    %v3554 = vpop.permute.xlu0 %3553
    %3557 = vst.msk [vmem:[#allocation3] sm:$0xff] %vm977, %v3552
    %3558 = vst.msk [vmem:[#allocation3 + $0x8] sm:$0x1] %vm979, %v3554
    %3559 = vrot.lane.b32.xlu0 %v2922, 104
    %v3560 = vpop.permute.xlu0 %3559
    %3561 = vrot.lane.b32.xlu0 %v2927, 104
    %v3562 = vpop.permute.xlu0 %3561
    %3563 = vrot.lane.b32.xlu0 %v2922, 72
    %v3564 = vpop.permute.xlu0 %3563
    %3565 = vrot.lane.b32.xlu0 %v2927, 72
    %v3566 = vpop.permute.xlu0 %3565
    %v3567 = vsel %vm349, %v3560, 0
    %v3569 = vsel %vm349, %v3562, 0
    %v3571 = vsel %vm349, %v3564, 0
    %v3573 = vsel %vm349, %v3566, 0
    %3575 = vmatprep.subr.mxu0 0.0
    %3576 = vmatpush1.xpose.msra.mxu0 %v3571
    %3577 = vmatprep.subr.mxu0 0.0
    %3578 = vmatpush1.xpose.msra.mxu0 %v3573
    %3579 = vmatprep.subr.mxu0 0.0
    %3580 = vmatpush1.xpose.msra.mxu0 0.0
    %3581 = vmatprep.subr.mxu0 0.0
    %3582 = vmatpush1.xpose.msra.mxu0 0.0
    %3583 = vmatprep.subr.mxu0 0.0
    %3584 = vmatpush1.xpose.msra.mxu0 0.0
    %3585 = vmatprep.subr.mxu0 0.0
    %3586 = vmatpush1.xpose.msra.mxu0 0.0
    %3587 = vmatprep.subr.mxu0 0.0
    %3588 = vmatpush1.xpose.msra.mxu0 0.0
    %3589 = vmatprep.subr.mxu0 0.0
    %3590 = vmatpush1.xpose.msra.mxu0 0.0
    %3591 = vmatprep.subr.mxu0 0.0
    %3592 = vmatpush1.xpose.msra.mxu0 0.0
    %3593 = vmatprep.subr.mxu0 0.0
    %3594 = vmatpush1.xpose.msra.mxu0 0.0
    %3595 = vmatprep.subr.mxu0 0.0
    %3596 = vmatpush1.xpose.msra.mxu0 0.0
    %3597 = vmatprep.subr.mxu0 0.0
    %3598 = vmatpush1.xpose.msra.mxu0 0.0
    %3599 = vmatprep.subr.mxu0 0.0
    %3600 = vmatpush1.xpose.msra.mxu0 0.0
    %3601 = vmatprep.subr.mxu0 0.0
    %3602 = vmatpush1.xpose.msra.mxu0 0.0
    %3603 = vmatprep.subr.mxu0 0.0
    %3604 = vmatpush1.xpose.msra.mxu0 0.0
    %3605 = vmatprep.subr.mxu0 0.0
    %3606 = vmatpush1.xpose.msra.mxu0 0.0
    %3607 = vmatprep.subr.mxu0 0.0
    %3608 = vmatpush1.xpose.msra.mxu0 0.0
    %3609 = vmatprep.subr.mxu0 0.0
    %3610 = vmatpush1.xpose.msra.mxu0 0.0
    %3611 = vmatprep.subr.mxu0 0.0
    %3612 = vmatpush1.xpose.msra.mxu0 0.0
    %3613 = vmatprep.subr.mxu0 0.0
    %3614 = vmatpush1.xpose.msra.mxu0 0.0
    %3615 = vmatprep.subr.mxu0 0.0
    %3616 = vmatpush1.xpose.msra.mxu0 0.0
    %3617 = vmatprep.subr.mxu0 0.0
    %3618 = vmatpush1.xpose.msra.mxu0 0.0
    %3619 = vmatprep.subr.mxu0 0.0
    %3620 = vmatpush1.xpose.msra.mxu0 0.0
    %3621 = vmatprep.subr.mxu0 0.0
    %3622 = vmatpush1.xpose.msra.mxu0 0.0
    %3623 = vmatprep.subr.mxu0 0.0
    %3624 = vmatpush1.xpose.msra.mxu0 0.0
    %3625 = vmatprep.subr.mxu0 0.0
    %3626 = vmatpush1.xpose.msra.mxu0 0.0
    %3627 = vmatprep.subr.mxu0 0.0
    %3628 = vmatpush1.xpose.msra.mxu0 0.0
    %3629 = vmatprep.subr.mxu0 0.0
    %3630 = vmatpush1.xpose.msra.mxu0 0.0
    %3631 = vmatprep.subr.mxu0 0.0
    %3632 = vmatpush1.xpose.msra.mxu0 0.0
    %3633 = vmatprep.subr.mxu0 0.0
    %3634 = vmatpush1.xpose.msra.mxu0 0.0
    %3635 = vmatprep.subr.mxu0 0.0
    %3636 = vmatpush1.xpose.msra.mxu0 0.0
    %3637 = vmatprep.subr.mxu0 0.0
    %3638 = vmatpush1.xpose.msra.mxu0 0.0
    %3639 = vmatprep.mubr.f32.mxu0 0.0
    %3640 = vmatmul.mubr.f32.gmra.mrb[0].mxu0 %v3567
    %v3641 = vpop.f32.mrb[0].mxu0
    %v3642 = vadd.f32 0.0, %v3641
    %v3643 = vpop.f32.mrb[0].mxu0
    %3644 = vmatprep.mubr.f32.mxu0 0.0
    %3645 = vmatmul.mubr.f32.gmra.mrb[0].mxu0 %v3569
    %v3646 = vpop.f32.mrb[0].mxu0
    %v3647 = vadd.f32 0.0, %v3646
    %v3648 = vpop.f32.mrb[0].mxu0
    %3649 = vdwg.mxu0
    %v3650 = vmul.f32 %v3642, 0.35355338
    %v3651 = vmul.f32 %v3647, 0.35355338
    %v3652 = vsel %vm435, %v3650, -inf
    %3653 = vmax.xlane.f32.xlu0 %v3652
    %v3654 = vpop.xlane.xlu0 %3653
    %v3655 = vsel %vm439, %v3651, -inf
    %3656 = vmax.xlane.f32.xlu0 %v3655
    %v3657 = vpop.xlane.xlu0 %3656
    %v3658 = vsub.f32 %v3650, %v3654
    %v3659 = vsub.f32 %v3651, %v3657
    %v3660 = vmul.f32 %v3658, 1.442695
    %v3661 = vpow.pop %v3660
    %v3662 = vmul.f32 %v3659, 1.442695
    %v3663 = vpow.pop %v3662
    %v3664 = vsel %vm435, %v3661, 0.0
    %3665 = vadd.xlane.f32.xlu0 %v3664
    %v3666 = vpop.xlane.xlu0 %3665
    %v3667 = vsel %vm439, %v3663, 0.0
    %3668 = vadd.xlane.f32.xlu0 %v3667
    %v3669 = vpop.xlane.xlu0 %3668
    %v3670 = vrcp.pop %v3666
    %v3671 = vmul.f32 %v3661, %v3670
    %v3672 = vrcp.pop %v3669
    %v3673 = vmul.f32 %v3663, %v3672
    %3674 = vrot.lane.b32.xlu0 %v2922, 40
    %v3675 = vpop.permute.xlu0 %3674
    %3676 = vrot.lane.b32.xlu0 %v2927, 40
    %v3677 = vpop.permute.xlu0 %3676
    %v3680 = vsel %vm435, %v3671, 0
    %v3683 = vsel %vm435, %v3673, 0
    %v3685 = vsel %vm470, %v3677, 0
    %3687 = vmatprep.subr.mxu0 0.0
    %3688 = vmatpush1.msra.mxu0 %v3675
    %3689 = vmatprep.subr.mxu0 0.0
    %3690 = vmatpush1.msra.mxu0 %v3685
    %3691 = vmatprep.subr.mxu0 0.0
    %3692 = vmatpush1.msra.mxu0 0.0
    %3693 = vmatprep.subr.mxu0 0.0
    %3694 = vmatpush1.msra.mxu0 0.0
    %3695 = vmatprep.subr.mxu0 0.0
    %3696 = vmatpush1.msra.mxu0 0.0
    %3697 = vmatprep.subr.mxu0 0.0
    %3698 = vmatpush1.msra.mxu0 0.0
    %3699 = vmatprep.subr.mxu0 0.0
    %3700 = vmatpush1.msra.mxu0 0.0
    %3701 = vmatprep.subr.mxu0 0.0
    %3702 = vmatpush1.msra.mxu0 0.0
    %3703 = vmatprep.subr.mxu0 0.0
    %3704 = vmatpush1.msra.mxu0 0.0
    %3705 = vmatprep.subr.mxu0 0.0
    %3706 = vmatpush1.msra.mxu0 0.0
    %3707 = vmatprep.subr.mxu0 0.0
    %3708 = vmatpush1.msra.mxu0 0.0
    %3709 = vmatprep.subr.mxu0 0.0
    %3710 = vmatpush1.msra.mxu0 0.0
    %3711 = vmatprep.subr.mxu0 0.0
    %3712 = vmatpush1.msra.mxu0 0.0
    %3713 = vmatprep.subr.mxu0 0.0
    %3714 = vmatpush1.msra.mxu0 0.0
    %3715 = vmatprep.subr.mxu0 0.0
    %3716 = vmatpush1.msra.mxu0 0.0
    %3717 = vmatprep.subr.mxu0 0.0
    %3718 = vmatpush1.msra.mxu0 0.0
    %3719 = vmatprep.subr.mxu0 0.0
    %3720 = vmatpush1.msra.mxu0 0.0
    %3721 = vmatprep.subr.mxu0 0.0
    %3722 = vmatpush1.msra.mxu0 0.0
    %3723 = vmatprep.subr.mxu0 0.0
    %3724 = vmatpush1.msra.mxu0 0.0
    %3725 = vmatprep.subr.mxu0 0.0
    %3726 = vmatpush1.msra.mxu0 0.0
    %3727 = vmatprep.subr.mxu0 0.0
    %3728 = vmatpush1.msra.mxu0 0.0
    %3729 = vmatprep.subr.mxu0 0.0
    %3730 = vmatpush1.msra.mxu0 0.0
    %3731 = vmatprep.subr.mxu0 0.0
    %3732 = vmatpush1.msra.mxu0 0.0
    %3733 = vmatprep.subr.mxu0 0.0
    %3734 = vmatpush1.msra.mxu0 0.0
    %3735 = vmatprep.subr.mxu0 0.0
    %3736 = vmatpush1.msra.mxu0 0.0
    %3737 = vmatprep.subr.mxu0 0.0
    %3738 = vmatpush1.msra.mxu0 0.0
    %3739 = vmatprep.subr.mxu0 0.0
    %3740 = vmatpush1.msra.mxu0 0.0
    %3741 = vmatprep.subr.mxu0 0.0
    %3742 = vmatpush1.msra.mxu0 0.0
    %3743 = vmatprep.subr.mxu0 0.0
    %3744 = vmatpush1.msra.mxu0 0.0
    %3745 = vmatprep.subr.mxu0 0.0
    %3746 = vmatpush1.msra.mxu0 0.0
    %3747 = vmatprep.subr.mxu0 0.0
    %3748 = vmatpush1.msra.mxu0 0.0
    %3749 = vmatprep.subr.mxu0 0.0
    %3750 = vmatpush1.msra.mxu0 0.0
    %3751 = vmatprep.mubr.f32.mxu0 0.0
    %3752 = vmatmul.mubr.f32.gmra.mrb[0].mxu0 %v3680
    %v3753 = vpop.f32.mrb[0].mxu0
    %v3754 = vadd.f32 0.0, %v3753
    %v3755 = vpop.f32.mrb[0].mxu0
    %3756 = vmatprep.mubr.f32.mxu0 0.0
    %3757 = vmatmul.mubr.f32.gmra.mrb[0].mxu0 %v3683
    %v3758 = vpop.f32.mrb[0].mxu0
    %v3759 = vadd.f32 0.0, %v3758
    %v3760 = vpop.f32.mrb[0].mxu0
    %3761 = vdwg.mxu0
    %3764 = vrot.lane.b32.xlu0 %v3754, 24
    %v3765 = vpop.permute.xlu0 %3764
    %3766 = vrot.lane.b32.xlu0 %v3759, 24
    %v3767 = vpop.permute.xlu0 %3766
    %3770 = vst.msk [vmem:[#allocation3] sm:$0xff] %vm1192, %v3765
    %3771 = vst.msk [vmem:[#allocation3 + $0x8] sm:$0x1] %vm1194, %v3767
    %v3772 = vld [vmem:[#allocation3] sm:$0xff]
    %v3773 = vld [vmem:[#allocation3 + $0x8] sm:$0x1]
    %v3774 = vlaneseq
    %v3775 = vshrl.u32 %v3774, 7
    %v3776 = vsub.s32 0, %v3775
    %v3777 = vrot.slane %v2927, %v3776
    %v3778 = vsel %vm1200, %v3777, 0.0
    %v3779 = vsel %vm1201, %v3777, 0.0
    %3782 = vrot.lane.b32.xlu0 %v3778, 32
    %v3783 = vpop.permute.xlu0 %3782
    %3784 = vrot.lane.b32.xlu0 %v3779, 32
    %v3785 = vpop.permute.xlu0 %3784
    %v3788 = vadd.f32 %v3772, %v3783
    %v3789 = vadd.f32 %v3773, %v3785
    %v3790 = vlaneseq
    %v3791 = vshrl.u32 %v3790, 7
    %v3792 = vsub.s32 0, %v3791
    %v3793 = vrot.slane %v2846, %v3792
    %v3795 = vsel %vm226, %v3788, 0
    %v3798 = vsel %vm226, %v3789, 0
    %3800 = vmatprep.subr.mxu0 0.0
    %3801 = vmatpush1.msra.mxu0 %v2827
    %3802 = vmatprep.subr.mxu0 0.0
    %3803 = vmatpush1.msra.mxu0 %v2828
    %3804 = vmatprep.subr.mxu0 0.0
    %3805 = vmatpush1.msra.mxu0 %v2829
    %3806 = vmatprep.subr.mxu0 0.0
    %3807 = vmatpush1.msra.mxu0 %v2830
    %3808 = vmatprep.subr.mxu0 0.0
    %3809 = vmatpush1.msra.mxu0 0.0
    %3810 = vmatprep.subr.mxu0 0.0
    %3811 = vmatpush1.msra.mxu0 0.0
    %3812 = vmatprep.subr.mxu0 0.0
    %3813 = vmatpush1.msra.mxu0 0.0
    %3814 = vmatprep.subr.mxu0 0.0
    %3815 = vmatpush1.msra.mxu0 0.0
    %3816 = vmatprep.subr.mxu0 0.0
    %3817 = vmatpush1.msra.mxu0 0.0
    %3818 = vmatprep.subr.mxu0 0.0
    %3819 = vmatpush1.msra.mxu0 0.0
    %3820 = vmatprep.subr.mxu0 0.0
    %3821 = vmatpush1.msra.mxu0 0.0
    %3822 = vmatprep.subr.mxu0 0.0
    %3823 = vmatpush1.msra.mxu0 0.0
    %3824 = vmatprep.subr.mxu0 0.0
    %3825 = vmatpush1.msra.mxu0 0.0
    %3826 = vmatprep.subr.mxu0 0.0
    %3827 = vmatpush1.msra.mxu0 0.0
    %3828 = vmatprep.subr.mxu0 0.0
    %3829 = vmatpush1.msra.mxu0 0.0
    %3830 = vmatprep.subr.mxu0 0.0
    %3831 = vmatpush1.msra.mxu0 0.0
    %3832 = vmatprep.subr.mxu0 0.0
    %3833 = vmatpush1.msra.mxu0 0.0
    %3834 = vmatprep.subr.mxu0 0.0
    %3835 = vmatpush1.msra.mxu0 0.0
    %3836 = vmatprep.subr.mxu0 0.0
    %3837 = vmatpush1.msra.mxu0 0.0
    %3838 = vmatprep.subr.mxu0 0.0
    %3839 = vmatpush1.msra.mxu0 0.0
    %3840 = vmatprep.subr.mxu0 0.0
    %3841 = vmatpush1.msra.mxu0 0.0
    %3842 = vmatprep.subr.mxu0 0.0
    %3843 = vmatpush1.msra.mxu0 0.0
    %3844 = vmatprep.subr.mxu0 0.0
    %3845 = vmatpush1.msra.mxu0 0.0
    %3846 = vmatprep.subr.mxu0 0.0
    %3847 = vmatpush1.msra.mxu0 0.0
    %3848 = vmatprep.subr.mxu0 0.0
    %3849 = vmatpush1.msra.mxu0 0.0
    %3850 = vmatprep.subr.mxu0 0.0
    %3851 = vmatpush1.msra.mxu0 0.0
    %3852 = vmatprep.subr.mxu0 0.0
    %3853 = vmatpush1.msra.mxu0 0.0
    %3854 = vmatprep.subr.mxu0 0.0
    %3855 = vmatpush1.msra.mxu0 0.0
    %3856 = vmatprep.subr.mxu0 0.0
    %3857 = vmatpush1.msra.mxu0 0.0
    %3858 = vmatprep.subr.mxu0 0.0
    %3859 = vmatpush1.msra.mxu0 0.0
    %3860 = vmatprep.subr.mxu0 0.0
    %3861 = vmatpush1.msra.mxu0 0.0
    %3862 = vmatprep.subr.mxu0 0.0
    %3863 = vmatpush1.msra.mxu0 0.0
    %3864 = vmatprep.mubr.f32.mxu0 0.0
    %3865 = vmatmul.mubr.f32.gmra.mrb[0].mxu0 %v3795
    %v3866 = vpop.f32.mrb[0].mxu0
    %v3867 = vadd.f32 %v3793, %v3866
    %v3868 = vpop.f32.mrb[0].mxu0
    %3869 = vmatprep.mubr.f32.mxu0 0.0
    %3870 = vmatmul.mubr.f32.gmra.mrb[0].mxu0 %v3798
    %v3871 = vpop.f32.mrb[0].mxu0
    %v3872 = vadd.f32 %v3793, %v3871
    %v3873 = vpop.f32.mrb[0].mxu0
    %3874 = vdwg.mxu0
    %v3875 = vadd.f32 %v2847, %v3867
    %v3876 = vadd.f32 %v2848, %v3872
    %v3877 = vsel %vm226, %v3875, 0.0
    %v3878 = vsel %vm228, %v3876, 0.0
    %v3879 = vadd.f32 %v3877, %v3878
    %v3880 = vrot.slane %v3879, 4
    %v3881 = vadd.f32 %v3879, %v3880
    %v3882 = vrot.slane %v3881, 2
    %v3883 = vadd.f32 %v3881, %v3882
    %v3884 = vrot.slane %v3883, 1
    %v3885 = vadd.f32 %v3883, %v3884
    %v3886 = vmul.f32 %v3885, %v1314
    %v3887 = vsub.f32 %v3875, %v3886
    %v3888 = vsub.f32 %v3876, %v3886
    %v3889 = vmul.f32 %v3887, %v3887
    %v3890 = vmul.f32 %v3888, %v3888
    %v3891 = vsel %vm226, %v3889, 0.0
    %v3892 = vsel %vm228, %v3890, 0.0
    %v3893 = vadd.f32 %v3891, %v3892
    %v3894 = vrot.slane %v3893, 4
    %v3895 = vadd.f32 %v3893, %v3894
    %v3896 = vrot.slane %v3895, 2
    %v3897 = vadd.f32 %v3895, %v3896
    %v3898 = vrot.slane %v3897, 1
    %v3899 = vadd.f32 %v3897, %v3898
    %v3900 = vmul.f32 %v3899, %v1314
    %v3901 = vadd.f32 %v3900, 1e-05
    %v3902 = vrsqrt.pop %v3901
    %v3903 = vmul.f32 %v3887, %v3902
    %v3904 = vmul.f32 %v3888, %v3902
    %v3905 = vlaneseq
    %v3906 = vshrl.u32 %v3905, 7
    %v3907 = vsub.s32 1, %v3906
    %v3908 = vrot.slane %v2846, %v3907
    %v3909 = vmul.f32 %v3903, %v3908
    %v3910 = vmul.f32 %v3904, %v3908
    %v3911 = vlaneseq
    %v3912 = vshrl.u32 %v3911, 7
    %v3913 = vsub.s32 2, %v3912
    %v3914 = vrot.slane %v2846, %v3913
    %v3915 = vadd.f32 %v3909, %v3914
    %v3916 = vadd.f32 %v3910, %v3914
    %v3917 = vlaneseq
    %v3918 = vshrl.u32 %v3917, 7
    %v3919 = vsub.s32 3, %v3918
    %v3920 = vrot.slane %v2846, %v3919
    %v3922 = vsel %vm226, %v3915, 0
    %v3925 = vsel %vm226, %v3916, 0
    %3927 = vmatprep.subr.mxu0 0.0
    %3928 = vmatpush1.msra.mxu0 %v2832
    %3929 = vmatprep.subr.mxu0 0.0
    %3930 = vmatpush1.msra.mxu0 %v2833
    %3931 = vmatprep.subr.mxu0 0.0
    %3932 = vmatpush1.msra.mxu0 %v2834
    %3933 = vmatprep.subr.mxu0 0.0
    %3934 = vmatpush1.msra.mxu0 %v2835
    %3935 = vmatprep.subr.mxu0 0.0
    %3936 = vmatpush1.msra.mxu0 0.0
    %3937 = vmatprep.subr.mxu0 0.0
    %3938 = vmatpush1.msra.mxu0 0.0
    %3939 = vmatprep.subr.mxu0 0.0
    %3940 = vmatpush1.msra.mxu0 0.0
    %3941 = vmatprep.subr.mxu0 0.0
    %3942 = vmatpush1.msra.mxu0 0.0
    %3943 = vmatprep.subr.mxu0 0.0
    %3944 = vmatpush1.msra.mxu0 0.0
    %3945 = vmatprep.subr.mxu0 0.0
    %3946 = vmatpush1.msra.mxu0 0.0
    %3947 = vmatprep.subr.mxu0 0.0
    %3948 = vmatpush1.msra.mxu0 0.0
    %3949 = vmatprep.subr.mxu0 0.0
    %3950 = vmatpush1.msra.mxu0 0.0
    %3951 = vmatprep.subr.mxu0 0.0
    %3952 = vmatpush1.msra.mxu0 0.0
    %3953 = vmatprep.subr.mxu0 0.0
    %3954 = vmatpush1.msra.mxu0 0.0
    %3955 = vmatprep.subr.mxu0 0.0
    %3956 = vmatpush1.msra.mxu0 0.0
    %3957 = vmatprep.subr.mxu0 0.0
    %3958 = vmatpush1.msra.mxu0 0.0
    %3959 = vmatprep.subr.mxu0 0.0
    %3960 = vmatpush1.msra.mxu0 0.0
    %3961 = vmatprep.subr.mxu0 0.0
    %3962 = vmatpush1.msra.mxu0 0.0
    %3963 = vmatprep.subr.mxu0 0.0
    %3964 = vmatpush1.msra.mxu0 0.0
    %3965 = vmatprep.subr.mxu0 0.0
    %3966 = vmatpush1.msra.mxu0 0.0
    %3967 = vmatprep.subr.mxu0 0.0
    %3968 = vmatpush1.msra.mxu0 0.0
    %3969 = vmatprep.subr.mxu0 0.0
    %3970 = vmatpush1.msra.mxu0 0.0
    %3971 = vmatprep.subr.mxu0 0.0
    %3972 = vmatpush1.msra.mxu0 0.0
    %3973 = vmatprep.subr.mxu0 0.0
    %3974 = vmatpush1.msra.mxu0 0.0
    %3975 = vmatprep.subr.mxu0 0.0
    %3976 = vmatpush1.msra.mxu0 0.0
    %3977 = vmatprep.subr.mxu0 0.0
    %3978 = vmatpush1.msra.mxu0 0.0
    %3979 = vmatprep.subr.mxu0 0.0
    %3980 = vmatpush1.msra.mxu0 0.0
    %3981 = vmatprep.subr.mxu0 0.0
    %3982 = vmatpush1.msra.mxu0 0.0
    %3983 = vmatprep.subr.mxu0 0.0
    %3984 = vmatpush1.msra.mxu0 0.0
    %3985 = vmatprep.subr.mxu0 0.0
    %3986 = vmatpush1.msra.mxu0 0.0
    %3987 = vmatprep.subr.mxu0 0.0
    %3988 = vmatpush1.msra.mxu0 0.0
    %3989 = vmatprep.subr.mxu0 0.0
    %3990 = vmatpush1.msra.mxu0 0.0
    %3991 = vmatprep.mubr.f32.mxu0 0.0
    %3992 = vmatmul.mubr.f32.gmra.mrb[0].mxu0 %v3922
    %v3993 = vpop.f32.mrb[0].mxu0
    %v3994 = vadd.f32 %v3920, %v3993
    %v3995 = vpop.f32.mrb[0].mxu0
    %3996 = vmatprep.mubr.f32.mxu0 0.0
    %3997 = vmatmul.mubr.f32.gmra.mrb[0].mxu0 %v3925
    %v3998 = vpop.f32.mrb[0].mxu0
    %v3999 = vadd.f32 %v3920, %v3998
    %v4000 = vpop.f32.mrb[0].mxu0
    %4001 = vdwg.mxu0
    %v4002 = vmax.f32 %v3994, 0.0
    %v4003 = vmax.f32 %v3999, 0.0
    %v4004 = vlaneseq
    %v4005 = vshrl.u32 %v4004, 7
    %v4006 = vsub.s32 4, %v4005
    %v4007 = vrot.slane %v2846, %v4006
    %v4009 = vsel %vm1437, %v4002, 0
    %v4012 = vsel %vm1437, %v4003, 0
    %4014 = vmatprep.subr.mxu0 0.0
    %4015 = vmatpush1.msra.mxu0 %v2837
    %4016 = vmatprep.subr.mxu0 0.0
    %4017 = vmatpush1.msra.mxu0 %v2838
    %4018 = vmatprep.subr.mxu0 0.0
    %4019 = vmatpush1.msra.mxu0 %v2839
    %4020 = vmatprep.subr.mxu0 0.0
    %4021 = vmatpush1.msra.mxu0 %v2840
    %4022 = vmatprep.subr.mxu0 0.0
    %4023 = vmatpush1.msra.mxu0 %v2841
    %4024 = vmatprep.subr.mxu0 0.0
    %4025 = vmatpush1.msra.mxu0 %v2842
    %4026 = vmatprep.subr.mxu0 0.0
    %4027 = vmatpush1.msra.mxu0 %v2843
    %4028 = vmatprep.subr.mxu0 0.0
    %4029 = vmatpush1.msra.mxu0 %v2844
    %4030 = vmatprep.subr.mxu0 0.0
    %4031 = vmatpush1.msra.mxu0 0.0
    %4032 = vmatprep.subr.mxu0 0.0
    %4033 = vmatpush1.msra.mxu0 0.0
    %4034 = vmatprep.subr.mxu0 0.0
    %4035 = vmatpush1.msra.mxu0 0.0
    %4036 = vmatprep.subr.mxu0 0.0
    %4037 = vmatpush1.msra.mxu0 0.0
    %4038 = vmatprep.subr.mxu0 0.0
    %4039 = vmatpush1.msra.mxu0 0.0
    %4040 = vmatprep.subr.mxu0 0.0
    %4041 = vmatpush1.msra.mxu0 0.0
    %4042 = vmatprep.subr.mxu0 0.0
    %4043 = vmatpush1.msra.mxu0 0.0
    %4044 = vmatprep.subr.mxu0 0.0
    %4045 = vmatpush1.msra.mxu0 0.0
    %4046 = vmatprep.subr.mxu0 0.0
    %4047 = vmatpush1.msra.mxu0 0.0
    %4048 = vmatprep.subr.mxu0 0.0
    %4049 = vmatpush1.msra.mxu0 0.0
    %4050 = vmatprep.subr.mxu0 0.0
    %4051 = vmatpush1.msra.mxu0 0.0
    %4052 = vmatprep.subr.mxu0 0.0
    %4053 = vmatpush1.msra.mxu0 0.0
    %4054 = vmatprep.subr.mxu0 0.0
    %4055 = vmatpush1.msra.mxu0 0.0
    %4056 = vmatprep.subr.mxu0 0.0
    %4057 = vmatpush1.msra.mxu0 0.0
    %4058 = vmatprep.subr.mxu0 0.0
    %4059 = vmatpush1.msra.mxu0 0.0
    %4060 = vmatprep.subr.mxu0 0.0
    %4061 = vmatpush1.msra.mxu0 0.0
    %4062 = vmatprep.subr.mxu0 0.0
    %4063 = vmatpush1.msra.mxu0 0.0
    %4064 = vmatprep.subr.mxu0 0.0
    %4065 = vmatpush1.msra.mxu0 0.0
    %4066 = vmatprep.subr.mxu0 0.0
    %4067 = vmatpush1.msra.mxu0 0.0
    %4068 = vmatprep.subr.mxu0 0.0
    %4069 = vmatpush1.msra.mxu0 0.0
    %4070 = vmatprep.subr.mxu0 0.0
    %4071 = vmatpush1.msra.mxu0 0.0
    %4072 = vmatprep.subr.mxu0 0.0
    %4073 = vmatpush1.msra.mxu0 0.0
    %4074 = vmatprep.subr.mxu0 0.0
    %4075 = vmatpush1.msra.mxu0 0.0
    %4076 = vmatprep.subr.mxu0 0.0
    %4077 = vmatpush1.msra.mxu0 0.0
    %4078 = vmatprep.mubr.f32.mxu0 0.0
    %4079 = vmatmul.mubr.f32.gmra.mrb[0].mxu0 %v4009
    %v4080 = vpop.f32.mrb[0].mxu0
    %v4081 = vadd.f32 %v4007, %v4080
    %v4082 = vpop.f32.mrb[0].mxu0
    %4083 = vmatprep.mubr.f32.mxu0 0.0
    %4084 = vmatmul.mubr.f32.gmra.mrb[0].mxu0 %v4012
    %v4085 = vpop.f32.mrb[0].mxu0
    %v4086 = vadd.f32 %v4007, %v4085
    %v4087 = vpop.f32.mrb[0].mxu0
    %4088 = vdwg.mxu0
    %v4089 = vadd.f32 %v3915, %v4081
    %v4090 = vadd.f32 %v3916, %v4086
    %v4091 = vsel %vm226, %v4089, 0.0
    %v4092 = vsel %vm228, %v4090, 0.0
    %v4093 = vadd.f32 %v4091, %v4092
    %v4094 = vrot.slane %v4093, 4
    %v4095 = vadd.f32 %v4093, %v4094
    %v4096 = vrot.slane %v4095, 2
    %v4097 = vadd.f32 %v4095, %v4096
    %v4098 = vrot.slane %v4097, 1
    %v4099 = vadd.f32 %v4097, %v4098
    %v4100 = vmul.f32 %v4099, %v1314
    %v4101 = vsub.f32 %v4089, %v4100
    %v4102 = vsub.f32 %v4090, %v4100
    %v4103 = vmul.f32 %v4101, %v4101
    %v4104 = vmul.f32 %v4102, %v4102
    %v4105 = vsel %vm226, %v4103, 0.0
    %v4106 = vsel %vm228, %v4104, 0.0
    %v4107 = vadd.f32 %v4105, %v4106
    %v4108 = vrot.slane %v4107, 4
    %v4109 = vadd.f32 %v4107, %v4108
    %v4110 = vrot.slane %v4109, 2
    %v4111 = vadd.f32 %v4109, %v4110
    %v4112 = vrot.slane %v4111, 1
    %v4113 = vadd.f32 %v4111, %v4112
    %v4114 = vmul.f32 %v4113, %v1314
    %v4115 = vadd.f32 %v4114, 1e-05
    %v4116 = vrsqrt.pop %v4115
    %v4117 = vmul.f32 %v4101, %v4116
    %v4118 = vmul.f32 %v4102, %v4116
    %v4119 = vlaneseq
    %v4120 = vshrl.u32 %v4119, 7
    %v4121 = vsub.s32 5, %v4120
    %v4122 = vrot.slane %v2846, %v4121
    %v4123 = vmul.f32 %v4117, %v4122
    %v4124 = vmul.f32 %v4118, %v4122
    %v4125 = vlaneseq
    %v4126 = vshrl.u32 %v4125, 7
    %v4127 = vsub.s32 6, %v4126
    %v4128 = vrot.slane %v2846, %v4127
    %v4129 = vadd.f32 %v4123, %v4128
    %v4130 = vadd.f32 %v4124, %v4128
    %4131 = vst.msk [vmem:[#allocation2] sm:$0xff] %vm226, %v4129
    %4132 = vst.msk [vmem:[#allocation2 + $0x8] sm:$0x1] %vm228, %v4130
    %v4133 = vld [vmem:[%s230] sm:$0xff]
    %v4134 = vld [vmem:[%s230 + $0x8] sm:$0x1]
    %v4136 = vsel %vm226, %v4133, 0
    %v4139 = vsel %vm226, %v4134, 0
    %4141 = vmatprep.subr.mxu0 0.0
    %4142 = vmatpush1.msra.mxu0 %v2822
    %4143 = vmatprep.subr.mxu0 0.0
    %4144 = vmatpush1.msra.mxu0 %v2823
    %4145 = vmatprep.subr.mxu0 0.0
    %4146 = vmatpush1.msra.mxu0 %v2824
    %4147 = vmatprep.subr.mxu0 0.0
    %4148 = vmatpush1.msra.mxu0 %v2825
    %4149 = vmatprep.subr.mxu0 0.0
    %4150 = vmatpush1.msra.mxu0 0.0
    %4151 = vmatprep.subr.mxu0 0.0
    %4152 = vmatpush1.msra.mxu0 0.0
    %4153 = vmatprep.subr.mxu0 0.0
    %4154 = vmatpush1.msra.mxu0 0.0
    %4155 = vmatprep.subr.mxu0 0.0
    %4156 = vmatpush1.msra.mxu0 0.0
    %4157 = vmatprep.subr.mxu0 0.0
    %4158 = vmatpush1.msra.mxu0 0.0
    %4159 = vmatprep.subr.mxu0 0.0
    %4160 = vmatpush1.msra.mxu0 0.0
    %4161 = vmatprep.subr.mxu0 0.0
    %4162 = vmatpush1.msra.mxu0 0.0
    %4163 = vmatprep.subr.mxu0 0.0
    %4164 = vmatpush1.msra.mxu0 0.0
    %4165 = vmatprep.subr.mxu0 0.0
    %4166 = vmatpush1.msra.mxu0 0.0
    %4167 = vmatprep.subr.mxu0 0.0
    %4168 = vmatpush1.msra.mxu0 0.0
    %4169 = vmatprep.subr.mxu0 0.0
    %4170 = vmatpush1.msra.mxu0 0.0
    %4171 = vmatprep.subr.mxu0 0.0
    %4172 = vmatpush1.msra.mxu0 0.0
    %4173 = vmatprep.subr.mxu0 0.0
    %4174 = vmatpush1.msra.mxu0 0.0
    %4175 = vmatprep.subr.mxu0 0.0
    %4176 = vmatpush1.msra.mxu0 0.0
    %4177 = vmatprep.subr.mxu0 0.0
    %4178 = vmatpush1.msra.mxu0 0.0
    %4179 = vmatprep.subr.mxu0 0.0
    %4180 = vmatpush1.msra.mxu0 0.0
    %4181 = vmatprep.subr.mxu0 0.0
    %4182 = vmatpush1.msra.mxu0 0.0
    %4183 = vmatprep.subr.mxu0 0.0
    %4184 = vmatpush1.msra.mxu0 0.0
    %4185 = vmatprep.subr.mxu0 0.0
    %4186 = vmatpush1.msra.mxu0 0.0
    %4187 = vmatprep.subr.mxu0 0.0
    %4188 = vmatpush1.msra.mxu0 0.0
    %4189 = vmatprep.subr.mxu0 0.0
    %4190 = vmatpush1.msra.mxu0 0.0
    %4191 = vmatprep.subr.mxu0 0.0
    %4192 = vmatpush1.msra.mxu0 0.0
    %4193 = vmatprep.subr.mxu0 0.0
    %4194 = vmatpush1.msra.mxu0 0.0
    %4195 = vmatprep.subr.mxu0 0.0
    %4196 = vmatpush1.msra.mxu0 0.0
    %4197 = vmatprep.subr.mxu0 0.0
    %4198 = vmatpush1.msra.mxu0 0.0
    %4199 = vmatprep.subr.mxu0 0.0
    %4200 = vmatpush1.msra.mxu0 0.0
    %4201 = vmatprep.subr.mxu0 0.0
    %4202 = vmatpush1.msra.mxu0 0.0
    %4203 = vmatprep.subr.mxu0 0.0
    %4204 = vmatpush1.msra.mxu0 0.0
    %4205 = vmatprep.mubr.f32.mxu0 0.0
    %4206 = vmatmul.mubr.f32.gmra.mrb[0].mxu0 %v4136
    %v4207 = vpop.f32.mrb[0].mxu0
    %v4208 = vadd.f32 0.0, %v4207
    %v4209 = vpop.f32.mrb[0].mxu0
    %4210 = vmatprep.mubr.f32.mxu0 0.0
    %4211 = vmatmul.mubr.f32.gmra.mrb[0].mxu0 %v4139
    %v4212 = vpop.f32.mrb[0].mxu0
    %v4213 = vadd.f32 0.0, %v4212
    %v4214 = vpop.f32.mrb[0].mxu0
    %4215 = vdwg.mxu0
    %4218 = vrot.lane.b32.xlu0 %v4208, 96
    %v4219 = vpop.permute.xlu0 %4218
    %4220 = vrot.lane.b32.xlu0 %v4213, 96
    %v4221 = vpop.permute.xlu0 %4220
    %v4222 = vsel %vm349, %v4208, 0
    %v4224 = vsel %vm349, %v4213, 0
    %v4226 = vsel %vm349, %v4219, 0
    %v4228 = vsel %vm349, %v4221, 0
    %4230 = vmatprep.subr.mxu0 0.0
    %4231 = vmatpush1.xpose.msra.mxu0 %v4226
    %4232 = vmatprep.subr.mxu0 0.0
    %4233 = vmatpush1.xpose.msra.mxu0 %v4228
    %4234 = vmatprep.subr.mxu0 0.0
    %4235 = vmatpush1.xpose.msra.mxu0 0.0
    %4236 = vmatprep.subr.mxu0 0.0
    %4237 = vmatpush1.xpose.msra.mxu0 0.0
    %4238 = vmatprep.subr.mxu0 0.0
    %4239 = vmatpush1.xpose.msra.mxu0 0.0
    %4240 = vmatprep.subr.mxu0 0.0
    %4241 = vmatpush1.xpose.msra.mxu0 0.0
    %4242 = vmatprep.subr.mxu0 0.0
    %4243 = vmatpush1.xpose.msra.mxu0 0.0
    %4244 = vmatprep.subr.mxu0 0.0
    %4245 = vmatpush1.xpose.msra.mxu0 0.0
    %4246 = vmatprep.subr.mxu0 0.0
    %4247 = vmatpush1.xpose.msra.mxu0 0.0
    %4248 = vmatprep.subr.mxu0 0.0
    %4249 = vmatpush1.xpose.msra.mxu0 0.0
    %4250 = vmatprep.subr.mxu0 0.0
    %4251 = vmatpush1.xpose.msra.mxu0 0.0
    %4252 = vmatprep.subr.mxu0 0.0
    %4253 = vmatpush1.xpose.msra.mxu0 0.0
    %4254 = vmatprep.subr.mxu0 0.0
    %4255 = vmatpush1.xpose.msra.mxu0 0.0
    %4256 = vmatprep.subr.mxu0 0.0
    %4257 = vmatpush1.xpose.msra.mxu0 0.0
    %4258 = vmatprep.subr.mxu0 0.0
    %4259 = vmatpush1.xpose.msra.mxu0 0.0
    %4260 = vmatprep.subr.mxu0 0.0
    %4261 = vmatpush1.xpose.msra.mxu0 0.0
    %4262 = vmatprep.subr.mxu0 0.0
    %4263 = vmatpush1.xpose.msra.mxu0 0.0
    %4264 = vmatprep.subr.mxu0 0.0
    %4265 = vmatpush1.xpose.msra.mxu0 0.0
    %4266 = vmatprep.subr.mxu0 0.0
    %4267 = vmatpush1.xpose.msra.mxu0 0.0
    %4268 = vmatprep.subr.mxu0 0.0
    %4269 = vmatpush1.xpose.msra.mxu0 0.0
    %4270 = vmatprep.subr.mxu0 0.0
    %4271 = vmatpush1.xpose.msra.mxu0 0.0
    %4272 = vmatprep.subr.mxu0 0.0
    %4273 = vmatpush1.xpose.msra.mxu0 0.0
    %4274 = vmatprep.subr.mxu0 0.0
    %4275 = vmatpush1.xpose.msra.mxu0 0.0
    %4276 = vmatprep.subr.mxu0 0.0
    %4277 = vmatpush1.xpose.msra.mxu0 0.0
    %4278 = vmatprep.subr.mxu0 0.0
    %4279 = vmatpush1.xpose.msra.mxu0 0.0
    %4280 = vmatprep.subr.mxu0 0.0
    %4281 = vmatpush1.xpose.msra.mxu0 0.0
    %4282 = vmatprep.subr.mxu0 0.0
    %4283 = vmatpush1.xpose.msra.mxu0 0.0
    %4284 = vmatprep.subr.mxu0 0.0
    %4285 = vmatpush1.xpose.msra.mxu0 0.0
    %4286 = vmatprep.subr.mxu0 0.0
    %4287 = vmatpush1.xpose.msra.mxu0 0.0
    %4288 = vmatprep.subr.mxu0 0.0
    %4289 = vmatpush1.xpose.msra.mxu0 0.0
    %4290 = vmatprep.subr.mxu0 0.0
    %4291 = vmatpush1.xpose.msra.mxu0 0.0
    %4292 = vmatprep.subr.mxu0 0.0
    %4293 = vmatpush1.xpose.msra.mxu0 0.0
    %4294 = vmatprep.mubr.f32.mxu0 0.0
    %4295 = vmatmul.mubr.f32.gmra.mrb[0].mxu0 %v4222
    %v4296 = vpop.f32.mrb[0].mxu0
    %v4297 = vadd.f32 0.0, %v4296
    %v4298 = vpop.f32.mrb[0].mxu0
    %4299 = vmatprep.mubr.f32.mxu0 0.0
    %4300 = vmatmul.mubr.f32.gmra.mrb[0].mxu0 %v4224
    %v4301 = vpop.f32.mrb[0].mxu0
    %v4302 = vadd.f32 0.0, %v4301
    %v4303 = vpop.f32.mrb[0].mxu0
    %4304 = vdwg.mxu0
    %v4305 = vmul.f32 %v4297, 0.35355338
    %v4306 = vmul.f32 %v4302, 0.35355338
    %v4307 = vsel %vm435, %v4305, -inf
    %4308 = vmax.xlane.f32.xlu0 %v4307
    %v4309 = vpop.xlane.xlu0 %4308
    %v4310 = vsel %vm439, %v4306, -inf
    %4311 = vmax.xlane.f32.xlu0 %v4310
    %v4312 = vpop.xlane.xlu0 %4311
    %v4313 = vsub.f32 %v4305, %v4309
    %v4314 = vsub.f32 %v4306, %v4312
    %v4315 = vmul.f32 %v4313, 1.442695
    %v4316 = vpow.pop %v4315
    %v4317 = vmul.f32 %v4314, 1.442695
    %v4318 = vpow.pop %v4317
    %v4319 = vsel %vm435, %v4316, 0.0
    %4320 = vadd.xlane.f32.xlu0 %v4319
    %v4321 = vpop.xlane.xlu0 %4320
    %v4322 = vsel %vm439, %v4318, 0.0
    %4323 = vadd.xlane.f32.xlu0 %v4322
    %v4324 = vpop.xlane.xlu0 %4323
    %v4325 = vrcp.pop %v4321
    %v4326 = vmul.f32 %v4316, %v4325
    %v4327 = vrcp.pop %v4324
    %v4328 = vmul.f32 %v4318, %v4327
    %4329 = vrot.lane.b32.xlu0 %v4208, 64
    %v4330 = vpop.permute.xlu0 %4329
    %4331 = vrot.lane.b32.xlu0 %v4213, 64
    %v4332 = vpop.permute.xlu0 %4331
    %v4335 = vsel %vm435, %v4326, 0
    %v4338 = vsel %vm435, %v4328, 0
    %v4340 = vsel %vm470, %v4332, 0
    %4342 = vmatprep.subr.mxu0 0.0
    %4343 = vmatpush1.msra.mxu0 %v4330
    %4344 = vmatprep.subr.mxu0 0.0
    %4345 = vmatpush1.msra.mxu0 %v4340
    %4346 = vmatprep.subr.mxu0 0.0
    %4347 = vmatpush1.msra.mxu0 0.0
    %4348 = vmatprep.subr.mxu0 0.0
    %4349 = vmatpush1.msra.mxu0 0.0
    %4350 = vmatprep.subr.mxu0 0.0
    %4351 = vmatpush1.msra.mxu0 0.0
    %4352 = vmatprep.subr.mxu0 0.0
    %4353 = vmatpush1.msra.mxu0 0.0
    %4354 = vmatprep.subr.mxu0 0.0
    %4355 = vmatpush1.msra.mxu0 0.0
    %4356 = vmatprep.subr.mxu0 0.0
    %4357 = vmatpush1.msra.mxu0 0.0
    %4358 = vmatprep.subr.mxu0 0.0
    %4359 = vmatpush1.msra.mxu0 0.0
    %4360 = vmatprep.subr.mxu0 0.0
    %4361 = vmatpush1.msra.mxu0 0.0
    %4362 = vmatprep.subr.mxu0 0.0
    %4363 = vmatpush1.msra.mxu0 0.0
    %4364 = vmatprep.subr.mxu0 0.0
    %4365 = vmatpush1.msra.mxu0 0.0
    %4366 = vmatprep.subr.mxu0 0.0
    %4367 = vmatpush1.msra.mxu0 0.0
    %4368 = vmatprep.subr.mxu0 0.0
    %4369 = vmatpush1.msra.mxu0 0.0
    %4370 = vmatprep.subr.mxu0 0.0
    %4371 = vmatpush1.msra.mxu0 0.0
    %4372 = vmatprep.subr.mxu0 0.0
    %4373 = vmatpush1.msra.mxu0 0.0
    %4374 = vmatprep.subr.mxu0 0.0
    %4375 = vmatpush1.msra.mxu0 0.0
    %4376 = vmatprep.subr.mxu0 0.0
    %4377 = vmatpush1.msra.mxu0 0.0
    %4378 = vmatprep.subr.mxu0 0.0
    %4379 = vmatpush1.msra.mxu0 0.0
    %4380 = vmatprep.subr.mxu0 0.0
    %4381 = vmatpush1.msra.mxu0 0.0
    %4382 = vmatprep.subr.mxu0 0.0
    %4383 = vmatpush1.msra.mxu0 0.0
    %4384 = vmatprep.subr.mxu0 0.0
    %4385 = vmatpush1.msra.mxu0 0.0
    %4386 = vmatprep.subr.mxu0 0.0
    %4387 = vmatpush1.msra.mxu0 0.0
    %4388 = vmatprep.subr.mxu0 0.0
    %4389 = vmatpush1.msra.mxu0 0.0
    %4390 = vmatprep.subr.mxu0 0.0
    %4391 = vmatpush1.msra.mxu0 0.0
    %4392 = vmatprep.subr.mxu0 0.0
    %4393 = vmatpush1.msra.mxu0 0.0
    %4394 = vmatprep.subr.mxu0 0.0
    %4395 = vmatpush1.msra.mxu0 0.0
    %4396 = vmatprep.subr.mxu0 0.0
    %4397 = vmatpush1.msra.mxu0 0.0
    %4398 = vmatprep.subr.mxu0 0.0
    %4399 = vmatpush1.msra.mxu0 0.0
    %4400 = vmatprep.subr.mxu0 0.0
    %4401 = vmatpush1.msra.mxu0 0.0
    %4402 = vmatprep.subr.mxu0 0.0
    %4403 = vmatpush1.msra.mxu0 0.0
    %4404 = vmatprep.subr.mxu0 0.0
    %4405 = vmatpush1.msra.mxu0 0.0
    %4406 = vmatprep.mubr.f32.mxu0 0.0
    %4407 = vmatmul.mubr.f32.gmra.mrb[0].mxu0 %v4335
    %v4408 = vpop.f32.mrb[0].mxu0
    %v4409 = vadd.f32 0.0, %v4408
    %v4410 = vpop.f32.mrb[0].mxu0
    %4411 = vmatprep.mubr.f32.mxu0 0.0
    %4412 = vmatmul.mubr.f32.gmra.mrb[0].mxu0 %v4338
    %v4413 = vpop.f32.mrb[0].mxu0
    %v4414 = vadd.f32 0.0, %v4413
    %v4415 = vpop.f32.mrb[0].mxu0
    %4416 = vdwg.mxu0
    %4417 = vst.msk [vmem:[#allocation3] sm:$0xff] %vm349, %v4409
    %4418 = vst.msk [vmem:[#allocation3 + $0x8] sm:$0x1] %vm549, %v4414
    %4419 = vrot.lane.b32.xlu0 %v4208, 120
    %v4420 = vpop.permute.xlu0 %4419
    %4421 = vrot.lane.b32.xlu0 %v4213, 120
    %v4422 = vpop.permute.xlu0 %4421
    %4423 = vrot.lane.b32.xlu0 %v4208, 88
    %v4424 = vpop.permute.xlu0 %4423
    %4425 = vrot.lane.b32.xlu0 %v4213, 88
    %v4426 = vpop.permute.xlu0 %4425
    %v4427 = vsel %vm349, %v4420, 0
    %v4429 = vsel %vm349, %v4422, 0
    %v4431 = vsel %vm349, %v4424, 0
    %v4433 = vsel %vm349, %v4426, 0
    %4435 = vmatprep.subr.mxu0 0.0
    %4436 = vmatpush1.xpose.msra.mxu0 %v4431
    %4437 = vmatprep.subr.mxu0 0.0
    %4438 = vmatpush1.xpose.msra.mxu0 %v4433
    %4439 = vmatprep.subr.mxu0 0.0
    %4440 = vmatpush1.xpose.msra.mxu0 0.0
    %4441 = vmatprep.subr.mxu0 0.0
    %4442 = vmatpush1.xpose.msra.mxu0 0.0
    %4443 = vmatprep.subr.mxu0 0.0
    %4444 = vmatpush1.xpose.msra.mxu0 0.0
    %4445 = vmatprep.subr.mxu0 0.0
    %4446 = vmatpush1.xpose.msra.mxu0 0.0
    %4447 = vmatprep.subr.mxu0 0.0
    %4448 = vmatpush1.xpose.msra.mxu0 0.0
    %4449 = vmatprep.subr.mxu0 0.0
    %4450 = vmatpush1.xpose.msra.mxu0 0.0
    %4451 = vmatprep.subr.mxu0 0.0
    %4452 = vmatpush1.xpose.msra.mxu0 0.0
    %4453 = vmatprep.subr.mxu0 0.0
    %4454 = vmatpush1.xpose.msra.mxu0 0.0
    %4455 = vmatprep.subr.mxu0 0.0
    %4456 = vmatpush1.xpose.msra.mxu0 0.0
    %4457 = vmatprep.subr.mxu0 0.0
    %4458 = vmatpush1.xpose.msra.mxu0 0.0
    %4459 = vmatprep.subr.mxu0 0.0
    %4460 = vmatpush1.xpose.msra.mxu0 0.0
    %4461 = vmatprep.subr.mxu0 0.0
    %4462 = vmatpush1.xpose.msra.mxu0 0.0
    %4463 = vmatprep.subr.mxu0 0.0
    %4464 = vmatpush1.xpose.msra.mxu0 0.0
    %4465 = vmatprep.subr.mxu0 0.0
    %4466 = vmatpush1.xpose.msra.mxu0 0.0
    %4467 = vmatprep.subr.mxu0 0.0
    %4468 = vmatpush1.xpose.msra.mxu0 0.0
    %4469 = vmatprep.subr.mxu0 0.0
    %4470 = vmatpush1.xpose.msra.mxu0 0.0
    %4471 = vmatprep.subr.mxu0 0.0
    %4472 = vmatpush1.xpose.msra.mxu0 0.0
    %4473 = vmatprep.subr.mxu0 0.0
    %4474 = vmatpush1.xpose.msra.mxu0 0.0
    %4475 = vmatprep.subr.mxu0 0.0
    %4476 = vmatpush1.xpose.msra.mxu0 0.0
    %4477 = vmatprep.subr.mxu0 0.0
    %4478 = vmatpush1.xpose.msra.mxu0 0.0
    %4479 = vmatprep.subr.mxu0 0.0
    %4480 = vmatpush1.xpose.msra.mxu0 0.0
    %4481 = vmatprep.subr.mxu0 0.0
    %4482 = vmatpush1.xpose.msra.mxu0 0.0
    %4483 = vmatprep.subr.mxu0 0.0
    %4484 = vmatpush1.xpose.msra.mxu0 0.0
    %4485 = vmatprep.subr.mxu0 0.0
    %4486 = vmatpush1.xpose.msra.mxu0 0.0
    %4487 = vmatprep.subr.mxu0 0.0
    %4488 = vmatpush1.xpose.msra.mxu0 0.0
    %4489 = vmatprep.subr.mxu0 0.0
    %4490 = vmatpush1.xpose.msra.mxu0 0.0
    %4491 = vmatprep.subr.mxu0 0.0
    %4492 = vmatpush1.xpose.msra.mxu0 0.0
    %4493 = vmatprep.subr.mxu0 0.0
    %4494 = vmatpush1.xpose.msra.mxu0 0.0
    %4495 = vmatprep.subr.mxu0 0.0
    %4496 = vmatpush1.xpose.msra.mxu0 0.0
    %4497 = vmatprep.subr.mxu0 0.0
    %4498 = vmatpush1.xpose.msra.mxu0 0.0
    %4499 = vmatprep.mubr.f32.mxu0 0.0
    %4500 = vmatmul.mubr.f32.gmra.mrb[0].mxu0 %v4427
    %v4501 = vpop.f32.mrb[0].mxu0
    %v4502 = vadd.f32 0.0, %v4501
    %v4503 = vpop.f32.mrb[0].mxu0
    %4504 = vmatprep.mubr.f32.mxu0 0.0
    %4505 = vmatmul.mubr.f32.gmra.mrb[0].mxu0 %v4429
    %v4506 = vpop.f32.mrb[0].mxu0
    %v4507 = vadd.f32 0.0, %v4506
    %v4508 = vpop.f32.mrb[0].mxu0
    %4509 = vdwg.mxu0
    %v4510 = vmul.f32 %v4502, 0.35355338
    %v4511 = vmul.f32 %v4507, 0.35355338
    %v4512 = vsel %vm435, %v4510, -inf
    %4513 = vmax.xlane.f32.xlu0 %v4512
    %v4514 = vpop.xlane.xlu0 %4513
    %v4515 = vsel %vm439, %v4511, -inf
    %4516 = vmax.xlane.f32.xlu0 %v4515
    %v4517 = vpop.xlane.xlu0 %4516
    %v4518 = vsub.f32 %v4510, %v4514
    %v4519 = vsub.f32 %v4511, %v4517
    %v4520 = vmul.f32 %v4518, 1.442695
    %v4521 = vpow.pop %v4520
    %v4522 = vmul.f32 %v4519, 1.442695
    %v4523 = vpow.pop %v4522
    %v4524 = vsel %vm435, %v4521, 0.0
    %4525 = vadd.xlane.f32.xlu0 %v4524
    %v4526 = vpop.xlane.xlu0 %4525
    %v4527 = vsel %vm439, %v4523, 0.0
    %4528 = vadd.xlane.f32.xlu0 %v4527
    %v4529 = vpop.xlane.xlu0 %4528
    %v4530 = vrcp.pop %v4526
    %v4531 = vmul.f32 %v4521, %v4530
    %v4532 = vrcp.pop %v4529
    %v4533 = vmul.f32 %v4523, %v4532
    %4534 = vrot.lane.b32.xlu0 %v4208, 56
    %v4535 = vpop.permute.xlu0 %4534
    %4536 = vrot.lane.b32.xlu0 %v4213, 56
    %v4537 = vpop.permute.xlu0 %4536
    %v4540 = vsel %vm435, %v4531, 0
    %v4543 = vsel %vm435, %v4533, 0
    %v4545 = vsel %vm470, %v4537, 0
    %4547 = vmatprep.subr.mxu0 0.0
    %4548 = vmatpush1.msra.mxu0 %v4535
    %4549 = vmatprep.subr.mxu0 0.0
    %4550 = vmatpush1.msra.mxu0 %v4545
    %4551 = vmatprep.subr.mxu0 0.0
    %4552 = vmatpush1.msra.mxu0 0.0
    %4553 = vmatprep.subr.mxu0 0.0
    %4554 = vmatpush1.msra.mxu0 0.0
    %4555 = vmatprep.subr.mxu0 0.0
    %4556 = vmatpush1.msra.mxu0 0.0
    %4557 = vmatprep.subr.mxu0 0.0
    %4558 = vmatpush1.msra.mxu0 0.0
    %4559 = vmatprep.subr.mxu0 0.0
    %4560 = vmatpush1.msra.mxu0 0.0
    %4561 = vmatprep.subr.mxu0 0.0
    %4562 = vmatpush1.msra.mxu0 0.0
    %4563 = vmatprep.subr.mxu0 0.0
    %4564 = vmatpush1.msra.mxu0 0.0
    %4565 = vmatprep.subr.mxu0 0.0
    %4566 = vmatpush1.msra.mxu0 0.0
    %4567 = vmatprep.subr.mxu0 0.0
    %4568 = vmatpush1.msra.mxu0 0.0
    %4569 = vmatprep.subr.mxu0 0.0
    %4570 = vmatpush1.msra.mxu0 0.0
    %4571 = vmatprep.subr.mxu0 0.0
    %4572 = vmatpush1.msra.mxu0 0.0
    %4573 = vmatprep.subr.mxu0 0.0
    %4574 = vmatpush1.msra.mxu0 0.0
    %4575 = vmatprep.subr.mxu0 0.0
    %4576 = vmatpush1.msra.mxu0 0.0
    %4577 = vmatprep.subr.mxu0 0.0
    %4578 = vmatpush1.msra.mxu0 0.0
    %4579 = vmatprep.subr.mxu0 0.0
    %4580 = vmatpush1.msra.mxu0 0.0
    %4581 = vmatprep.subr.mxu0 0.0
    %4582 = vmatpush1.msra.mxu0 0.0
    %4583 = vmatprep.subr.mxu0 0.0
    %4584 = vmatpush1.msra.mxu0 0.0
    %4585 = vmatprep.subr.mxu0 0.0
    %4586 = vmatpush1.msra.mxu0 0.0
    %4587 = vmatprep.subr.mxu0 0.0
    %4588 = vmatpush1.msra.mxu0 0.0
    %4589 = vmatprep.subr.mxu0 0.0
    %4590 = vmatpush1.msra.mxu0 0.0
    %4591 = vmatprep.subr.mxu0 0.0
    %4592 = vmatpush1.msra.mxu0 0.0
    %4593 = vmatprep.subr.mxu0 0.0
    %4594 = vmatpush1.msra.mxu0 0.0
    %4595 = vmatprep.subr.mxu0 0.0
    %4596 = vmatpush1.msra.mxu0 0.0
    %4597 = vmatprep.subr.mxu0 0.0
    %4598 = vmatpush1.msra.mxu0 0.0
    %4599 = vmatprep.subr.mxu0 0.0
    %4600 = vmatpush1.msra.mxu0 0.0
    %4601 = vmatprep.subr.mxu0 0.0
    %4602 = vmatpush1.msra.mxu0 0.0
    %4603 = vmatprep.subr.mxu0 0.0
    %4604 = vmatpush1.msra.mxu0 0.0
    %4605 = vmatprep.subr.mxu0 0.0
    %4606 = vmatpush1.msra.mxu0 0.0
    %4607 = vmatprep.subr.mxu0 0.0
    %4608 = vmatpush1.msra.mxu0 0.0
    %4609 = vmatprep.subr.mxu0 0.0
    %4610 = vmatpush1.msra.mxu0 0.0
    %4611 = vmatprep.mubr.f32.mxu0 0.0
    %4612 = vmatmul.mubr.f32.gmra.mrb[0].mxu0 %v4540
    %v4613 = vpop.f32.mrb[0].mxu0
    %v4614 = vadd.f32 0.0, %v4613
    %v4615 = vpop.f32.mrb[0].mxu0
    %4616 = vmatprep.mubr.f32.mxu0 0.0
    %4617 = vmatmul.mubr.f32.gmra.mrb[0].mxu0 %v4543
    %v4618 = vpop.f32.mrb[0].mxu0
    %v4619 = vadd.f32 0.0, %v4618
    %v4620 = vpop.f32.mrb[0].mxu0
    %4621 = vdwg.mxu0
    %4624 = vrot.lane.b32.xlu0 %v4614, 8
    %v4625 = vpop.permute.xlu0 %4624
    %4626 = vrot.lane.b32.xlu0 %v4619, 8
    %v4627 = vpop.permute.xlu0 %4626
    %4630 = vst.msk [vmem:[#allocation3] sm:$0xff] %vm762, %v4625
    %4631 = vst.msk [vmem:[#allocation3 + $0x8] sm:$0x1] %vm764, %v4627
    %4632 = vrot.lane.b32.xlu0 %v4208, 112
    %v4633 = vpop.permute.xlu0 %4632
    %4634 = vrot.lane.b32.xlu0 %v4213, 112
    %v4635 = vpop.permute.xlu0 %4634
    %4636 = vrot.lane.b32.xlu0 %v4208, 80
    %v4637 = vpop.permute.xlu0 %4636
    %4638 = vrot.lane.b32.xlu0 %v4213, 80
    %v4639 = vpop.permute.xlu0 %4638
    %v4640 = vsel %vm349, %v4633, 0
    %v4642 = vsel %vm349, %v4635, 0
    %v4644 = vsel %vm349, %v4637, 0
    %v4646 = vsel %vm349, %v4639, 0
    %4648 = vmatprep.subr.mxu0 0.0
    %4649 = vmatpush1.xpose.msra.mxu0 %v4644
    %4650 = vmatprep.subr.mxu0 0.0
    %4651 = vmatpush1.xpose.msra.mxu0 %v4646
    %4652 = vmatprep.subr.mxu0 0.0
    %4653 = vmatpush1.xpose.msra.mxu0 0.0
    %4654 = vmatprep.subr.mxu0 0.0
    %4655 = vmatpush1.xpose.msra.mxu0 0.0
    %4656 = vmatprep.subr.mxu0 0.0
    %4657 = vmatpush1.xpose.msra.mxu0 0.0
    %4658 = vmatprep.subr.mxu0 0.0
    %4659 = vmatpush1.xpose.msra.mxu0 0.0
    %4660 = vmatprep.subr.mxu0 0.0
    %4661 = vmatpush1.xpose.msra.mxu0 0.0
    %4662 = vmatprep.subr.mxu0 0.0
    %4663 = vmatpush1.xpose.msra.mxu0 0.0
    %4664 = vmatprep.subr.mxu0 0.0
    %4665 = vmatpush1.xpose.msra.mxu0 0.0
    %4666 = vmatprep.subr.mxu0 0.0
    %4667 = vmatpush1.xpose.msra.mxu0 0.0
    %4668 = vmatprep.subr.mxu0 0.0
    %4669 = vmatpush1.xpose.msra.mxu0 0.0
    %4670 = vmatprep.subr.mxu0 0.0
    %4671 = vmatpush1.xpose.msra.mxu0 0.0
    %4672 = vmatprep.subr.mxu0 0.0
    %4673 = vmatpush1.xpose.msra.mxu0 0.0
    %4674 = vmatprep.subr.mxu0 0.0
    %4675 = vmatpush1.xpose.msra.mxu0 0.0
    %4676 = vmatprep.subr.mxu0 0.0
    %4677 = vmatpush1.xpose.msra.mxu0 0.0
    %4678 = vmatprep.subr.mxu0 0.0
    %4679 = vmatpush1.xpose.msra.mxu0 0.0
    %4680 = vmatprep.subr.mxu0 0.0
    %4681 = vmatpush1.xpose.msra.mxu0 0.0
    %4682 = vmatprep.subr.mxu0 0.0
    %4683 = vmatpush1.xpose.msra.mxu0 0.0
    %4684 = vmatprep.subr.mxu0 0.0
    %4685 = vmatpush1.xpose.msra.mxu0 0.0
    %4686 = vmatprep.subr.mxu0 0.0
    %4687 = vmatpush1.xpose.msra.mxu0 0.0
    %4688 = vmatprep.subr.mxu0 0.0
    %4689 = vmatpush1.xpose.msra.mxu0 0.0
    %4690 = vmatprep.subr.mxu0 0.0
    %4691 = vmatpush1.xpose.msra.mxu0 0.0
    %4692 = vmatprep.subr.mxu0 0.0
    %4693 = vmatpush1.xpose.msra.mxu0 0.0
    %4694 = vmatprep.subr.mxu0 0.0
    %4695 = vmatpush1.xpose.msra.mxu0 0.0
    %4696 = vmatprep.subr.mxu0 0.0
    %4697 = vmatpush1.xpose.msra.mxu0 0.0
    %4698 = vmatprep.subr.mxu0 0.0
    %4699 = vmatpush1.xpose.msra.mxu0 0.0
    %4700 = vmatprep.subr.mxu0 0.0
    %4701 = vmatpush1.xpose.msra.mxu0 0.0
    %4702 = vmatprep.subr.mxu0 0.0
    %4703 = vmatpush1.xpose.msra.mxu0 0.0
    %4704 = vmatprep.subr.mxu0 0.0
    %4705 = vmatpush1.xpose.msra.mxu0 0.0
    %4706 = vmatprep.subr.mxu0 0.0
    %4707 = vmatpush1.xpose.msra.mxu0 0.0
    %4708 = vmatprep.subr.mxu0 0.0
    %4709 = vmatpush1.xpose.msra.mxu0 0.0
    %4710 = vmatprep.subr.mxu0 0.0
    %4711 = vmatpush1.xpose.msra.mxu0 0.0
    %4712 = vmatprep.mubr.f32.mxu0 0.0
    %4713 = vmatmul.mubr.f32.gmra.mrb[0].mxu0 %v4640
    %v4714 = vpop.f32.mrb[0].mxu0
    %v4715 = vadd.f32 0.0, %v4714
    %v4716 = vpop.f32.mrb[0].mxu0
    %4717 = vmatprep.mubr.f32.mxu0 0.0
    %4718 = vmatmul.mubr.f32.gmra.mrb[0].mxu0 %v4642
    %v4719 = vpop.f32.mrb[0].mxu0
    %v4720 = vadd.f32 0.0, %v4719
    %v4721 = vpop.f32.mrb[0].mxu0
    %4722 = vdwg.mxu0
    %v4723 = vmul.f32 %v4715, 0.35355338
    %v4724 = vmul.f32 %v4720, 0.35355338
    %v4725 = vsel %vm435, %v4723, -inf
    %4726 = vmax.xlane.f32.xlu0 %v4725
    %v4727 = vpop.xlane.xlu0 %4726
    %v4728 = vsel %vm439, %v4724, -inf
    %4729 = vmax.xlane.f32.xlu0 %v4728
    %v4730 = vpop.xlane.xlu0 %4729
    %v4731 = vsub.f32 %v4723, %v4727
    %v4732 = vsub.f32 %v4724, %v4730
    %v4733 = vmul.f32 %v4731, 1.442695
    %v4734 = vpow.pop %v4733
    %v4735 = vmul.f32 %v4732, 1.442695
    %v4736 = vpow.pop %v4735
    %v4737 = vsel %vm435, %v4734, 0.0
    %4738 = vadd.xlane.f32.xlu0 %v4737
    %v4739 = vpop.xlane.xlu0 %4738
    %v4740 = vsel %vm439, %v4736, 0.0
    %4741 = vadd.xlane.f32.xlu0 %v4740
    %v4742 = vpop.xlane.xlu0 %4741
    %v4743 = vrcp.pop %v4739
    %v4744 = vmul.f32 %v4734, %v4743
    %v4745 = vrcp.pop %v4742
    %v4746 = vmul.f32 %v4736, %v4745
    %4747 = vrot.lane.b32.xlu0 %v4208, 48
    %v4748 = vpop.permute.xlu0 %4747
    %4749 = vrot.lane.b32.xlu0 %v4213, 48
    %v4750 = vpop.permute.xlu0 %4749
    %v4753 = vsel %vm435, %v4744, 0
    %v4756 = vsel %vm435, %v4746, 0
    %v4758 = vsel %vm470, %v4750, 0
    %4760 = vmatprep.subr.mxu0 0.0
    %4761 = vmatpush1.msra.mxu0 %v4748
    %4762 = vmatprep.subr.mxu0 0.0
    %4763 = vmatpush1.msra.mxu0 %v4758
    %4764 = vmatprep.subr.mxu0 0.0
    %4765 = vmatpush1.msra.mxu0 0.0
    %4766 = vmatprep.subr.mxu0 0.0
    %4767 = vmatpush1.msra.mxu0 0.0
    %4768 = vmatprep.subr.mxu0 0.0
    %4769 = vmatpush1.msra.mxu0 0.0
    %4770 = vmatprep.subr.mxu0 0.0
    %4771 = vmatpush1.msra.mxu0 0.0
    %4772 = vmatprep.subr.mxu0 0.0
    %4773 = vmatpush1.msra.mxu0 0.0
    %4774 = vmatprep.subr.mxu0 0.0
    %4775 = vmatpush1.msra.mxu0 0.0
    %4776 = vmatprep.subr.mxu0 0.0
    %4777 = vmatpush1.msra.mxu0 0.0
    %4778 = vmatprep.subr.mxu0 0.0
    %4779 = vmatpush1.msra.mxu0 0.0
    %4780 = vmatprep.subr.mxu0 0.0
    %4781 = vmatpush1.msra.mxu0 0.0
    %4782 = vmatprep.subr.mxu0 0.0
    %4783 = vmatpush1.msra.mxu0 0.0
    %4784 = vmatprep.subr.mxu0 0.0
    %4785 = vmatpush1.msra.mxu0 0.0
    %4786 = vmatprep.subr.mxu0 0.0
    %4787 = vmatpush1.msra.mxu0 0.0
    %4788 = vmatprep.subr.mxu0 0.0
    %4789 = vmatpush1.msra.mxu0 0.0
    %4790 = vmatprep.subr.mxu0 0.0
    %4791 = vmatpush1.msra.mxu0 0.0
    %4792 = vmatprep.subr.mxu0 0.0
    %4793 = vmatpush1.msra.mxu0 0.0
    %4794 = vmatprep.subr.mxu0 0.0
    %4795 = vmatpush1.msra.mxu0 0.0
    %4796 = vmatprep.subr.mxu0 0.0
    %4797 = vmatpush1.msra.mxu0 0.0
    %4798 = vmatprep.subr.mxu0 0.0
    %4799 = vmatpush1.msra.mxu0 0.0
    %4800 = vmatprep.subr.mxu0 0.0
    %4801 = vmatpush1.msra.mxu0 0.0
    %4802 = vmatprep.subr.mxu0 0.0
    %4803 = vmatpush1.msra.mxu0 0.0
    %4804 = vmatprep.subr.mxu0 0.0
    %4805 = vmatpush1.msra.mxu0 0.0
    %4806 = vmatprep.subr.mxu0 0.0
    %4807 = vmatpush1.msra.mxu0 0.0
    %4808 = vmatprep.subr.mxu0 0.0
    %4809 = vmatpush1.msra.mxu0 0.0
    %4810 = vmatprep.subr.mxu0 0.0
    %4811 = vmatpush1.msra.mxu0 0.0
    %4812 = vmatprep.subr.mxu0 0.0
    %4813 = vmatpush1.msra.mxu0 0.0
    %4814 = vmatprep.subr.mxu0 0.0
    %4815 = vmatpush1.msra.mxu0 0.0
    %4816 = vmatprep.subr.mxu0 0.0
    %4817 = vmatpush1.msra.mxu0 0.0
    %4818 = vmatprep.subr.mxu0 0.0
    %4819 = vmatpush1.msra.mxu0 0.0
    %4820 = vmatprep.subr.mxu0 0.0
    %4821 = vmatpush1.msra.mxu0 0.0
    %4822 = vmatprep.subr.mxu0 0.0
    %4823 = vmatpush1.msra.mxu0 0.0
    %4824 = vmatprep.mubr.f32.mxu0 0.0
    %4825 = vmatmul.mubr.f32.gmra.mrb[0].mxu0 %v4753
    %v4826 = vpop.f32.mrb[0].mxu0
    %v4827 = vadd.f32 0.0, %v4826
    %v4828 = vpop.f32.mrb[0].mxu0
    %4829 = vmatprep.mubr.f32.mxu0 0.0
    %4830 = vmatmul.mubr.f32.gmra.mrb[0].mxu0 %v4756
    %v4831 = vpop.f32.mrb[0].mxu0
    %v4832 = vadd.f32 0.0, %v4831
    %v4833 = vpop.f32.mrb[0].mxu0
    %4834 = vdwg.mxu0
    %4837 = vrot.lane.b32.xlu0 %v4827, 16
    %v4838 = vpop.permute.xlu0 %4837
    %4839 = vrot.lane.b32.xlu0 %v4832, 16
    %v4840 = vpop.permute.xlu0 %4839
    %4843 = vst.msk [vmem:[#allocation3] sm:$0xff] %vm977, %v4838
    %4844 = vst.msk [vmem:[#allocation3 + $0x8] sm:$0x1] %vm979, %v4840
    %4845 = vrot.lane.b32.xlu0 %v4208, 104
    %v4846 = vpop.permute.xlu0 %4845
    %4847 = vrot.lane.b32.xlu0 %v4213, 104
    %v4848 = vpop.permute.xlu0 %4847
    %4849 = vrot.lane.b32.xlu0 %v4208, 72
    %v4850 = vpop.permute.xlu0 %4849
    %4851 = vrot.lane.b32.xlu0 %v4213, 72
    %v4852 = vpop.permute.xlu0 %4851
    %v4853 = vsel %vm349, %v4846, 0
    %v4855 = vsel %vm349, %v4848, 0
    %v4857 = vsel %vm349, %v4850, 0
    %v4859 = vsel %vm349, %v4852, 0
    %4861 = vmatprep.subr.mxu0 0.0
    %4862 = vmatpush1.xpose.msra.mxu0 %v4857
    %4863 = vmatprep.subr.mxu0 0.0
    %4864 = vmatpush1.xpose.msra.mxu0 %v4859
    %4865 = vmatprep.subr.mxu0 0.0
    %4866 = vmatpush1.xpose.msra.mxu0 0.0
    %4867 = vmatprep.subr.mxu0 0.0
    %4868 = vmatpush1.xpose.msra.mxu0 0.0
    %4869 = vmatprep.subr.mxu0 0.0
    %4870 = vmatpush1.xpose.msra.mxu0 0.0
    %4871 = vmatprep.subr.mxu0 0.0
    %4872 = vmatpush1.xpose.msra.mxu0 0.0
    %4873 = vmatprep.subr.mxu0 0.0
    %4874 = vmatpush1.xpose.msra.mxu0 0.0
    %4875 = vmatprep.subr.mxu0 0.0
    %4876 = vmatpush1.xpose.msra.mxu0 0.0
    %4877 = vmatprep.subr.mxu0 0.0
    %4878 = vmatpush1.xpose.msra.mxu0 0.0
    %4879 = vmatprep.subr.mxu0 0.0
    %4880 = vmatpush1.xpose.msra.mxu0 0.0
    %4881 = vmatprep.subr.mxu0 0.0
    %4882 = vmatpush1.xpose.msra.mxu0 0.0
    %4883 = vmatprep.subr.mxu0 0.0
    %4884 = vmatpush1.xpose.msra.mxu0 0.0
    %4885 = vmatprep.subr.mxu0 0.0
    %4886 = vmatpush1.xpose.msra.mxu0 0.0
    %4887 = vmatprep.subr.mxu0 0.0
    %4888 = vmatpush1.xpose.msra.mxu0 0.0
    %4889 = vmatprep.subr.mxu0 0.0
    %4890 = vmatpush1.xpose.msra.mxu0 0.0
    %4891 = vmatprep.subr.mxu0 0.0
    %4892 = vmatpush1.xpose.msra.mxu0 0.0
    %4893 = vmatprep.subr.mxu0 0.0
    %4894 = vmatpush1.xpose.msra.mxu0 0.0
    %4895 = vmatprep.subr.mxu0 0.0
    %4896 = vmatpush1.xpose.msra.mxu0 0.0
    %4897 = vmatprep.subr.mxu0 0.0
    %4898 = vmatpush1.xpose.msra.mxu0 0.0
    %4899 = vmatprep.subr.mxu0 0.0
    %4900 = vmatpush1.xpose.msra.mxu0 0.0
    %4901 = vmatprep.subr.mxu0 0.0
    %4902 = vmatpush1.xpose.msra.mxu0 0.0
    %4903 = vmatprep.subr.mxu0 0.0
    %4904 = vmatpush1.xpose.msra.mxu0 0.0
    %4905 = vmatprep.subr.mxu0 0.0
    %4906 = vmatpush1.xpose.msra.mxu0 0.0
    %4907 = vmatprep.subr.mxu0 0.0
    %4908 = vmatpush1.xpose.msra.mxu0 0.0
    %4909 = vmatprep.subr.mxu0 0.0
    %4910 = vmatpush1.xpose.msra.mxu0 0.0
    %4911 = vmatprep.subr.mxu0 0.0
    %4912 = vmatpush1.xpose.msra.mxu0 0.0
    %4913 = vmatprep.subr.mxu0 0.0
    %4914 = vmatpush1.xpose.msra.mxu0 0.0
    %4915 = vmatprep.subr.mxu0 0.0
    %4916 = vmatpush1.xpose.msra.mxu0 0.0
    %4917 = vmatprep.subr.mxu0 0.0
    %4918 = vmatpush1.xpose.msra.mxu0 0.0
    %4919 = vmatprep.subr.mxu0 0.0
    %4920 = vmatpush1.xpose.msra.mxu0 0.0
    %4921 = vmatprep.subr.mxu0 0.0
    %4922 = vmatpush1.xpose.msra.mxu0 0.0
    %4923 = vmatprep.subr.mxu0 0.0
    %4924 = vmatpush1.xpose.msra.mxu0 0.0
    %4925 = vmatprep.mubr.f32.mxu0 0.0
    %4926 = vmatmul.mubr.f32.gmra.mrb[0].mxu0 %v4853
    %v4927 = vpop.f32.mrb[0].mxu0
    %v4928 = vadd.f32 0.0, %v4927
    %v4929 = vpop.f32.mrb[0].mxu0
    %4930 = vmatprep.mubr.f32.mxu0 0.0
    %4931 = vmatmul.mubr.f32.gmra.mrb[0].mxu0 %v4855
    %v4932 = vpop.f32.mrb[0].mxu0
    %v4933 = vadd.f32 0.0, %v4932
    %v4934 = vpop.f32.mrb[0].mxu0
    %4935 = vdwg.mxu0
    %v4936 = vmul.f32 %v4928, 0.35355338
    %v4937 = vmul.f32 %v4933, 0.35355338
    %v4938 = vsel %vm435, %v4936, -inf
    %4939 = vmax.xlane.f32.xlu0 %v4938
    %v4940 = vpop.xlane.xlu0 %4939
    %v4941 = vsel %vm439, %v4937, -inf
    %4942 = vmax.xlane.f32.xlu0 %v4941
    %v4943 = vpop.xlane.xlu0 %4942
    %v4944 = vsub.f32 %v4936, %v4940
    %v4945 = vsub.f32 %v4937, %v4943
    %v4946 = vmul.f32 %v4944, 1.442695
    %v4947 = vpow.pop %v4946
    %v4948 = vmul.f32 %v4945, 1.442695
    %v4949 = vpow.pop %v4948
    %v4950 = vsel %vm435, %v4947, 0.0
    %4951 = vadd.xlane.f32.xlu0 %v4950
    %v4952 = vpop.xlane.xlu0 %4951
    %v4953 = vsel %vm439, %v4949, 0.0
    %4954 = vadd.xlane.f32.xlu0 %v4953
    %v4955 = vpop.xlane.xlu0 %4954
    %v4956 = vrcp.pop %v4952
    %v4957 = vmul.f32 %v4947, %v4956
    %v4958 = vrcp.pop %v4955
    %v4959 = vmul.f32 %v4949, %v4958
    %4960 = vrot.lane.b32.xlu0 %v4208, 40
    %v4961 = vpop.permute.xlu0 %4960
    %4962 = vrot.lane.b32.xlu0 %v4213, 40
    %v4963 = vpop.permute.xlu0 %4962
    %v4966 = vsel %vm435, %v4957, 0
    %v4969 = vsel %vm435, %v4959, 0
    %v4971 = vsel %vm470, %v4963, 0
    %4973 = vmatprep.subr.mxu0 0.0
    %4974 = vmatpush1.msra.mxu0 %v4961
    %4975 = vmatprep.subr.mxu0 0.0
    %4976 = vmatpush1.msra.mxu0 %v4971
    %4977 = vmatprep.subr.mxu0 0.0
    %4978 = vmatpush1.msra.mxu0 0.0
    %4979 = vmatprep.subr.mxu0 0.0
    %4980 = vmatpush1.msra.mxu0 0.0
    %4981 = vmatprep.subr.mxu0 0.0
    %4982 = vmatpush1.msra.mxu0 0.0
    %4983 = vmatprep.subr.mxu0 0.0
    %4984 = vmatpush1.msra.mxu0 0.0
    %4985 = vmatprep.subr.mxu0 0.0
    %4986 = vmatpush1.msra.mxu0 0.0
    %4987 = vmatprep.subr.mxu0 0.0
    %4988 = vmatpush1.msra.mxu0 0.0
    %4989 = vmatprep.subr.mxu0 0.0
    %4990 = vmatpush1.msra.mxu0 0.0
    %4991 = vmatprep.subr.mxu0 0.0
    %4992 = vmatpush1.msra.mxu0 0.0
    %4993 = vmatprep.subr.mxu0 0.0
    %4994 = vmatpush1.msra.mxu0 0.0
    %4995 = vmatprep.subr.mxu0 0.0
    %4996 = vmatpush1.msra.mxu0 0.0
    %4997 = vmatprep.subr.mxu0 0.0
    %4998 = vmatpush1.msra.mxu0 0.0
    %4999 = vmatprep.subr.mxu0 0.0
    %5000 = vmatpush1.msra.mxu0 0.0
    %5001 = vmatprep.subr.mxu0 0.0
    %5002 = vmatpush1.msra.mxu0 0.0
    %5003 = vmatprep.subr.mxu0 0.0
    %5004 = vmatpush1.msra.mxu0 0.0
    %5005 = vmatprep.subr.mxu0 0.0
    %5006 = vmatpush1.msra.mxu0 0.0
    %5007 = vmatprep.subr.mxu0 0.0
    %5008 = vmatpush1.msra.mxu0 0.0
    %5009 = vmatprep.subr.mxu0 0.0
    %5010 = vmatpush1.msra.mxu0 0.0
    %5011 = vmatprep.subr.mxu0 0.0
    %5012 = vmatpush1.msra.mxu0 0.0
    %5013 = vmatprep.subr.mxu0 0.0
    %5014 = vmatpush1.msra.mxu0 0.0
    %5015 = vmatprep.subr.mxu0 0.0
    %5016 = vmatpush1.msra.mxu0 0.0
    %5017 = vmatprep.subr.mxu0 0.0
    %5018 = vmatpush1.msra.mxu0 0.0
    %5019 = vmatprep.subr.mxu0 0.0
    %5020 = vmatpush1.msra.mxu0 0.0
    %5021 = vmatprep.subr.mxu0 0.0
    %5022 = vmatpush1.msra.mxu0 0.0
    %5023 = vmatprep.subr.mxu0 0.0
    %5024 = vmatpush1.msra.mxu0 0.0
    %5025 = vmatprep.subr.mxu0 0.0
    %5026 = vmatpush1.msra.mxu0 0.0
    %5027 = vmatprep.subr.mxu0 0.0
    %5028 = vmatpush1.msra.mxu0 0.0
    %5029 = vmatprep.subr.mxu0 0.0
    %5030 = vmatpush1.msra.mxu0 0.0
    %5031 = vmatprep.subr.mxu0 0.0
    %5032 = vmatpush1.msra.mxu0 0.0
    %5033 = vmatprep.subr.mxu0 0.0
    %5034 = vmatpush1.msra.mxu0 0.0
    %5035 = vmatprep.subr.mxu0 0.0
    %5036 = vmatpush1.msra.mxu0 0.0
    %5037 = vmatprep.mubr.f32.mxu0 0.0
    %5038 = vmatmul.mubr.f32.gmra.mrb[0].mxu0 %v4966
    %v5039 = vpop.f32.mrb[0].mxu0
    %v5040 = vadd.f32 0.0, %v5039
    %v5041 = vpop.f32.mrb[0].mxu0
    %5042 = vmatprep.mubr.f32.mxu0 0.0
    %5043 = vmatmul.mubr.f32.gmra.mrb[0].mxu0 %v4969
    %v5044 = vpop.f32.mrb[0].mxu0
    %v5045 = vadd.f32 0.0, %v5044
    %v5046 = vpop.f32.mrb[0].mxu0
    %5047 = vdwg.mxu0
    %5050 = vrot.lane.b32.xlu0 %v5040, 24
    %v5051 = vpop.permute.xlu0 %5050
    %5052 = vrot.lane.b32.xlu0 %v5045, 24
    %v5053 = vpop.permute.xlu0 %5052
    %5056 = vst.msk [vmem:[#allocation3] sm:$0xff] %vm1192, %v5051
    %5057 = vst.msk [vmem:[#allocation3 + $0x8] sm:$0x1] %vm1194, %v5053
    %v5058 = vld [vmem:[#allocation3] sm:$0xff]
    %v5059 = vld [vmem:[#allocation3 + $0x8] sm:$0x1]
    %v5060 = vlaneseq
    %v5061 = vshrl.u32 %v5060, 7
    %v5062 = vsub.s32 0, %v5061
    %v5063 = vrot.slane %v4213, %v5062
    %v5064 = vsel %vm1200, %v5063, 0.0
    %v5065 = vsel %vm1201, %v5063, 0.0
    %5068 = vrot.lane.b32.xlu0 %v5064, 32
    %v5069 = vpop.permute.xlu0 %5068
    %5070 = vrot.lane.b32.xlu0 %v5065, 32
    %v5071 = vpop.permute.xlu0 %5070
    %v5074 = vadd.f32 %v5058, %v5069
    %v5075 = vadd.f32 %v5059, %v5071
    %v5077 = vsel %vm226, %v5074, 0
    %v5080 = vsel %vm226, %v5075, 0
    %5082 = vmatprep.subr.mxu0 0.0
    %5083 = vmatpush1.msra.mxu0 %v2827
    %5084 = vmatprep.subr.mxu0 0.0
    %5085 = vmatpush1.msra.mxu0 %v2828
    %5086 = vmatprep.subr.mxu0 0.0
    %5087 = vmatpush1.msra.mxu0 %v2829
    %5088 = vmatprep.subr.mxu0 0.0
    %5089 = vmatpush1.msra.mxu0 %v2830
    %5090 = vmatprep.subr.mxu0 0.0
    %5091 = vmatpush1.msra.mxu0 0.0
    %5092 = vmatprep.subr.mxu0 0.0
    %5093 = vmatpush1.msra.mxu0 0.0
    %5094 = vmatprep.subr.mxu0 0.0
    %5095 = vmatpush1.msra.mxu0 0.0
    %5096 = vmatprep.subr.mxu0 0.0
    %5097 = vmatpush1.msra.mxu0 0.0
    %5098 = vmatprep.subr.mxu0 0.0
    %5099 = vmatpush1.msra.mxu0 0.0
    %5100 = vmatprep.subr.mxu0 0.0
    %5101 = vmatpush1.msra.mxu0 0.0
    %5102 = vmatprep.subr.mxu0 0.0
    %5103 = vmatpush1.msra.mxu0 0.0
    %5104 = vmatprep.subr.mxu0 0.0
    %5105 = vmatpush1.msra.mxu0 0.0
    %5106 = vmatprep.subr.mxu0 0.0
    %5107 = vmatpush1.msra.mxu0 0.0
    %5108 = vmatprep.subr.mxu0 0.0
    %5109 = vmatpush1.msra.mxu0 0.0
    %5110 = vmatprep.subr.mxu0 0.0
    %5111 = vmatpush1.msra.mxu0 0.0
    %5112 = vmatprep.subr.mxu0 0.0
    %5113 = vmatpush1.msra.mxu0 0.0
    %5114 = vmatprep.subr.mxu0 0.0
    %5115 = vmatpush1.msra.mxu0 0.0
    %5116 = vmatprep.subr.mxu0 0.0
    %5117 = vmatpush1.msra.mxu0 0.0
    %5118 = vmatprep.subr.mxu0 0.0
    %5119 = vmatpush1.msra.mxu0 0.0
    %5120 = vmatprep.subr.mxu0 0.0
    %5121 = vmatpush1.msra.mxu0 0.0
    %5122 = vmatprep.subr.mxu0 0.0
    %5123 = vmatpush1.msra.mxu0 0.0
    %5124 = vmatprep.subr.mxu0 0.0
    %5125 = vmatpush1.msra.mxu0 0.0
    %5126 = vmatprep.subr.mxu0 0.0
    %5127 = vmatpush1.msra.mxu0 0.0
    %5128 = vmatprep.subr.mxu0 0.0
    %5129 = vmatpush1.msra.mxu0 0.0
    %5130 = vmatprep.subr.mxu0 0.0
    %5131 = vmatpush1.msra.mxu0 0.0
    %5132 = vmatprep.subr.mxu0 0.0
    %5133 = vmatpush1.msra.mxu0 0.0
    %5134 = vmatprep.subr.mxu0 0.0
    %5135 = vmatpush1.msra.mxu0 0.0
    %5136 = vmatprep.subr.mxu0 0.0
    %5137 = vmatpush1.msra.mxu0 0.0
    %5138 = vmatprep.subr.mxu0 0.0
    %5139 = vmatpush1.msra.mxu0 0.0
    %5140 = vmatprep.subr.mxu0 0.0
    %5141 = vmatpush1.msra.mxu0 0.0
    %5142 = vmatprep.subr.mxu0 0.0
    %5143 = vmatpush1.msra.mxu0 0.0
    %5144 = vmatprep.subr.mxu0 0.0
    %5145 = vmatpush1.msra.mxu0 0.0
    %5146 = vmatprep.mubr.f32.mxu0 0.0
    %5147 = vmatmul.mubr.f32.gmra.mrb[0].mxu0 %v5077
    %v5148 = vpop.f32.mrb[0].mxu0
    %v5149 = vadd.f32 %v3793, %v5148
    %v5150 = vpop.f32.mrb[0].mxu0
    %5151 = vmatprep.mubr.f32.mxu0 0.0
    %5152 = vmatmul.mubr.f32.gmra.mrb[0].mxu0 %v5080
    %v5153 = vpop.f32.mrb[0].mxu0
    %v5154 = vadd.f32 %v3793, %v5153
    %v5155 = vpop.f32.mrb[0].mxu0
    %5156 = vdwg.mxu0
    %v5157 = vadd.f32 %v4133, %v5149
    %v5158 = vadd.f32 %v4134, %v5154
    %v5159 = vsel %vm226, %v5157, 0.0
    %v5160 = vsel %vm228, %v5158, 0.0
    %v5161 = vadd.f32 %v5159, %v5160
    %v5162 = vrot.slane %v5161, 4
    %v5163 = vadd.f32 %v5161, %v5162
    %v5164 = vrot.slane %v5163, 2
    %v5165 = vadd.f32 %v5163, %v5164
    %v5166 = vrot.slane %v5165, 1
    %v5167 = vadd.f32 %v5165, %v5166
    %v5168 = vmul.f32 %v5167, %v1314
    %v5169 = vsub.f32 %v5157, %v5168
    %v5170 = vsub.f32 %v5158, %v5168
    %v5171 = vmul.f32 %v5169, %v5169
    %v5172 = vmul.f32 %v5170, %v5170
    %v5173 = vsel %vm226, %v5171, 0.0
    %v5174 = vsel %vm228, %v5172, 0.0
    %v5175 = vadd.f32 %v5173, %v5174
    %v5176 = vrot.slane %v5175, 4
    %v5177 = vadd.f32 %v5175, %v5176
    %v5178 = vrot.slane %v5177, 2
    %v5179 = vadd.f32 %v5177, %v5178
    %v5180 = vrot.slane %v5179, 1
    %v5181 = vadd.f32 %v5179, %v5180
    %v5182 = vmul.f32 %v5181, %v1314
    %v5183 = vadd.f32 %v5182, 1e-05
    %v5184 = vrsqrt.pop %v5183
    %v5185 = vmul.f32 %v5169, %v5184
    %v5186 = vmul.f32 %v5170, %v5184
    %v5187 = vmul.f32 %v5185, %v3908
    %v5188 = vmul.f32 %v5186, %v3908
    %v5189 = vadd.f32 %v5187, %v3914
    %v5190 = vadd.f32 %v5188, %v3914
    %v5192 = vsel %vm226, %v5189, 0
    %v5195 = vsel %vm226, %v5190, 0
    %5197 = vmatprep.subr.mxu0 0.0
    %5198 = vmatpush1.msra.mxu0 %v2832
    %5199 = vmatprep.subr.mxu0 0.0
    %5200 = vmatpush1.msra.mxu0 %v2833
    %5201 = vmatprep.subr.mxu0 0.0
    %5202 = vmatpush1.msra.mxu0 %v2834
    %5203 = vmatprep.subr.mxu0 0.0
    %5204 = vmatpush1.msra.mxu0 %v2835
    %5205 = vmatprep.subr.mxu0 0.0
    %5206 = vmatpush1.msra.mxu0 0.0
    %5207 = vmatprep.subr.mxu0 0.0
    %5208 = vmatpush1.msra.mxu0 0.0
    %5209 = vmatprep.subr.mxu0 0.0
    %5210 = vmatpush1.msra.mxu0 0.0
    %5211 = vmatprep.subr.mxu0 0.0
    %5212 = vmatpush1.msra.mxu0 0.0
    %5213 = vmatprep.subr.mxu0 0.0
    %5214 = vmatpush1.msra.mxu0 0.0
    %5215 = vmatprep.subr.mxu0 0.0
    %5216 = vmatpush1.msra.mxu0 0.0
    %5217 = vmatprep.subr.mxu0 0.0
    %5218 = vmatpush1.msra.mxu0 0.0
    %5219 = vmatprep.subr.mxu0 0.0
    %5220 = vmatpush1.msra.mxu0 0.0
    %5221 = vmatprep.subr.mxu0 0.0
    %5222 = vmatpush1.msra.mxu0 0.0
    %5223 = vmatprep.subr.mxu0 0.0
    %5224 = vmatpush1.msra.mxu0 0.0
    %5225 = vmatprep.subr.mxu0 0.0
    %5226 = vmatpush1.msra.mxu0 0.0
    %5227 = vmatprep.subr.mxu0 0.0
    %5228 = vmatpush1.msra.mxu0 0.0
    %5229 = vmatprep.subr.mxu0 0.0
    %5230 = vmatpush1.msra.mxu0 0.0
    %5231 = vmatprep.subr.mxu0 0.0
    %5232 = vmatpush1.msra.mxu0 0.0
    %5233 = vmatprep.subr.mxu0 0.0
    %5234 = vmatpush1.msra.mxu0 0.0
    %5235 = vmatprep.subr.mxu0 0.0
    %5236 = vmatpush1.msra.mxu0 0.0
    %5237 = vmatprep.subr.mxu0 0.0
    %5238 = vmatpush1.msra.mxu0 0.0
    %5239 = vmatprep.subr.mxu0 0.0
    %5240 = vmatpush1.msra.mxu0 0.0
    %5241 = vmatprep.subr.mxu0 0.0
    %5242 = vmatpush1.msra.mxu0 0.0
    %5243 = vmatprep.subr.mxu0 0.0
    %5244 = vmatpush1.msra.mxu0 0.0
    %5245 = vmatprep.subr.mxu0 0.0
    %5246 = vmatpush1.msra.mxu0 0.0
    %5247 = vmatprep.subr.mxu0 0.0
    %5248 = vmatpush1.msra.mxu0 0.0
    %5249 = vmatprep.subr.mxu0 0.0
    %5250 = vmatpush1.msra.mxu0 0.0
    %5251 = vmatprep.subr.mxu0 0.0
    %5252 = vmatpush1.msra.mxu0 0.0
    %5253 = vmatprep.subr.mxu0 0.0
    %5254 = vmatpush1.msra.mxu0 0.0
    %5255 = vmatprep.subr.mxu0 0.0
    %5256 = vmatpush1.msra.mxu0 0.0
    %5257 = vmatprep.subr.mxu0 0.0
    %5258 = vmatpush1.msra.mxu0 0.0
    %5259 = vmatprep.subr.mxu0 0.0
    %5260 = vmatpush1.msra.mxu0 0.0
    %5261 = vmatprep.mubr.f32.mxu0 0.0
    %5262 = vmatmul.mubr.f32.gmra.mrb[0].mxu0 %v5192
    %v5263 = vpop.f32.mrb[0].mxu0
    %v5264 = vadd.f32 %v3920, %v5263
    %v5265 = vpop.f32.mrb[0].mxu0
    %5266 = vmatprep.mubr.f32.mxu0 0.0
    %5267 = vmatmul.mubr.f32.gmra.mrb[0].mxu0 %v5195
    %v5268 = vpop.f32.mrb[0].mxu0
    %v5269 = vadd.f32 %v3920, %v5268
    %v5270 = vpop.f32.mrb[0].mxu0
    %5271 = vdwg.mxu0
    %v5272 = vmax.f32 %v5264, 0.0
    %v5273 = vmax.f32 %v5269, 0.0
    %v5275 = vsel %vm1437, %v5272, 0
    %v5278 = vsel %vm1437, %v5273, 0
    %5280 = vmatprep.subr.mxu0 0.0
    %5281 = vmatpush1.msra.mxu0 %v2837
    %5282 = vmatprep.subr.mxu0 0.0
    %5283 = vmatpush1.msra.mxu0 %v2838
    %5284 = vmatprep.subr.mxu0 0.0
    %5285 = vmatpush1.msra.mxu0 %v2839
    %5286 = vmatprep.subr.mxu0 0.0
    %5287 = vmatpush1.msra.mxu0 %v2840
    %5288 = vmatprep.subr.mxu0 0.0
    %5289 = vmatpush1.msra.mxu0 %v2841
    %5290 = vmatprep.subr.mxu0 0.0
    %5291 = vmatpush1.msra.mxu0 %v2842
    %5292 = vmatprep.subr.mxu0 0.0
    %5293 = vmatpush1.msra.mxu0 %v2843
    %5294 = vmatprep.subr.mxu0 0.0
    %5295 = vmatpush1.msra.mxu0 %v2844
    %5296 = vmatprep.subr.mxu0 0.0
    %5297 = vmatpush1.msra.mxu0 0.0
    %5298 = vmatprep.subr.mxu0 0.0
    %5299 = vmatpush1.msra.mxu0 0.0
    %5300 = vmatprep.subr.mxu0 0.0
    %5301 = vmatpush1.msra.mxu0 0.0
    %5302 = vmatprep.subr.mxu0 0.0
    %5303 = vmatpush1.msra.mxu0 0.0
    %5304 = vmatprep.subr.mxu0 0.0
    %5305 = vmatpush1.msra.mxu0 0.0
    %5306 = vmatprep.subr.mxu0 0.0
    %5307 = vmatpush1.msra.mxu0 0.0
    %5308 = vmatprep.subr.mxu0 0.0
    %5309 = vmatpush1.msra.mxu0 0.0
    %5310 = vmatprep.subr.mxu0 0.0
    %5311 = vmatpush1.msra.mxu0 0.0
    %5312 = vmatprep.subr.mxu0 0.0
    %5313 = vmatpush1.msra.mxu0 0.0
    %5314 = vmatprep.subr.mxu0 0.0
    %5315 = vmatpush1.msra.mxu0 0.0
    %5316 = vmatprep.subr.mxu0 0.0
    %5317 = vmatpush1.msra.mxu0 0.0
    %5318 = vmatprep.subr.mxu0 0.0
    %5319 = vmatpush1.msra.mxu0 0.0
    %5320 = vmatprep.subr.mxu0 0.0
    %5321 = vmatpush1.msra.mxu0 0.0
    %5322 = vmatprep.subr.mxu0 0.0
    %5323 = vmatpush1.msra.mxu0 0.0
    %5324 = vmatprep.subr.mxu0 0.0
    %5325 = vmatpush1.msra.mxu0 0.0
    %5326 = vmatprep.subr.mxu0 0.0
    %5327 = vmatpush1.msra.mxu0 0.0
    %5328 = vmatprep.subr.mxu0 0.0
    %5329 = vmatpush1.msra.mxu0 0.0
    %5330 = vmatprep.subr.mxu0 0.0
    %5331 = vmatpush1.msra.mxu0 0.0
    %5332 = vmatprep.subr.mxu0 0.0
    %5333 = vmatpush1.msra.mxu0 0.0
    %5334 = vmatprep.subr.mxu0 0.0
    %5335 = vmatpush1.msra.mxu0 0.0
    %5336 = vmatprep.subr.mxu0 0.0
    %5337 = vmatpush1.msra.mxu0 0.0
    %5338 = vmatprep.subr.mxu0 0.0
    %5339 = vmatpush1.msra.mxu0 0.0
    %5340 = vmatprep.subr.mxu0 0.0
    %5341 = vmatpush1.msra.mxu0 0.0
    %5342 = vmatprep.subr.mxu0 0.0
    %5343 = vmatpush1.msra.mxu0 0.0
    %5344 = vmatprep.mubr.f32.mxu0 0.0
    %5345 = vmatmul.mubr.f32.gmra.mrb[0].mxu0 %v5275
    %v5346 = vpop.f32.mrb[0].mxu0
    %v5347 = vadd.f32 %v4007, %v5346
    %v5348 = vpop.f32.mrb[0].mxu0
    %5349 = vmatprep.mubr.f32.mxu0 0.0
    %5350 = vmatmul.mubr.f32.gmra.mrb[0].mxu0 %v5278
    %v5351 = vpop.f32.mrb[0].mxu0
    %v5352 = vadd.f32 %v4007, %v5351
    %v5353 = vpop.f32.mrb[0].mxu0
    %5354 = vdwg.mxu0
    %v5355 = vadd.f32 %v5189, %v5347
    %v5356 = vadd.f32 %v5190, %v5352
    %v5357 = vsel %vm226, %v5355, 0.0
    %v5358 = vsel %vm228, %v5356, 0.0
    %v5359 = vadd.f32 %v5357, %v5358
    %v5360 = vrot.slane %v5359, 4
    %v5361 = vadd.f32 %v5359, %v5360
    %v5362 = vrot.slane %v5361, 2
    %v5363 = vadd.f32 %v5361, %v5362
    %v5364 = vrot.slane %v5363, 1
    %v5365 = vadd.f32 %v5363, %v5364
    %v5366 = vmul.f32 %v5365, %v1314
    %v5367 = vsub.f32 %v5355, %v5366
    %v5368 = vsub.f32 %v5356, %v5366
    %v5369 = vmul.f32 %v5367, %v5367
    %v5370 = vmul.f32 %v5368, %v5368
    %v5371 = vsel %vm226, %v5369, 0.0
    %v5372 = vsel %vm228, %v5370, 0.0
    %v5373 = vadd.f32 %v5371, %v5372
    %v5374 = vrot.slane %v5373, 4
    %v5375 = vadd.f32 %v5373, %v5374
    %v5376 = vrot.slane %v5375, 2
    %v5377 = vadd.f32 %v5375, %v5376
    %v5378 = vrot.slane %v5377, 1
    %v5379 = vadd.f32 %v5377, %v5378
    %v5380 = vmul.f32 %v5379, %v1314
    %v5381 = vadd.f32 %v5380, 1e-05
    %v5382 = vrsqrt.pop %v5381
    %v5383 = vmul.f32 %v5367, %v5382
    %v5384 = vmul.f32 %v5368, %v5382
    %v5385 = vmul.f32 %v5383, %v4122
    %v5386 = vmul.f32 %v5384, %v4122
    %v5387 = vadd.f32 %v5385, %v4128
    %v5388 = vadd.f32 %v5386, %v4128
    %5389 = vst.msk [vmem:[%s230] sm:$0xff] %vm226, %v5387
    %5390 = vst.msk [vmem:[%s230 + $0x8] sm:$0x1] %vm228, %v5388
    %v5391 = vld [vmem:[%s2] sm:$0x1]
    %v5392 = vld [vmem:[%s9] sm:$0xff]
    %v5393 = vld [vmem:[%s9 + $0x8] sm:$0xff]
    %v5394 = vld [vmem:[%s9 + $0x10] sm:$0xff]
    %v5395 = vld [vmem:[%s9 + $0x18] sm:$0xff]
    %v5396 = vld [vmem:[%s9 + $0x20] sm:$0xff]
    %v5397 = vld [vmem:[%s9 + $0x28] sm:$0xff]
    %v5398 = vld [vmem:[%s9 + $0x30] sm:$0xff]
    %v5399 = vld [vmem:[%s9 + $0x38] sm:$0xff]
    %s5400 = scalar_lea.vmem %s9, 64
    %v5401 = vld [vmem:[%s5400] ss:$8 sm:$0x3]
    %v5403 = vlaneseq
    %v5404 = vshrl.u32 %v5403, 7
    %v5405 = vsub.s32 0, %v5404
    %v5406 = vrot.slane %v5401, %v5405
    %v5407 = vlaneseq
    %v5408 = vshrl.u32 %v5407, 7
    %v5409 = vsub.s32 1, %v5408
    %v5410 = vrot.slane %v5401, %v5409
    %v5414 = vsel %vm226, %v5391, 0
    %5416 = vmatprep.subr.mxu0 %v5393
    %5417 = vmatpush1.msra.mxu0 %v5392
    %5418 = vmatprep.subr.mxu0 %v5395
    %5419 = vmatpush1.msra.mxu0 %v5394
    %5420 = vmatprep.subr.mxu0 %v5397
    %5421 = vmatpush1.msra.mxu0 %v5396
    %5422 = vmatprep.subr.mxu0 %v5399
    %5423 = vmatpush1.msra.mxu0 %v5398
    %5424 = vmatprep.subr.mxu0 0.0
    %5425 = vmatpush1.msra.mxu0 0.0
    %5426 = vmatprep.subr.mxu0 0.0
    %5427 = vmatpush1.msra.mxu0 0.0
    %5428 = vmatprep.subr.mxu0 0.0
    %5429 = vmatpush1.msra.mxu0 0.0
    %5430 = vmatprep.subr.mxu0 0.0
    %5431 = vmatpush1.msra.mxu0 0.0
    %5432 = vmatprep.subr.mxu0 0.0
    %5433 = vmatpush1.msra.mxu0 0.0
    %5434 = vmatprep.subr.mxu0 0.0
    %5435 = vmatpush1.msra.mxu0 0.0
    %5436 = vmatprep.subr.mxu0 0.0
    %5437 = vmatpush1.msra.mxu0 0.0
    %5438 = vmatprep.subr.mxu0 0.0
    %5439 = vmatpush1.msra.mxu0 0.0
    %5440 = vmatprep.subr.mxu0 0.0
    %5441 = vmatpush1.msra.mxu0 0.0
    %5442 = vmatprep.subr.mxu0 0.0
    %5443 = vmatpush1.msra.mxu0 0.0
    %5444 = vmatprep.subr.mxu0 0.0
    %5445 = vmatpush1.msra.mxu0 0.0
    %5446 = vmatprep.subr.mxu0 0.0
    %5447 = vmatpush1.msra.mxu0 0.0
    %5448 = vmatprep.subr.mxu0 0.0
    %5449 = vmatpush1.msra.mxu0 0.0
    %5450 = vmatprep.subr.mxu0 0.0
    %5451 = vmatpush1.msra.mxu0 0.0
    %5452 = vmatprep.subr.mxu0 0.0
    %5453 = vmatpush1.msra.mxu0 0.0
    %5454 = vmatprep.subr.mxu0 0.0
    %5455 = vmatpush1.msra.mxu0 0.0
    %5456 = vmatprep.subr.mxu0 0.0
    %5457 = vmatpush1.msra.mxu0 0.0
    %5458 = vmatprep.subr.mxu0 0.0
    %5459 = vmatpush1.msra.mxu0 0.0
    %5460 = vmatprep.subr.mxu0 0.0
    %5461 = vmatpush1.msra.mxu0 0.0
    %5462 = vmatprep.subr.mxu0 0.0
    %5463 = vmatpush1.msra.mxu0 0.0
    %5464 = vmatprep.subr.mxu0 0.0
    %5465 = vmatpush1.msra.mxu0 0.0
    %5466 = vmatprep.subr.mxu0 0.0
    %5467 = vmatpush1.msra.mxu0 0.0
    %5468 = vmatprep.subr.mxu0 0.0
    %5469 = vmatpush1.msra.mxu0 0.0
    %5470 = vmatprep.subr.mxu0 0.0
    %5471 = vmatpush1.msra.mxu0 0.0
    %5472 = vmatprep.subr.mxu0 0.0
    %5473 = vmatpush1.msra.mxu0 0.0
    %5474 = vmatprep.subr.mxu0 0.0
    %5475 = vmatpush1.msra.mxu0 0.0
    %5476 = vmatprep.subr.mxu0 0.0
    %5477 = vmatpush1.msra.mxu0 0.0
    %5478 = vmatprep.subr.mxu0 0.0
    %5479 = vmatpush1.msra.mxu0 0.0
    %5480 = vmatprep.mubr.f32.mxu0 0.0
    %5481 = vmatmul.mubr.f32.gmra.mrb[0].mxu0 %v5414
    %v5482 = vpop.f32.mrb[0].mxu0
    %v5483 = vadd.f32 %v5406, %v5482
    %v5484 = vpop.f32.mrb[0].mxu0
    %v5485 = vadd.f32 %v5410, %v5484
    %5486 = vdwg.mxu0
    %v5487 = vld [vmem:[%s10] sm:$0xff]
    %v5488 = vld [vmem:[%s10 + $0x8] sm:$0xff]
    %v5489 = vld [vmem:[%s10 + $0x10] sm:$0xff]
    %v5490 = vld [vmem:[%s10 + $0x18] sm:$0xff]
    %v5491 = vld [vmem:[%s10 + $0x20] sm:$0xff]
    %v5492 = vld [vmem:[%s10 + $0x28] sm:$0xff]
    %v5493 = vld [vmem:[%s10 + $0x30] sm:$0xff]
    %v5494 = vld [vmem:[%s10 + $0x38] sm:$0xff]
    %v5495 = vld [vmem:[%s10 + $0x40] sm:$0xff]
    %v5496 = vld [vmem:[%s10 + $0x48] sm:$0xff]
    %v5497 = vld [vmem:[%s10 + $0x50] sm:$0xff]
    %v5498 = vld [vmem:[%s10 + $0x58] sm:$0xff]
    %v5499 = vld [vmem:[%s10 + $0x60] sm:$0xff]
    %v5500 = vld [vmem:[%s10 + $0x68] sm:$0xff]
    %v5501 = vld [vmem:[%s10 + $0x70] sm:$0xff]
    %v5502 = vld [vmem:[%s10 + $0x78] sm:$0xff]
    %v5503 = vld [vmem:[%s10 + $0x80] sm:$0xff]
    %v5504 = vld [vmem:[%s10 + $0x88] sm:$0xff]
    %v5505 = vld [vmem:[%s10 + $0x90] sm:$0xff]
    %v5506 = vld [vmem:[%s10 + $0x98] sm:$0xff]
    %v5507 = vld [vmem:[%s10 + $0xa0] sm:$0xff]
    %v5508 = vld [vmem:[%s10 + $0xa8] sm:$0xff]
    %v5509 = vld [vmem:[%s10 + $0xb0] sm:$0xff]
    %v5510 = vld [vmem:[%s10 + $0xb8] sm:$0xff]
    %v5511 = vld [vmem:[%s10 + $0xc0] sm:$0xff]
    %v5512 = vld [vmem:[%s10 + $0xc8] sm:$0xff]
    %v5513 = vld [vmem:[%s10 + $0xd0] sm:$0xff]
    %v5514 = vld [vmem:[%s10 + $0xd8] sm:$0xff]
    %v5515 = vld [vmem:[%s10 + $0xe0] sm:$0xff]
    %v5516 = vld [vmem:[%s10 + $0xe8] sm:$0xff]
    %v5517 = vld [vmem:[%s10 + $0xf0] sm:$0xff]
    %v5518 = vld [vmem:[%s10 + $0xf8] sm:$0xff]
    %v5519 = vld [vmem:[%s10 + $0x100] sm:$0x1]
    %5520 = vmatprep.subr.mxu0 0.0
    %5521 = vmatpush1.msra.mxu0 %v5487
    %5522 = vmatprep.subr.mxu0 0.0
    %5523 = vmatpush1.msra.mxu0 %v5488
    %5524 = vmatprep.subr.mxu0 0.0
    %5525 = vmatpush1.msra.mxu0 %v5489
    %5526 = vmatprep.subr.mxu0 0.0
    %5527 = vmatpush1.msra.mxu0 %v5490
    %5528 = vmatprep.subr.mxu0 0.0
    %5529 = vmatpush1.msra.mxu0 %v5491
    %5530 = vmatprep.subr.mxu0 0.0
    %5531 = vmatpush1.msra.mxu0 %v5492
    %5532 = vmatprep.subr.mxu0 0.0
    %5533 = vmatpush1.msra.mxu0 %v5493
    %5534 = vmatprep.subr.mxu0 0.0
    %5535 = vmatpush1.msra.mxu0 %v5494
    %5536 = vmatprep.subr.mxu0 0.0
    %5537 = vmatpush1.msra.mxu0 %v5495
    %5538 = vmatprep.subr.mxu0 0.0
    %5539 = vmatpush1.msra.mxu0 %v5496
    %5540 = vmatprep.subr.mxu0 0.0
    %5541 = vmatpush1.msra.mxu0 %v5497
    %5542 = vmatprep.subr.mxu0 0.0
    %5543 = vmatpush1.msra.mxu0 %v5498
    %5544 = vmatprep.subr.mxu0 0.0
    %5545 = vmatpush1.msra.mxu0 %v5499
    %5546 = vmatprep.subr.mxu0 0.0
    %5547 = vmatpush1.msra.mxu0 %v5500
    %5548 = vmatprep.subr.mxu0 0.0
    %5549 = vmatpush1.msra.mxu0 %v5501
    %5550 = vmatprep.subr.mxu0 0.0
    %5551 = vmatpush1.msra.mxu0 %v5502
    %5552 = vmatprep.subr.mxu0 0.0
    %5553 = vmatpush1.msra.mxu0 %v5503
    %5554 = vmatprep.subr.mxu0 0.0
    %5555 = vmatpush1.msra.mxu0 %v5504
    %5556 = vmatprep.subr.mxu0 0.0
    %5557 = vmatpush1.msra.mxu0 %v5505
    %5558 = vmatprep.subr.mxu0 0.0
    %5559 = vmatpush1.msra.mxu0 %v5506
    %5560 = vmatprep.subr.mxu0 0.0
    %5561 = vmatpush1.msra.mxu0 %v5507
    %5562 = vmatprep.subr.mxu0 0.0
    %5563 = vmatpush1.msra.mxu0 %v5508
    %5564 = vmatprep.subr.mxu0 0.0
    %5565 = vmatpush1.msra.mxu0 %v5509
    %5566 = vmatprep.subr.mxu0 0.0
    %5567 = vmatpush1.msra.mxu0 %v5510
    %5568 = vmatprep.subr.mxu0 0.0
    %5569 = vmatpush1.msra.mxu0 %v5511
    %5570 = vmatprep.subr.mxu0 0.0
    %5571 = vmatpush1.msra.mxu0 %v5512
    %5572 = vmatprep.subr.mxu0 0.0
    %5573 = vmatpush1.msra.mxu0 %v5513
    %5574 = vmatprep.subr.mxu0 0.0
    %5575 = vmatpush1.msra.mxu0 %v5514
    %5576 = vmatprep.subr.mxu0 0.0
    %5577 = vmatpush1.msra.mxu0 %v5515
    %5578 = vmatprep.subr.mxu0 0.0
    %5579 = vmatpush1.msra.mxu0 %v5516
    %5580 = vmatprep.subr.mxu0 0.0
    %5581 = vmatpush1.msra.mxu0 %v5517
    %5582 = vmatprep.subr.mxu0 0.0
    %5583 = vmatpush1.msra.mxu0 %v5518
    %5584 = vmatprep.mubr.f32.mxu0 %v5485
    %5585 = vmatmul.mubr.f32.gmra.mrb[0].mxu0 %v5483
    %v5586 = vpop.f32.mrb[0].mxu0
    %v5587 = vadd.f32 %v5519, %v5586
    %v5588 = vpop.f32.mrb[0].mxu0
    %5589 = vdwg.mxu0
    %v5590 = vld [vmem:[#allocation2] sm:$0xff]
    %v5591 = vlaneseq
    %v5592 = vshrl.u32 %v5591, 7
    %v5593 = vsub.s32 0, %v5592
    %v5594 = vrot.slane %v5587, %v5593
    %v5595 = vadd.f32 %v5590, %v5594
    %v5596 = vld [vmem:[%s11] sm:$0xff]
    %v5597 = vld [vmem:[%s11 + $0x8] sm:$0xff]
    %v5598 = vld [vmem:[%s11 + $0x10] sm:$0xff]
    %v5599 = vld [vmem:[%s11 + $0x18] sm:$0xff]
    %v5601 = vsel %vm226, %v5595, 0
    %5603 = vmatprep.subr.mxu0 0.0
    %5604 = vmatpush1.msra.mxu0 %v5596
    %5605 = vmatprep.subr.mxu0 0.0
    %5606 = vmatpush1.msra.mxu0 %v5597
    %5607 = vmatprep.subr.mxu0 0.0
    %5608 = vmatpush1.msra.mxu0 %v5598
    %5609 = vmatprep.subr.mxu0 0.0
    %5610 = vmatpush1.msra.mxu0 %v5599
    %5611 = vmatprep.subr.mxu0 0.0
    %5612 = vmatpush1.msra.mxu0 0.0
    %5613 = vmatprep.subr.mxu0 0.0
    %5614 = vmatpush1.msra.mxu0 0.0
    %5615 = vmatprep.subr.mxu0 0.0
    %5616 = vmatpush1.msra.mxu0 0.0
    %5617 = vmatprep.subr.mxu0 0.0
    %5618 = vmatpush1.msra.mxu0 0.0
    %5619 = vmatprep.subr.mxu0 0.0
    %5620 = vmatpush1.msra.mxu0 0.0
    %5621 = vmatprep.subr.mxu0 0.0
    %5622 = vmatpush1.msra.mxu0 0.0
    %5623 = vmatprep.subr.mxu0 0.0
    %5624 = vmatpush1.msra.mxu0 0.0
    %5625 = vmatprep.subr.mxu0 0.0
    %5626 = vmatpush1.msra.mxu0 0.0
    %5627 = vmatprep.subr.mxu0 0.0
    %5628 = vmatpush1.msra.mxu0 0.0
    %5629 = vmatprep.subr.mxu0 0.0
    %5630 = vmatpush1.msra.mxu0 0.0
    %5631 = vmatprep.subr.mxu0 0.0
    %5632 = vmatpush1.msra.mxu0 0.0
    %5633 = vmatprep.subr.mxu0 0.0
    %5634 = vmatpush1.msra.mxu0 0.0
    %5635 = vmatprep.subr.mxu0 0.0
    %5636 = vmatpush1.msra.mxu0 0.0
    %5637 = vmatprep.subr.mxu0 0.0
    %5638 = vmatpush1.msra.mxu0 0.0
    %5639 = vmatprep.subr.mxu0 0.0
    %5640 = vmatpush1.msra.mxu0 0.0
    %5641 = vmatprep.subr.mxu0 0.0
    %5642 = vmatpush1.msra.mxu0 0.0
    %5643 = vmatprep.subr.mxu0 0.0
    %5644 = vmatpush1.msra.mxu0 0.0
    %5645 = vmatprep.subr.mxu0 0.0
    %5646 = vmatpush1.msra.mxu0 0.0
    %5647 = vmatprep.subr.mxu0 0.0
    %5648 = vmatpush1.msra.mxu0 0.0
    %5649 = vmatprep.subr.mxu0 0.0
    %5650 = vmatpush1.msra.mxu0 0.0
    %5651 = vmatprep.subr.mxu0 0.0
    %5652 = vmatpush1.msra.mxu0 0.0
    %5653 = vmatprep.subr.mxu0 0.0
    %5654 = vmatpush1.msra.mxu0 0.0
    %5655 = vmatprep.subr.mxu0 0.0
    %5656 = vmatpush1.msra.mxu0 0.0
    %5657 = vmatprep.subr.mxu0 0.0
    %5658 = vmatpush1.msra.mxu0 0.0
    %5659 = vmatprep.subr.mxu0 0.0
    %5660 = vmatpush1.msra.mxu0 0.0
    %5661 = vmatprep.subr.mxu0 0.0
    %5662 = vmatpush1.msra.mxu0 0.0
    %5663 = vmatprep.subr.mxu0 0.0
    %5664 = vmatpush1.msra.mxu0 0.0
    %5665 = vmatprep.subr.mxu0 0.0
    %5666 = vmatpush1.msra.mxu0 0.0
    %5667 = vmatprep.mubr.f32.mxu0 0.0
    %5668 = vmatmul.mubr.f32.gmra.mrb[0].mxu0 %v5601
    %v5669 = vpop.f32.mrb[0].mxu0
    %v5670 = vadd.f32 0.0, %v5669
    %v5671 = vpop.f32.mrb[0].mxu0
    %5672 = vdwg.mxu0
    %5673 = vst.msk [vmem:[#allocation4] sm:$0xff] %vm226, %v5590
    %5674 = vrot.lane.b32.xlu0 %v5595, 32
    %v5675 = vpop.permute.xlu0 %5674
    %vm5677 = vcmask 523520
    %5678 = vst.msk [vmem:[#allocation4] sm:$0xff] %vm5677, %v5675
    %5680 = vrot.lane.b32.xlu0 %v5670, 64
    %v5681 = vpop.permute.xlu0 %5680
    %vm5683 = vcmask 1048064
    %5684 = vst.msk [vmem:[#allocation4] sm:$0xff] %vm5683, %v5681
    %v5685 = vld [vmem:[%s230] sm:$0xff]
    %v5686 = vadd.f32 %v5685, %v5594
    %v5687 = vld [vmem:[%s11] sm:$0xff]
    %v5688 = vld [vmem:[%s11 + $0x8] sm:$0xff]
    %v5689 = vld [vmem:[%s11 + $0x10] sm:$0xff]
    %v5690 = vld [vmem:[%s11 + $0x18] sm:$0xff]
    %v5692 = vsel %vm226, %v5686, 0
    %5694 = vmatprep.subr.mxu0 0.0
    %5695 = vmatpush1.msra.mxu0 %v5687
    %5696 = vmatprep.subr.mxu0 0.0
    %5697 = vmatpush1.msra.mxu0 %v5688
    %5698 = vmatprep.subr.mxu0 0.0
    %5699 = vmatpush1.msra.mxu0 %v5689
    %5700 = vmatprep.subr.mxu0 0.0
    %5701 = vmatpush1.msra.mxu0 %v5690
    %5702 = vmatprep.subr.mxu0 0.0
    %5703 = vmatpush1.msra.mxu0 0.0
    %5704 = vmatprep.subr.mxu0 0.0
    %5705 = vmatpush1.msra.mxu0 0.0
    %5706 = vmatprep.subr.mxu0 0.0
    %5707 = vmatpush1.msra.mxu0 0.0
    %5708 = vmatprep.subr.mxu0 0.0
    %5709 = vmatpush1.msra.mxu0 0.0
    %5710 = vmatprep.subr.mxu0 0.0
    %5711 = vmatpush1.msra.mxu0 0.0
    %5712 = vmatprep.subr.mxu0 0.0
    %5713 = vmatpush1.msra.mxu0 0.0
    %5714 = vmatprep.subr.mxu0 0.0
    %5715 = vmatpush1.msra.mxu0 0.0
    %5716 = vmatprep.subr.mxu0 0.0
    %5717 = vmatpush1.msra.mxu0 0.0
    %5718 = vmatprep.subr.mxu0 0.0
    %5719 = vmatpush1.msra.mxu0 0.0
    %5720 = vmatprep.subr.mxu0 0.0
    %5721 = vmatpush1.msra.mxu0 0.0
    %5722 = vmatprep.subr.mxu0 0.0
    %5723 = vmatpush1.msra.mxu0 0.0
    %5724 = vmatprep.subr.mxu0 0.0
    %5725 = vmatpush1.msra.mxu0 0.0
    %5726 = vmatprep.subr.mxu0 0.0
    %5727 = vmatpush1.msra.mxu0 0.0
    %5728 = vmatprep.subr.mxu0 0.0
    %5729 = vmatpush1.msra.mxu0 0.0
    %5730 = vmatprep.subr.mxu0 0.0
    %5731 = vmatpush1.msra.mxu0 0.0
    %5732 = vmatprep.subr.mxu0 0.0
    %5733 = vmatpush1.msra.mxu0 0.0
    %5734 = vmatprep.subr.mxu0 0.0
    %5735 = vmatpush1.msra.mxu0 0.0
    %5736 = vmatprep.subr.mxu0 0.0
    %5737 = vmatpush1.msra.mxu0 0.0
    %5738 = vmatprep.subr.mxu0 0.0
    %5739 = vmatpush1.msra.mxu0 0.0
    %5740 = vmatprep.subr.mxu0 0.0
    %5741 = vmatpush1.msra.mxu0 0.0
    %5742 = vmatprep.subr.mxu0 0.0
    %5743 = vmatpush1.msra.mxu0 0.0
    %5744 = vmatprep.subr.mxu0 0.0
    %5745 = vmatpush1.msra.mxu0 0.0
    %5746 = vmatprep.subr.mxu0 0.0
    %5747 = vmatpush1.msra.mxu0 0.0
    %5748 = vmatprep.subr.mxu0 0.0
    %5749 = vmatpush1.msra.mxu0 0.0
    %5750 = vmatprep.subr.mxu0 0.0
    %5751 = vmatpush1.msra.mxu0 0.0
    %5752 = vmatprep.subr.mxu0 0.0
    %5753 = vmatpush1.msra.mxu0 0.0
    %5754 = vmatprep.subr.mxu0 0.0
    %5755 = vmatpush1.msra.mxu0 0.0
    %5756 = vmatprep.subr.mxu0 0.0
    %5757 = vmatpush1.msra.mxu0 0.0
    %5758 = vmatprep.mubr.f32.mxu0 0.0
    %5759 = vmatmul.mubr.f32.gmra.mrb[0].mxu0 %v5692
    %v5760 = vpop.f32.mrb[0].mxu0
    %v5761 = vadd.f32 0.0, %v5760
    %v5762 = vpop.f32.mrb[0].mxu0
    %5763 = vdwg.mxu0
    %s5764 = scalar_lea.vmem [#allocation4], 8
    %5765 = vst.msk [vmem:[%s5764] sm:$0xff] %vm226, %v5685
    %5766 = vrot.lane.b32.xlu0 %v5686, 32
    %v5767 = vpop.permute.xlu0 %5766
    %5769 = vst.msk [vmem:[%s5764] sm:$0xff] %vm5677, %v5767
    %5771 = vrot.lane.b32.xlu0 %v5761, 64
    %v5772 = vpop.permute.xlu0 %5771
    %5774 = vst.msk [vmem:[%s5764] sm:$0xff] %vm5683, %v5772
    // Predicated region
    $region50: #{pre_forward.1} parent=1 // pred_check
      _
    $region51: #{pre_forward.1} parent=1 // pred_check_branch
      %5776 = sbr.rel (0) target = $region53
    $region52: #{pre_forward.1} parent=1 // pred_region
      %s5778 = ssub.s32 256, 256
      %5779 = vsyncadd [#allocation5], %s5778
      %s5780 = sshll.u32 [#allocation4], 4
      %s5781 = int_to_ptr.vmem [resolvable:$true] %s5780
      %5786 = dma.vmem_to_hbm [thread:$0]  %s5781, 256, %s12, [#allocation5], 128, 128, 8
    $region53: #{pre_forward.1} parent=1 // pred_fallthru
      _
    // Predicated region
    $region54: #{pre_forward.1} parent=1 // pred_check
      _
    $region55: #{pre_forward.1} parent=1 // pred_check_branch
      %5788 = sbr.rel (0) target = $region57
    $region56: #{pre_forward.1} parent=1 // pred_region
      %s5790 = ssub.s32 32, 32
      %5791 = vsyncadd [#allocation7], %s5790
      %s5793 = sshll.u32 [#allocation6], 4
      %s5794 = int_to_ptr.vmem [resolvable:$true] %s5793
      %5796 = dma.vmem_to_hbm [thread:$0]  %s5794, 32, %s13, [#allocation7]
    $region57: #{pre_forward.1} parent=1 // pred_fallthru
      _
    // Predicated region
    $region58: #{pre_forward.1} parent=1 // pred_check
      _
    $region59: #{pre_forward.1} parent=1 // pred_check_branch
      %5798 = sbr.rel (0) target = $region61
    $region60: #{pre_forward.1} parent=1 // pred_region
      %5799 = dma.done [#allocation5], 256
    $region61: #{pre_forward.1} parent=1 // pred_fallthru
      _
    // Predicated region
    $region62: #{pre_forward.1} parent=1 // pred_check
      _
    $region63: #{pre_forward.1} parent=1 // pred_check_branch
      %5801 = sbr.rel (0) target = $region65
    $region64: #{pre_forward.1} parent=1 // pred_region
      %5802 = dma.done [#allocation7], 32
    $region65: #{pre_forward.1} parent=1 // pred_fallthru
      _
    %5803 = vsyncpa [#allocation5], 1
    %5804 = vsyncpa [#allocation7], 1

</llo_original>
